<compile_context>
chip_gen: v7x
topology: tpu7x:2x2x1
jax: 0.10.0
libtpu: 0.0.40
codegen_flags: <defaults>
</compile_context>

<pallas_src>
import numpy as np

import jax
import jax.numpy as jnp
from jax.experimental import pallas as pl
from jax.experimental.pallas import tpu as pltpu

VMEM = pl.BlockSpec(memory_space=pltpu.MemorySpace.VMEM)

KSIZE = 6
PAD = 5


# ------------------------------ fused kernel ------------------------------- #

def fused_cnn_auto_kernel(
    x_ref,                                   # (N, 16) f32
    w1_ref, b1_ref,                          # conv1+pool banded [even|odd] (bf16), bias f32
    w2_ref, b2_ref,                          # conv2+pool banded [even|odd] (bf16), bias f32
    wd1_ref, bd1_ref,                        # dense1 (rows pre-permuted to NLC order), bf16/f32
    wcls_ref, bcls_ref,                      # folded dense2∘cnn_out  (1024,10), bf16/f32
    wauto_ref, bauto_ref,                    # folded autoencoder     (1024,1024), bf16/f32
    cnn_ref, mid_ref, recon_ref,             # outputs (f32)
):
    f32 = jnp.float32
    bf16 = jnp.bfloat16

    x = x_ref[...].astype(bf16)

    # conv1 + ReLU + MaxPool(2): one wide dot (even|odd), split, max, bias, relu (f32 VPU path)
    s = jnp.dot(x, w1_ref[...], preferred_element_type=f32)             # (N, 640)
    half = s.shape[-1] // 2
    h1 = jnp.maximum(jnp.maximum(s[:, :half], s[:, half:]) + b1_ref[...], 0.0)   # (N, 320)

    # conv2 + ReLU + MaxPool(2)
    s = jnp.dot(h1.astype(bf16), w2_ref[...], preferred_element_type=f32)        # (N, 896)
    half = s.shape[-1] // 2
    h2 = jnp.maximum(jnp.maximum(s[:, :half], s[:, half:]) + b2_ref[...], 0.0)   # (N, 448)

    # dense1 -> mid  (h2 is already the flatten; dense1 rows permuted at init)
    mid = jnp.dot(h2.astype(bf16), wd1_ref[...], preferred_element_type=f32) + bd1_ref[...]
    mid_ref[...] = mid

    mid_b = mid.astype(bf16)
    # classifier head: dense2∘cnn_out folded into one matmul
    cnn_ref[...] = jnp.dot(mid_b, wcls_ref[...], preferred_element_type=f32) + bcls_ref[...]
    # autoencoder: encoder_1/2∘decoder_1/2 folded into one (1024,1024) matmul
    recon_ref[...] = jnp.dot(mid_b, wauto_ref[...], preferred_element_type=f32) + bauto_ref[...]


@jax.jit
def cnn_auto_forward(x_ncw, kparams):
    """x_ncw: (N, 1, L) float32 (PyTorch NCW layout). kparams: tuple from prepare_kernel_params."""
    n = x_ncw.shape[0]
    x_flat = x_ncw.reshape(n, -1).astype(jnp.float32)   # Cin=1 -> (N, L)

    out_shape = (
        jax.ShapeDtypeStruct((n, 10), jnp.float32),      # cnn_output
        jax.ShapeDtypeStruct((n, 1024), jnp.float32),    # mid
        jax.ShapeDtypeStruct((n, 1024), jnp.float32),    # reconstruction
    )

    # Advisory cost estimate so XLA can schedule surrounding work against the call.
    matmul_weights = kparams[0::2]                       # w1, w2, wd1, wcls, wauto
    flops = 2 * n * sum(int(np.prod(w.shape)) for w in matmul_weights)
    bytes_accessed = (
        int(np.prod(x_flat.shape)) * 4
        + sum(int(np.prod(a.shape)) * a.dtype.itemsize for a in kparams)
        + n * (10 + 1024 + 1024) * 4
    )
    cost = pl.CostEstimate(flops=flops, transcendentals=0, bytes_accessed=bytes_accessed)

    call = pl.pallas_call(
        fused_cnn_auto_kernel,
        out_shape=out_shape,
        in_specs=[VMEM] * (1 + len(kparams)),
        out_specs=(VMEM, VMEM, VMEM),
        compiler_params=pltpu.CompilerParams(vmem_limit_bytes=12 * 1024 * 1024),
        cost_estimate=cost,
    )
    return call(x_flat, *kparams)


# ----------------------- init-time weight transformations ------------------ #

def _conv_pool_banded(w_torch, b_torch, lin, padding=PAD):
    """Fold Conv1d(pad, stride 1) + MaxPool1d(2) into one concatenated banded matrix.

    Returns W_cat (Lin*Cin, 2*Lhalf*Cout) bf16 (columns = [even | odd] pooled parity)
    and b_flat (1, Lhalf*Cout) f32 such that the pooled/ReLU'd output (channels-last
    flat, index l*Cout+co) is relu(max(split(x @ W_cat)) + b_flat).  Zero padding is
    folded into the band.
    """
    cout, cin, k = w_torch.shape
    lout = lin + 2 * padding - k + 1
    lhalf = lout // 2
    li = jnp.arange(lin)[:, None]              # (Lin, 1)
    lo = jnp.arange(lout)[None, :]             # (1, Lout)
    tap = li - lo + padding                    # (Lin, Lout)
    valid = (tap >= 0) & (tap < k)
    w_kic = jnp.transpose(w_torch, (2, 1, 0))  # (K, Cin, Cout)
    full = w_kic[jnp.clip(tap, 0, k - 1)]      # (Lin, Lout, Cin, Cout)
    full = jnp.where(valid[:, :, None, None], full, 0.0)
    full = jnp.transpose(full, (0, 2, 1, 3)).reshape(lin * cin, lout, cout)
    w_even = full[:, 0:2 * lhalf:2, :].reshape(lin * cin, lhalf * cout)
    w_odd = full[:, 1:2 * lhalf:2, :].reshape(lin * cin, lhalf * cout)
    w_cat = jnp.concatenate([w_even, w_odd], axis=1).astype(jnp.bfloat16)
    b_flat = jnp.tile(b_torch[None, :], (1, lhalf)).astype(jnp.float32)
    return w_cat, b_flat


def _permute_dense1_rows(wd1_torch, l2, c2=64):
    """Permute dense1 rows so it consumes the kernel's (l, c)-ordered flatten.

    torch flatten of (N, C, L) uses index c*L + l; kernel uses l*C + c.
    """
    wt = wd1_torch.T                                          # (C*L, 1024), row = c*L + l
    return jnp.transpose(wt.reshape(c2, l2, -1), (1, 0, 2)).reshape(c2 * l2, -1)


def _fold_linear_chain(tp, names):
    """Exactly fold a chain of activation-free Linear layers (torch layout) in float64.

    y = (...((x @ W0.T + b0) @ W1.T + b1)...) == x @ W_fold + b_fold
    """
    W, b = None, None
    for nm in names:
        w = np.asarray(tp[nm + "_w"], np.float64).T           # (in, out)
        bb = np.asarray(tp[nm + "_b"], np.float64)
        if W is None:
            W, b = w, bb
        else:
            b = b @ w + bb
            W = W @ w
    return jnp.asarray(W, jnp.bfloat16), jnp.asarray(b[None, :], jnp.float32)


def prepare_kernel_params(tp, input_len):
    l1 = (input_len + 2 * PAD - KSIZE + 1) // 2               # 10
    l2 = (l1 + 2 * PAD - KSIZE + 1) // 2                      # 7

    w1, b1 = _conv_pool_banded(tp["conv1_w"], tp["conv1_b"], lin=input_len)
    w2, b2 = _conv_pool_banded(tp["conv2_w"], tp["conv2_b"], lin=l1)
    wd1 = _permute_dense1_rows(tp["dense1_w"], l2=l2, c2=64).astype(jnp.bfloat16)
    bd1 = tp["dense1_b"][None, :].astype(jnp.float32)

    wcls, bcls = _fold_linear_chain(tp, ["dense2", "cnn_out"])
    wauto, bauto = _fold_linear_chain(
        tp, ["encoder_1", "encoder_2", "decoder_1", "decoder_2"])

    return (w1, b1, w2, b2, wd1, bd1, wcls, bcls, wauto, bauto)


# -------------------------- synthetic torch-layout params ------------------ #

def init_torch_params(key, input_len):
    """Deterministic synthetic params in PyTorch-native layouts."""
    l1 = (input_len + 2 * PAD - KSIZE + 1) // 2
    l2 = (l1 + 2 * PAD - KSIZE + 1) // 2
    flat = 64 * l2

    keys = jax.random.split(key, 18)

    def w(k, shape, s):
        return jax.random.normal(k, shape, jnp.float32) * s

    return {
        "conv1_w": w(keys[0], (32, 1, KSIZE), 0.1),   "conv1_b": w(keys[1], (32,), 0.1),
        "conv2_w": w(keys[2], (64, 32, KSIZE), 0.05), "conv2_b": w(keys[3], (64,), 0.05),
        "dense1_w": w(keys[4], (1024, flat), 0.05),   "dense1_b": w(keys[5], (1024,), 0.05),
        "dense2_w": w(keys[6], (25, 1024), 0.05),     "dense2_b": w(keys[7], (25,), 0.05),
        "cnn_out_w": w(keys[8], (10, 25), 0.05),      "cnn_out_b": w(keys[9], (10,), 0.05),
        "encoder_1_w": w(keys[10], (512, 1024), 0.05), "encoder_1_b": w(keys[11], (512,), 0.05),
        "encoder_2_w": w(keys[12], (256, 512), 0.05),  "encoder_2_b": w(keys[13], (256,), 0.05),
        "decoder_1_w": w(keys[14], (512, 256), 0.05),  "decoder_1_b": w(keys[15], (512,), 0.05),
        "decoder_2_w": w(keys[16], (1024, 512), 0.05), "decoder_2_b": w(keys[17], (1024,), 0.05),
    }


# ------------------------------ pure-JAX reference ------------------------- #

def reference_forward(x_ncw, tp):
    """Mirror of the PyTorch forward, pure jnp f32, torch layouts."""
    hp = jax.lax.Precision.HIGHEST

    def conv1d(x, w, b, pad):
        n, _, l = x.shape
        cout, _, k = w.shape
        xp = jnp.pad(x, ((0, 0), (0, 0), (pad, pad)))
        lout = l + 2 * pad - k + 1
        out = jnp.zeros((n, cout, lout), jnp.float32)
        for kk in range(k):
            out = out + jnp.einsum("nil,oi->nol", xp[:, :, kk:kk + lout], w[:, :, kk],
                                   precision=hp)
        return out + b[None, :, None]

    def pool2(x):
        h = x.shape[2] // 2
        return jnp.maximum(x[:, :, 0:2 * h:2], x[:, :, 1:2 * h:2])

    def lin(x, w, b):
        return jnp.dot(x, w.T, precision=hp) + b[None, :]

    h = pool2(jnp.maximum(conv1d(x_ncw, tp["conv1_w"], tp["conv1_b"], PAD), 0.0))
    h = pool2(jnp.maximum(conv1d(h, tp["conv2_w"], tp["conv2_b"], PAD), 0.0))
    flat = h.reshape(h.shape[0], -1)                       # torch (N, C, L).view(N, -1)
    mid = lin(flat, tp["dense1_w"], tp["dense1_b"])
    cnn_out = lin(lin(mid, tp["dense2_w"], tp["dense2_b"]), tp["cnn_out_w"], tp["cnn_out_b"])
    e = lin(lin(mid, tp["encoder_1_w"], tp["encoder_1_b"]), tp["encoder_2_w"], tp["encoder_2_b"])
    recon = lin(lin(e, tp["decoder_1_w"], tp["decoder_1_b"]), tp["decoder_2_w"], tp["decoder_2_b"])
    return cnn_out, mid, recon


# ------------------------------------ main ---------------------------------- #

if __name__ == "__main__":
    BATCH, LENGTH = 2, 16      # module built with input_size = (1, 16)
    key = jax.random.PRNGKey(0)
    k_x, k_p = jax.random.split(key)

    x = jax.random.normal(k_x, (BATCH, 1, LENGTH), jnp.float32)     # NCW like torch
    torch_params = init_torch_params(k_p, LENGTH)
    kparams = prepare_kernel_params(torch_params, LENGTH)

    outs = cnn_auto_forward(x, kparams)
    jax.block_until_ready(outs)
    cnn_output, mid, recon = outs

    assert cnn_output.shape == (BATCH, 10)
    assert mid.shape == (BATCH, 1024)
    assert recon.shape == (BATCH, 1024)

    # correctness check vs pure-JAX mirror of the PyTorch forward
    # (tolerance accounts for bf16 weights + exact linear-chain folding reassociation)
    ref = reference_forward(x, torch_params)
    for got, want, name in zip(outs, ref, ("cnn_output", "mid", "recon")):
        np.testing.assert_allclose(np.asarray(got), np.asarray(want),
                                   rtol=3e-2, atol=5e-3, err_msg=name)

    print("KERNEL_OK")
</pallas_src>

<mosaic_0001>
module attributes {stable_mosaic.version = 11 : i64} {
  func.func @fused_cnn_auto_kernel(%arg0: memref<2x16xf32, #tpu.memory_space<vmem>>, %arg1: memref<16x640xbf16, #tpu.memory_space<vmem>>, %arg2: memref<1x320xf32, #tpu.memory_space<vmem>>, %arg3: memref<320x896xbf16, #tpu.memory_space<vmem>>, %arg4: memref<1x448xf32, #tpu.memory_space<vmem>>, %arg5: memref<448x1024xbf16, #tpu.memory_space<vmem>>, %arg6: memref<1x1024xf32, #tpu.memory_space<vmem>>, %arg7: memref<1024x10xbf16, #tpu.memory_space<vmem>>, %arg8: memref<1x10xf32, #tpu.memory_space<vmem>>, %arg9: memref<1024x1024xbf16, #tpu.memory_space<vmem>>, %arg10: memref<1x1024xf32, #tpu.memory_space<vmem>>, %arg11: memref<2x10xf32, #tpu.memory_space<vmem>>, %arg12: memref<2x1024xf32, #tpu.memory_space<vmem>>, %arg13: memref<2x1024xf32, #tpu.memory_space<vmem>>) attributes {dimension_semantics = [], scalar_prefetch = 0 : i64, scratch_operands = 0 : i64, tpu.core_type = #tpu.core_type<tc>} {
    %c0 = arith.constant 0 : index
    %c0_0 = arith.constant 0 : index
    %0 = vector.load %arg0[%c0, %c0_0] : memref<2x16xf32, #tpu.memory_space<vmem>>, vector<2x16xf32>
    %1 = arith.truncf %0 : vector<2x16xf32> to vector<2x16xbf16>
    %c0_1 = arith.constant 0 : index
    %c0_2 = arith.constant 0 : index
    %2 = vector.load %arg1[%c0_1, %c0_2] : memref<16x640xbf16, #tpu.memory_space<vmem>>, vector<16x640xbf16>
    %cst = arith.constant dense<0.000000e+00> : vector<2x640xf32>
    %3 = tpu.matmul %1, %2, %cst {dimension_numbers = #tpu.dot_dimension_numbers<[1], [0], [0], [1], [0, 0, 1, 1], [], []>} : vector<2x16xbf16>, vector<16x640xbf16>, vector<2x640xf32> -> vector<2x640xf32>
    %4 = vector.extract_strided_slice %3 {offsets = [0, 0], sizes = [2, 320], strides = [1, 1]} : vector<2x640xf32> to vector<2x320xf32>
    %5 = vector.extract_strided_slice %3 {offsets = [0, 320], sizes = [2, 320], strides = [1, 1]} : vector<2x640xf32> to vector<2x320xf32>
    %6 = arith.maximumf %4, %5 : vector<2x320xf32>
    %c0_3 = arith.constant 0 : index
    %c0_4 = arith.constant 0 : index
    %7 = vector.load %arg2[%c0_3, %c0_4] : memref<1x320xf32, #tpu.memory_space<vmem>>, vector<1x320xf32>
    %8 = vector.broadcast %7 : vector<1x320xf32> to vector<2x320xf32>
    %9 = arith.addf %6, %8 : vector<2x320xf32>
    %cst_5 = arith.constant 0.000000e+00 : f32
    %10 = vector.broadcast %cst_5 : f32 to vector<2x320xf32>
    %11 = arith.maximumf %9, %10 : vector<2x320xf32>
    %12 = arith.truncf %11 : vector<2x320xf32> to vector<2x320xbf16>
    %c0_6 = arith.constant 0 : index
    %c0_7 = arith.constant 0 : index
    %13 = vector.load %arg3[%c0_6, %c0_7] : memref<320x896xbf16, #tpu.memory_space<vmem>>, vector<320x896xbf16>
    %cst_8 = arith.constant dense<0.000000e+00> : vector<2x896xf32>
    %14 = tpu.matmul %12, %13, %cst_8 {dimension_numbers = #tpu.dot_dimension_numbers<[1], [0], [0], [1], [0, 0, 1, 1], [], []>} : vector<2x320xbf16>, vector<320x896xbf16>, vector<2x896xf32> -> vector<2x896xf32>
    %15 = vector.extract_strided_slice %14 {offsets = [0, 0], sizes = [2, 448], strides = [1, 1]} : vector<2x896xf32> to vector<2x448xf32>
    %16 = vector.extract_strided_slice %14 {offsets = [0, 448], sizes = [2, 448], strides = [1, 1]} : vector<2x896xf32> to vector<2x448xf32>
    %17 = arith.maximumf %15, %16 : vector<2x448xf32>
    %c0_9 = arith.constant 0 : index
    %c0_10 = arith.constant 0 : index
    %18 = vector.load %arg4[%c0_9, %c0_10] : memref<1x448xf32, #tpu.memory_space<vmem>>, vector<1x448xf32>
    %19 = vector.broadcast %18 : vector<1x448xf32> to vector<2x448xf32>
    %20 = arith.addf %17, %19 : vector<2x448xf32>
    %cst_11 = arith.constant 0.000000e+00 : f32
    %21 = vector.broadcast %cst_11 : f32 to vector<2x448xf32>
    %22 = arith.maximumf %20, %21 : vector<2x448xf32>
    %23 = arith.truncf %22 : vector<2x448xf32> to vector<2x448xbf16>
    %c0_12 = arith.constant 0 : index
    %c0_13 = arith.constant 0 : index
    %24 = vector.load %arg5[%c0_12, %c0_13] : memref<448x1024xbf16, #tpu.memory_space<vmem>>, vector<448x1024xbf16>
    %cst_14 = arith.constant dense<0.000000e+00> : vector<2x1024xf32>
    %25 = tpu.matmul %23, %24, %cst_14 {dimension_numbers = #tpu.dot_dimension_numbers<[1], [0], [0], [1], [0, 0, 1, 1], [], []>} : vector<2x448xbf16>, vector<448x1024xbf16>, vector<2x1024xf32> -> vector<2x1024xf32>
    %c0_15 = arith.constant 0 : index
    %c0_16 = arith.constant 0 : index
    %26 = vector.load %arg6[%c0_15, %c0_16] : memref<1x1024xf32, #tpu.memory_space<vmem>>, vector<1x1024xf32>
    %27 = vector.broadcast %26 : vector<1x1024xf32> to vector<2x1024xf32>
    %28 = arith.addf %25, %27 : vector<2x1024xf32>
    %c0_17 = arith.constant 0 : index
    %c0_18 = arith.constant 0 : index
    %29 = vector.load %arg12[%c0_17, %c0_18] : memref<2x1024xf32, #tpu.memory_space<vmem>>, vector<2x1024xf32>
    tpu.vector_store %arg12[%c0_17, %c0_18], %28 {strides = array<i32>} : memref<2x1024xf32, #tpu.memory_space<vmem>>, vector<2x1024xf32>,
    %30 = arith.truncf %28 : vector<2x1024xf32> to vector<2x1024xbf16>
    %c0_19 = arith.constant 0 : index
    %c0_20 = arith.constant 0 : index
    %31 = vector.load %arg7[%c0_19, %c0_20] : memref<1024x10xbf16, #tpu.memory_space<vmem>>, vector<1024x10xbf16>
    %cst_21 = arith.constant dense<0.000000e+00> : vector<2x10xf32>
    %32 = tpu.matmul %30, %31, %cst_21 {dimension_numbers = #tpu.dot_dimension_numbers<[1], [0], [0], [1], [0, 0, 1, 1], [], []>} : vector<2x1024xbf16>, vector<1024x10xbf16>, vector<2x10xf32> -> vector<2x10xf32>
    %c0_22 = arith.constant 0 : index
    %c0_23 = arith.constant 0 : index
    %33 = vector.load %arg8[%c0_22, %c0_23] : memref<1x10xf32, #tpu.memory_space<vmem>>, vector<1x10xf32>
    %34 = vector.broadcast %33 : vector<1x10xf32> to vector<2x10xf32>
    %35 = arith.addf %32, %34 : vector<2x10xf32>
    %c0_24 = arith.constant 0 : index
    %c0_25 = arith.constant 0 : index
    %36 = vector.load %arg11[%c0_24, %c0_25] : memref<2x10xf32, #tpu.memory_space<vmem>>, vector<2x10xf32>
    tpu.vector_store %arg11[%c0_24, %c0_25], %35 {strides = array<i32>} : memref<2x10xf32, #tpu.memory_space<vmem>>, vector<2x10xf32>,
    %c0_26 = arith.constant 0 : index
    %c0_27 = arith.constant 0 : index
    %37 = vector.load %arg9[%c0_26, %c0_27] : memref<1024x1024xbf16, #tpu.memory_space<vmem>>, vector<1024x1024xbf16>
    %cst_28 = arith.constant dense<0.000000e+00> : vector<2x1024xf32>
    %38 = tpu.matmul %30, %37, %cst_28 {dimension_numbers = #tpu.dot_dimension_numbers<[1], [0], [0], [1], [0, 0, 1, 1], [], []>} : vector<2x1024xbf16>, vector<1024x1024xbf16>, vector<2x1024xf32> -> vector<2x1024xf32>
    %c0_29 = arith.constant 0 : index
    %c0_30 = arith.constant 0 : index
    %39 = vector.load %arg10[%c0_29, %c0_30] : memref<1x1024xf32, #tpu.memory_space<vmem>>, vector<1x1024xf32>
    %40 = vector.broadcast %39 : vector<1x1024xf32> to vector<2x1024xf32>
    %41 = arith.addf %38, %40 : vector<2x1024xf32>
    %c0_31 = arith.constant 0 : index
    %c0_32 = arith.constant 0 : index
    %42 = vector.load %arg13[%c0_31, %c0_32] : memref<2x1024xf32, #tpu.memory_space<vmem>>, vector<2x1024xf32>
    tpu.vector_store %arg13[%c0_31, %c0_32], %41 {strides = array<i32>} : memref<2x1024xf32, #tpu.memory_space<vmem>>, vector<2x1024xf32>,
    return
  }
}

</mosaic_0001>

<llo_original>
// kernel: cnn_auto_forward.1
$region0: #{cnn_auto_forward.1}
  #allocation0 [shape = 'u32[]', space=smem, size = 0x4, offset = 0x4, fixed_abs, tag = 'smem constant byte address 0x4 - core index']
  #allocation1 [shape = 'u32[144,128]{1,0:T(1,128)}', space=vmem, size = 0x12000, scoped, tag = 'internal scratch']
  %s0 = inlined_call_operand.hbm [shape: f32[2,16], index: 0, kind: input, shape index: {}]
  %s1 = inlined_call_operand.hbm [shape: bf16[16,640], index: 1, kind: input, shape index: {}]
  %s2 = inlined_call_operand.hbm [shape: f32[1,320], index: 2, kind: input, shape index: {}]
  %s3 = inlined_call_operand.hbm [shape: bf16[320,896], index: 3, kind: input, shape index: {}]
  %s4 = inlined_call_operand.hbm [shape: f32[1,448], index: 4, kind: input, shape index: {}]
  %s5 = inlined_call_operand.hbm [shape: bf16[448,1024], index: 5, kind: input, shape index: {}]
  %s6 = inlined_call_operand.hbm [shape: f32[1,1024], index: 6, kind: input, shape index: {}]
  %s7 = inlined_call_operand.vmem [shape: bf16[1024,10], index: 7, kind: input, shape index: {}]
  %s8 = inlined_call_operand.hbm [shape: f32[1,10], index: 8, kind: input, shape index: {}]
  %s9 = inlined_call_operand.hbm [shape: bf16[1024,1024], index: 9, kind: input, shape index: {}]
  %s10 = inlined_call_operand.hbm [shape: f32[1,1024], index: 10, kind: input, shape index: {}]
  %s11 = inlined_call_operand.hbm [shape: f32[2,10], index: 11, kind: output, shape index: {0}]
  %s12 = inlined_call_operand.hbm [shape: f32[2,1024], index: 12, kind: output, shape index: {1}]
  %s13 = inlined_call_operand.hbm [shape: f32[2,1024], index: 13, kind: output, shape index: {2}]
  %14 = xla_tuple %s11, %s12, %s13
  %s15 = sld [smem:[#allocation0]]
  $region110: #{cnn_auto_forward.1} parent=0
    _
  %s17 = ssub.s32 1, %s15
  %s18 = scalar_select 0, %s17, %s15
  $region1: #{cnn_auto_forward.1} parent=0
    #allocation2 [shape = 'u8[1024]{0}', space=vmem, size = 0x400, scoped, tag = 'input window, operand 0, single buffered']
    #allocation3 [shape = 's32[1]{0}', space=sflag, size = 0x4, scoped, tag = 'scoped memory for cnn_auto_forward.1']
    #allocation4 [shape = 's32[1]{0}', space=sflag, size = 0x4, scoped, tag = 'scoped memory for cnn_auto_forward.1']
    #allocation5 [shape = 'u8[20480]{0}', space=vmem, size = 0x5000, scoped, tag = 'input window, operand 1, single buffered']
    #allocation6 [shape = 's32[1]{0}', space=sflag, size = 0x4, scoped, tag = 'scoped memory for cnn_auto_forward.1']
    #allocation7 [shape = 'u8[1536]{0}', space=vmem, size = 0x800, scoped, tag = 'input window, operand 2, single buffered']
    #allocation8 [shape = 'u8[573440]{0}', space=vmem, size = 0x8c000, scoped, tag = 'input window, operand 3, single buffered']
    #allocation9 [shape = 's32[1]{0}', space=sflag, size = 0x4, scoped, tag = 'scoped memory for cnn_auto_forward.1']
    #allocation10 [shape = 'u8[2048]{0}', space=vmem, size = 0x800, scoped, tag = 'input window, operand 4, single buffered']
    #allocation11 [shape = 'u8[917504]{0}', space=vmem, size = 0xe0000, scoped, tag = 'input window, operand 5, single buffered']
    #allocation12 [shape = 's32[1]{0}', space=sflag, size = 0x4, scoped, tag = 'scoped memory for cnn_auto_forward.1']
    #allocation13 [shape = 'u8[4096]{0}', space=vmem, size = 0x1000, scoped, tag = 'input window, operand 6, single buffered']
    #allocation14 [shape = 'u8[512]{0}', space=vmem, size = 0x400, scoped, tag = 'input window, operand 8, single buffered']
    #allocation15 [shape = 's32[1]{0}', space=sflag, size = 0x4, scoped, tag = 'scoped memory for cnn_auto_forward.1']
    #allocation16 [shape = 'u8[2097152]{0}', space=vmem, size = 0x200000, scoped, tag = 'input window, operand 9, single buffered']
    #allocation17 [shape = 'u8[4096]{0}', space=vmem, size = 0x1000, scoped, tag = 'input window, operand 10, single buffered']
    #allocation18 [shape = 's32[1]{0}', space=sflag, size = 0x4, scoped, tag = 'scoped memory for cnn_auto_forward.1']
    #allocation19 [shape = 'u8[1024]{0}', space=vmem, size = 0x400, scoped, tag = 'output window, operand 0, single buffered']
    #allocation20 [shape = 'u8[8192]{0}', space=vmem, size = 0x2000, scoped, tag = 'output window, operand 1, single buffered']
    #allocation21 [shape = 's32[1]{0}', space=sflag, size = 0x4, scoped, tag = 'scoped memory for cnn_auto_forward.1']
    #allocation22 [shape = 'u8[8192]{0}', space=vmem, size = 0x2000, scoped, tag = 'output window, operand 2, single buffered']
    %19 = vsyncpa [#allocation3], 0
    %20 = vsyncpa [#allocation6], 0
    %21 = vsyncpa [#allocation9], 0
    %22 = vsyncpa [#allocation12], 0
    %23 = vsyncpa [#allocation15], 0
    %24 = vsyncpa [#allocation18], 0
    %25 = vsyncpa [#allocation4], 0
    %26 = vsyncpa [#allocation21], 0
    // Predicated region
    $region2: #{cnn_auto_forward.1} parent=1 // pred_check
      _
    $region3: #{cnn_auto_forward.1} parent=1 // pred_check_branch
      %28 = sbr.rel (0) target = $region5
    $region4: #{cnn_auto_forward.1} parent=1 // pred_region
      %s30 = ssub.s32 32, 32
      %31 = vsyncadd [#allocation3], %s30
      %s33 = sshll.u32 [#allocation2], 4
      %s34 = int_to_ptr.vmem [resolvable:$true] %s33
      %36 = dma.hbm_to_vmem [thread:$0]  %s0, 32, %s34, [#allocation3]
    $region5: #{cnn_auto_forward.1} parent=1 // pred_fallthru
      _
    // Predicated region
    $region6: #{cnn_auto_forward.1} parent=1 // pred_check
      _
    $region7: #{cnn_auto_forward.1} parent=1 // pred_check_branch
      %38 = sbr.rel (0) target = $region9
    $region8: #{cnn_auto_forward.1} parent=1 // pred_region
      %s40 = ssub.s32 640, 640
      %41 = vsyncadd [#allocation6], %s40
      %s42 = sshll.u32 [#allocation5], 4
      %s43 = int_to_ptr.vmem [resolvable:$true] %s42
      %48 = dma.hbm_to_vmem [thread:$0]  %s1, 640, %s43, [#allocation6], 320, 320, 20
    $region9: #{cnn_auto_forward.1} parent=1 // pred_fallthru
      _
    // Predicated region
    $region10: #{cnn_auto_forward.1} parent=1 // pred_check
      _
    $region11: #{cnn_auto_forward.1} parent=1 // pred_check_branch
      %50 = sbr.rel (0) target = $region13
    $region12: #{cnn_auto_forward.1} parent=1 // pred_region
      %s52 = ssub.s32 48, 48
      %53 = vsyncadd [#allocation6], %s52
      %s55 = sshll.u32 [#allocation7], 4
      %s56 = int_to_ptr.vmem [resolvable:$true] %s55
      %58 = dma.hbm_to_vmem [thread:$0]  %s2, 48, %s56, [#allocation6]
    $region13: #{cnn_auto_forward.1} parent=1 // pred_fallthru
      _
    // Predicated region
    $region14: #{cnn_auto_forward.1} parent=1 // pred_check
      _
    $region15: #{cnn_auto_forward.1} parent=1 // pred_check_branch
      %60 = sbr.rel (0) target = $region17
    $region16: #{cnn_auto_forward.1} parent=1 // pred_region
      %s62 = ssub.s32 17920, 17920
      %63 = vsyncadd [#allocation9], %s62
      %s64 = sshll.u32 [#allocation8], 4
      %s65 = int_to_ptr.vmem [resolvable:$true] %s64
      %70 = dma.hbm_to_vmem [thread:$0]  %s3, 17920, %s65, [#allocation9], 448, 448, 28
    $region17: #{cnn_auto_forward.1} parent=1 // pred_fallthru
      _
    // Predicated region
    $region18: #{cnn_auto_forward.1} parent=1 // pred_check
      _
    $region19: #{cnn_auto_forward.1} parent=1 // pred_check_branch
      %72 = sbr.rel (0) target = $region21
    $region20: #{cnn_auto_forward.1} parent=1 // pred_region
      %s74 = ssub.s32 64, 64
      %75 = vsyncadd [#allocation9], %s74
      %s77 = sshll.u32 [#allocation10], 4
      %s78 = int_to_ptr.vmem [resolvable:$true] %s77
      %80 = dma.hbm_to_vmem [thread:$0]  %s4, 64, %s78, [#allocation9]
    $region21: #{cnn_auto_forward.1} parent=1 // pred_fallthru
      _
    // Predicated region
    $region22: #{cnn_auto_forward.1} parent=1 // pred_check
      _
    $region23: #{cnn_auto_forward.1} parent=1 // pred_check_branch
      %82 = sbr.rel (0) target = $region25
    $region24: #{cnn_auto_forward.1} parent=1 // pred_region
      %s84 = ssub.s32 28672, 28672
      %85 = vsyncadd [#allocation12], %s84
      %s86 = sshll.u32 [#allocation11], 4
      %s87 = int_to_ptr.vmem [resolvable:$true] %s86
      %92 = dma.hbm_to_vmem [thread:$0]  %s5, 28672, %s87, [#allocation12], 512, 512, 32
    $region25: #{cnn_auto_forward.1} parent=1 // pred_fallthru
      _
    // Predicated region
    $region26: #{cnn_auto_forward.1} parent=1 // pred_check
      _
    $region27: #{cnn_auto_forward.1} parent=1 // pred_check_branch
      %94 = sbr.rel (0) target = $region29
    $region28: #{cnn_auto_forward.1} parent=1 // pred_region
      %s96 = ssub.s32 128, 128
      %97 = vsyncadd [#allocation12], %s96
      %s99 = sshll.u32 [#allocation13], 4
      %s100 = int_to_ptr.vmem [resolvable:$true] %s99
      %102 = dma.hbm_to_vmem [thread:$0]  %s6, 128, %s100, [#allocation12]
    $region29: #{cnn_auto_forward.1} parent=1 // pred_fallthru
      _
    // Predicated region
    $region30: #{cnn_auto_forward.1} parent=1 // pred_check
      _
    $region31: #{cnn_auto_forward.1} parent=1 // pred_check_branch
      %104 = sbr.rel (0) target = $region33
    $region32: #{cnn_auto_forward.1} parent=1 // pred_region
      _
    $region33: #{cnn_auto_forward.1} parent=1 // pred_fallthru
      _
    // Predicated region
    $region34: #{cnn_auto_forward.1} parent=1 // pred_check
      _
    $region35: #{cnn_auto_forward.1} parent=1 // pred_check_branch
      %106 = sbr.rel (0) target = $region37
    $region36: #{cnn_auto_forward.1} parent=1 // pred_region
      %s108 = ssub.s32 16, 16
      %109 = vsyncadd [#allocation15], %s108
      %s111 = sshll.u32 [#allocation14], 4
      %s112 = int_to_ptr.vmem [resolvable:$true] %s111
      %114 = dma.hbm_to_vmem [thread:$0]  %s8, 16, %s112, [#allocation15]
    $region37: #{cnn_auto_forward.1} parent=1 // pred_fallthru
      _
    // Predicated region
    $region38: #{cnn_auto_forward.1} parent=1 // pred_check
      _
    $region39: #{cnn_auto_forward.1} parent=1 // pred_check_branch
      %116 = sbr.rel (0) target = $region41
    $region40: #{cnn_auto_forward.1} parent=1 // pred_region
      %s118 = ssub.s32 65536, 65536
      %119 = vsyncadd [#allocation15], %s118
      %s120 = sshll.u32 [#allocation16], 4
      %s121 = int_to_ptr.vmem [resolvable:$true] %s120
      %126 = dma.hbm_to_vmem [thread:$0]  %s9, 65536, %s121, [#allocation15], 512, 512, 32
    $region41: #{cnn_auto_forward.1} parent=1 // pred_fallthru
      _
    // Predicated region
    $region42: #{cnn_auto_forward.1} parent=1 // pred_check
      _
    $region43: #{cnn_auto_forward.1} parent=1 // pred_check_branch
      %128 = sbr.rel (0) target = $region45
    $region44: #{cnn_auto_forward.1} parent=1 // pred_region
      %s130 = ssub.s32 128, 128
      %131 = vsyncadd [#allocation18], %s130
      %s133 = sshll.u32 [#allocation17], 4
      %s134 = int_to_ptr.vmem [resolvable:$true] %s133
      %136 = dma.hbm_to_vmem [thread:$0]  %s10, 128, %s134, [#allocation18]
    $region45: #{cnn_auto_forward.1} parent=1 // pred_fallthru
      _
    // Predicated region
    $region46: #{cnn_auto_forward.1} parent=1 // pred_check
      _
    $region47: #{cnn_auto_forward.1} parent=1 // pred_check_branch
      %138 = sbr.rel (0) target = $region49
    $region48: #{cnn_auto_forward.1} parent=1 // pred_region
      %139 = dma.done [#allocation3], 32
    $region49: #{cnn_auto_forward.1} parent=1 // pred_fallthru
      _
    // Predicated region
    $region50: #{cnn_auto_forward.1} parent=1 // pred_check
      _
    $region51: #{cnn_auto_forward.1} parent=1 // pred_check_branch
      %141 = sbr.rel (0) target = $region53
    $region52: #{cnn_auto_forward.1} parent=1 // pred_region
      %142 = dma.done [#allocation6], 640
    $region53: #{cnn_auto_forward.1} parent=1 // pred_fallthru
      _
    // Predicated region
    $region54: #{cnn_auto_forward.1} parent=1 // pred_check
      _
    $region55: #{cnn_auto_forward.1} parent=1 // pred_check_branch
      %144 = sbr.rel (0) target = $region57
    $region56: #{cnn_auto_forward.1} parent=1 // pred_region
      %145 = dma.done [#allocation6], 48
    $region57: #{cnn_auto_forward.1} parent=1 // pred_fallthru
      _
    // Predicated region
    $region58: #{cnn_auto_forward.1} parent=1 // pred_check
      _
    $region59: #{cnn_auto_forward.1} parent=1 // pred_check_branch
      %147 = sbr.rel (0) target = $region61
    $region60: #{cnn_auto_forward.1} parent=1 // pred_region
      %148 = dma.done [#allocation9], 17920
    $region61: #{cnn_auto_forward.1} parent=1 // pred_fallthru
      _
    // Predicated region
    $region62: #{cnn_auto_forward.1} parent=1 // pred_check
      _
    $region63: #{cnn_auto_forward.1} parent=1 // pred_check_branch
      %150 = sbr.rel (0) target = $region65
    $region64: #{cnn_auto_forward.1} parent=1 // pred_region
      %151 = dma.done [#allocation9], 64
    $region65: #{cnn_auto_forward.1} parent=1 // pred_fallthru
      _
    // Predicated region
    $region66: #{cnn_auto_forward.1} parent=1 // pred_check
      _
    $region67: #{cnn_auto_forward.1} parent=1 // pred_check_branch
      %153 = sbr.rel (0) target = $region69
    $region68: #{cnn_auto_forward.1} parent=1 // pred_region
      %154 = dma.done [#allocation12], 28672
    $region69: #{cnn_auto_forward.1} parent=1 // pred_fallthru
      _
    // Predicated region
    $region70: #{cnn_auto_forward.1} parent=1 // pred_check
      _
    $region71: #{cnn_auto_forward.1} parent=1 // pred_check_branch
      %156 = sbr.rel (0) target = $region73
    $region72: #{cnn_auto_forward.1} parent=1 // pred_region
      %157 = dma.done [#allocation12], 128
    $region73: #{cnn_auto_forward.1} parent=1 // pred_fallthru
      _
    // Predicated region
    $region74: #{cnn_auto_forward.1} parent=1 // pred_check
      _
    $region75: #{cnn_auto_forward.1} parent=1 // pred_check_branch
      %159 = sbr.rel (0) target = $region77
    $region76: #{cnn_auto_forward.1} parent=1 // pred_region
      %160 = dma.done [#allocation15], 16
    $region77: #{cnn_auto_forward.1} parent=1 // pred_fallthru
      _
    // Predicated region
    $region78: #{cnn_auto_forward.1} parent=1 // pred_check
      _
    $region79: #{cnn_auto_forward.1} parent=1 // pred_check_branch
      %162 = sbr.rel (0) target = $region81
    $region80: #{cnn_auto_forward.1} parent=1 // pred_region
      %163 = dma.done [#allocation15], 65536
    $region81: #{cnn_auto_forward.1} parent=1 // pred_fallthru
      _
    // Predicated region
    $region82: #{cnn_auto_forward.1} parent=1 // pred_check
      _
    $region83: #{cnn_auto_forward.1} parent=1 // pred_check_branch
      %165 = sbr.rel (0) target = $region85
    $region84: #{cnn_auto_forward.1} parent=1 // pred_region
      %166 = dma.done [#allocation18], 128
    $region85: #{cnn_auto_forward.1} parent=1 // pred_fallthru
      _
    %v168 = vld [vmem:[#allocation2] sm:$0x3]
    %v169 = vpack.c.bf16 %v168, %v168
    %v170 = vld [vmem:[#allocation5] sm:$0xff]
    %v171 = vld [vmem:[#allocation5 + $0x8] sm:$0xff]
    %v172 = vld [vmem:[#allocation5 + $0x10] sm:$0xf]
    %v173 = vld [vmem:[#allocation5 + $0x14] sm:$0xff]
    %v174 = vld [vmem:[#allocation5 + $0x1c] sm:$0xff]
    %v175 = vld [vmem:[#allocation5 + $0x24] sm:$0xf]
    %v182 = vunpack.c.l.b16 %v170
    %v183 = vunpack.c.h.b16 %v170
    %v184 = vunpack.c.l.b16 %v171
    %v185 = vunpack.c.h.b16 %v171
    %v186 = vunpack.c.l.b16 %v172
    %v187 = vunpack.c.l.b16 %v173
    %v188 = vunpack.c.h.b16 %v173
    %v189 = vunpack.c.l.b16 %v174
    %v190 = vunpack.c.h.b16 %v174
    %v191 = vunpack.c.l.b16 %v175
    %v192 = vpack.c.b16 %v187, %v182
    %v193 = vpack.c.b16 %v188, %v183
    %v194 = vpack.c.b16 %v189, %v184
    %v195 = vpack.c.b16 %v190, %v185
    %v196 = vpack.c.b16 %v191, %v186
    %vm202 = vcmask 130048
    %v204 = vsel %vm202, %v169, 0
    %206 = vmatprep.subr.bf16.mxu0 %v193
    %207 = vmatpush1.bf16.msra.mxu0 %v192
    %208 = vmatprep.subr.bf16.mxu0 0
    %209 = vmatpush1.bf16.msra.mxu0 0
    %210 = vmatprep.subr.bf16.mxu0 0
    %211 = vmatpush1.bf16.msra.mxu0 0
    %212 = vmatprep.subr.bf16.mxu0 0
    %213 = vmatpush1.bf16.msra.mxu0 0
    %214 = vmatprep.subr.bf16.mxu0 0
    %215 = vmatpush1.bf16.msra.mxu0 0
    %216 = vmatprep.subr.bf16.mxu0 0
    %217 = vmatpush1.bf16.msra.mxu0 0
    %218 = vmatprep.subr.bf16.mxu0 0
    %219 = vmatpush1.bf16.msra.mxu0 0
    %220 = vmatprep.subr.bf16.mxu0 0
    %221 = vmatpush1.bf16.msra.mxu0 0
    %222 = vmatprep.subr.bf16.mxu0 0
    %223 = vmatpush1.bf16.msra.mxu0 0
    %224 = vmatprep.subr.bf16.mxu0 0
    %225 = vmatpush1.bf16.msra.mxu0 0
    %226 = vmatprep.subr.bf16.mxu0 0
    %227 = vmatpush1.bf16.msra.mxu0 0
    %228 = vmatprep.subr.bf16.mxu0 0
    %229 = vmatpush1.bf16.msra.mxu0 0
    %230 = vmatprep.subr.bf16.mxu0 0
    %231 = vmatpush1.bf16.msra.mxu0 0
    %232 = vmatprep.subr.bf16.mxu0 0
    %233 = vmatpush1.bf16.msra.mxu0 0
    %234 = vmatprep.subr.bf16.mxu0 0
    %235 = vmatpush1.bf16.msra.mxu0 0
    %236 = vmatprep.subr.bf16.mxu0 0
    %237 = vmatpush1.bf16.msra.mxu0 0
    %238 = vmatprep.mubr.bf16.mxu0 0
    %239 = vmatmul.mubr.bf16.gmra.mrb[0].mxu0 %v204
    %v240 = vpop.f32.mrb[0].mxu0
    %v241 = vadd.f32 0.0, %v240
    %v242 = vpop.f32.mrb[0].mxu0
    %v243 = vadd.f32 0.0, %v242
    %v244 = vpop.f32.mrb[0].mxu0
    %v245 = vpop.f32.mrb[0].mxu0
    %246 = vdwg.mxu0
    %247 = vmatprep.subr.bf16.mxu0 %v195
    %248 = vmatpush1.bf16.msra.mxu0 %v194
    %249 = vmatprep.subr.bf16.mxu0 0
    %250 = vmatpush1.bf16.msra.mxu0 0
    %251 = vmatprep.subr.bf16.mxu0 0
    %252 = vmatpush1.bf16.msra.mxu0 0
    %253 = vmatprep.subr.bf16.mxu0 0
    %254 = vmatpush1.bf16.msra.mxu0 0
    %255 = vmatprep.subr.bf16.mxu0 0
    %256 = vmatpush1.bf16.msra.mxu0 0
    %257 = vmatprep.subr.bf16.mxu0 0
    %258 = vmatpush1.bf16.msra.mxu0 0
    %259 = vmatprep.subr.bf16.mxu0 0
    %260 = vmatpush1.bf16.msra.mxu0 0
    %261 = vmatprep.subr.bf16.mxu0 0
    %262 = vmatpush1.bf16.msra.mxu0 0
    %263 = vmatprep.subr.bf16.mxu0 0
    %264 = vmatpush1.bf16.msra.mxu0 0
    %265 = vmatprep.subr.bf16.mxu0 0
    %266 = vmatpush1.bf16.msra.mxu0 0
    %267 = vmatprep.subr.bf16.mxu0 0
    %268 = vmatpush1.bf16.msra.mxu0 0
    %269 = vmatprep.subr.bf16.mxu0 0
    %270 = vmatpush1.bf16.msra.mxu0 0
    %271 = vmatprep.subr.bf16.mxu0 0
    %272 = vmatpush1.bf16.msra.mxu0 0
    %273 = vmatprep.subr.bf16.mxu0 0
    %274 = vmatpush1.bf16.msra.mxu0 0
    %275 = vmatprep.subr.bf16.mxu0 0
    %276 = vmatpush1.bf16.msra.mxu0 0
    %277 = vmatprep.subr.bf16.mxu0 0
    %278 = vmatpush1.bf16.msra.mxu0 0
    %279 = vmatprep.mubr.bf16.mxu0 0
    %280 = vmatmul.mubr.bf16.gmra.mrb[0].mxu0 %v204
    %v281 = vpop.f32.mrb[0].mxu0
    %v282 = vadd.f32 0.0, %v281
    %v283 = vpop.f32.mrb[0].mxu0
    %v284 = vadd.f32 0.0, %v283
    %v285 = vpop.f32.mrb[0].mxu0
    %v286 = vpop.f32.mrb[0].mxu0
    %287 = vdwg.mxu0
    %288 = vmatprep.subr.bf16.mxu0 0
    %289 = vmatpush1.bf16.msra.mxu0 %v196
    %290 = vmatprep.subr.bf16.mxu0 0
    %291 = vmatpush1.bf16.msra.mxu0 0
    %292 = vmatprep.subr.bf16.mxu0 0
    %293 = vmatpush1.bf16.msra.mxu0 0
    %294 = vmatprep.subr.bf16.mxu0 0
    %295 = vmatpush1.bf16.msra.mxu0 0
    %296 = vmatprep.subr.bf16.mxu0 0
    %297 = vmatpush1.bf16.msra.mxu0 0
    %298 = vmatprep.subr.bf16.mxu0 0
    %299 = vmatpush1.bf16.msra.mxu0 0
    %300 = vmatprep.subr.bf16.mxu0 0
    %301 = vmatpush1.bf16.msra.mxu0 0
    %302 = vmatprep.subr.bf16.mxu0 0
    %303 = vmatpush1.bf16.msra.mxu0 0
    %304 = vmatprep.subr.bf16.mxu0 0
    %305 = vmatpush1.bf16.msra.mxu0 0
    %306 = vmatprep.subr.bf16.mxu0 0
    %307 = vmatpush1.bf16.msra.mxu0 0
    %308 = vmatprep.subr.bf16.mxu0 0
    %309 = vmatpush1.bf16.msra.mxu0 0
    %310 = vmatprep.subr.bf16.mxu0 0
    %311 = vmatpush1.bf16.msra.mxu0 0
    %312 = vmatprep.subr.bf16.mxu0 0
    %313 = vmatpush1.bf16.msra.mxu0 0
    %314 = vmatprep.subr.bf16.mxu0 0
    %315 = vmatpush1.bf16.msra.mxu0 0
    %316 = vmatprep.subr.bf16.mxu0 0
    %317 = vmatpush1.bf16.msra.mxu0 0
    %318 = vmatprep.subr.bf16.mxu0 0
    %319 = vmatpush1.bf16.msra.mxu0 0
    %320 = vmatprep.mubr.bf16.mxu0 0
    %321 = vmatmul.mubr.bf16.gmra.mrb[0].mxu0 %v204
    %v322 = vpop.f32.mrb[0].mxu0
    %v323 = vadd.f32 0.0, %v322
    %v324 = vpop.f32.mrb[0].mxu0
    %v325 = vpop.f32.mrb[0].mxu0
    %v326 = vpop.f32.mrb[0].mxu0
    %327 = vdwg.mxu0
    %331 = vrot.lane.b32.xlu0 %v282, 64
    %v332 = vpop.permute.xlu0 %331
    %333 = vrot.lane.b32.xlu0 %v284, 64
    %v334 = vpop.permute.xlu0 %333
    %335 = vrot.lane.b32.xlu0 %v323, 64
    %v336 = vpop.permute.xlu0 %335
    %vm337 = vcmask 523264
    %v338 = vsel %vm337, %v332, %v334
    %v339 = vsel %vm337, %v334, %v336
    %v343 = vmax.f32 %v241, %v338
    %v344 = vmax.f32 %v243, %v339
    %v345 = vmax.f32 %v282, %v336
    %v346 = vld [vmem:[#allocation7] sm:$0x7]
    %v348 = vlaneseq
    %v349 = vshrl.u32 %v348, 7
    %v350 = vsub.s32 0, %v349
    %v351 = vrot.slane %v346, %v350
    %v352 = vlaneseq
    %v353 = vshrl.u32 %v352, 7
    %v354 = vsub.s32 1, %v353
    %v355 = vrot.slane %v346, %v354
    %v356 = vlaneseq
    %v357 = vshrl.u32 %v356, 7
    %v358 = vsub.s32 2, %v357
    %v359 = vrot.slane %v346, %v358
    %v363 = vadd.f32 %v343, %v351
    %v364 = vadd.f32 %v344, %v355
    %v365 = vadd.f32 %v345, %v359
    %v366 = vmax.f32 %v363, 0.0
    %v367 = vmax.f32 %v364, 0.0
    %v368 = vmax.f32 %v365, 0.0
    %v369 = vpack.c.bf16 %v366, %v366
    %v370 = vpack.c.bf16 %v367, %v367
    %v371 = vpack.c.bf16 %v368, %v368
    %v372 = vld [vmem:[#allocation8] sm:$0xff]
    %v373 = vld [vmem:[#allocation8 + $0x8] sm:$0xff]
    %v374 = vld [vmem:[#allocation8 + $0x10] sm:$0xff]
    %v375 = vld [vmem:[#allocation8 + $0x18] sm:$0xf]
    %v376 = vld [vmem:[#allocation8 + $0x1c] sm:$0xff]
    %v377 = vld [vmem:[#allocation8 + $0x24] sm:$0xff]
    %v378 = vld [vmem:[#allocation8 + $0x2c] sm:$0xff]
    %v379 = vld [vmem:[#allocation8 + $0x34] sm:$0xf]
    %v380 = vld [vmem:[#allocation8 + $0x38] sm:$0xff]
    %v381 = vld [vmem:[#allocation8 + $0x40] sm:$0xff]
    %v382 = vld [vmem:[#allocation8 + $0x48] sm:$0xff]
    %v383 = vld [vmem:[#allocation8 + $0x50] sm:$0xf]
    %v384 = vld [vmem:[#allocation8 + $0x54] sm:$0xff]
    %v385 = vld [vmem:[#allocation8 + $0x5c] sm:$0xff]
    %v386 = vld [vmem:[#allocation8 + $0x64] sm:$0xff]
    %v387 = vld [vmem:[#allocation8 + $0x6c] sm:$0xf]
    %v388 = vld [vmem:[#allocation8 + $0x70] sm:$0xff]
    %v389 = vld [vmem:[#allocation8 + $0x78] sm:$0xff]
    %v390 = vld [vmem:[#allocation8 + $0x80] sm:$0xff]
    %v391 = vld [vmem:[#allocation8 + $0x88] sm:$0xf]
    %v392 = vld [vmem:[#allocation8 + $0x8c] sm:$0xff]
    %v393 = vld [vmem:[#allocation8 + $0x94] sm:$0xff]
    %v394 = vld [vmem:[#allocation8 + $0x9c] sm:$0xff]
    %v395 = vld [vmem:[#allocation8 + $0xa4] sm:$0xf]
    %v396 = vld [vmem:[#allocation8 + $0xa8] sm:$0xff]
    %v397 = vld [vmem:[#allocation8 + $0xb0] sm:$0xff]
    %v398 = vld [vmem:[#allocation8 + $0xb8] sm:$0xff]
    %v399 = vld [vmem:[#allocation8 + $0xc0] sm:$0xf]
    %v400 = vld [vmem:[#allocation8 + $0xc4] sm:$0xff]
    %v401 = vld [vmem:[#allocation8 + $0xcc] sm:$0xff]
    %v402 = vld [vmem:[#allocation8 + $0xd4] sm:$0xff]
    %v403 = vld [vmem:[#allocation8 + $0xdc] sm:$0xf]
    %v404 = vld [vmem:[#allocation8 + $0xe0] sm:$0xff]
    %v405 = vld [vmem:[#allocation8 + $0xe8] sm:$0xff]
    %v406 = vld [vmem:[#allocation8 + $0xf0] sm:$0xff]
    %v407 = vld [vmem:[#allocation8 + $0xf8] sm:$0xf]
    %v408 = vld [vmem:[#allocation8 + $0xfc] sm:$0xff]
    %v409 = vld [vmem:[#allocation8 + $0x104] sm:$0xff]
    %v410 = vld [vmem:[#allocation8 + $0x10c] sm:$0xff]
    %v411 = vld [vmem:[#allocation8 + $0x114] sm:$0xf]
    %v412 = vld [vmem:[#allocation8 + $0x118] sm:$0xff]
    %v413 = vld [vmem:[#allocation8 + $0x120] sm:$0xff]
    %v414 = vld [vmem:[#allocation8 + $0x128] sm:$0xff]
    %v415 = vld [vmem:[#allocation8 + $0x130] sm:$0xf]
    %v416 = vld [vmem:[#allocation8 + $0x134] sm:$0xff]
    %v417 = vld [vmem:[#allocation8 + $0x13c] sm:$0xff]
    %v418 = vld [vmem:[#allocation8 + $0x144] sm:$0xff]
    %v419 = vld [vmem:[#allocation8 + $0x14c] sm:$0xf]
    %v420 = vld [vmem:[#allocation8 + $0x150] sm:$0xff]
    %v421 = vld [vmem:[#allocation8 + $0x158] sm:$0xff]
    %v422 = vld [vmem:[#allocation8 + $0x160] sm:$0xff]
    %v423 = vld [vmem:[#allocation8 + $0x168] sm:$0xf]
    %v424 = vld [vmem:[#allocation8 + $0x16c] sm:$0xff]
    %v425 = vld [vmem:[#allocation8 + $0x174] sm:$0xff]
    %v426 = vld [vmem:[#allocation8 + $0x17c] sm:$0xff]
    %v427 = vld [vmem:[#allocation8 + $0x184] sm:$0xf]
    %v428 = vld [vmem:[#allocation8 + $0x188] sm:$0xff]
    %v429 = vld [vmem:[#allocation8 + $0x190] sm:$0xff]
    %v430 = vld [vmem:[#allocation8 + $0x198] sm:$0xff]
    %v431 = vld [vmem:[#allocation8 + $0x1a0] sm:$0xf]
    %v432 = vld [vmem:[#allocation8 + $0x1a4] sm:$0xff]
    %v433 = vld [vmem:[#allocation8 + $0x1ac] sm:$0xff]
    %v434 = vld [vmem:[#allocation8 + $0x1b4] sm:$0xff]
    %v435 = vld [vmem:[#allocation8 + $0x1bc] sm:$0xf]
    %v436 = vld [vmem:[#allocation8 + $0x1c0] sm:$0xff]
    %v437 = vld [vmem:[#allocation8 + $0x1c8] sm:$0xff]
    %v438 = vld [vmem:[#allocation8 + $0x1d0] sm:$0xff]
    %v439 = vld [vmem:[#allocation8 + $0x1d8] sm:$0xf]
    %v440 = vld [vmem:[#allocation8 + $0x1dc] sm:$0xff]
    %v441 = vld [vmem:[#allocation8 + $0x1e4] sm:$0xff]
    %v442 = vld [vmem:[#allocation8 + $0x1ec] sm:$0xff]
    %v443 = vld [vmem:[#allocation8 + $0x1f4] sm:$0xf]
    %v444 = vld [vmem:[#allocation8 + $0x1f8] sm:$0xff]
    %v445 = vld [vmem:[#allocation8 + $0x200] sm:$0xff]
    %v446 = vld [vmem:[#allocation8 + $0x208] sm:$0xff]
    %v447 = vld [vmem:[#allocation8 + $0x210] sm:$0xf]
    %v448 = vld [vmem:[#allocation8 + $0x214] sm:$0xff]
    %v449 = vld [vmem:[#allocation8 + $0x21c] sm:$0xff]
    %v450 = vld [vmem:[#allocation8 + $0x224] sm:$0xff]
    %v451 = vld [vmem:[#allocation8 + $0x22c] sm:$0xf]
    %v452 = vld [vmem:[#allocation8 + $0x230] sm:$0xff]
    %v453 = vld [vmem:[#allocation8 + $0x238] sm:$0xff]
    %v454 = vld [vmem:[#allocation8 + $0x240] sm:$0xff]
    %v455 = vld [vmem:[#allocation8 + $0x248] sm:$0xf]
    %v456 = vld [vmem:[#allocation8 + $0x24c] sm:$0xff]
    %v457 = vld [vmem:[#allocation8 + $0x254] sm:$0xff]
    %v458 = vld [vmem:[#allocation8 + $0x25c] sm:$0xff]
    %v459 = vld [vmem:[#allocation8 + $0x264] sm:$0xf]
    %v460 = vld [vmem:[#allocation8 + $0x268] sm:$0xff]
    %v461 = vld [vmem:[#allocation8 + $0x270] sm:$0xff]
    %v462 = vld [vmem:[#allocation8 + $0x278] sm:$0xff]
    %v463 = vld [vmem:[#allocation8 + $0x280] sm:$0xf]
    %v464 = vld [vmem:[#allocation8 + $0x284] sm:$0xff]
    %v465 = vld [vmem:[#allocation8 + $0x28c] sm:$0xff]
    %v466 = vld [vmem:[#allocation8 + $0x294] sm:$0xff]
    %v467 = vld [vmem:[#allocation8 + $0x29c] sm:$0xf]
    %v468 = vld [vmem:[#allocation8 + $0x2a0] sm:$0xff]
    %v469 = vld [vmem:[#allocation8 + $0x2a8] sm:$0xff]
    %v470 = vld [vmem:[#allocation8 + $0x2b0] sm:$0xff]
    %v471 = vld [vmem:[#allocation8 + $0x2b8] sm:$0xf]
    %v472 = vld [vmem:[#allocation8 + $0x2bc] sm:$0xff]
    %v473 = vld [vmem:[#allocation8 + $0x2c4] sm:$0xff]
    %v474 = vld [vmem:[#allocation8 + $0x2cc] sm:$0xff]
    %v475 = vld [vmem:[#allocation8 + $0x2d4] sm:$0xf]
    %v476 = vld [vmem:[#allocation8 + $0x2d8] sm:$0xff]
    %v477 = vld [vmem:[#allocation8 + $0x2e0] sm:$0xff]
    %v478 = vld [vmem:[#allocation8 + $0x2e8] sm:$0xff]
    %v479 = vld [vmem:[#allocation8 + $0x2f0] sm:$0xf]
    %v480 = vld [vmem:[#allocation8 + $0x2f4] sm:$0xff]
    %v481 = vld [vmem:[#allocation8 + $0x2fc] sm:$0xff]
    %v482 = vld [vmem:[#allocation8 + $0x304] sm:$0xff]
    %v483 = vld [vmem:[#allocation8 + $0x30c] sm:$0xf]
    %v484 = vld [vmem:[#allocation8 + $0x310] sm:$0xff]
    %v485 = vld [vmem:[#allocation8 + $0x318] sm:$0xff]
    %v486 = vld [vmem:[#allocation8 + $0x320] sm:$0xff]
    %v487 = vld [vmem:[#allocation8 + $0x328] sm:$0xf]
    %v488 = vld [vmem:[#allocation8 + $0x32c] sm:$0xff]
    %v489 = vld [vmem:[#allocation8 + $0x334] sm:$0xff]
    %v490 = vld [vmem:[#allocation8 + $0x33c] sm:$0xff]
    %v491 = vld [vmem:[#allocation8 + $0x344] sm:$0xf]
    %v492 = vld [vmem:[#allocation8 + $0x348] sm:$0xff]
    %v493 = vld [vmem:[#allocation8 + $0x350] sm:$0xff]
    %v494 = vld [vmem:[#allocation8 + $0x358] sm:$0xff]
    %v495 = vld [vmem:[#allocation8 + $0x360] sm:$0xf]
    %v496 = vld [vmem:[#allocation8 + $0x364] sm:$0xff]
    %v497 = vld [vmem:[#allocation8 + $0x36c] sm:$0xff]
    %v498 = vld [vmem:[#allocation8 + $0x374] sm:$0xff]
    %v499 = vld [vmem:[#allocation8 + $0x37c] sm:$0xf]
    %v500 = vld [vmem:[#allocation8 + $0x380] sm:$0xff]
    %v501 = vld [vmem:[#allocation8 + $0x388] sm:$0xff]
    %v502 = vld [vmem:[#allocation8 + $0x390] sm:$0xff]
    %v503 = vld [vmem:[#allocation8 + $0x398] sm:$0xf]
    %v504 = vld [vmem:[#allocation8 + $0x39c] sm:$0xff]
    %v505 = vld [vmem:[#allocation8 + $0x3a4] sm:$0xff]
    %v506 = vld [vmem:[#allocation8 + $0x3ac] sm:$0xff]
    %v507 = vld [vmem:[#allocation8 + $0x3b4] sm:$0xf]
    %v508 = vld [vmem:[#allocation8 + $0x3b8] sm:$0xff]
    %v509 = vld [vmem:[#allocation8 + $0x3c0] sm:$0xff]
    %v510 = vld [vmem:[#allocation8 + $0x3c8] sm:$0xff]
    %v511 = vld [vmem:[#allocation8 + $0x3d0] sm:$0xf]
    %v512 = vld [vmem:[#allocation8 + $0x3d4] sm:$0xff]
    %v513 = vld [vmem:[#allocation8 + $0x3dc] sm:$0xff]
    %v514 = vld [vmem:[#allocation8 + $0x3e4] sm:$0xff]
    %v515 = vld [vmem:[#allocation8 + $0x3ec] sm:$0xf]
    %v516 = vld [vmem:[#allocation8 + $0x3f0] sm:$0xff]
    %v517 = vld [vmem:[#allocation8 + $0x3f8] sm:$0xff]
    %v518 = vld [vmem:[#allocation8 + $0x400] sm:$0xff]
    %v519 = vld [vmem:[#allocation8 + $0x408] sm:$0xf]
    %v520 = vld [vmem:[#allocation8 + $0x40c] sm:$0xff]
    %v521 = vld [vmem:[#allocation8 + $0x414] sm:$0xff]
    %v522 = vld [vmem:[#allocation8 + $0x41c] sm:$0xff]
    %v523 = vld [vmem:[#allocation8 + $0x424] sm:$0xf]
    %v524 = vld [vmem:[#allocation8 + $0x428] sm:$0xff]
    %v525 = vld [vmem:[#allocation8 + $0x430] sm:$0xff]
    %v526 = vld [vmem:[#allocation8 + $0x438] sm:$0xff]
    %v527 = vld [vmem:[#allocation8 + $0x440] sm:$0xf]
    %v528 = vld [vmem:[#allocation8 + $0x444] sm:$0xff]
    %v529 = vld [vmem:[#allocation8 + $0x44c] sm:$0xff]
    %v530 = vld [vmem:[#allocation8 + $0x454] sm:$0xff]
    %v531 = vld [vmem:[#allocation8 + $0x45c] sm:$0xf]
    %v692 = vunpack.c.l.b16 %v372
    %v693 = vunpack.c.h.b16 %v372
    %v694 = vunpack.c.l.b16 %v373
    %v695 = vunpack.c.h.b16 %v373
    %v696 = vunpack.c.l.b16 %v374
    %v697 = vunpack.c.h.b16 %v374
    %v698 = vunpack.c.l.b16 %v375
    %v699 = vunpack.c.l.b16 %v376
    %v700 = vunpack.c.h.b16 %v376
    %v701 = vunpack.c.l.b16 %v377
    %v702 = vunpack.c.h.b16 %v377
    %v703 = vunpack.c.l.b16 %v378
    %v704 = vunpack.c.h.b16 %v378
    %v705 = vunpack.c.l.b16 %v379
    %v706 = vunpack.c.l.b16 %v380
    %v707 = vunpack.c.h.b16 %v380
    %v708 = vunpack.c.l.b16 %v381
    %v709 = vunpack.c.h.b16 %v381
    %v710 = vunpack.c.l.b16 %v382
    %v711 = vunpack.c.h.b16 %v382
    %v712 = vunpack.c.l.b16 %v383
    %v713 = vunpack.c.l.b16 %v384
    %v714 = vunpack.c.h.b16 %v384
    %v715 = vunpack.c.l.b16 %v385
    %v716 = vunpack.c.h.b16 %v385
    %v717 = vunpack.c.l.b16 %v386
    %v718 = vunpack.c.h.b16 %v386
    %v719 = vunpack.c.l.b16 %v387
    %v720 = vunpack.c.l.b16 %v388
    %v721 = vunpack.c.h.b16 %v388
    %v722 = vunpack.c.l.b16 %v389
    %v723 = vunpack.c.h.b16 %v389
    %v724 = vunpack.c.l.b16 %v390
    %v725 = vunpack.c.h.b16 %v390
    %v726 = vunpack.c.l.b16 %v391
    %v727 = vunpack.c.l.b16 %v392
    %v728 = vunpack.c.h.b16 %v392
    %v729 = vunpack.c.l.b16 %v393
    %v730 = vunpack.c.h.b16 %v393
    %v731 = vunpack.c.l.b16 %v394
    %v732 = vunpack.c.h.b16 %v394
    %v733 = vunpack.c.l.b16 %v395
    %v734 = vunpack.c.l.b16 %v396
    %v735 = vunpack.c.h.b16 %v396
    %v736 = vunpack.c.l.b16 %v397
    %v737 = vunpack.c.h.b16 %v397
    %v738 = vunpack.c.l.b16 %v398
    %v739 = vunpack.c.h.b16 %v398
    %v740 = vunpack.c.l.b16 %v399
    %v741 = vunpack.c.l.b16 %v400
    %v742 = vunpack.c.h.b16 %v400
    %v743 = vunpack.c.l.b16 %v401
    %v744 = vunpack.c.h.b16 %v401
    %v745 = vunpack.c.l.b16 %v402
    %v746 = vunpack.c.h.b16 %v402
    %v747 = vunpack.c.l.b16 %v403
    %v748 = vunpack.c.l.b16 %v404
    %v749 = vunpack.c.h.b16 %v404
    %v750 = vunpack.c.l.b16 %v405
    %v751 = vunpack.c.h.b16 %v405
    %v752 = vunpack.c.l.b16 %v406
    %v753 = vunpack.c.h.b16 %v406
    %v754 = vunpack.c.l.b16 %v407
    %v755 = vunpack.c.l.b16 %v408
    %v756 = vunpack.c.h.b16 %v408
    %v757 = vunpack.c.l.b16 %v409
    %v758 = vunpack.c.h.b16 %v409
    %v759 = vunpack.c.l.b16 %v410
    %v760 = vunpack.c.h.b16 %v410
    %v761 = vunpack.c.l.b16 %v411
    %v762 = vunpack.c.l.b16 %v412
    %v763 = vunpack.c.h.b16 %v412
    %v764 = vunpack.c.l.b16 %v413
    %v765 = vunpack.c.h.b16 %v413
    %v766 = vunpack.c.l.b16 %v414
    %v767 = vunpack.c.h.b16 %v414
    %v768 = vunpack.c.l.b16 %v415
    %v769 = vunpack.c.l.b16 %v416
    %v770 = vunpack.c.h.b16 %v416
    %v771 = vunpack.c.l.b16 %v417
    %v772 = vunpack.c.h.b16 %v417
    %v773 = vunpack.c.l.b16 %v418
    %v774 = vunpack.c.h.b16 %v418
    %v775 = vunpack.c.l.b16 %v419
    %v776 = vunpack.c.l.b16 %v420
    %v777 = vunpack.c.h.b16 %v420
    %v778 = vunpack.c.l.b16 %v421
    %v779 = vunpack.c.h.b16 %v421
    %v780 = vunpack.c.l.b16 %v422
    %v781 = vunpack.c.h.b16 %v422
    %v782 = vunpack.c.l.b16 %v423
    %v783 = vunpack.c.l.b16 %v424
    %v784 = vunpack.c.h.b16 %v424
    %v785 = vunpack.c.l.b16 %v425
    %v786 = vunpack.c.h.b16 %v425
    %v787 = vunpack.c.l.b16 %v426
    %v788 = vunpack.c.h.b16 %v426
    %v789 = vunpack.c.l.b16 %v427
    %v790 = vunpack.c.l.b16 %v428
    %v791 = vunpack.c.h.b16 %v428
    %v792 = vunpack.c.l.b16 %v429
    %v793 = vunpack.c.h.b16 %v429
    %v794 = vunpack.c.l.b16 %v430
    %v795 = vunpack.c.h.b16 %v430
    %v796 = vunpack.c.l.b16 %v431
    %v797 = vunpack.c.l.b16 %v432
    %v798 = vunpack.c.h.b16 %v432
    %v799 = vunpack.c.l.b16 %v433
    %v800 = vunpack.c.h.b16 %v433
    %v801 = vunpack.c.l.b16 %v434
    %v802 = vunpack.c.h.b16 %v434
    %v803 = vunpack.c.l.b16 %v435
    %v804 = vunpack.c.l.b16 %v436
    %v805 = vunpack.c.h.b16 %v436
    %v806 = vunpack.c.l.b16 %v437
    %v807 = vunpack.c.h.b16 %v437
    %v808 = vunpack.c.l.b16 %v438
    %v809 = vunpack.c.h.b16 %v438
    %v810 = vunpack.c.l.b16 %v439
    %v811 = vunpack.c.l.b16 %v440
    %v812 = vunpack.c.h.b16 %v440
    %v813 = vunpack.c.l.b16 %v441
    %v814 = vunpack.c.h.b16 %v441
    %v815 = vunpack.c.l.b16 %v442
    %v816 = vunpack.c.h.b16 %v442
    %v817 = vunpack.c.l.b16 %v443
    %v818 = vunpack.c.l.b16 %v444
    %v819 = vunpack.c.h.b16 %v444
    %v820 = vunpack.c.l.b16 %v445
    %v821 = vunpack.c.h.b16 %v445
    %v822 = vunpack.c.l.b16 %v446
    %v823 = vunpack.c.h.b16 %v446
    %v824 = vunpack.c.l.b16 %v447
    %v825 = vunpack.c.l.b16 %v448
    %v826 = vunpack.c.h.b16 %v448
    %v827 = vunpack.c.l.b16 %v449
    %v828 = vunpack.c.h.b16 %v449
    %v829 = vunpack.c.l.b16 %v450
    %v830 = vunpack.c.h.b16 %v450
    %v831 = vunpack.c.l.b16 %v451
    %v832 = vunpack.c.l.b16 %v452
    %v833 = vunpack.c.h.b16 %v452
    %v834 = vunpack.c.l.b16 %v453
    %v835 = vunpack.c.h.b16 %v453
    %v836 = vunpack.c.l.b16 %v454
    %v837 = vunpack.c.h.b16 %v454
    %v838 = vunpack.c.l.b16 %v455
    %v839 = vunpack.c.l.b16 %v456
    %v840 = vunpack.c.h.b16 %v456
    %v841 = vunpack.c.l.b16 %v457
    %v842 = vunpack.c.h.b16 %v457
    %v843 = vunpack.c.l.b16 %v458
    %v844 = vunpack.c.h.b16 %v458
    %v845 = vunpack.c.l.b16 %v459
    %v846 = vunpack.c.l.b16 %v460
    %v847 = vunpack.c.h.b16 %v460
    %v848 = vunpack.c.l.b16 %v461
    %v849 = vunpack.c.h.b16 %v461
    %v850 = vunpack.c.l.b16 %v462
    %v851 = vunpack.c.h.b16 %v462
    %v852 = vunpack.c.l.b16 %v463
    %v853 = vunpack.c.l.b16 %v464
    %v854 = vunpack.c.h.b16 %v464
    %v855 = vunpack.c.l.b16 %v465
    %v856 = vunpack.c.h.b16 %v465
    %v857 = vunpack.c.l.b16 %v466
    %v858 = vunpack.c.h.b16 %v466
    %v859 = vunpack.c.l.b16 %v467
    %v860 = vunpack.c.l.b16 %v468
    %v861 = vunpack.c.h.b16 %v468
    %v862 = vunpack.c.l.b16 %v469
    %v863 = vunpack.c.h.b16 %v469
    %v864 = vunpack.c.l.b16 %v470
    %v865 = vunpack.c.h.b16 %v470
    %v866 = vunpack.c.l.b16 %v471
    %v867 = vunpack.c.l.b16 %v472
    %v868 = vunpack.c.h.b16 %v472
    %v869 = vunpack.c.l.b16 %v473
    %v870 = vunpack.c.h.b16 %v473
    %v871 = vunpack.c.l.b16 %v474
    %v872 = vunpack.c.h.b16 %v474
    %v873 = vunpack.c.l.b16 %v475
    %v874 = vunpack.c.l.b16 %v476
    %v875 = vunpack.c.h.b16 %v476
    %v876 = vunpack.c.l.b16 %v477
    %v877 = vunpack.c.h.b16 %v477
    %v878 = vunpack.c.l.b16 %v478
    %v879 = vunpack.c.h.b16 %v478
    %v880 = vunpack.c.l.b16 %v479
    %v881 = vunpack.c.l.b16 %v480
    %v882 = vunpack.c.h.b16 %v480
    %v883 = vunpack.c.l.b16 %v481
    %v884 = vunpack.c.h.b16 %v481
    %v885 = vunpack.c.l.b16 %v482
    %v886 = vunpack.c.h.b16 %v482
    %v887 = vunpack.c.l.b16 %v483
    %v888 = vunpack.c.l.b16 %v484
    %v889 = vunpack.c.h.b16 %v484
    %v890 = vunpack.c.l.b16 %v485
    %v891 = vunpack.c.h.b16 %v485
    %v892 = vunpack.c.l.b16 %v486
    %v893 = vunpack.c.h.b16 %v486
    %v894 = vunpack.c.l.b16 %v487
    %v895 = vunpack.c.l.b16 %v488
    %v896 = vunpack.c.h.b16 %v488
    %v897 = vunpack.c.l.b16 %v489
    %v898 = vunpack.c.h.b16 %v489
    %v899 = vunpack.c.l.b16 %v490
    %v900 = vunpack.c.h.b16 %v490
    %v901 = vunpack.c.l.b16 %v491
    %v902 = vunpack.c.l.b16 %v492
    %v903 = vunpack.c.h.b16 %v492
    %v904 = vunpack.c.l.b16 %v493
    %v905 = vunpack.c.h.b16 %v493
    %v906 = vunpack.c.l.b16 %v494
    %v907 = vunpack.c.h.b16 %v494
    %v908 = vunpack.c.l.b16 %v495
    %v909 = vunpack.c.l.b16 %v496
    %v910 = vunpack.c.h.b16 %v496
    %v911 = vunpack.c.l.b16 %v497
    %v912 = vunpack.c.h.b16 %v497
    %v913 = vunpack.c.l.b16 %v498
    %v914 = vunpack.c.h.b16 %v498
    %v915 = vunpack.c.l.b16 %v499
    %v916 = vunpack.c.l.b16 %v500
    %v917 = vunpack.c.h.b16 %v500
    %v918 = vunpack.c.l.b16 %v501
    %v919 = vunpack.c.h.b16 %v501
    %v920 = vunpack.c.l.b16 %v502
    %v921 = vunpack.c.h.b16 %v502
    %v922 = vunpack.c.l.b16 %v503
    %v923 = vunpack.c.l.b16 %v504
    %v924 = vunpack.c.h.b16 %v504
    %v925 = vunpack.c.l.b16 %v505
    %v926 = vunpack.c.h.b16 %v505
    %v927 = vunpack.c.l.b16 %v506
    %v928 = vunpack.c.h.b16 %v506
    %v929 = vunpack.c.l.b16 %v507
    %v930 = vunpack.c.l.b16 %v508
    %v931 = vunpack.c.h.b16 %v508
    %v932 = vunpack.c.l.b16 %v509
    %v933 = vunpack.c.h.b16 %v509
    %v934 = vunpack.c.l.b16 %v510
    %v935 = vunpack.c.h.b16 %v510
    %v936 = vunpack.c.l.b16 %v511
    %v937 = vunpack.c.l.b16 %v512
    %v938 = vunpack.c.h.b16 %v512
    %v939 = vunpack.c.l.b16 %v513
    %v940 = vunpack.c.h.b16 %v513
    %v941 = vunpack.c.l.b16 %v514
    %v942 = vunpack.c.h.b16 %v514
    %v943 = vunpack.c.l.b16 %v515
    %v944 = vunpack.c.l.b16 %v516
    %v945 = vunpack.c.h.b16 %v516
    %v946 = vunpack.c.l.b16 %v517
    %v947 = vunpack.c.h.b16 %v517
    %v948 = vunpack.c.l.b16 %v518
    %v949 = vunpack.c.h.b16 %v518
    %v950 = vunpack.c.l.b16 %v519
    %v951 = vunpack.c.l.b16 %v520
    %v952 = vunpack.c.h.b16 %v520
    %v953 = vunpack.c.l.b16 %v521
    %v954 = vunpack.c.h.b16 %v521
    %v955 = vunpack.c.l.b16 %v522
    %v956 = vunpack.c.h.b16 %v522
    %v957 = vunpack.c.l.b16 %v523
    %v958 = vunpack.c.l.b16 %v524
    %v959 = vunpack.c.h.b16 %v524
    %v960 = vunpack.c.l.b16 %v525
    %v961 = vunpack.c.h.b16 %v525
    %v962 = vunpack.c.l.b16 %v526
    %v963 = vunpack.c.h.b16 %v526
    %v964 = vunpack.c.l.b16 %v527
    %v965 = vunpack.c.l.b16 %v528
    %v966 = vunpack.c.h.b16 %v528
    %v967 = vunpack.c.l.b16 %v529
    %v968 = vunpack.c.h.b16 %v529
    %v969 = vunpack.c.l.b16 %v530
    %v970 = vunpack.c.h.b16 %v530
    %v971 = vunpack.c.l.b16 %v531
    %v972 = vpack.c.b16 %v699, %v692
    %v973 = vpack.c.b16 %v700, %v693
    %v974 = vpack.c.b16 %v701, %v694
    %v975 = vpack.c.b16 %v702, %v695
    %v976 = vpack.c.b16 %v703, %v696
    %v977 = vpack.c.b16 %v704, %v697
    %v978 = vpack.c.b16 %v705, %v698
    %v979 = vpack.c.b16 %v713, %v706
    %v980 = vpack.c.b16 %v714, %v707
    %v981 = vpack.c.b16 %v715, %v708
    %v982 = vpack.c.b16 %v716, %v709
    %v983 = vpack.c.b16 %v717, %v710
    %v984 = vpack.c.b16 %v718, %v711
    %v985 = vpack.c.b16 %v719, %v712
    %v986 = vpack.c.b16 %v727, %v720
    %v987 = vpack.c.b16 %v728, %v721
    %v988 = vpack.c.b16 %v729, %v722
    %v989 = vpack.c.b16 %v730, %v723
    %v990 = vpack.c.b16 %v731, %v724
    %v991 = vpack.c.b16 %v732, %v725
    %v992 = vpack.c.b16 %v733, %v726
    %v993 = vpack.c.b16 %v741, %v734
    %v994 = vpack.c.b16 %v742, %v735
    %v995 = vpack.c.b16 %v743, %v736
    %v996 = vpack.c.b16 %v744, %v737
    %v997 = vpack.c.b16 %v745, %v738
    %v998 = vpack.c.b16 %v746, %v739
    %v999 = vpack.c.b16 %v747, %v740
    %v1000 = vpack.c.b16 %v755, %v748
    %v1001 = vpack.c.b16 %v756, %v749
    %v1002 = vpack.c.b16 %v757, %v750
    %v1003 = vpack.c.b16 %v758, %v751
    %v1004 = vpack.c.b16 %v759, %v752
    %v1005 = vpack.c.b16 %v760, %v753
    %v1006 = vpack.c.b16 %v761, %v754
    %v1007 = vpack.c.b16 %v769, %v762
    %v1008 = vpack.c.b16 %v770, %v763
    %v1009 = vpack.c.b16 %v771, %v764
    %v1010 = vpack.c.b16 %v772, %v765
    %v1011 = vpack.c.b16 %v773, %v766
    %v1012 = vpack.c.b16 %v774, %v767
    %v1013 = vpack.c.b16 %v775, %v768
    %v1014 = vpack.c.b16 %v783, %v776
    %v1015 = vpack.c.b16 %v784, %v777
    %v1016 = vpack.c.b16 %v785, %v778
    %v1017 = vpack.c.b16 %v786, %v779
    %v1018 = vpack.c.b16 %v787, %v780
    %v1019 = vpack.c.b16 %v788, %v781
    %v1020 = vpack.c.b16 %v789, %v782
    %v1021 = vpack.c.b16 %v797, %v790
    %v1022 = vpack.c.b16 %v798, %v791
    %v1023 = vpack.c.b16 %v799, %v792
    %v1024 = vpack.c.b16 %v800, %v793
    %v1025 = vpack.c.b16 %v801, %v794
    %v1026 = vpack.c.b16 %v802, %v795
    %v1027 = vpack.c.b16 %v803, %v796
    %v1028 = vpack.c.b16 %v811, %v804
    %v1029 = vpack.c.b16 %v812, %v805
    %v1030 = vpack.c.b16 %v813, %v806
    %v1031 = vpack.c.b16 %v814, %v807
    %v1032 = vpack.c.b16 %v815, %v808
    %v1033 = vpack.c.b16 %v816, %v809
    %v1034 = vpack.c.b16 %v817, %v810
    %v1035 = vpack.c.b16 %v825, %v818
    %v1036 = vpack.c.b16 %v826, %v819
    %v1037 = vpack.c.b16 %v827, %v820
    %v1038 = vpack.c.b16 %v828, %v821
    %v1039 = vpack.c.b16 %v829, %v822
    %v1040 = vpack.c.b16 %v830, %v823
    %v1041 = vpack.c.b16 %v831, %v824
    %v1042 = vpack.c.b16 %v839, %v832
    %v1043 = vpack.c.b16 %v840, %v833
    %v1044 = vpack.c.b16 %v841, %v834
    %v1045 = vpack.c.b16 %v842, %v835
    %v1046 = vpack.c.b16 %v843, %v836
    %v1047 = vpack.c.b16 %v844, %v837
    %v1048 = vpack.c.b16 %v845, %v838
    %v1049 = vpack.c.b16 %v853, %v846
    %v1050 = vpack.c.b16 %v854, %v847
    %v1051 = vpack.c.b16 %v855, %v848
    %v1052 = vpack.c.b16 %v856, %v849
    %v1053 = vpack.c.b16 %v857, %v850
    %v1054 = vpack.c.b16 %v858, %v851
    %v1055 = vpack.c.b16 %v859, %v852
    %v1056 = vpack.c.b16 %v867, %v860
    %v1057 = vpack.c.b16 %v868, %v861
    %v1058 = vpack.c.b16 %v869, %v862
    %v1059 = vpack.c.b16 %v870, %v863
    %v1060 = vpack.c.b16 %v871, %v864
    %v1061 = vpack.c.b16 %v872, %v865
    %v1062 = vpack.c.b16 %v873, %v866
    %v1063 = vpack.c.b16 %v881, %v874
    %v1064 = vpack.c.b16 %v882, %v875
    %v1065 = vpack.c.b16 %v883, %v876
    %v1066 = vpack.c.b16 %v884, %v877
    %v1067 = vpack.c.b16 %v885, %v878
    %v1068 = vpack.c.b16 %v886, %v879
    %v1069 = vpack.c.b16 %v887, %v880
    %v1070 = vpack.c.b16 %v895, %v888
    %v1071 = vpack.c.b16 %v896, %v889
    %v1072 = vpack.c.b16 %v897, %v890
    %v1073 = vpack.c.b16 %v898, %v891
    %v1074 = vpack.c.b16 %v899, %v892
    %v1075 = vpack.c.b16 %v900, %v893
    %v1076 = vpack.c.b16 %v901, %v894
    %v1077 = vpack.c.b16 %v909, %v902
    %v1078 = vpack.c.b16 %v910, %v903
    %v1079 = vpack.c.b16 %v911, %v904
    %v1080 = vpack.c.b16 %v912, %v905
    %v1081 = vpack.c.b16 %v913, %v906
    %v1082 = vpack.c.b16 %v914, %v907
    %v1083 = vpack.c.b16 %v915, %v908
    %v1084 = vpack.c.b16 %v923, %v916
    %v1085 = vpack.c.b16 %v924, %v917
    %v1086 = vpack.c.b16 %v925, %v918
    %v1087 = vpack.c.b16 %v926, %v919
    %v1088 = vpack.c.b16 %v927, %v920
    %v1089 = vpack.c.b16 %v928, %v921
    %v1090 = vpack.c.b16 %v929, %v922
    %v1091 = vpack.c.b16 %v937, %v930
    %v1092 = vpack.c.b16 %v938, %v931
    %v1093 = vpack.c.b16 %v939, %v932
    %v1094 = vpack.c.b16 %v940, %v933
    %v1095 = vpack.c.b16 %v941, %v934
    %v1096 = vpack.c.b16 %v942, %v935
    %v1097 = vpack.c.b16 %v943, %v936
    %v1098 = vpack.c.b16 %v951, %v944
    %v1099 = vpack.c.b16 %v952, %v945
    %v1100 = vpack.c.b16 %v953, %v946
    %v1101 = vpack.c.b16 %v954, %v947
    %v1102 = vpack.c.b16 %v955, %v948
    %v1103 = vpack.c.b16 %v956, %v949
    %v1104 = vpack.c.b16 %v957, %v950
    %v1105 = vpack.c.b16 %v965, %v958
    %v1106 = vpack.c.b16 %v966, %v959
    %v1107 = vpack.c.b16 %v967, %v960
    %v1108 = vpack.c.b16 %v968, %v961
    %v1109 = vpack.c.b16 %v969, %v962
    %v1110 = vpack.c.b16 %v970, %v963
    %v1111 = vpack.c.b16 %v971, %v964
    %v1253 = vsel %vm337, %v371, 0
    %1255 = vmatprep.subr.bf16.mxu0 %v973
    %1256 = vmatpush1.bf16.msra.mxu0 %v972
    %1257 = vmatprep.subr.bf16.mxu0 %v980
    %1258 = vmatpush1.bf16.msra.mxu0 %v979
    %1259 = vmatprep.subr.bf16.mxu0 %v987
    %1260 = vmatpush1.bf16.msra.mxu0 %v986
    %1261 = vmatprep.subr.bf16.mxu0 %v994
    %1262 = vmatpush1.bf16.msra.mxu0 %v993
    %1263 = vmatprep.subr.bf16.mxu0 %v1001
    %1264 = vmatpush1.bf16.msra.mxu0 %v1000
    %1265 = vmatprep.subr.bf16.mxu0 %v1008
    %1266 = vmatpush1.bf16.msra.mxu0 %v1007
    %1267 = vmatprep.subr.bf16.mxu0 %v1015
    %1268 = vmatpush1.bf16.msra.mxu0 %v1014
    %1269 = vmatprep.subr.bf16.mxu0 %v1022
    %1270 = vmatpush1.bf16.msra.mxu0 %v1021
    %1271 = vmatprep.subr.bf16.mxu0 %v1029
    %1272 = vmatpush1.bf16.msra.mxu0 %v1028
    %1273 = vmatprep.subr.bf16.mxu0 %v1036
    %1274 = vmatpush1.bf16.msra.mxu0 %v1035
    %1275 = vmatprep.subr.bf16.mxu0 %v1043
    %1276 = vmatpush1.bf16.msra.mxu0 %v1042
    %1277 = vmatprep.subr.bf16.mxu0 %v1050
    %1278 = vmatpush1.bf16.msra.mxu0 %v1049
    %1279 = vmatprep.subr.bf16.mxu0 %v1057
    %1280 = vmatpush1.bf16.msra.mxu0 %v1056
    %1281 = vmatprep.subr.bf16.mxu0 %v1064
    %1282 = vmatpush1.bf16.msra.mxu0 %v1063
    %1283 = vmatprep.subr.bf16.mxu0 %v1071
    %1284 = vmatpush1.bf16.msra.mxu0 %v1070
    %1285 = vmatprep.subr.bf16.mxu0 %v1078
    %1286 = vmatpush1.bf16.msra.mxu0 %v1077
    %1287 = vmatprep.mubr.bf16.mxu0 %v370
    %1288 = vmatmul.mubr.bf16.gmra.mrb[0].mxu0 %v369
    %v1289 = vpop.f32.mrb[0].mxu0
    %v1290 = vadd.f32 0.0, %v1289
    %v1291 = vpop.f32.mrb[0].mxu0
    %v1292 = vadd.f32 0.0, %v1291
    %v1293 = vpop.f32.mrb[0].mxu0
    %v1294 = vpop.f32.mrb[0].mxu0
    %1295 = vdwg.mxu0
    %1296 = vmatprep.subr.bf16.mxu0 %v1085
    %1297 = vmatpush1.bf16.msra.mxu0 %v1084
    %1298 = vmatprep.subr.bf16.mxu0 %v1092
    %1299 = vmatpush1.bf16.msra.mxu0 %v1091
    %1300 = vmatprep.subr.bf16.mxu0 %v1099
    %1301 = vmatpush1.bf16.msra.mxu0 %v1098
    %1302 = vmatprep.subr.bf16.mxu0 %v1106
    %1303 = vmatpush1.bf16.msra.mxu0 %v1105
    %1304 = vmatprep.subr.bf16.mxu0 0
    %1305 = vmatpush1.bf16.msra.mxu0 0
    %1306 = vmatprep.subr.bf16.mxu0 0
    %1307 = vmatpush1.bf16.msra.mxu0 0
    %1308 = vmatprep.subr.bf16.mxu0 0
    %1309 = vmatpush1.bf16.msra.mxu0 0
    %1310 = vmatprep.subr.bf16.mxu0 0
    %1311 = vmatpush1.bf16.msra.mxu0 0
    %1312 = vmatprep.subr.bf16.mxu0 0
    %1313 = vmatpush1.bf16.msra.mxu0 0
    %1314 = vmatprep.subr.bf16.mxu0 0
    %1315 = vmatpush1.bf16.msra.mxu0 0
    %1316 = vmatprep.subr.bf16.mxu0 0
    %1317 = vmatpush1.bf16.msra.mxu0 0
    %1318 = vmatprep.subr.bf16.mxu0 0
    %1319 = vmatpush1.bf16.msra.mxu0 0
    %1320 = vmatprep.subr.bf16.mxu0 0
    %1321 = vmatpush1.bf16.msra.mxu0 0
    %1322 = vmatprep.subr.bf16.mxu0 0
    %1323 = vmatpush1.bf16.msra.mxu0 0
    %1324 = vmatprep.subr.bf16.mxu0 0
    %1325 = vmatpush1.bf16.msra.mxu0 0
    %1326 = vmatprep.subr.bf16.mxu0 0
    %1327 = vmatpush1.bf16.msra.mxu0 0
    %1328 = vmatprep.mubr.bf16.mxu0 0
    %1329 = vmatmul.mubr.bf16.gmra.mrb[0].mxu0 %v1253
    %v1330 = vpop.f32.mrb[0].mxu0
    %v1331 = vadd.f32 %v1290, %v1330
    %v1332 = vpop.f32.mrb[0].mxu0
    %v1333 = vadd.f32 %v1292, %v1332
    %v1334 = vpop.f32.mrb[0].mxu0
    %v1335 = vpop.f32.mrb[0].mxu0
    %1336 = vdwg.mxu0
    %1337 = vmatprep.subr.bf16.mxu0 %v975
    %1338 = vmatpush1.bf16.msra.mxu0 %v974
    %1339 = vmatprep.subr.bf16.mxu0 %v982
    %1340 = vmatpush1.bf16.msra.mxu0 %v981
    %1341 = vmatprep.subr.bf16.mxu0 %v989
    %1342 = vmatpush1.bf16.msra.mxu0 %v988
    %1343 = vmatprep.subr.bf16.mxu0 %v996
    %1344 = vmatpush1.bf16.msra.mxu0 %v995
    %1345 = vmatprep.subr.bf16.mxu0 %v1003
    %1346 = vmatpush1.bf16.msra.mxu0 %v1002
    %1347 = vmatprep.subr.bf16.mxu0 %v1010
    %1348 = vmatpush1.bf16.msra.mxu0 %v1009
    %1349 = vmatprep.subr.bf16.mxu0 %v1017
    %1350 = vmatpush1.bf16.msra.mxu0 %v1016
    %1351 = vmatprep.subr.bf16.mxu0 %v1024
    %1352 = vmatpush1.bf16.msra.mxu0 %v1023
    %1353 = vmatprep.subr.bf16.mxu0 %v1031
    %1354 = vmatpush1.bf16.msra.mxu0 %v1030
    %1355 = vmatprep.subr.bf16.mxu0 %v1038
    %1356 = vmatpush1.bf16.msra.mxu0 %v1037
    %1357 = vmatprep.subr.bf16.mxu0 %v1045
    %1358 = vmatpush1.bf16.msra.mxu0 %v1044
    %1359 = vmatprep.subr.bf16.mxu0 %v1052
    %1360 = vmatpush1.bf16.msra.mxu0 %v1051
    %1361 = vmatprep.subr.bf16.mxu0 %v1059
    %1362 = vmatpush1.bf16.msra.mxu0 %v1058
    %1363 = vmatprep.subr.bf16.mxu0 %v1066
    %1364 = vmatpush1.bf16.msra.mxu0 %v1065
    %1365 = vmatprep.subr.bf16.mxu0 %v1073
    %1366 = vmatpush1.bf16.msra.mxu0 %v1072
    %1367 = vmatprep.subr.bf16.mxu0 %v1080
    %1368 = vmatpush1.bf16.msra.mxu0 %v1079
    %1369 = vmatprep.mubr.bf16.mxu0 %v370
    %1370 = vmatmul.mubr.bf16.gmra.mrb[0].mxu0 %v369
    %v1371 = vpop.f32.mrb[0].mxu0
    %v1372 = vadd.f32 0.0, %v1371
    %v1373 = vpop.f32.mrb[0].mxu0
    %v1374 = vadd.f32 0.0, %v1373
    %v1375 = vpop.f32.mrb[0].mxu0
    %v1376 = vpop.f32.mrb[0].mxu0
    %1377 = vdwg.mxu0
    %1378 = vmatprep.subr.bf16.mxu0 %v1087
    %1379 = vmatpush1.bf16.msra.mxu0 %v1086
    %1380 = vmatprep.subr.bf16.mxu0 %v1094
    %1381 = vmatpush1.bf16.msra.mxu0 %v1093
    %1382 = vmatprep.subr.bf16.mxu0 %v1101
    %1383 = vmatpush1.bf16.msra.mxu0 %v1100
    %1384 = vmatprep.subr.bf16.mxu0 %v1108
    %1385 = vmatpush1.bf16.msra.mxu0 %v1107
    %1386 = vmatprep.subr.bf16.mxu0 0
    %1387 = vmatpush1.bf16.msra.mxu0 0
    %1388 = vmatprep.subr.bf16.mxu0 0
    %1389 = vmatpush1.bf16.msra.mxu0 0
    %1390 = vmatprep.subr.bf16.mxu0 0
    %1391 = vmatpush1.bf16.msra.mxu0 0
    %1392 = vmatprep.subr.bf16.mxu0 0
    %1393 = vmatpush1.bf16.msra.mxu0 0
    %1394 = vmatprep.subr.bf16.mxu0 0
    %1395 = vmatpush1.bf16.msra.mxu0 0
    %1396 = vmatprep.subr.bf16.mxu0 0
    %1397 = vmatpush1.bf16.msra.mxu0 0
    %1398 = vmatprep.subr.bf16.mxu0 0
    %1399 = vmatpush1.bf16.msra.mxu0 0
    %1400 = vmatprep.subr.bf16.mxu0 0
    %1401 = vmatpush1.bf16.msra.mxu0 0
    %1402 = vmatprep.subr.bf16.mxu0 0
    %1403 = vmatpush1.bf16.msra.mxu0 0
    %1404 = vmatprep.subr.bf16.mxu0 0
    %1405 = vmatpush1.bf16.msra.mxu0 0
    %1406 = vmatprep.subr.bf16.mxu0 0
    %1407 = vmatpush1.bf16.msra.mxu0 0
    %1408 = vmatprep.subr.bf16.mxu0 0
    %1409 = vmatpush1.bf16.msra.mxu0 0
    %1410 = vmatprep.mubr.bf16.mxu0 0
    %1411 = vmatmul.mubr.bf16.gmra.mrb[0].mxu0 %v1253
    %v1412 = vpop.f32.mrb[0].mxu0
    %v1413 = vadd.f32 %v1372, %v1412
    %v1414 = vpop.f32.mrb[0].mxu0
    %v1415 = vadd.f32 %v1374, %v1414
    %v1416 = vpop.f32.mrb[0].mxu0
    %v1417 = vpop.f32.mrb[0].mxu0
    %1418 = vdwg.mxu0
    %1419 = vmatprep.subr.bf16.mxu0 %v977
    %1420 = vmatpush1.bf16.msra.mxu0 %v976
    %1421 = vmatprep.subr.bf16.mxu0 %v984
    %1422 = vmatpush1.bf16.msra.mxu0 %v983
    %1423 = vmatprep.subr.bf16.mxu0 %v991
    %1424 = vmatpush1.bf16.msra.mxu0 %v990
    %1425 = vmatprep.subr.bf16.mxu0 %v998
    %1426 = vmatpush1.bf16.msra.mxu0 %v997
    %1427 = vmatprep.subr.bf16.mxu0 %v1005
    %1428 = vmatpush1.bf16.msra.mxu0 %v1004
    %1429 = vmatprep.subr.bf16.mxu0 %v1012
    %1430 = vmatpush1.bf16.msra.mxu0 %v1011
    %1431 = vmatprep.subr.bf16.mxu0 %v1019
    %1432 = vmatpush1.bf16.msra.mxu0 %v1018
    %1433 = vmatprep.subr.bf16.mxu0 %v1026
    %1434 = vmatpush1.bf16.msra.mxu0 %v1025
    %1435 = vmatprep.subr.bf16.mxu0 %v1033
    %1436 = vmatpush1.bf16.msra.mxu0 %v1032
    %1437 = vmatprep.subr.bf16.mxu0 %v1040
    %1438 = vmatpush1.bf16.msra.mxu0 %v1039
    %1439 = vmatprep.subr.bf16.mxu0 %v1047
    %1440 = vmatpush1.bf16.msra.mxu0 %v1046
    %1441 = vmatprep.subr.bf16.mxu0 %v1054
    %1442 = vmatpush1.bf16.msra.mxu0 %v1053
    %1443 = vmatprep.subr.bf16.mxu0 %v1061
    %1444 = vmatpush1.bf16.msra.mxu0 %v1060
    %1445 = vmatprep.subr.bf16.mxu0 %v1068
    %1446 = vmatpush1.bf16.msra.mxu0 %v1067
    %1447 = vmatprep.subr.bf16.mxu0 %v1075
    %1448 = vmatpush1.bf16.msra.mxu0 %v1074
    %1449 = vmatprep.subr.bf16.mxu0 %v1082
    %1450 = vmatpush1.bf16.msra.mxu0 %v1081
    %1451 = vmatprep.mubr.bf16.mxu0 %v370
    %1452 = vmatmul.mubr.bf16.gmra.mrb[0].mxu0 %v369
    %v1453 = vpop.f32.mrb[0].mxu0
    %v1454 = vadd.f32 0.0, %v1453
    %v1455 = vpop.f32.mrb[0].mxu0
    %v1456 = vadd.f32 0.0, %v1455
    %v1457 = vpop.f32.mrb[0].mxu0
    %v1458 = vpop.f32.mrb[0].mxu0
    %1459 = vdwg.mxu0
    %1460 = vmatprep.subr.bf16.mxu0 %v1089
    %1461 = vmatpush1.bf16.msra.mxu0 %v1088
    %1462 = vmatprep.subr.bf16.mxu0 %v1096
    %1463 = vmatpush1.bf16.msra.mxu0 %v1095
    %1464 = vmatprep.subr.bf16.mxu0 %v1103
    %1465 = vmatpush1.bf16.msra.mxu0 %v1102
    %1466 = vmatprep.subr.bf16.mxu0 %v1110
    %1467 = vmatpush1.bf16.msra.mxu0 %v1109
    %1468 = vmatprep.subr.bf16.mxu0 0
    %1469 = vmatpush1.bf16.msra.mxu0 0
    %1470 = vmatprep.subr.bf16.mxu0 0
    %1471 = vmatpush1.bf16.msra.mxu0 0
    %1472 = vmatprep.subr.bf16.mxu0 0
    %1473 = vmatpush1.bf16.msra.mxu0 0
    %1474 = vmatprep.subr.bf16.mxu0 0
    %1475 = vmatpush1.bf16.msra.mxu0 0
    %1476 = vmatprep.subr.bf16.mxu0 0
    %1477 = vmatpush1.bf16.msra.mxu0 0
    %1478 = vmatprep.subr.bf16.mxu0 0
    %1479 = vmatpush1.bf16.msra.mxu0 0
    %1480 = vmatprep.subr.bf16.mxu0 0
    %1481 = vmatpush1.bf16.msra.mxu0 0
    %1482 = vmatprep.subr.bf16.mxu0 0
    %1483 = vmatpush1.bf16.msra.mxu0 0
    %1484 = vmatprep.subr.bf16.mxu0 0
    %1485 = vmatpush1.bf16.msra.mxu0 0
    %1486 = vmatprep.subr.bf16.mxu0 0
    %1487 = vmatpush1.bf16.msra.mxu0 0
    %1488 = vmatprep.subr.bf16.mxu0 0
    %1489 = vmatpush1.bf16.msra.mxu0 0
    %1490 = vmatprep.subr.bf16.mxu0 0
    %1491 = vmatpush1.bf16.msra.mxu0 0
    %1492 = vmatprep.mubr.bf16.mxu0 0
    %1493 = vmatmul.mubr.bf16.gmra.mrb[0].mxu0 %v1253
    %v1494 = vpop.f32.mrb[0].mxu0
    %v1495 = vadd.f32 %v1454, %v1494
    %v1496 = vpop.f32.mrb[0].mxu0
    %v1497 = vadd.f32 %v1456, %v1496
    %v1498 = vpop.f32.mrb[0].mxu0
    %v1499 = vpop.f32.mrb[0].mxu0
    %1500 = vdwg.mxu0
    %1501 = vmatprep.subr.bf16.mxu0 0
    %1502 = vmatpush1.bf16.msra.mxu0 %v978
    %1503 = vmatprep.subr.bf16.mxu0 0
    %1504 = vmatpush1.bf16.msra.mxu0 %v985
    %1505 = vmatprep.subr.bf16.mxu0 0
    %1506 = vmatpush1.bf16.msra.mxu0 %v992
    %1507 = vmatprep.subr.bf16.mxu0 0
    %1508 = vmatpush1.bf16.msra.mxu0 %v999
    %1509 = vmatprep.subr.bf16.mxu0 0
    %1510 = vmatpush1.bf16.msra.mxu0 %v1006
    %1511 = vmatprep.subr.bf16.mxu0 0
    %1512 = vmatpush1.bf16.msra.mxu0 %v1013
    %1513 = vmatprep.subr.bf16.mxu0 0
    %1514 = vmatpush1.bf16.msra.mxu0 %v1020
    %1515 = vmatprep.subr.bf16.mxu0 0
    %1516 = vmatpush1.bf16.msra.mxu0 %v1027
    %1517 = vmatprep.subr.bf16.mxu0 0
    %1518 = vmatpush1.bf16.msra.mxu0 %v1034
    %1519 = vmatprep.subr.bf16.mxu0 0
    %1520 = vmatpush1.bf16.msra.mxu0 %v1041
    %1521 = vmatprep.subr.bf16.mxu0 0
    %1522 = vmatpush1.bf16.msra.mxu0 %v1048
    %1523 = vmatprep.subr.bf16.mxu0 0
    %1524 = vmatpush1.bf16.msra.mxu0 %v1055
    %1525 = vmatprep.subr.bf16.mxu0 0
    %1526 = vmatpush1.bf16.msra.mxu0 %v1062
    %1527 = vmatprep.subr.bf16.mxu0 0
    %1528 = vmatpush1.bf16.msra.mxu0 %v1069
    %1529 = vmatprep.subr.bf16.mxu0 0
    %1530 = vmatpush1.bf16.msra.mxu0 %v1076
    %1531 = vmatprep.subr.bf16.mxu0 0
    %1532 = vmatpush1.bf16.msra.mxu0 %v1083
    %1533 = vmatprep.mubr.bf16.mxu0 %v370
    %1534 = vmatmul.mubr.bf16.gmra.mrb[0].mxu0 %v369
    %v1535 = vpop.f32.mrb[0].mxu0
    %v1536 = vadd.f32 0.0, %v1535
    %v1537 = vpop.f32.mrb[0].mxu0
    %v1538 = vpop.f32.mrb[0].mxu0
    %v1539 = vpop.f32.mrb[0].mxu0
    %1540 = vdwg.mxu0
    %1541 = vmatprep.subr.bf16.mxu0 0
    %1542 = vmatpush1.bf16.msra.mxu0 %v1090
    %1543 = vmatprep.subr.bf16.mxu0 0
    %1544 = vmatpush1.bf16.msra.mxu0 %v1097
    %1545 = vmatprep.subr.bf16.mxu0 0
    %1546 = vmatpush1.bf16.msra.mxu0 %v1104
    %1547 = vmatprep.subr.bf16.mxu0 0
    %1548 = vmatpush1.bf16.msra.mxu0 %v1111
    %1549 = vmatprep.subr.bf16.mxu0 0
    %1550 = vmatpush1.bf16.msra.mxu0 0
    %1551 = vmatprep.subr.bf16.mxu0 0
    %1552 = vmatpush1.bf16.msra.mxu0 0
    %1553 = vmatprep.subr.bf16.mxu0 0
    %1554 = vmatpush1.bf16.msra.mxu0 0
    %1555 = vmatprep.subr.bf16.mxu0 0
    %1556 = vmatpush1.bf16.msra.mxu0 0
    %1557 = vmatprep.subr.bf16.mxu0 0
    %1558 = vmatpush1.bf16.msra.mxu0 0
    %1559 = vmatprep.subr.bf16.mxu0 0
    %1560 = vmatpush1.bf16.msra.mxu0 0
    %1561 = vmatprep.subr.bf16.mxu0 0
    %1562 = vmatpush1.bf16.msra.mxu0 0
    %1563 = vmatprep.subr.bf16.mxu0 0
    %1564 = vmatpush1.bf16.msra.mxu0 0
    %1565 = vmatprep.subr.bf16.mxu0 0
    %1566 = vmatpush1.bf16.msra.mxu0 0
    %1567 = vmatprep.subr.bf16.mxu0 0
    %1568 = vmatpush1.bf16.msra.mxu0 0
    %1569 = vmatprep.subr.bf16.mxu0 0
    %1570 = vmatpush1.bf16.msra.mxu0 0
    %1571 = vmatprep.subr.bf16.mxu0 0
    %1572 = vmatpush1.bf16.msra.mxu0 0
    %1573 = vmatprep.mubr.bf16.mxu0 0
    %1574 = vmatmul.mubr.bf16.gmra.mrb[0].mxu0 %v1253
    %v1575 = vpop.f32.mrb[0].mxu0
    %v1576 = vadd.f32 %v1536, %v1575
    %v1577 = vpop.f32.mrb[0].mxu0
    %v1578 = vpop.f32.mrb[0].mxu0
    %v1579 = vpop.f32.mrb[0].mxu0
    %1580 = vdwg.mxu0
    %1585 = vrot.lane.b32.xlu0 %v1415, 64
    %v1586 = vpop.permute.xlu0 %1585
    %1587 = vrot.lane.b32.xlu0 %v1495, 64
    %v1588 = vpop.permute.xlu0 %1587
    %1589 = vrot.lane.b32.xlu0 %v1497, 64
    %v1590 = vpop.permute.xlu0 %1589
    %1591 = vrot.lane.b32.xlu0 %v1576, 64
    %v1592 = vpop.permute.xlu0 %1591
    %v1593 = vsel %vm337, %v1586, %v1588
    %v1594 = vsel %vm337, %v1588, %v1590
    %v1595 = vsel %vm337, %v1590, %v1592
    %v1600 = vmax.f32 %v1331, %v1593
    %v1601 = vmax.f32 %v1333, %v1594
    %v1602 = vmax.f32 %v1413, %v1595
    %v1603 = vmax.f32 %v1415, %v1592
    %v1604 = vld [vmem:[#allocation10] sm:$0xf]
    %v1606 = vlaneseq
    %v1607 = vshrl.u32 %v1606, 7
    %v1608 = vsub.s32 0, %v1607
    %v1609 = vrot.slane %v1604, %v1608
    %v1610 = vlaneseq
    %v1611 = vshrl.u32 %v1610, 7
    %v1612 = vsub.s32 1, %v1611
    %v1613 = vrot.slane %v1604, %v1612
    %v1614 = vlaneseq
    %v1615 = vshrl.u32 %v1614, 7
    %v1616 = vsub.s32 2, %v1615
    %v1617 = vrot.slane %v1604, %v1616
    %v1618 = vlaneseq
    %v1619 = vshrl.u32 %v1618, 7
    %v1620 = vsub.s32 3, %v1619
    %v1621 = vrot.slane %v1604, %v1620
    %v1626 = vadd.f32 %v1600, %v1609
    %v1627 = vadd.f32 %v1601, %v1613
    %v1628 = vadd.f32 %v1602, %v1617
    %v1629 = vadd.f32 %v1603, %v1621
    %v1630 = vmax.f32 %v1626, 0.0
    %v1631 = vmax.f32 %v1627, 0.0
    %v1632 = vmax.f32 %v1628, 0.0
    %v1633 = vmax.f32 %v1629, 0.0
    %v1634 = vpack.c.bf16 %v1630, %v1630
    %v1635 = vpack.c.bf16 %v1631, %v1631
    %v1636 = vpack.c.bf16 %v1632, %v1632
    %v1637 = vpack.c.bf16 %v1633, %v1633
    %v1638 = vld [vmem:[#allocation11] sm:$0xff]
    %v1639 = vld [vmem:[#allocation11 + $0x8] sm:$0xff]
    %v1640 = vld [vmem:[#allocation11 + $0x10] sm:$0xff]
    %v1641 = vld [vmem:[#allocation11 + $0x18] sm:$0xff]
    %v1642 = vld [vmem:[#allocation11 + $0x20] sm:$0xff]
    %v1643 = vld [vmem:[#allocation11 + $0x28] sm:$0xff]
    %v1644 = vld [vmem:[#allocation11 + $0x30] sm:$0xff]
    %v1645 = vld [vmem:[#allocation11 + $0x38] sm:$0xff]
    %v1646 = vld [vmem:[#allocation11 + $0x40] sm:$0xff]
    %v1647 = vld [vmem:[#allocation11 + $0x48] sm:$0xff]
    %v1648 = vld [vmem:[#allocation11 + $0x50] sm:$0xff]
    %v1649 = vld [vmem:[#allocation11 + $0x58] sm:$0xff]
    %v1650 = vld [vmem:[#allocation11 + $0x60] sm:$0xff]
    %v1651 = vld [vmem:[#allocation11 + $0x68] sm:$0xff]
    %v1652 = vld [vmem:[#allocation11 + $0x70] sm:$0xff]
    %v1653 = vld [vmem:[#allocation11 + $0x78] sm:$0xff]
    %v1654 = vld [vmem:[#allocation11 + $0x80] sm:$0xff]
    %v1655 = vld [vmem:[#allocation11 + $0x88] sm:$0xff]
    %v1656 = vld [vmem:[#allocation11 + $0x90] sm:$0xff]
    %v1657 = vld [vmem:[#allocation11 + $0x98] sm:$0xff]
    %v1658 = vld [vmem:[#allocation11 + $0xa0] sm:$0xff]
    %v1659 = vld [vmem:[#allocation11 + $0xa8] sm:$0xff]
    %v1660 = vld [vmem:[#allocation11 + $0xb0] sm:$0xff]
    %v1661 = vld [vmem:[#allocation11 + $0xb8] sm:$0xff]
    %v1662 = vld [vmem:[#allocation11 + $0xc0] sm:$0xff]
    %v1663 = vld [vmem:[#allocation11 + $0xc8] sm:$0xff]
    %v1664 = vld [vmem:[#allocation11 + $0xd0] sm:$0xff]
    %v1665 = vld [vmem:[#allocation11 + $0xd8] sm:$0xff]
    %v1666 = vld [vmem:[#allocation11 + $0xe0] sm:$0xff]
    %v1667 = vld [vmem:[#allocation11 + $0xe8] sm:$0xff]
    %v1668 = vld [vmem:[#allocation11 + $0xf0] sm:$0xff]
    %v1669 = vld [vmem:[#allocation11 + $0xf8] sm:$0xff]
    %v1670 = vld [vmem:[#allocation11 + $0x100] sm:$0xff]
    %v1671 = vld [vmem:[#allocation11 + $0x108] sm:$0xff]
    %v1672 = vld [vmem:[#allocation11 + $0x110] sm:$0xff]
    %v1673 = vld [vmem:[#allocation11 + $0x118] sm:$0xff]
    %v1674 = vld [vmem:[#allocation11 + $0x120] sm:$0xff]
    %v1675 = vld [vmem:[#allocation11 + $0x128] sm:$0xff]
    %v1676 = vld [vmem:[#allocation11 + $0x130] sm:$0xff]
    %v1677 = vld [vmem:[#allocation11 + $0x138] sm:$0xff]
    %v1678 = vld [vmem:[#allocation11 + $0x140] sm:$0xff]
    %v1679 = vld [vmem:[#allocation11 + $0x148] sm:$0xff]
    %v1680 = vld [vmem:[#allocation11 + $0x150] sm:$0xff]
    %v1681 = vld [vmem:[#allocation11 + $0x158] sm:$0xff]
    %v1682 = vld [vmem:[#allocation11 + $0x160] sm:$0xff]
    %v1683 = vld [vmem:[#allocation11 + $0x168] sm:$0xff]
    %v1684 = vld [vmem:[#allocation11 + $0x170] sm:$0xff]
    %v1685 = vld [vmem:[#allocation11 + $0x178] sm:$0xff]
    %v1686 = vld [vmem:[#allocation11 + $0x180] sm:$0xff]
    %v1687 = vld [vmem:[#allocation11 + $0x188] sm:$0xff]
    %v1688 = vld [vmem:[#allocation11 + $0x190] sm:$0xff]
    %v1689 = vld [vmem:[#allocation11 + $0x198] sm:$0xff]
    %v1690 = vld [vmem:[#allocation11 + $0x1a0] sm:$0xff]
    %v1691 = vld [vmem:[#allocation11 + $0x1a8] sm:$0xff]
    %v1692 = vld [vmem:[#allocation11 + $0x1b0] sm:$0xff]
    %v1693 = vld [vmem:[#allocation11 + $0x1b8] sm:$0xff]
    %v1694 = vld [vmem:[#allocation11 + $0x1c0] sm:$0xff]
    %v1695 = vld [vmem:[#allocation11 + $0x1c8] sm:$0xff]
    %v1696 = vld [vmem:[#allocation11 + $0x1d0] sm:$0xff]
    %v1697 = vld [vmem:[#allocation11 + $0x1d8] sm:$0xff]
    %v1698 = vld [vmem:[#allocation11 + $0x1e0] sm:$0xff]
    %v1699 = vld [vmem:[#allocation11 + $0x1e8] sm:$0xff]
    %v1700 = vld [vmem:[#allocation11 + $0x1f0] sm:$0xff]
    %v1701 = vld [vmem:[#allocation11 + $0x1f8] sm:$0xff]
    %v1702 = vld [vmem:[#allocation11 + $0x200] sm:$0xff]
    %v1703 = vld [vmem:[#allocation11 + $0x208] sm:$0xff]
    %v1704 = vld [vmem:[#allocation11 + $0x210] sm:$0xff]
    %v1705 = vld [vmem:[#allocation11 + $0x218] sm:$0xff]
    %v1706 = vld [vmem:[#allocation11 + $0x220] sm:$0xff]
    %v1707 = vld [vmem:[#allocation11 + $0x228] sm:$0xff]
    %v1708 = vld [vmem:[#allocation11 + $0x230] sm:$0xff]
    %v1709 = vld [vmem:[#allocation11 + $0x238] sm:$0xff]
    %v1710 = vld [vmem:[#allocation11 + $0x240] sm:$0xff]
    %v1711 = vld [vmem:[#allocation11 + $0x248] sm:$0xff]
    %v1712 = vld [vmem:[#allocation11 + $0x250] sm:$0xff]
    %v1713 = vld [vmem:[#allocation11 + $0x258] sm:$0xff]
    %v1714 = vld [vmem:[#allocation11 + $0x260] sm:$0xff]
    %v1715 = vld [vmem:[#allocation11 + $0x268] sm:$0xff]
    %v1716 = vld [vmem:[#allocation11 + $0x270] sm:$0xff]
    %v1717 = vld [vmem:[#allocation11 + $0x278] sm:$0xff]
    %v1718 = vld [vmem:[#allocation11 + $0x280] sm:$0xff]
    %v1719 = vld [vmem:[#allocation11 + $0x288] sm:$0xff]
    %v1720 = vld [vmem:[#allocation11 + $0x290] sm:$0xff]
    %v1721 = vld [vmem:[#allocation11 + $0x298] sm:$0xff]
    %v1722 = vld [vmem:[#allocation11 + $0x2a0] sm:$0xff]
    %v1723 = vld [vmem:[#allocation11 + $0x2a8] sm:$0xff]
    %v1724 = vld [vmem:[#allocation11 + $0x2b0] sm:$0xff]
    %v1725 = vld [vmem:[#allocation11 + $0x2b8] sm:$0xff]
    %v1726 = vld [vmem:[#allocation11 + $0x2c0] sm:$0xff]
    %v1727 = vld [vmem:[#allocation11 + $0x2c8] sm:$0xff]
    %v1728 = vld [vmem:[#allocation11 + $0x2d0] sm:$0xff]
    %v1729 = vld [vmem:[#allocation11 + $0x2d8] sm:$0xff]
    %v1730 = vld [vmem:[#allocation11 + $0x2e0] sm:$0xff]
    %v1731 = vld [vmem:[#allocation11 + $0x2e8] sm:$0xff]
    %v1732 = vld [vmem:[#allocation11 + $0x2f0] sm:$0xff]
    %v1733 = vld [vmem:[#allocation11 + $0x2f8] sm:$0xff]
    %v1734 = vld [vmem:[#allocation11 + $0x300] sm:$0xff]
    %v1735 = vld [vmem:[#allocation11 + $0x308] sm:$0xff]
    %v1736 = vld [vmem:[#allocation11 + $0x310] sm:$0xff]
    %v1737 = vld [vmem:[#allocation11 + $0x318] sm:$0xff]
    %v1738 = vld [vmem:[#allocation11 + $0x320] sm:$0xff]
    %v1739 = vld [vmem:[#allocation11 + $0x328] sm:$0xff]
    %v1740 = vld [vmem:[#allocation11 + $0x330] sm:$0xff]
    %v1741 = vld [vmem:[#allocation11 + $0x338] sm:$0xff]
    %v1742 = vld [vmem:[#allocation11 + $0x340] sm:$0xff]
    %v1743 = vld [vmem:[#allocation11 + $0x348] sm:$0xff]
    %v1744 = vld [vmem:[#allocation11 + $0x350] sm:$0xff]
    %v1745 = vld [vmem:[#allocation11 + $0x358] sm:$0xff]
    %v1746 = vld [vmem:[#allocation11 + $0x360] sm:$0xff]
    %v1747 = vld [vmem:[#allocation11 + $0x368] sm:$0xff]
    %v1748 = vld [vmem:[#allocation11 + $0x370] sm:$0xff]
    %v1749 = vld [vmem:[#allocation11 + $0x378] sm:$0xff]
    %v1750 = vld [vmem:[#allocation11 + $0x380] sm:$0xff]
    %v1751 = vld [vmem:[#allocation11 + $0x388] sm:$0xff]
    %v1752 = vld [vmem:[#allocation11 + $0x390] sm:$0xff]
    %v1753 = vld [vmem:[#allocation11 + $0x398] sm:$0xff]
    %v1754 = vld [vmem:[#allocation11 + $0x3a0] sm:$0xff]
    %v1755 = vld [vmem:[#allocation11 + $0x3a8] sm:$0xff]
    %v1756 = vld [vmem:[#allocation11 + $0x3b0] sm:$0xff]
    %v1757 = vld [vmem:[#allocation11 + $0x3b8] sm:$0xff]
    %v1758 = vld [vmem:[#allocation11 + $0x3c0] sm:$0xff]
    %v1759 = vld [vmem:[#allocation11 + $0x3c8] sm:$0xff]
    %v1760 = vld [vmem:[#allocation11 + $0x3d0] sm:$0xff]
    %v1761 = vld [vmem:[#allocation11 + $0x3d8] sm:$0xff]
    %v1762 = vld [vmem:[#allocation11 + $0x3e0] sm:$0xff]
    %v1763 = vld [vmem:[#allocation11 + $0x3e8] sm:$0xff]
    %v1764 = vld [vmem:[#allocation11 + $0x3f0] sm:$0xff]
    %v1765 = vld [vmem:[#allocation11 + $0x3f8] sm:$0xff]
    %v1766 = vld [vmem:[#allocation11 + $0x400] sm:$0xff]
    %v1767 = vld [vmem:[#allocation11 + $0x408] sm:$0xff]
    %v1768 = vld [vmem:[#allocation11 + $0x410] sm:$0xff]
    %v1769 = vld [vmem:[#allocation11 + $0x418] sm:$0xff]
    %v1770 = vld [vmem:[#allocation11 + $0x420] sm:$0xff]
    %v1771 = vld [vmem:[#allocation11 + $0x428] sm:$0xff]
    %v1772 = vld [vmem:[#allocation11 + $0x430] sm:$0xff]
    %v1773 = vld [vmem:[#allocation11 + $0x438] sm:$0xff]
    %v1774 = vld [vmem:[#allocation11 + $0x440] sm:$0xff]
    %v1775 = vld [vmem:[#allocation11 + $0x448] sm:$0xff]
    %v1776 = vld [vmem:[#allocation11 + $0x450] sm:$0xff]
    %v1777 = vld [vmem:[#allocation11 + $0x458] sm:$0xff]
    %v1778 = vld [vmem:[#allocation11 + $0x460] sm:$0xff]
    %v1779 = vld [vmem:[#allocation11 + $0x468] sm:$0xff]
    %v1780 = vld [vmem:[#allocation11 + $0x470] sm:$0xff]
    %v1781 = vld [vmem:[#allocation11 + $0x478] sm:$0xff]
    %v1782 = vld [vmem:[#allocation11 + $0x480] sm:$0xff]
    %v1783 = vld [vmem:[#allocation11 + $0x488] sm:$0xff]
    %v1784 = vld [vmem:[#allocation11 + $0x490] sm:$0xff]
    %v1785 = vld [vmem:[#allocation11 + $0x498] sm:$0xff]
    %v1786 = vld [vmem:[#allocation11 + $0x4a0] sm:$0xff]
    %v1787 = vld [vmem:[#allocation11 + $0x4a8] sm:$0xff]
    %v1788 = vld [vmem:[#allocation11 + $0x4b0] sm:$0xff]
    %v1789 = vld [vmem:[#allocation11 + $0x4b8] sm:$0xff]
    %v1790 = vld [vmem:[#allocation11 + $0x4c0] sm:$0xff]
    %v1791 = vld [vmem:[#allocation11 + $0x4c8] sm:$0xff]
    %v1792 = vld [vmem:[#allocation11 + $0x4d0] sm:$0xff]
    %v1793 = vld [vmem:[#allocation11 + $0x4d8] sm:$0xff]
    %v1794 = vld [vmem:[#allocation11 + $0x4e0] sm:$0xff]
    %v1795 = vld [vmem:[#allocation11 + $0x4e8] sm:$0xff]
    %v1796 = vld [vmem:[#allocation11 + $0x4f0] sm:$0xff]
    %v1797 = vld [vmem:[#allocation11 + $0x4f8] sm:$0xff]
    %v1798 = vld [vmem:[#allocation11 + $0x500] sm:$0xff]
    %v1799 = vld [vmem:[#allocation11 + $0x508] sm:$0xff]
    %v1800 = vld [vmem:[#allocation11 + $0x510] sm:$0xff]
    %v1801 = vld [vmem:[#allocation11 + $0x518] sm:$0xff]
    %v1802 = vld [vmem:[#allocation11 + $0x520] sm:$0xff]
    %v1803 = vld [vmem:[#allocation11 + $0x528] sm:$0xff]
    %v1804 = vld [vmem:[#allocation11 + $0x530] sm:$0xff]
    %v1805 = vld [vmem:[#allocation11 + $0x538] sm:$0xff]
    %v1806 = vld [vmem:[#allocation11 + $0x540] sm:$0xff]
    %v1807 = vld [vmem:[#allocation11 + $0x548] sm:$0xff]
    %v1808 = vld [vmem:[#allocation11 + $0x550] sm:$0xff]
    %v1809 = vld [vmem:[#allocation11 + $0x558] sm:$0xff]
    %v1810 = vld [vmem:[#allocation11 + $0x560] sm:$0xff]
    %v1811 = vld [vmem:[#allocation11 + $0x568] sm:$0xff]
    %v1812 = vld [vmem:[#allocation11 + $0x570] sm:$0xff]
    %v1813 = vld [vmem:[#allocation11 + $0x578] sm:$0xff]
    %v1814 = vld [vmem:[#allocation11 + $0x580] sm:$0xff]
    %v1815 = vld [vmem:[#allocation11 + $0x588] sm:$0xff]
    %v1816 = vld [vmem:[#allocation11 + $0x590] sm:$0xff]
    %v1817 = vld [vmem:[#allocation11 + $0x598] sm:$0xff]
    %v1818 = vld [vmem:[#allocation11 + $0x5a0] sm:$0xff]
    %v1819 = vld [vmem:[#allocation11 + $0x5a8] sm:$0xff]
    %v1820 = vld [vmem:[#allocation11 + $0x5b0] sm:$0xff]
    %v1821 = vld [vmem:[#allocation11 + $0x5b8] sm:$0xff]
    %v1822 = vld [vmem:[#allocation11 + $0x5c0] sm:$0xff]
    %v1823 = vld [vmem:[#allocation11 + $0x5c8] sm:$0xff]
    %v1824 = vld [vmem:[#allocation11 + $0x5d0] sm:$0xff]
    %v1825 = vld [vmem:[#allocation11 + $0x5d8] sm:$0xff]
    %v1826 = vld [vmem:[#allocation11 + $0x5e0] sm:$0xff]
    %v1827 = vld [vmem:[#allocation11 + $0x5e8] sm:$0xff]
    %v1828 = vld [vmem:[#allocation11 + $0x5f0] sm:$0xff]
    %v1829 = vld [vmem:[#allocation11 + $0x5f8] sm:$0xff]
    %v1830 = vld [vmem:[#allocation11 + $0x600] sm:$0xff]
    %v1831 = vld [vmem:[#allocation11 + $0x608] sm:$0xff]
    %v1832 = vld [vmem:[#allocation11 + $0x610] sm:$0xff]
    %v1833 = vld [vmem:[#allocation11 + $0x618] sm:$0xff]
    %v1834 = vld [vmem:[#allocation11 + $0x620] sm:$0xff]
    %v1835 = vld [vmem:[#allocation11 + $0x628] sm:$0xff]
    %v1836 = vld [vmem:[#allocation11 + $0x630] sm:$0xff]
    %v1837 = vld [vmem:[#allocation11 + $0x638] sm:$0xff]
    %v1838 = vld [vmem:[#allocation11 + $0x640] sm:$0xff]
    %v1839 = vld [vmem:[#allocation11 + $0x648] sm:$0xff]
    %v1840 = vld [vmem:[#allocation11 + $0x650] sm:$0xff]
    %v1841 = vld [vmem:[#allocation11 + $0x658] sm:$0xff]
    %v1842 = vld [vmem:[#allocation11 + $0x660] sm:$0xff]
    %v1843 = vld [vmem:[#allocation11 + $0x668] sm:$0xff]
    %v1844 = vld [vmem:[#allocation11 + $0x670] sm:$0xff]
    %v1845 = vld [vmem:[#allocation11 + $0x678] sm:$0xff]
    %v1846 = vld [vmem:[#allocation11 + $0x680] sm:$0xff]
    %v1847 = vld [vmem:[#allocation11 + $0x688] sm:$0xff]
    %v1848 = vld [vmem:[#allocation11 + $0x690] sm:$0xff]
    %v1849 = vld [vmem:[#allocation11 + $0x698] sm:$0xff]
    %v1850 = vld [vmem:[#allocation11 + $0x6a0] sm:$0xff]
    %v1851 = vld [vmem:[#allocation11 + $0x6a8] sm:$0xff]
    %v1852 = vld [vmem:[#allocation11 + $0x6b0] sm:$0xff]
    %v1853 = vld [vmem:[#allocation11 + $0x6b8] sm:$0xff]
    %v1854 = vld [vmem:[#allocation11 + $0x6c0] sm:$0xff]
    %v1855 = vld [vmem:[#allocation11 + $0x6c8] sm:$0xff]
    %v1856 = vld [vmem:[#allocation11 + $0x6d0] sm:$0xff]
    %v1857 = vld [vmem:[#allocation11 + $0x6d8] sm:$0xff]
    %v1858 = vld [vmem:[#allocation11 + $0x6e0] sm:$0xff]
    %v1859 = vld [vmem:[#allocation11 + $0x6e8] sm:$0xff]
    %v1860 = vld [vmem:[#allocation11 + $0x6f0] sm:$0xff]
    %v1861 = vld [vmem:[#allocation11 + $0x6f8] sm:$0xff]
    %v1862 = vld [vmem:[#allocation13] sm:$0xff]
    %v1864 = vlaneseq
    %v1865 = vshrl.u32 %v1864, 7
    %v1866 = vsub.s32 0, %v1865
    %v1867 = vrot.slane %v1862, %v1866
    %v1868 = vlaneseq
    %v1869 = vshrl.u32 %v1868, 7
    %v1870 = vsub.s32 1, %v1869
    %v1871 = vrot.slane %v1862, %v1870
    %v1872 = vlaneseq
    %v1873 = vshrl.u32 %v1872, 7
    %v1874 = vsub.s32 2, %v1873
    %v1875 = vrot.slane %v1862, %v1874
    %v1876 = vlaneseq
    %v1877 = vshrl.u32 %v1876, 7
    %v1878 = vsub.s32 3, %v1877
    %v1879 = vrot.slane %v1862, %v1878
    %v1880 = vlaneseq
    %v1881 = vshrl.u32 %v1880, 7
    %v1882 = vsub.s32 4, %v1881
    %v1883 = vrot.slane %v1862, %v1882
    %v1884 = vlaneseq
    %v1885 = vshrl.u32 %v1884, 7
    %v1886 = vsub.s32 5, %v1885
    %v1887 = vrot.slane %v1862, %v1886
    %v1888 = vlaneseq
    %v1889 = vshrl.u32 %v1888, 7
    %v1890 = vsub.s32 6, %v1889
    %v1891 = vrot.slane %v1862, %v1890
    %v1892 = vlaneseq
    %v1893 = vshrl.u32 %v1892, 7
    %v1894 = vsub.s32 7, %v1893
    %v1895 = vrot.slane %v1862, %v1894
    %v2128 = vunpack.c.l.b16 %v1638
    %v2129 = vunpack.c.h.b16 %v1638
    %v2130 = vunpack.c.l.b16 %v1639
    %v2131 = vunpack.c.h.b16 %v1639
    %v2132 = vunpack.c.l.b16 %v1640
    %v2133 = vunpack.c.h.b16 %v1640
    %v2134 = vunpack.c.l.b16 %v1641
    %v2135 = vunpack.c.h.b16 %v1641
    %v2136 = vunpack.c.l.b16 %v1642
    %v2137 = vunpack.c.h.b16 %v1642
    %v2138 = vunpack.c.l.b16 %v1643
    %v2139 = vunpack.c.h.b16 %v1643
    %v2140 = vunpack.c.l.b16 %v1644
    %v2141 = vunpack.c.h.b16 %v1644
    %v2142 = vunpack.c.l.b16 %v1645
    %v2143 = vunpack.c.h.b16 %v1645
    %v2144 = vunpack.c.l.b16 %v1646
    %v2145 = vunpack.c.h.b16 %v1646
    %v2146 = vunpack.c.l.b16 %v1647
    %v2147 = vunpack.c.h.b16 %v1647
    %v2148 = vunpack.c.l.b16 %v1648
    %v2149 = vunpack.c.h.b16 %v1648
    %v2150 = vunpack.c.l.b16 %v1649
    %v2151 = vunpack.c.h.b16 %v1649
    %v2152 = vunpack.c.l.b16 %v1650
    %v2153 = vunpack.c.h.b16 %v1650
    %v2154 = vunpack.c.l.b16 %v1651
    %v2155 = vunpack.c.h.b16 %v1651
    %v2156 = vunpack.c.l.b16 %v1652
    %v2157 = vunpack.c.h.b16 %v1652
    %v2158 = vunpack.c.l.b16 %v1653
    %v2159 = vunpack.c.h.b16 %v1653
    %v2160 = vunpack.c.l.b16 %v1654
    %v2161 = vunpack.c.h.b16 %v1654
    %v2162 = vunpack.c.l.b16 %v1655
    %v2163 = vunpack.c.h.b16 %v1655
    %v2164 = vunpack.c.l.b16 %v1656
    %v2165 = vunpack.c.h.b16 %v1656
    %v2166 = vunpack.c.l.b16 %v1657
    %v2167 = vunpack.c.h.b16 %v1657
    %v2168 = vunpack.c.l.b16 %v1658
    %v2169 = vunpack.c.h.b16 %v1658
    %v2170 = vunpack.c.l.b16 %v1659
    %v2171 = vunpack.c.h.b16 %v1659
    %v2172 = vunpack.c.l.b16 %v1660
    %v2173 = vunpack.c.h.b16 %v1660
    %v2174 = vunpack.c.l.b16 %v1661
    %v2175 = vunpack.c.h.b16 %v1661
    %v2176 = vunpack.c.l.b16 %v1662
    %v2177 = vunpack.c.h.b16 %v1662
    %v2178 = vunpack.c.l.b16 %v1663
    %v2179 = vunpack.c.h.b16 %v1663
    %v2180 = vunpack.c.l.b16 %v1664
    %v2181 = vunpack.c.h.b16 %v1664
    %v2182 = vunpack.c.l.b16 %v1665
    %v2183 = vunpack.c.h.b16 %v1665
    %v2184 = vunpack.c.l.b16 %v1666
    %v2185 = vunpack.c.h.b16 %v1666
    %v2186 = vunpack.c.l.b16 %v1667
    %v2187 = vunpack.c.h.b16 %v1667
    %v2188 = vunpack.c.l.b16 %v1668
    %v2189 = vunpack.c.h.b16 %v1668
    %v2190 = vunpack.c.l.b16 %v1669
    %v2191 = vunpack.c.h.b16 %v1669
    %v2192 = vunpack.c.l.b16 %v1670
    %v2193 = vunpack.c.h.b16 %v1670
    %v2194 = vunpack.c.l.b16 %v1671
    %v2195 = vunpack.c.h.b16 %v1671
    %v2196 = vunpack.c.l.b16 %v1672
    %v2197 = vunpack.c.h.b16 %v1672
    %v2198 = vunpack.c.l.b16 %v1673
    %v2199 = vunpack.c.h.b16 %v1673
    %v2200 = vunpack.c.l.b16 %v1674
    %v2201 = vunpack.c.h.b16 %v1674
    %v2202 = vunpack.c.l.b16 %v1675
    %v2203 = vunpack.c.h.b16 %v1675
    %v2204 = vunpack.c.l.b16 %v1676
    %v2205 = vunpack.c.h.b16 %v1676
    %v2206 = vunpack.c.l.b16 %v1677
    %v2207 = vunpack.c.h.b16 %v1677
    %v2208 = vunpack.c.l.b16 %v1678
    %v2209 = vunpack.c.h.b16 %v1678
    %v2210 = vunpack.c.l.b16 %v1679
    %v2211 = vunpack.c.h.b16 %v1679
    %v2212 = vunpack.c.l.b16 %v1680
    %v2213 = vunpack.c.h.b16 %v1680
    %v2214 = vunpack.c.l.b16 %v1681
    %v2215 = vunpack.c.h.b16 %v1681
    %v2216 = vunpack.c.l.b16 %v1682
    %v2217 = vunpack.c.h.b16 %v1682
    %v2218 = vunpack.c.l.b16 %v1683
    %v2219 = vunpack.c.h.b16 %v1683
    %v2220 = vunpack.c.l.b16 %v1684
    %v2221 = vunpack.c.h.b16 %v1684
    %v2222 = vunpack.c.l.b16 %v1685
    %v2223 = vunpack.c.h.b16 %v1685
    %v2224 = vunpack.c.l.b16 %v1686
    %v2225 = vunpack.c.h.b16 %v1686
    %v2226 = vunpack.c.l.b16 %v1687
    %v2227 = vunpack.c.h.b16 %v1687
    %v2228 = vunpack.c.l.b16 %v1688
    %v2229 = vunpack.c.h.b16 %v1688
    %v2230 = vunpack.c.l.b16 %v1689
    %v2231 = vunpack.c.h.b16 %v1689
    %v2232 = vunpack.c.l.b16 %v1690
    %v2233 = vunpack.c.h.b16 %v1690
    %v2234 = vunpack.c.l.b16 %v1691
    %v2235 = vunpack.c.h.b16 %v1691
    %v2236 = vunpack.c.l.b16 %v1692
    %v2237 = vunpack.c.h.b16 %v1692
    %v2238 = vunpack.c.l.b16 %v1693
    %v2239 = vunpack.c.h.b16 %v1693
    %v2240 = vunpack.c.l.b16 %v1694
    %v2241 = vunpack.c.h.b16 %v1694
    %v2242 = vunpack.c.l.b16 %v1695
    %v2243 = vunpack.c.h.b16 %v1695
    %v2244 = vunpack.c.l.b16 %v1696
    %v2245 = vunpack.c.h.b16 %v1696
    %v2246 = vunpack.c.l.b16 %v1697
    %v2247 = vunpack.c.h.b16 %v1697
    %v2248 = vunpack.c.l.b16 %v1698
    %v2249 = vunpack.c.h.b16 %v1698
    %v2250 = vunpack.c.l.b16 %v1699
    %v2251 = vunpack.c.h.b16 %v1699
    %v2252 = vunpack.c.l.b16 %v1700
    %v2253 = vunpack.c.h.b16 %v1700
    %v2254 = vunpack.c.l.b16 %v1701
    %v2255 = vunpack.c.h.b16 %v1701
    %v2256 = vunpack.c.l.b16 %v1702
    %v2257 = vunpack.c.h.b16 %v1702
    %v2258 = vunpack.c.l.b16 %v1703
    %v2259 = vunpack.c.h.b16 %v1703
    %v2260 = vunpack.c.l.b16 %v1704
    %v2261 = vunpack.c.h.b16 %v1704
    %v2262 = vunpack.c.l.b16 %v1705
    %v2263 = vunpack.c.h.b16 %v1705
    %v2264 = vunpack.c.l.b16 %v1706
    %v2265 = vunpack.c.h.b16 %v1706
    %v2266 = vunpack.c.l.b16 %v1707
    %v2267 = vunpack.c.h.b16 %v1707
    %v2268 = vunpack.c.l.b16 %v1708
    %v2269 = vunpack.c.h.b16 %v1708
    %v2270 = vunpack.c.l.b16 %v1709
    %v2271 = vunpack.c.h.b16 %v1709
    %v2272 = vunpack.c.l.b16 %v1710
    %v2273 = vunpack.c.h.b16 %v1710
    %v2274 = vunpack.c.l.b16 %v1711
    %v2275 = vunpack.c.h.b16 %v1711
    %v2276 = vunpack.c.l.b16 %v1712
    %v2277 = vunpack.c.h.b16 %v1712
    %v2278 = vunpack.c.l.b16 %v1713
    %v2279 = vunpack.c.h.b16 %v1713
    %v2280 = vunpack.c.l.b16 %v1714
    %v2281 = vunpack.c.h.b16 %v1714
    %v2282 = vunpack.c.l.b16 %v1715
    %v2283 = vunpack.c.h.b16 %v1715
    %v2284 = vunpack.c.l.b16 %v1716
    %v2285 = vunpack.c.h.b16 %v1716
    %v2286 = vunpack.c.l.b16 %v1717
    %v2287 = vunpack.c.h.b16 %v1717
    %v2288 = vunpack.c.l.b16 %v1718
    %v2289 = vunpack.c.h.b16 %v1718
    %v2290 = vunpack.c.l.b16 %v1719
    %v2291 = vunpack.c.h.b16 %v1719
    %v2292 = vunpack.c.l.b16 %v1720
    %v2293 = vunpack.c.h.b16 %v1720
    %v2294 = vunpack.c.l.b16 %v1721
    %v2295 = vunpack.c.h.b16 %v1721
    %v2296 = vunpack.c.l.b16 %v1722
    %v2297 = vunpack.c.h.b16 %v1722
    %v2298 = vunpack.c.l.b16 %v1723
    %v2299 = vunpack.c.h.b16 %v1723
    %v2300 = vunpack.c.l.b16 %v1724
    %v2301 = vunpack.c.h.b16 %v1724
    %v2302 = vunpack.c.l.b16 %v1725
    %v2303 = vunpack.c.h.b16 %v1725
    %v2304 = vunpack.c.l.b16 %v1726
    %v2305 = vunpack.c.h.b16 %v1726
    %v2306 = vunpack.c.l.b16 %v1727
    %v2307 = vunpack.c.h.b16 %v1727
    %v2308 = vunpack.c.l.b16 %v1728
    %v2309 = vunpack.c.h.b16 %v1728
    %v2310 = vunpack.c.l.b16 %v1729
    %v2311 = vunpack.c.h.b16 %v1729
    %v2312 = vunpack.c.l.b16 %v1730
    %v2313 = vunpack.c.h.b16 %v1730
    %v2314 = vunpack.c.l.b16 %v1731
    %v2315 = vunpack.c.h.b16 %v1731
    %v2316 = vunpack.c.l.b16 %v1732
    %v2317 = vunpack.c.h.b16 %v1732
    %v2318 = vunpack.c.l.b16 %v1733
    %v2319 = vunpack.c.h.b16 %v1733
    %v2320 = vunpack.c.l.b16 %v1734
    %v2321 = vunpack.c.h.b16 %v1734
    %v2322 = vunpack.c.l.b16 %v1735
    %v2323 = vunpack.c.h.b16 %v1735
    %v2324 = vunpack.c.l.b16 %v1736
    %v2325 = vunpack.c.h.b16 %v1736
    %v2326 = vunpack.c.l.b16 %v1737
    %v2327 = vunpack.c.h.b16 %v1737
    %v2328 = vunpack.c.l.b16 %v1738
    %v2329 = vunpack.c.h.b16 %v1738
    %v2330 = vunpack.c.l.b16 %v1739
    %v2331 = vunpack.c.h.b16 %v1739
    %v2332 = vunpack.c.l.b16 %v1740
    %v2333 = vunpack.c.h.b16 %v1740
    %v2334 = vunpack.c.l.b16 %v1741
    %v2335 = vunpack.c.h.b16 %v1741
    %v2336 = vunpack.c.l.b16 %v1742
    %v2337 = vunpack.c.h.b16 %v1742
    %v2338 = vunpack.c.l.b16 %v1743
    %v2339 = vunpack.c.h.b16 %v1743
    %v2340 = vunpack.c.l.b16 %v1744
    %v2341 = vunpack.c.h.b16 %v1744
    %v2342 = vunpack.c.l.b16 %v1745
    %v2343 = vunpack.c.h.b16 %v1745
    %v2344 = vunpack.c.l.b16 %v1746
    %v2345 = vunpack.c.h.b16 %v1746
    %v2346 = vunpack.c.l.b16 %v1747
    %v2347 = vunpack.c.h.b16 %v1747
    %v2348 = vunpack.c.l.b16 %v1748
    %v2349 = vunpack.c.h.b16 %v1748
    %v2350 = vunpack.c.l.b16 %v1749
    %v2351 = vunpack.c.h.b16 %v1749
    %v2352 = vunpack.c.l.b16 %v1750
    %v2353 = vunpack.c.h.b16 %v1750
    %v2354 = vunpack.c.l.b16 %v1751
    %v2355 = vunpack.c.h.b16 %v1751
    %v2356 = vunpack.c.l.b16 %v1752
    %v2357 = vunpack.c.h.b16 %v1752
    %v2358 = vunpack.c.l.b16 %v1753
    %v2359 = vunpack.c.h.b16 %v1753
    %v2360 = vunpack.c.l.b16 %v1754
    %v2361 = vunpack.c.h.b16 %v1754
    %v2362 = vunpack.c.l.b16 %v1755
    %v2363 = vunpack.c.h.b16 %v1755
    %v2364 = vunpack.c.l.b16 %v1756
    %v2365 = vunpack.c.h.b16 %v1756
    %v2366 = vunpack.c.l.b16 %v1757
    %v2367 = vunpack.c.h.b16 %v1757
    %v2368 = vunpack.c.l.b16 %v1758
    %v2369 = vunpack.c.h.b16 %v1758
    %v2370 = vunpack.c.l.b16 %v1759
    %v2371 = vunpack.c.h.b16 %v1759
    %v2372 = vunpack.c.l.b16 %v1760
    %v2373 = vunpack.c.h.b16 %v1760
    %v2374 = vunpack.c.l.b16 %v1761
    %v2375 = vunpack.c.h.b16 %v1761
    %v2376 = vunpack.c.l.b16 %v1762
    %v2377 = vunpack.c.h.b16 %v1762
    %v2378 = vunpack.c.l.b16 %v1763
    %v2379 = vunpack.c.h.b16 %v1763
    %v2380 = vunpack.c.l.b16 %v1764
    %v2381 = vunpack.c.h.b16 %v1764
    %v2382 = vunpack.c.l.b16 %v1765
    %v2383 = vunpack.c.h.b16 %v1765
    %v2384 = vunpack.c.l.b16 %v1766
    %v2385 = vunpack.c.h.b16 %v1766
    %v2386 = vunpack.c.l.b16 %v1767
    %v2387 = vunpack.c.h.b16 %v1767
    %v2388 = vunpack.c.l.b16 %v1768
    %v2389 = vunpack.c.h.b16 %v1768
    %v2390 = vunpack.c.l.b16 %v1769
    %v2391 = vunpack.c.h.b16 %v1769
    %v2392 = vunpack.c.l.b16 %v1770
    %v2393 = vunpack.c.h.b16 %v1770
    %v2394 = vunpack.c.l.b16 %v1771
    %v2395 = vunpack.c.h.b16 %v1771
    %v2396 = vunpack.c.l.b16 %v1772
    %v2397 = vunpack.c.h.b16 %v1772
    %v2398 = vunpack.c.l.b16 %v1773
    %v2399 = vunpack.c.h.b16 %v1773
    %v2400 = vunpack.c.l.b16 %v1774
    %v2401 = vunpack.c.h.b16 %v1774
    %v2402 = vunpack.c.l.b16 %v1775
    %v2403 = vunpack.c.h.b16 %v1775
    %v2404 = vunpack.c.l.b16 %v1776
    %v2405 = vunpack.c.h.b16 %v1776
    %v2406 = vunpack.c.l.b16 %v1777
    %v2407 = vunpack.c.h.b16 %v1777
    %v2408 = vunpack.c.l.b16 %v1778
    %v2409 = vunpack.c.h.b16 %v1778
    %v2410 = vunpack.c.l.b16 %v1779
    %v2411 = vunpack.c.h.b16 %v1779
    %v2412 = vunpack.c.l.b16 %v1780
    %v2413 = vunpack.c.h.b16 %v1780
    %v2414 = vunpack.c.l.b16 %v1781
    %v2415 = vunpack.c.h.b16 %v1781
    %v2416 = vunpack.c.l.b16 %v1782
    %v2417 = vunpack.c.h.b16 %v1782
    %v2418 = vunpack.c.l.b16 %v1783
    %v2419 = vunpack.c.h.b16 %v1783
    %v2420 = vunpack.c.l.b16 %v1784
    %v2421 = vunpack.c.h.b16 %v1784
    %v2422 = vunpack.c.l.b16 %v1785
    %v2423 = vunpack.c.h.b16 %v1785
    %v2424 = vunpack.c.l.b16 %v1786
    %v2425 = vunpack.c.h.b16 %v1786
    %v2426 = vunpack.c.l.b16 %v1787
    %v2427 = vunpack.c.h.b16 %v1787
    %v2428 = vunpack.c.l.b16 %v1788
    %v2429 = vunpack.c.h.b16 %v1788
    %v2430 = vunpack.c.l.b16 %v1789
    %v2431 = vunpack.c.h.b16 %v1789
    %v2432 = vunpack.c.l.b16 %v1790
    %v2433 = vunpack.c.h.b16 %v1790
    %v2434 = vunpack.c.l.b16 %v1791
    %v2435 = vunpack.c.h.b16 %v1791
    %v2436 = vunpack.c.l.b16 %v1792
    %v2437 = vunpack.c.h.b16 %v1792
    %v2438 = vunpack.c.l.b16 %v1793
    %v2439 = vunpack.c.h.b16 %v1793
    %v2440 = vunpack.c.l.b16 %v1794
    %v2441 = vunpack.c.h.b16 %v1794
    %v2442 = vunpack.c.l.b16 %v1795
    %v2443 = vunpack.c.h.b16 %v1795
    %v2444 = vunpack.c.l.b16 %v1796
    %v2445 = vunpack.c.h.b16 %v1796
    %v2446 = vunpack.c.l.b16 %v1797
    %v2447 = vunpack.c.h.b16 %v1797
    %v2448 = vunpack.c.l.b16 %v1798
    %v2449 = vunpack.c.h.b16 %v1798
    %v2450 = vunpack.c.l.b16 %v1799
    %v2451 = vunpack.c.h.b16 %v1799
    %v2452 = vunpack.c.l.b16 %v1800
    %v2453 = vunpack.c.h.b16 %v1800
    %v2454 = vunpack.c.l.b16 %v1801
    %v2455 = vunpack.c.h.b16 %v1801
    %v2456 = vunpack.c.l.b16 %v1802
    %v2457 = vunpack.c.h.b16 %v1802
    %v2458 = vunpack.c.l.b16 %v1803
    %v2459 = vunpack.c.h.b16 %v1803
    %v2460 = vunpack.c.l.b16 %v1804
    %v2461 = vunpack.c.h.b16 %v1804
    %v2462 = vunpack.c.l.b16 %v1805
    %v2463 = vunpack.c.h.b16 %v1805
    %v2464 = vunpack.c.l.b16 %v1806
    %v2465 = vunpack.c.h.b16 %v1806
    %v2466 = vunpack.c.l.b16 %v1807
    %v2467 = vunpack.c.h.b16 %v1807
    %v2468 = vunpack.c.l.b16 %v1808
    %v2469 = vunpack.c.h.b16 %v1808
    %v2470 = vunpack.c.l.b16 %v1809
    %v2471 = vunpack.c.h.b16 %v1809
    %v2472 = vunpack.c.l.b16 %v1810
    %v2473 = vunpack.c.h.b16 %v1810
    %v2474 = vunpack.c.l.b16 %v1811
    %v2475 = vunpack.c.h.b16 %v1811
    %v2476 = vunpack.c.l.b16 %v1812
    %v2477 = vunpack.c.h.b16 %v1812
    %v2478 = vunpack.c.l.b16 %v1813
    %v2479 = vunpack.c.h.b16 %v1813
    %v2480 = vunpack.c.l.b16 %v1814
    %v2481 = vunpack.c.h.b16 %v1814
    %v2482 = vunpack.c.l.b16 %v1815
    %v2483 = vunpack.c.h.b16 %v1815
    %v2484 = vunpack.c.l.b16 %v1816
    %v2485 = vunpack.c.h.b16 %v1816
    %v2486 = vunpack.c.l.b16 %v1817
    %v2487 = vunpack.c.h.b16 %v1817
    %v2488 = vunpack.c.l.b16 %v1818
    %v2489 = vunpack.c.h.b16 %v1818
    %v2490 = vunpack.c.l.b16 %v1819
    %v2491 = vunpack.c.h.b16 %v1819
    %v2492 = vunpack.c.l.b16 %v1820
    %v2493 = vunpack.c.h.b16 %v1820
    %v2494 = vunpack.c.l.b16 %v1821
    %v2495 = vunpack.c.h.b16 %v1821
    %v2496 = vunpack.c.l.b16 %v1822
    %v2497 = vunpack.c.h.b16 %v1822
    %v2498 = vunpack.c.l.b16 %v1823
    %v2499 = vunpack.c.h.b16 %v1823
    %v2500 = vunpack.c.l.b16 %v1824
    %v2501 = vunpack.c.h.b16 %v1824
    %v2502 = vunpack.c.l.b16 %v1825
    %v2503 = vunpack.c.h.b16 %v1825
    %v2504 = vunpack.c.l.b16 %v1826
    %v2505 = vunpack.c.h.b16 %v1826
    %v2506 = vunpack.c.l.b16 %v1827
    %v2507 = vunpack.c.h.b16 %v1827
    %v2508 = vunpack.c.l.b16 %v1828
    %v2509 = vunpack.c.h.b16 %v1828
    %v2510 = vunpack.c.l.b16 %v1829
    %v2511 = vunpack.c.h.b16 %v1829
    %v2512 = vunpack.c.l.b16 %v1830
    %v2513 = vunpack.c.h.b16 %v1830
    %v2514 = vunpack.c.l.b16 %v1831
    %v2515 = vunpack.c.h.b16 %v1831
    %v2516 = vunpack.c.l.b16 %v1832
    %v2517 = vunpack.c.h.b16 %v1832
    %v2518 = vunpack.c.l.b16 %v1833
    %v2519 = vunpack.c.h.b16 %v1833
    %v2520 = vunpack.c.l.b16 %v1834
    %v2521 = vunpack.c.h.b16 %v1834
    %v2522 = vunpack.c.l.b16 %v1835
    %v2523 = vunpack.c.h.b16 %v1835
    %v2524 = vunpack.c.l.b16 %v1836
    %v2525 = vunpack.c.h.b16 %v1836
    %v2526 = vunpack.c.l.b16 %v1837
    %v2527 = vunpack.c.h.b16 %v1837
    %v2528 = vunpack.c.l.b16 %v1838
    %v2529 = vunpack.c.h.b16 %v1838
    %v2530 = vunpack.c.l.b16 %v1839
    %v2531 = vunpack.c.h.b16 %v1839
    %v2532 = vunpack.c.l.b16 %v1840
    %v2533 = vunpack.c.h.b16 %v1840
    %v2534 = vunpack.c.l.b16 %v1841
    %v2535 = vunpack.c.h.b16 %v1841
    %v2536 = vunpack.c.l.b16 %v1842
    %v2537 = vunpack.c.h.b16 %v1842
    %v2538 = vunpack.c.l.b16 %v1843
    %v2539 = vunpack.c.h.b16 %v1843
    %v2540 = vunpack.c.l.b16 %v1844
    %v2541 = vunpack.c.h.b16 %v1844
    %v2542 = vunpack.c.l.b16 %v1845
    %v2543 = vunpack.c.h.b16 %v1845
    %v2544 = vunpack.c.l.b16 %v1846
    %v2545 = vunpack.c.h.b16 %v1846
    %v2546 = vunpack.c.l.b16 %v1847
    %v2547 = vunpack.c.h.b16 %v1847
    %v2548 = vunpack.c.l.b16 %v1848
    %v2549 = vunpack.c.h.b16 %v1848
    %v2550 = vunpack.c.l.b16 %v1849
    %v2551 = vunpack.c.h.b16 %v1849
    %v2552 = vunpack.c.l.b16 %v1850
    %v2553 = vunpack.c.h.b16 %v1850
    %v2554 = vunpack.c.l.b16 %v1851
    %v2555 = vunpack.c.h.b16 %v1851
    %v2556 = vunpack.c.l.b16 %v1852
    %v2557 = vunpack.c.h.b16 %v1852
    %v2558 = vunpack.c.l.b16 %v1853
    %v2559 = vunpack.c.h.b16 %v1853
    %v2560 = vunpack.c.l.b16 %v1854
    %v2561 = vunpack.c.h.b16 %v1854
    %v2562 = vunpack.c.l.b16 %v1855
    %v2563 = vunpack.c.h.b16 %v1855
    %v2564 = vunpack.c.l.b16 %v1856
    %v2565 = vunpack.c.h.b16 %v1856
    %v2566 = vunpack.c.l.b16 %v1857
    %v2567 = vunpack.c.h.b16 %v1857
    %v2568 = vunpack.c.l.b16 %v1858
    %v2569 = vunpack.c.h.b16 %v1858
    %v2570 = vunpack.c.l.b16 %v1859
    %v2571 = vunpack.c.h.b16 %v1859
    %v2572 = vunpack.c.l.b16 %v1860
    %v2573 = vunpack.c.h.b16 %v1860
    %v2574 = vunpack.c.l.b16 %v1861
    %v2575 = vunpack.c.h.b16 %v1861
    %v2576 = vpack.c.b16 %v2136, %v2128
    %v2577 = vpack.c.b16 %v2137, %v2129
    %v2578 = vpack.c.b16 %v2138, %v2130
    %v2579 = vpack.c.b16 %v2139, %v2131
    %v2580 = vpack.c.b16 %v2140, %v2132
    %v2581 = vpack.c.b16 %v2141, %v2133
    %v2582 = vpack.c.b16 %v2142, %v2134
    %v2583 = vpack.c.b16 %v2143, %v2135
    %v2584 = vpack.c.b16 %v2152, %v2144
    %v2585 = vpack.c.b16 %v2153, %v2145
    %v2586 = vpack.c.b16 %v2154, %v2146
    %v2587 = vpack.c.b16 %v2155, %v2147
    %v2588 = vpack.c.b16 %v2156, %v2148
    %v2589 = vpack.c.b16 %v2157, %v2149
    %v2590 = vpack.c.b16 %v2158, %v2150
    %v2591 = vpack.c.b16 %v2159, %v2151
    %v2592 = vpack.c.b16 %v2168, %v2160
    %v2593 = vpack.c.b16 %v2169, %v2161
    %v2594 = vpack.c.b16 %v2170, %v2162
    %v2595 = vpack.c.b16 %v2171, %v2163
    %v2596 = vpack.c.b16 %v2172, %v2164
    %v2597 = vpack.c.b16 %v2173, %v2165
    %v2598 = vpack.c.b16 %v2174, %v2166
    %v2599 = vpack.c.b16 %v2175, %v2167
    %v2600 = vpack.c.b16 %v2184, %v2176
    %v2601 = vpack.c.b16 %v2185, %v2177
    %v2602 = vpack.c.b16 %v2186, %v2178
    %v2603 = vpack.c.b16 %v2187, %v2179
    %v2604 = vpack.c.b16 %v2188, %v2180
    %v2605 = vpack.c.b16 %v2189, %v2181
    %v2606 = vpack.c.b16 %v2190, %v2182
    %v2607 = vpack.c.b16 %v2191, %v2183
    %v2608 = vpack.c.b16 %v2200, %v2192
    %v2609 = vpack.c.b16 %v2201, %v2193
    %v2610 = vpack.c.b16 %v2202, %v2194
    %v2611 = vpack.c.b16 %v2203, %v2195
    %v2612 = vpack.c.b16 %v2204, %v2196
    %v2613 = vpack.c.b16 %v2205, %v2197
    %v2614 = vpack.c.b16 %v2206, %v2198
    %v2615 = vpack.c.b16 %v2207, %v2199
    %v2616 = vpack.c.b16 %v2216, %v2208
    %v2617 = vpack.c.b16 %v2217, %v2209
    %v2618 = vpack.c.b16 %v2218, %v2210
    %v2619 = vpack.c.b16 %v2219, %v2211
    %v2620 = vpack.c.b16 %v2220, %v2212
    %v2621 = vpack.c.b16 %v2221, %v2213
    %v2622 = vpack.c.b16 %v2222, %v2214
    %v2623 = vpack.c.b16 %v2223, %v2215
    %v2624 = vpack.c.b16 %v2232, %v2224
    %v2625 = vpack.c.b16 %v2233, %v2225
    %v2626 = vpack.c.b16 %v2234, %v2226
    %v2627 = vpack.c.b16 %v2235, %v2227
    %v2628 = vpack.c.b16 %v2236, %v2228
    %v2629 = vpack.c.b16 %v2237, %v2229
    %v2630 = vpack.c.b16 %v2238, %v2230
    %v2631 = vpack.c.b16 %v2239, %v2231
    %v2632 = vpack.c.b16 %v2248, %v2240
    %v2633 = vpack.c.b16 %v2249, %v2241
    %v2634 = vpack.c.b16 %v2250, %v2242
    %v2635 = vpack.c.b16 %v2251, %v2243
    %v2636 = vpack.c.b16 %v2252, %v2244
    %v2637 = vpack.c.b16 %v2253, %v2245
    %v2638 = vpack.c.b16 %v2254, %v2246
    %v2639 = vpack.c.b16 %v2255, %v2247
    %v2640 = vpack.c.b16 %v2264, %v2256
    %v2641 = vpack.c.b16 %v2265, %v2257
    %v2642 = vpack.c.b16 %v2266, %v2258
    %v2643 = vpack.c.b16 %v2267, %v2259
    %v2644 = vpack.c.b16 %v2268, %v2260
    %v2645 = vpack.c.b16 %v2269, %v2261
    %v2646 = vpack.c.b16 %v2270, %v2262
    %v2647 = vpack.c.b16 %v2271, %v2263
    %v2648 = vpack.c.b16 %v2280, %v2272
    %v2649 = vpack.c.b16 %v2281, %v2273
    %v2650 = vpack.c.b16 %v2282, %v2274
    %v2651 = vpack.c.b16 %v2283, %v2275
    %v2652 = vpack.c.b16 %v2284, %v2276
    %v2653 = vpack.c.b16 %v2285, %v2277
    %v2654 = vpack.c.b16 %v2286, %v2278
    %v2655 = vpack.c.b16 %v2287, %v2279
    %v2656 = vpack.c.b16 %v2296, %v2288
    %v2657 = vpack.c.b16 %v2297, %v2289
    %v2658 = vpack.c.b16 %v2298, %v2290
    %v2659 = vpack.c.b16 %v2299, %v2291
    %v2660 = vpack.c.b16 %v2300, %v2292
    %v2661 = vpack.c.b16 %v2301, %v2293
    %v2662 = vpack.c.b16 %v2302, %v2294
    %v2663 = vpack.c.b16 %v2303, %v2295
    %v2664 = vpack.c.b16 %v2312, %v2304
    %v2665 = vpack.c.b16 %v2313, %v2305
    %v2666 = vpack.c.b16 %v2314, %v2306
    %v2667 = vpack.c.b16 %v2315, %v2307
    %v2668 = vpack.c.b16 %v2316, %v2308
    %v2669 = vpack.c.b16 %v2317, %v2309
    %v2670 = vpack.c.b16 %v2318, %v2310
    %v2671 = vpack.c.b16 %v2319, %v2311
    %v2672 = vpack.c.b16 %v2328, %v2320
    %v2673 = vpack.c.b16 %v2329, %v2321
    %v2674 = vpack.c.b16 %v2330, %v2322
    %v2675 = vpack.c.b16 %v2331, %v2323
    %v2676 = vpack.c.b16 %v2332, %v2324
    %v2677 = vpack.c.b16 %v2333, %v2325
    %v2678 = vpack.c.b16 %v2334, %v2326
    %v2679 = vpack.c.b16 %v2335, %v2327
    %v2680 = vpack.c.b16 %v2344, %v2336
    %v2681 = vpack.c.b16 %v2345, %v2337
    %v2682 = vpack.c.b16 %v2346, %v2338
    %v2683 = vpack.c.b16 %v2347, %v2339
    %v2684 = vpack.c.b16 %v2348, %v2340
    %v2685 = vpack.c.b16 %v2349, %v2341
    %v2686 = vpack.c.b16 %v2350, %v2342
    %v2687 = vpack.c.b16 %v2351, %v2343
    %v2688 = vpack.c.b16 %v2360, %v2352
    %v2689 = vpack.c.b16 %v2361, %v2353
    %v2690 = vpack.c.b16 %v2362, %v2354
    %v2691 = vpack.c.b16 %v2363, %v2355
    %v2692 = vpack.c.b16 %v2364, %v2356
    %v2693 = vpack.c.b16 %v2365, %v2357
    %v2694 = vpack.c.b16 %v2366, %v2358
    %v2695 = vpack.c.b16 %v2367, %v2359
    %v2696 = vpack.c.b16 %v2376, %v2368
    %v2697 = vpack.c.b16 %v2377, %v2369
    %v2698 = vpack.c.b16 %v2378, %v2370
    %v2699 = vpack.c.b16 %v2379, %v2371
    %v2700 = vpack.c.b16 %v2380, %v2372
    %v2701 = vpack.c.b16 %v2381, %v2373
    %v2702 = vpack.c.b16 %v2382, %v2374
    %v2703 = vpack.c.b16 %v2383, %v2375
    %v2704 = vpack.c.b16 %v2392, %v2384
    %v2705 = vpack.c.b16 %v2393, %v2385
    %v2706 = vpack.c.b16 %v2394, %v2386
    %v2707 = vpack.c.b16 %v2395, %v2387
    %v2708 = vpack.c.b16 %v2396, %v2388
    %v2709 = vpack.c.b16 %v2397, %v2389
    %v2710 = vpack.c.b16 %v2398, %v2390
    %v2711 = vpack.c.b16 %v2399, %v2391
    %v2712 = vpack.c.b16 %v2408, %v2400
    %v2713 = vpack.c.b16 %v2409, %v2401
    %v2714 = vpack.c.b16 %v2410, %v2402
    %v2715 = vpack.c.b16 %v2411, %v2403
    %v2716 = vpack.c.b16 %v2412, %v2404
    %v2717 = vpack.c.b16 %v2413, %v2405
    %v2718 = vpack.c.b16 %v2414, %v2406
    %v2719 = vpack.c.b16 %v2415, %v2407
    %v2720 = vpack.c.b16 %v2424, %v2416
    %v2721 = vpack.c.b16 %v2425, %v2417
    %v2722 = vpack.c.b16 %v2426, %v2418
    %v2723 = vpack.c.b16 %v2427, %v2419
    %v2724 = vpack.c.b16 %v2428, %v2420
    %v2725 = vpack.c.b16 %v2429, %v2421
    %v2726 = vpack.c.b16 %v2430, %v2422
    %v2727 = vpack.c.b16 %v2431, %v2423
    %v2728 = vpack.c.b16 %v2440, %v2432
    %v2729 = vpack.c.b16 %v2441, %v2433
    %v2730 = vpack.c.b16 %v2442, %v2434
    %v2731 = vpack.c.b16 %v2443, %v2435
    %v2732 = vpack.c.b16 %v2444, %v2436
    %v2733 = vpack.c.b16 %v2445, %v2437
    %v2734 = vpack.c.b16 %v2446, %v2438
    %v2735 = vpack.c.b16 %v2447, %v2439
    %v2736 = vpack.c.b16 %v2456, %v2448
    %v2737 = vpack.c.b16 %v2457, %v2449
    %v2738 = vpack.c.b16 %v2458, %v2450
    %v2739 = vpack.c.b16 %v2459, %v2451
    %v2740 = vpack.c.b16 %v2460, %v2452
    %v2741 = vpack.c.b16 %v2461, %v2453
    %v2742 = vpack.c.b16 %v2462, %v2454
    %v2743 = vpack.c.b16 %v2463, %v2455
    %v2744 = vpack.c.b16 %v2472, %v2464
    %v2745 = vpack.c.b16 %v2473, %v2465
    %v2746 = vpack.c.b16 %v2474, %v2466
    %v2747 = vpack.c.b16 %v2475, %v2467
    %v2748 = vpack.c.b16 %v2476, %v2468
    %v2749 = vpack.c.b16 %v2477, %v2469
    %v2750 = vpack.c.b16 %v2478, %v2470
    %v2751 = vpack.c.b16 %v2479, %v2471
    %v2752 = vpack.c.b16 %v2488, %v2480
    %v2753 = vpack.c.b16 %v2489, %v2481
    %v2754 = vpack.c.b16 %v2490, %v2482
    %v2755 = vpack.c.b16 %v2491, %v2483
    %v2756 = vpack.c.b16 %v2492, %v2484
    %v2757 = vpack.c.b16 %v2493, %v2485
    %v2758 = vpack.c.b16 %v2494, %v2486
    %v2759 = vpack.c.b16 %v2495, %v2487
    %v2760 = vpack.c.b16 %v2504, %v2496
    %v2761 = vpack.c.b16 %v2505, %v2497
    %v2762 = vpack.c.b16 %v2506, %v2498
    %v2763 = vpack.c.b16 %v2507, %v2499
    %v2764 = vpack.c.b16 %v2508, %v2500
    %v2765 = vpack.c.b16 %v2509, %v2501
    %v2766 = vpack.c.b16 %v2510, %v2502
    %v2767 = vpack.c.b16 %v2511, %v2503
    %v2768 = vpack.c.b16 %v2520, %v2512
    %v2769 = vpack.c.b16 %v2521, %v2513
    %v2770 = vpack.c.b16 %v2522, %v2514
    %v2771 = vpack.c.b16 %v2523, %v2515
    %v2772 = vpack.c.b16 %v2524, %v2516
    %v2773 = vpack.c.b16 %v2525, %v2517
    %v2774 = vpack.c.b16 %v2526, %v2518
    %v2775 = vpack.c.b16 %v2527, %v2519
    %v2776 = vpack.c.b16 %v2536, %v2528
    %v2777 = vpack.c.b16 %v2537, %v2529
    %v2778 = vpack.c.b16 %v2538, %v2530
    %v2779 = vpack.c.b16 %v2539, %v2531
    %v2780 = vpack.c.b16 %v2540, %v2532
    %v2781 = vpack.c.b16 %v2541, %v2533
    %v2782 = vpack.c.b16 %v2542, %v2534
    %v2783 = vpack.c.b16 %v2543, %v2535
    %v2784 = vpack.c.b16 %v2552, %v2544
    %v2785 = vpack.c.b16 %v2553, %v2545
    %v2786 = vpack.c.b16 %v2554, %v2546
    %v2787 = vpack.c.b16 %v2555, %v2547
    %v2788 = vpack.c.b16 %v2556, %v2548
    %v2789 = vpack.c.b16 %v2557, %v2549
    %v2790 = vpack.c.b16 %v2558, %v2550
    %v2791 = vpack.c.b16 %v2559, %v2551
    %v2792 = vpack.c.b16 %v2568, %v2560
    %v2793 = vpack.c.b16 %v2569, %v2561
    %v2794 = vpack.c.b16 %v2570, %v2562
    %v2795 = vpack.c.b16 %v2571, %v2563
    %v2796 = vpack.c.b16 %v2572, %v2564
    %v2797 = vpack.c.b16 %v2573, %v2565
    %v2798 = vpack.c.b16 %v2574, %v2566
    %v2799 = vpack.c.b16 %v2575, %v2567
    %v3025 = vsel %vm337, %v1637, 0
    %3027 = vmatprep.subr.bf16.mxu0 %v2577
    %3028 = vmatpush1.bf16.msra.mxu0 %v2576
    %3029 = vmatprep.subr.bf16.mxu0 %v2585
    %3030 = vmatpush1.bf16.msra.mxu0 %v2584
    %3031 = vmatprep.subr.bf16.mxu0 %v2593
    %3032 = vmatpush1.bf16.msra.mxu0 %v2592
    %3033 = vmatprep.subr.bf16.mxu0 %v2601
    %3034 = vmatpush1.bf16.msra.mxu0 %v2600
    %3035 = vmatprep.subr.bf16.mxu0 %v2609
    %3036 = vmatpush1.bf16.msra.mxu0 %v2608
    %3037 = vmatprep.subr.bf16.mxu0 %v2617
    %3038 = vmatpush1.bf16.msra.mxu0 %v2616
    %3039 = vmatprep.subr.bf16.mxu0 %v2625
    %3040 = vmatpush1.bf16.msra.mxu0 %v2624
    %3041 = vmatprep.subr.bf16.mxu0 %v2633
    %3042 = vmatpush1.bf16.msra.mxu0 %v2632
    %3043 = vmatprep.subr.bf16.mxu0 %v2641
    %3044 = vmatpush1.bf16.msra.mxu0 %v2640
    %3045 = vmatprep.subr.bf16.mxu0 %v2649
    %3046 = vmatpush1.bf16.msra.mxu0 %v2648
    %3047 = vmatprep.subr.bf16.mxu0 %v2657
    %3048 = vmatpush1.bf16.msra.mxu0 %v2656
    %3049 = vmatprep.subr.bf16.mxu0 %v2665
    %3050 = vmatpush1.bf16.msra.mxu0 %v2664
    %3051 = vmatprep.subr.bf16.mxu0 %v2673
    %3052 = vmatpush1.bf16.msra.mxu0 %v2672
    %3053 = vmatprep.subr.bf16.mxu0 %v2681
    %3054 = vmatpush1.bf16.msra.mxu0 %v2680
    %3055 = vmatprep.subr.bf16.mxu0 %v2689
    %3056 = vmatpush1.bf16.msra.mxu0 %v2688
    %3057 = vmatprep.subr.bf16.mxu0 %v2697
    %3058 = vmatpush1.bf16.msra.mxu0 %v2696
    %3059 = vmatprep.mubr.bf16.mxu0 %v1635
    %3060 = vmatmul.mubr.bf16.gmra.mrb[0].mxu0 %v1634
    %v3061 = vpop.f32.mrb[0].mxu0
    %v3062 = vadd.f32 %v1867, %v3061
    %v3063 = vpop.f32.mrb[0].mxu0
    %v3064 = vadd.f32 %v1871, %v3063
    %v3065 = vpop.f32.mrb[0].mxu0
    %v3066 = vpop.f32.mrb[0].mxu0
    %3067 = vdwg.mxu0
    %3068 = vmatprep.subr.bf16.mxu0 %v2705
    %3069 = vmatpush1.bf16.msra.mxu0 %v2704
    %3070 = vmatprep.subr.bf16.mxu0 %v2713
    %3071 = vmatpush1.bf16.msra.mxu0 %v2712
    %3072 = vmatprep.subr.bf16.mxu0 %v2721
    %3073 = vmatpush1.bf16.msra.mxu0 %v2720
    %3074 = vmatprep.subr.bf16.mxu0 %v2729
    %3075 = vmatpush1.bf16.msra.mxu0 %v2728
    %3076 = vmatprep.subr.bf16.mxu0 %v2737
    %3077 = vmatpush1.bf16.msra.mxu0 %v2736
    %3078 = vmatprep.subr.bf16.mxu0 %v2745
    %3079 = vmatpush1.bf16.msra.mxu0 %v2744
    %3080 = vmatprep.subr.bf16.mxu0 %v2753
    %3081 = vmatpush1.bf16.msra.mxu0 %v2752
    %3082 = vmatprep.subr.bf16.mxu0 %v2761
    %3083 = vmatpush1.bf16.msra.mxu0 %v2760
    %3084 = vmatprep.subr.bf16.mxu0 %v2769
    %3085 = vmatpush1.bf16.msra.mxu0 %v2768
    %3086 = vmatprep.subr.bf16.mxu0 %v2777
    %3087 = vmatpush1.bf16.msra.mxu0 %v2776
    %3088 = vmatprep.subr.bf16.mxu0 %v2785
    %3089 = vmatpush1.bf16.msra.mxu0 %v2784
    %3090 = vmatprep.subr.bf16.mxu0 %v2793
    %3091 = vmatpush1.bf16.msra.mxu0 %v2792
    %3092 = vmatprep.subr.bf16.mxu0 0
    %3093 = vmatpush1.bf16.msra.mxu0 0
    %3094 = vmatprep.subr.bf16.mxu0 0
    %3095 = vmatpush1.bf16.msra.mxu0 0
    %3096 = vmatprep.subr.bf16.mxu0 0
    %3097 = vmatpush1.bf16.msra.mxu0 0
    %3098 = vmatprep.subr.bf16.mxu0 0
    %3099 = vmatpush1.bf16.msra.mxu0 0
    %3100 = vmatprep.mubr.bf16.mxu0 %v3025
    %3101 = vmatmul.mubr.bf16.gmra.mrb[0].mxu0 %v1636
    %v3102 = vpop.f32.mrb[0].mxu0
    %v3103 = vadd.f32 %v3062, %v3102
    %v3104 = vpop.f32.mrb[0].mxu0
    %v3105 = vadd.f32 %v3064, %v3104
    %v3106 = vpop.f32.mrb[0].mxu0
    %v3107 = vpop.f32.mrb[0].mxu0
    %3108 = vdwg.mxu0
    %3109 = vmatprep.subr.bf16.mxu0 %v2579
    %3110 = vmatpush1.bf16.msra.mxu0 %v2578
    %3111 = vmatprep.subr.bf16.mxu0 %v2587
    %3112 = vmatpush1.bf16.msra.mxu0 %v2586
    %3113 = vmatprep.subr.bf16.mxu0 %v2595
    %3114 = vmatpush1.bf16.msra.mxu0 %v2594
    %3115 = vmatprep.subr.bf16.mxu0 %v2603
    %3116 = vmatpush1.bf16.msra.mxu0 %v2602
    %3117 = vmatprep.subr.bf16.mxu0 %v2611
    %3118 = vmatpush1.bf16.msra.mxu0 %v2610
    %3119 = vmatprep.subr.bf16.mxu0 %v2619
    %3120 = vmatpush1.bf16.msra.mxu0 %v2618
    %3121 = vmatprep.subr.bf16.mxu0 %v2627
    %3122 = vmatpush1.bf16.msra.mxu0 %v2626
    %3123 = vmatprep.subr.bf16.mxu0 %v2635
    %3124 = vmatpush1.bf16.msra.mxu0 %v2634
    %3125 = vmatprep.subr.bf16.mxu0 %v2643
    %3126 = vmatpush1.bf16.msra.mxu0 %v2642
    %3127 = vmatprep.subr.bf16.mxu0 %v2651
    %3128 = vmatpush1.bf16.msra.mxu0 %v2650
    %3129 = vmatprep.subr.bf16.mxu0 %v2659
    %3130 = vmatpush1.bf16.msra.mxu0 %v2658
    %3131 = vmatprep.subr.bf16.mxu0 %v2667
    %3132 = vmatpush1.bf16.msra.mxu0 %v2666
    %3133 = vmatprep.subr.bf16.mxu0 %v2675
    %3134 = vmatpush1.bf16.msra.mxu0 %v2674
    %3135 = vmatprep.subr.bf16.mxu0 %v2683
    %3136 = vmatpush1.bf16.msra.mxu0 %v2682
    %3137 = vmatprep.subr.bf16.mxu0 %v2691
    %3138 = vmatpush1.bf16.msra.mxu0 %v2690
    %3139 = vmatprep.subr.bf16.mxu0 %v2699
    %3140 = vmatpush1.bf16.msra.mxu0 %v2698
    %3141 = vmatprep.mubr.bf16.mxu0 %v1635
    %3142 = vmatmul.mubr.bf16.gmra.mrb[0].mxu0 %v1634
    %v3143 = vpop.f32.mrb[0].mxu0
    %v3144 = vadd.f32 %v1875, %v3143
    %v3145 = vpop.f32.mrb[0].mxu0
    %v3146 = vadd.f32 %v1879, %v3145
    %v3147 = vpop.f32.mrb[0].mxu0
    %v3148 = vpop.f32.mrb[0].mxu0
    %3149 = vdwg.mxu0
    %3150 = vmatprep.subr.bf16.mxu0 %v2707
    %3151 = vmatpush1.bf16.msra.mxu0 %v2706
    %3152 = vmatprep.subr.bf16.mxu0 %v2715
    %3153 = vmatpush1.bf16.msra.mxu0 %v2714
    %3154 = vmatprep.subr.bf16.mxu0 %v2723
    %3155 = vmatpush1.bf16.msra.mxu0 %v2722
    %3156 = vmatprep.subr.bf16.mxu0 %v2731
    %3157 = vmatpush1.bf16.msra.mxu0 %v2730
    %3158 = vmatprep.subr.bf16.mxu0 %v2739
    %3159 = vmatpush1.bf16.msra.mxu0 %v2738
    %3160 = vmatprep.subr.bf16.mxu0 %v2747
    %3161 = vmatpush1.bf16.msra.mxu0 %v2746
    %3162 = vmatprep.subr.bf16.mxu0 %v2755
    %3163 = vmatpush1.bf16.msra.mxu0 %v2754
    %3164 = vmatprep.subr.bf16.mxu0 %v2763
    %3165 = vmatpush1.bf16.msra.mxu0 %v2762
    %3166 = vmatprep.subr.bf16.mxu0 %v2771
    %3167 = vmatpush1.bf16.msra.mxu0 %v2770
    %3168 = vmatprep.subr.bf16.mxu0 %v2779
    %3169 = vmatpush1.bf16.msra.mxu0 %v2778
    %3170 = vmatprep.subr.bf16.mxu0 %v2787
    %3171 = vmatpush1.bf16.msra.mxu0 %v2786
    %3172 = vmatprep.subr.bf16.mxu0 %v2795
    %3173 = vmatpush1.bf16.msra.mxu0 %v2794
    %3174 = vmatprep.subr.bf16.mxu0 0
    %3175 = vmatpush1.bf16.msra.mxu0 0
    %3176 = vmatprep.subr.bf16.mxu0 0
    %3177 = vmatpush1.bf16.msra.mxu0 0
    %3178 = vmatprep.subr.bf16.mxu0 0
    %3179 = vmatpush1.bf16.msra.mxu0 0
    %3180 = vmatprep.subr.bf16.mxu0 0
    %3181 = vmatpush1.bf16.msra.mxu0 0
    %3182 = vmatprep.mubr.bf16.mxu0 %v3025
    %3183 = vmatmul.mubr.bf16.gmra.mrb[0].mxu0 %v1636
    %v3184 = vpop.f32.mrb[0].mxu0
    %v3185 = vadd.f32 %v3144, %v3184
    %v3186 = vpop.f32.mrb[0].mxu0
    %v3187 = vadd.f32 %v3146, %v3186
    %v3188 = vpop.f32.mrb[0].mxu0
    %v3189 = vpop.f32.mrb[0].mxu0
    %3190 = vdwg.mxu0
    %3191 = vmatprep.subr.bf16.mxu0 %v2581
    %3192 = vmatpush1.bf16.msra.mxu0 %v2580
    %3193 = vmatprep.subr.bf16.mxu0 %v2589
    %3194 = vmatpush1.bf16.msra.mxu0 %v2588
    %3195 = vmatprep.subr.bf16.mxu0 %v2597
    %3196 = vmatpush1.bf16.msra.mxu0 %v2596
    %3197 = vmatprep.subr.bf16.mxu0 %v2605
    %3198 = vmatpush1.bf16.msra.mxu0 %v2604
    %3199 = vmatprep.subr.bf16.mxu0 %v2613
    %3200 = vmatpush1.bf16.msra.mxu0 %v2612
    %3201 = vmatprep.subr.bf16.mxu0 %v2621
    %3202 = vmatpush1.bf16.msra.mxu0 %v2620
    %3203 = vmatprep.subr.bf16.mxu0 %v2629
    %3204 = vmatpush1.bf16.msra.mxu0 %v2628
    %3205 = vmatprep.subr.bf16.mxu0 %v2637
    %3206 = vmatpush1.bf16.msra.mxu0 %v2636
    %3207 = vmatprep.subr.bf16.mxu0 %v2645
    %3208 = vmatpush1.bf16.msra.mxu0 %v2644
    %3209 = vmatprep.subr.bf16.mxu0 %v2653
    %3210 = vmatpush1.bf16.msra.mxu0 %v2652
    %3211 = vmatprep.subr.bf16.mxu0 %v2661
    %3212 = vmatpush1.bf16.msra.mxu0 %v2660
    %3213 = vmatprep.subr.bf16.mxu0 %v2669
    %3214 = vmatpush1.bf16.msra.mxu0 %v2668
    %3215 = vmatprep.subr.bf16.mxu0 %v2677
    %3216 = vmatpush1.bf16.msra.mxu0 %v2676
    %3217 = vmatprep.subr.bf16.mxu0 %v2685
    %3218 = vmatpush1.bf16.msra.mxu0 %v2684
    %3219 = vmatprep.subr.bf16.mxu0 %v2693
    %3220 = vmatpush1.bf16.msra.mxu0 %v2692
    %3221 = vmatprep.subr.bf16.mxu0 %v2701
    %3222 = vmatpush1.bf16.msra.mxu0 %v2700
    %3223 = vmatprep.mubr.bf16.mxu0 %v1635
    %3224 = vmatmul.mubr.bf16.gmra.mrb[0].mxu0 %v1634
    %v3225 = vpop.f32.mrb[0].mxu0
    %v3226 = vadd.f32 %v1883, %v3225
    %v3227 = vpop.f32.mrb[0].mxu0
    %v3228 = vadd.f32 %v1887, %v3227
    %v3229 = vpop.f32.mrb[0].mxu0
    %v3230 = vpop.f32.mrb[0].mxu0
    %3231 = vdwg.mxu0
    %3232 = vmatprep.subr.bf16.mxu0 %v2709
    %3233 = vmatpush1.bf16.msra.mxu0 %v2708
    %3234 = vmatprep.subr.bf16.mxu0 %v2717
    %3235 = vmatpush1.bf16.msra.mxu0 %v2716
    %3236 = vmatprep.subr.bf16.mxu0 %v2725
    %3237 = vmatpush1.bf16.msra.mxu0 %v2724
    %3238 = vmatprep.subr.bf16.mxu0 %v2733
    %3239 = vmatpush1.bf16.msra.mxu0 %v2732
    %3240 = vmatprep.subr.bf16.mxu0 %v2741
    %3241 = vmatpush1.bf16.msra.mxu0 %v2740
    %3242 = vmatprep.subr.bf16.mxu0 %v2749
    %3243 = vmatpush1.bf16.msra.mxu0 %v2748
    %3244 = vmatprep.subr.bf16.mxu0 %v2757
    %3245 = vmatpush1.bf16.msra.mxu0 %v2756
    %3246 = vmatprep.subr.bf16.mxu0 %v2765
    %3247 = vmatpush1.bf16.msra.mxu0 %v2764
    %3248 = vmatprep.subr.bf16.mxu0 %v2773
    %3249 = vmatpush1.bf16.msra.mxu0 %v2772
    %3250 = vmatprep.subr.bf16.mxu0 %v2781
    %3251 = vmatpush1.bf16.msra.mxu0 %v2780
    %3252 = vmatprep.subr.bf16.mxu0 %v2789
    %3253 = vmatpush1.bf16.msra.mxu0 %v2788
    %3254 = vmatprep.subr.bf16.mxu0 %v2797
    %3255 = vmatpush1.bf16.msra.mxu0 %v2796
    %3256 = vmatprep.subr.bf16.mxu0 0
    %3257 = vmatpush1.bf16.msra.mxu0 0
    %3258 = vmatprep.subr.bf16.mxu0 0
    %3259 = vmatpush1.bf16.msra.mxu0 0
    %3260 = vmatprep.subr.bf16.mxu0 0
    %3261 = vmatpush1.bf16.msra.mxu0 0
    %3262 = vmatprep.subr.bf16.mxu0 0
    %3263 = vmatpush1.bf16.msra.mxu0 0
    %3264 = vmatprep.mubr.bf16.mxu0 %v3025
    %3265 = vmatmul.mubr.bf16.gmra.mrb[0].mxu0 %v1636
    %v3266 = vpop.f32.mrb[0].mxu0
    %v3267 = vadd.f32 %v3226, %v3266
    %v3268 = vpop.f32.mrb[0].mxu0
    %v3269 = vadd.f32 %v3228, %v3268
    %v3270 = vpop.f32.mrb[0].mxu0
    %v3271 = vpop.f32.mrb[0].mxu0
    %3272 = vdwg.mxu0
    %3273 = vmatprep.subr.bf16.mxu0 %v2583
    %3274 = vmatpush1.bf16.msra.mxu0 %v2582
    %3275 = vmatprep.subr.bf16.mxu0 %v2591
    %3276 = vmatpush1.bf16.msra.mxu0 %v2590
    %3277 = vmatprep.subr.bf16.mxu0 %v2599
    %3278 = vmatpush1.bf16.msra.mxu0 %v2598
    %3279 = vmatprep.subr.bf16.mxu0 %v2607
    %3280 = vmatpush1.bf16.msra.mxu0 %v2606
    %3281 = vmatprep.subr.bf16.mxu0 %v2615
    %3282 = vmatpush1.bf16.msra.mxu0 %v2614
    %3283 = vmatprep.subr.bf16.mxu0 %v2623
    %3284 = vmatpush1.bf16.msra.mxu0 %v2622
    %3285 = vmatprep.subr.bf16.mxu0 %v2631
    %3286 = vmatpush1.bf16.msra.mxu0 %v2630
    %3287 = vmatprep.subr.bf16.mxu0 %v2639
    %3288 = vmatpush1.bf16.msra.mxu0 %v2638
    %3289 = vmatprep.subr.bf16.mxu0 %v2647
    %3290 = vmatpush1.bf16.msra.mxu0 %v2646
    %3291 = vmatprep.subr.bf16.mxu0 %v2655
    %3292 = vmatpush1.bf16.msra.mxu0 %v2654
    %3293 = vmatprep.subr.bf16.mxu0 %v2663
    %3294 = vmatpush1.bf16.msra.mxu0 %v2662
    %3295 = vmatprep.subr.bf16.mxu0 %v2671
    %3296 = vmatpush1.bf16.msra.mxu0 %v2670
    %3297 = vmatprep.subr.bf16.mxu0 %v2679
    %3298 = vmatpush1.bf16.msra.mxu0 %v2678
    %3299 = vmatprep.subr.bf16.mxu0 %v2687
    %3300 = vmatpush1.bf16.msra.mxu0 %v2686
    %3301 = vmatprep.subr.bf16.mxu0 %v2695
    %3302 = vmatpush1.bf16.msra.mxu0 %v2694
    %3303 = vmatprep.subr.bf16.mxu0 %v2703
    %3304 = vmatpush1.bf16.msra.mxu0 %v2702
    %3305 = vmatprep.mubr.bf16.mxu0 %v1635
    %3306 = vmatmul.mubr.bf16.gmra.mrb[0].mxu0 %v1634
    %v3307 = vpop.f32.mrb[0].mxu0
    %v3308 = vadd.f32 %v1891, %v3307
    %v3309 = vpop.f32.mrb[0].mxu0
    %v3310 = vadd.f32 %v1895, %v3309
    %v3311 = vpop.f32.mrb[0].mxu0
    %v3312 = vpop.f32.mrb[0].mxu0
    %3313 = vdwg.mxu0
    %3314 = vmatprep.subr.bf16.mxu0 %v2711
    %3315 = vmatpush1.bf16.msra.mxu0 %v2710
    %3316 = vmatprep.subr.bf16.mxu0 %v2719
    %3317 = vmatpush1.bf16.msra.mxu0 %v2718
    %3318 = vmatprep.subr.bf16.mxu0 %v2727
    %3319 = vmatpush1.bf16.msra.mxu0 %v2726
    %3320 = vmatprep.subr.bf16.mxu0 %v2735
    %3321 = vmatpush1.bf16.msra.mxu0 %v2734
    %3322 = vmatprep.subr.bf16.mxu0 %v2743
    %3323 = vmatpush1.bf16.msra.mxu0 %v2742
    %3324 = vmatprep.subr.bf16.mxu0 %v2751
    %3325 = vmatpush1.bf16.msra.mxu0 %v2750
    %3326 = vmatprep.subr.bf16.mxu0 %v2759
    %3327 = vmatpush1.bf16.msra.mxu0 %v2758
    %3328 = vmatprep.subr.bf16.mxu0 %v2767
    %3329 = vmatpush1.bf16.msra.mxu0 %v2766
    %3330 = vmatprep.subr.bf16.mxu0 %v2775
    %3331 = vmatpush1.bf16.msra.mxu0 %v2774
    %3332 = vmatprep.subr.bf16.mxu0 %v2783
    %3333 = vmatpush1.bf16.msra.mxu0 %v2782
    %3334 = vmatprep.subr.bf16.mxu0 %v2791
    %3335 = vmatpush1.bf16.msra.mxu0 %v2790
    %3336 = vmatprep.subr.bf16.mxu0 %v2799
    %3337 = vmatpush1.bf16.msra.mxu0 %v2798
    %3338 = vmatprep.subr.bf16.mxu0 0
    %3339 = vmatpush1.bf16.msra.mxu0 0
    %3340 = vmatprep.subr.bf16.mxu0 0
    %3341 = vmatpush1.bf16.msra.mxu0 0
    %3342 = vmatprep.subr.bf16.mxu0 0
    %3343 = vmatpush1.bf16.msra.mxu0 0
    %3344 = vmatprep.subr.bf16.mxu0 0
    %3345 = vmatpush1.bf16.msra.mxu0 0
    %3346 = vmatprep.mubr.bf16.mxu0 %v3025
    %3347 = vmatmul.mubr.bf16.gmra.mrb[0].mxu0 %v1636
    %v3348 = vpop.f32.mrb[0].mxu0
    %v3349 = vadd.f32 %v3308, %v3348
    %v3350 = vpop.f32.mrb[0].mxu0
    %v3351 = vadd.f32 %v3310, %v3350
    %v3352 = vpop.f32.mrb[0].mxu0
    %v3353 = vpop.f32.mrb[0].mxu0
    %3354 = vdwg.mxu0
    %v3363 = vcombine.low %v3103, %v3105
    %v3364 = vcombine.low %v3185, %v3187
    %v3366 = vunpack.c.l.s4 1983009808
    %v3367 = vunpack.c.0.s8 %v3366
    %v3368 = vlaneseq
    %v3369 = vshrl.u32 %v3368, 7
    %v3370 = vsub.s32 %v3367, %v3369
    %v3371 = vrot.slane %v3363, %v3370
    %v3373 = vunpack.c.l.s4 1983009808
    %v3374 = vunpack.c.0.s8 %v3373
    %v3375 = vlaneseq
    %v3376 = vshrl.u32 %v3375, 7
    %v3377 = vsub.s32 %v3374, %v3376
    %v3378 = vrot.slane %v3364, %v3377
    %v3379 = vcombine.low %v3371, %v3378
    %v3380 = vcombine.low %v3267, %v3269
    %v3381 = vcombine.low %v3349, %v3351
    %v3383 = vunpack.c.l.s4 1983009808
    %v3384 = vunpack.c.0.s8 %v3383
    %v3385 = vlaneseq
    %v3386 = vshrl.u32 %v3385, 7
    %v3387 = vsub.s32 %v3384, %v3386
    %v3388 = vrot.slane %v3380, %v3387
    %v3390 = vunpack.c.l.s4 1983009808
    %v3391 = vunpack.c.0.s8 %v3390
    %v3392 = vlaneseq
    %v3393 = vshrl.u32 %v3392, 7
    %v3394 = vsub.s32 %v3391, %v3393
    %v3395 = vrot.slane %v3381, %v3394
    %v3396 = vcombine.low %v3388, %v3395
    %3399 = vst [vmem:[#allocation20] sm:$0xff] %v3379
    %3400 = vst [vmem:[#allocation20 + $0x8] sm:$0xff] %v3396
    %v3401 = vpack.c.bf16 %v3103, %v3103
    %v3402 = vpack.c.bf16 %v3105, %v3105
    %v3403 = vpack.c.bf16 %v3185, %v3185
    %v3404 = vpack.c.bf16 %v3187, %v3187
    %v3405 = vpack.c.bf16 %v3267, %v3267
    %v3406 = vpack.c.bf16 %v3269, %v3269
    %v3407 = vpack.c.bf16 %v3349, %v3349
    %v3408 = vpack.c.bf16 %v3351, %v3351
    %v3409 = vld [vmem:[%s7] sm:$0xf]
    %v3410 = vld [vmem:[%s7 + $0x4] sm:$0xf]
    %v3411 = vld [vmem:[%s7 + $0x8] sm:$0xf]
    %v3412 = vld [vmem:[%s7 + $0xc] sm:$0xf]
    %v3413 = vld [vmem:[%s7 + $0x10] sm:$0xf]
    %v3414 = vld [vmem:[%s7 + $0x14] sm:$0xf]
    %v3415 = vld [vmem:[%s7 + $0x18] sm:$0xf]
    %v3416 = vld [vmem:[%s7 + $0x1c] sm:$0xf]
    %v3417 = vld [vmem:[%s7 + $0x20] sm:$0xf]
    %v3418 = vld [vmem:[%s7 + $0x24] sm:$0xf]
    %v3419 = vld [vmem:[%s7 + $0x28] sm:$0xf]
    %v3420 = vld [vmem:[%s7 + $0x2c] sm:$0xf]
    %v3421 = vld [vmem:[%s7 + $0x30] sm:$0xf]
    %v3422 = vld [vmem:[%s7 + $0x34] sm:$0xf]
    %v3423 = vld [vmem:[%s7 + $0x38] sm:$0xf]
    %v3424 = vld [vmem:[%s7 + $0x3c] sm:$0xf]
    %v3425 = vld [vmem:[%s7 + $0x40] sm:$0xf]
    %v3426 = vld [vmem:[%s7 + $0x44] sm:$0xf]
    %v3427 = vld [vmem:[%s7 + $0x48] sm:$0xf]
    %v3428 = vld [vmem:[%s7 + $0x4c] sm:$0xf]
    %v3429 = vld [vmem:[%s7 + $0x50] sm:$0xf]
    %v3430 = vld [vmem:[%s7 + $0x54] sm:$0xf]
    %v3431 = vld [vmem:[%s7 + $0x58] sm:$0xf]
    %v3432 = vld [vmem:[%s7 + $0x5c] sm:$0xf]
    %v3433 = vld [vmem:[%s7 + $0x60] sm:$0xf]
    %v3434 = vld [vmem:[%s7 + $0x64] sm:$0xf]
    %v3435 = vld [vmem:[%s7 + $0x68] sm:$0xf]
    %v3436 = vld [vmem:[%s7 + $0x6c] sm:$0xf]
    %v3437 = vld [vmem:[%s7 + $0x70] sm:$0xf]
    %v3438 = vld [vmem:[%s7 + $0x74] sm:$0xf]
    %v3439 = vld [vmem:[%s7 + $0x78] sm:$0xf]
    %v3440 = vld [vmem:[%s7 + $0x7c] sm:$0xf]
    %v3441 = vld [vmem:[%s7 + $0x80] sm:$0xf]
    %v3442 = vld [vmem:[%s7 + $0x84] sm:$0xf]
    %v3443 = vld [vmem:[%s7 + $0x88] sm:$0xf]
    %v3444 = vld [vmem:[%s7 + $0x8c] sm:$0xf]
    %v3445 = vld [vmem:[%s7 + $0x90] sm:$0xf]
    %v3446 = vld [vmem:[%s7 + $0x94] sm:$0xf]
    %v3447 = vld [vmem:[%s7 + $0x98] sm:$0xf]
    %v3448 = vld [vmem:[%s7 + $0x9c] sm:$0xf]
    %v3449 = vld [vmem:[%s7 + $0xa0] sm:$0xf]
    %v3450 = vld [vmem:[%s7 + $0xa4] sm:$0xf]
    %v3451 = vld [vmem:[%s7 + $0xa8] sm:$0xf]
    %v3452 = vld [vmem:[%s7 + $0xac] sm:$0xf]
    %v3453 = vld [vmem:[%s7 + $0xb0] sm:$0xf]
    %v3454 = vld [vmem:[%s7 + $0xb4] sm:$0xf]
    %v3455 = vld [vmem:[%s7 + $0xb8] sm:$0xf]
    %v3456 = vld [vmem:[%s7 + $0xbc] sm:$0xf]
    %v3457 = vld [vmem:[%s7 + $0xc0] sm:$0xf]
    %v3458 = vld [vmem:[%s7 + $0xc4] sm:$0xf]
    %v3459 = vld [vmem:[%s7 + $0xc8] sm:$0xf]
    %v3460 = vld [vmem:[%s7 + $0xcc] sm:$0xf]
    %v3461 = vld [vmem:[%s7 + $0xd0] sm:$0xf]
    %v3462 = vld [vmem:[%s7 + $0xd4] sm:$0xf]
    %v3463 = vld [vmem:[%s7 + $0xd8] sm:$0xf]
    %v3464 = vld [vmem:[%s7 + $0xdc] sm:$0xf]
    %v3465 = vld [vmem:[%s7 + $0xe0] sm:$0xf]
    %v3466 = vld [vmem:[%s7 + $0xe4] sm:$0xf]
    %v3467 = vld [vmem:[%s7 + $0xe8] sm:$0xf]
    %v3468 = vld [vmem:[%s7 + $0xec] sm:$0xf]
    %v3469 = vld [vmem:[%s7 + $0xf0] sm:$0xf]
    %v3470 = vld [vmem:[%s7 + $0xf4] sm:$0xf]
    %v3471 = vld [vmem:[%s7 + $0xf8] sm:$0xf]
    %v3472 = vld [vmem:[%s7 + $0xfc] sm:$0xf]
    %v3473 = vld [vmem:[%s7 + $0x100] sm:$0xf]
    %v3474 = vld [vmem:[%s7 + $0x104] sm:$0xf]
    %v3475 = vld [vmem:[%s7 + $0x108] sm:$0xf]
    %v3476 = vld [vmem:[%s7 + $0x10c] sm:$0xf]
    %v3477 = vld [vmem:[%s7 + $0x110] sm:$0xf]
    %v3478 = vld [vmem:[%s7 + $0x114] sm:$0xf]
    %v3479 = vld [vmem:[%s7 + $0x118] sm:$0xf]
    %v3480 = vld [vmem:[%s7 + $0x11c] sm:$0xf]
    %v3481 = vld [vmem:[%s7 + $0x120] sm:$0xf]
    %v3482 = vld [vmem:[%s7 + $0x124] sm:$0xf]
    %v3483 = vld [vmem:[%s7 + $0x128] sm:$0xf]
    %v3484 = vld [vmem:[%s7 + $0x12c] sm:$0xf]
    %v3485 = vld [vmem:[%s7 + $0x130] sm:$0xf]
    %v3486 = vld [vmem:[%s7 + $0x134] sm:$0xf]
    %v3487 = vld [vmem:[%s7 + $0x138] sm:$0xf]
    %v3488 = vld [vmem:[%s7 + $0x13c] sm:$0xf]
    %v3489 = vld [vmem:[%s7 + $0x140] sm:$0xf]
    %v3490 = vld [vmem:[%s7 + $0x144] sm:$0xf]
    %v3491 = vld [vmem:[%s7 + $0x148] sm:$0xf]
    %v3492 = vld [vmem:[%s7 + $0x14c] sm:$0xf]
    %v3493 = vld [vmem:[%s7 + $0x150] sm:$0xf]
    %v3494 = vld [vmem:[%s7 + $0x154] sm:$0xf]
    %v3495 = vld [vmem:[%s7 + $0x158] sm:$0xf]
    %v3496 = vld [vmem:[%s7 + $0x15c] sm:$0xf]
    %v3497 = vld [vmem:[%s7 + $0x160] sm:$0xf]
    %v3498 = vld [vmem:[%s7 + $0x164] sm:$0xf]
    %v3499 = vld [vmem:[%s7 + $0x168] sm:$0xf]
    %v3500 = vld [vmem:[%s7 + $0x16c] sm:$0xf]
    %v3501 = vld [vmem:[%s7 + $0x170] sm:$0xf]
    %v3502 = vld [vmem:[%s7 + $0x174] sm:$0xf]
    %v3503 = vld [vmem:[%s7 + $0x178] sm:$0xf]
    %v3504 = vld [vmem:[%s7 + $0x17c] sm:$0xf]
    %v3505 = vld [vmem:[%s7 + $0x180] sm:$0xf]
    %v3506 = vld [vmem:[%s7 + $0x184] sm:$0xf]
    %v3507 = vld [vmem:[%s7 + $0x188] sm:$0xf]
    %v3508 = vld [vmem:[%s7 + $0x18c] sm:$0xf]
    %v3509 = vld [vmem:[%s7 + $0x190] sm:$0xf]
    %v3510 = vld [vmem:[%s7 + $0x194] sm:$0xf]
    %v3511 = vld [vmem:[%s7 + $0x198] sm:$0xf]
    %v3512 = vld [vmem:[%s7 + $0x19c] sm:$0xf]
    %v3513 = vld [vmem:[%s7 + $0x1a0] sm:$0xf]
    %v3514 = vld [vmem:[%s7 + $0x1a4] sm:$0xf]
    %v3515 = vld [vmem:[%s7 + $0x1a8] sm:$0xf]
    %v3516 = vld [vmem:[%s7 + $0x1ac] sm:$0xf]
    %v3517 = vld [vmem:[%s7 + $0x1b0] sm:$0xf]
    %v3518 = vld [vmem:[%s7 + $0x1b4] sm:$0xf]
    %v3519 = vld [vmem:[%s7 + $0x1b8] sm:$0xf]
    %v3520 = vld [vmem:[%s7 + $0x1bc] sm:$0xf]
    %v3521 = vld [vmem:[%s7 + $0x1c0] sm:$0xf]
    %v3522 = vld [vmem:[%s7 + $0x1c4] sm:$0xf]
    %v3523 = vld [vmem:[%s7 + $0x1c8] sm:$0xf]
    %v3524 = vld [vmem:[%s7 + $0x1cc] sm:$0xf]
    %v3525 = vld [vmem:[%s7 + $0x1d0] sm:$0xf]
    %v3526 = vld [vmem:[%s7 + $0x1d4] sm:$0xf]
    %v3527 = vld [vmem:[%s7 + $0x1d8] sm:$0xf]
    %v3528 = vld [vmem:[%s7 + $0x1dc] sm:$0xf]
    %v3529 = vld [vmem:[%s7 + $0x1e0] sm:$0xf]
    %v3530 = vld [vmem:[%s7 + $0x1e4] sm:$0xf]
    %v3531 = vld [vmem:[%s7 + $0x1e8] sm:$0xf]
    %v3532 = vld [vmem:[%s7 + $0x1ec] sm:$0xf]
    %v3533 = vld [vmem:[%s7 + $0x1f0] sm:$0xf]
    %v3534 = vld [vmem:[%s7 + $0x1f4] sm:$0xf]
    %v3535 = vld [vmem:[%s7 + $0x1f8] sm:$0xf]
    %v3536 = vld [vmem:[%s7 + $0x1fc] sm:$0xf]
    %v3537 = vld [vmem:[#allocation14] sm:$0x1]
    %v3539 = vlaneseq
    %v3540 = vshrl.u32 %v3539, 7
    %v3541 = vsub.s32 0, %v3540
    %v3542 = vrot.slane %v3537, %v3541
    %v3672 = vunpack.c.l.b16 %v3409
    %v3673 = vunpack.c.l.b16 %v3410
    %v3674 = vunpack.c.l.b16 %v3411
    %v3675 = vunpack.c.l.b16 %v3412
    %v3676 = vunpack.c.l.b16 %v3413
    %v3677 = vunpack.c.l.b16 %v3414
    %v3678 = vunpack.c.l.b16 %v3415
    %v3679 = vunpack.c.l.b16 %v3416
    %v3680 = vunpack.c.l.b16 %v3417
    %v3681 = vunpack.c.l.b16 %v3418
    %v3682 = vunpack.c.l.b16 %v3419
    %v3683 = vunpack.c.l.b16 %v3420
    %v3684 = vunpack.c.l.b16 %v3421
    %v3685 = vunpack.c.l.b16 %v3422
    %v3686 = vunpack.c.l.b16 %v3423
    %v3687 = vunpack.c.l.b16 %v3424
    %v3688 = vunpack.c.l.b16 %v3425
    %v3689 = vunpack.c.l.b16 %v3426
    %v3690 = vunpack.c.l.b16 %v3427
    %v3691 = vunpack.c.l.b16 %v3428
    %v3692 = vunpack.c.l.b16 %v3429
    %v3693 = vunpack.c.l.b16 %v3430
    %v3694 = vunpack.c.l.b16 %v3431
    %v3695 = vunpack.c.l.b16 %v3432
    %v3696 = vunpack.c.l.b16 %v3433
    %v3697 = vunpack.c.l.b16 %v3434
    %v3698 = vunpack.c.l.b16 %v3435
    %v3699 = vunpack.c.l.b16 %v3436
    %v3700 = vunpack.c.l.b16 %v3437
    %v3701 = vunpack.c.l.b16 %v3438
    %v3702 = vunpack.c.l.b16 %v3439
    %v3703 = vunpack.c.l.b16 %v3440
    %v3704 = vunpack.c.l.b16 %v3441
    %v3705 = vunpack.c.l.b16 %v3442
    %v3706 = vunpack.c.l.b16 %v3443
    %v3707 = vunpack.c.l.b16 %v3444
    %v3708 = vunpack.c.l.b16 %v3445
    %v3709 = vunpack.c.l.b16 %v3446
    %v3710 = vunpack.c.l.b16 %v3447
    %v3711 = vunpack.c.l.b16 %v3448
    %v3712 = vunpack.c.l.b16 %v3449
    %v3713 = vunpack.c.l.b16 %v3450
    %v3714 = vunpack.c.l.b16 %v3451
    %v3715 = vunpack.c.l.b16 %v3452
    %v3716 = vunpack.c.l.b16 %v3453
    %v3717 = vunpack.c.l.b16 %v3454
    %v3718 = vunpack.c.l.b16 %v3455
    %v3719 = vunpack.c.l.b16 %v3456
    %v3720 = vunpack.c.l.b16 %v3457
    %v3721 = vunpack.c.l.b16 %v3458
    %v3722 = vunpack.c.l.b16 %v3459
    %v3723 = vunpack.c.l.b16 %v3460
    %v3724 = vunpack.c.l.b16 %v3461
    %v3725 = vunpack.c.l.b16 %v3462
    %v3726 = vunpack.c.l.b16 %v3463
    %v3727 = vunpack.c.l.b16 %v3464
    %v3728 = vunpack.c.l.b16 %v3465
    %v3729 = vunpack.c.l.b16 %v3466
    %v3730 = vunpack.c.l.b16 %v3467
    %v3731 = vunpack.c.l.b16 %v3468
    %v3732 = vunpack.c.l.b16 %v3469
    %v3733 = vunpack.c.l.b16 %v3470
    %v3734 = vunpack.c.l.b16 %v3471
    %v3735 = vunpack.c.l.b16 %v3472
    %v3736 = vunpack.c.l.b16 %v3473
    %v3737 = vunpack.c.l.b16 %v3474
    %v3738 = vunpack.c.l.b16 %v3475
    %v3739 = vunpack.c.l.b16 %v3476
    %v3740 = vunpack.c.l.b16 %v3477
    %v3741 = vunpack.c.l.b16 %v3478
    %v3742 = vunpack.c.l.b16 %v3479
    %v3743 = vunpack.c.l.b16 %v3480
    %v3744 = vunpack.c.l.b16 %v3481
    %v3745 = vunpack.c.l.b16 %v3482
    %v3746 = vunpack.c.l.b16 %v3483
    %v3747 = vunpack.c.l.b16 %v3484
    %v3748 = vunpack.c.l.b16 %v3485
    %v3749 = vunpack.c.l.b16 %v3486
    %v3750 = vunpack.c.l.b16 %v3487
    %v3751 = vunpack.c.l.b16 %v3488
    %v3752 = vunpack.c.l.b16 %v3489
    %v3753 = vunpack.c.l.b16 %v3490
    %v3754 = vunpack.c.l.b16 %v3491
    %v3755 = vunpack.c.l.b16 %v3492
    %v3756 = vunpack.c.l.b16 %v3493
    %v3757 = vunpack.c.l.b16 %v3494
    %v3758 = vunpack.c.l.b16 %v3495
    %v3759 = vunpack.c.l.b16 %v3496
    %v3760 = vunpack.c.l.b16 %v3497
    %v3761 = vunpack.c.l.b16 %v3498
    %v3762 = vunpack.c.l.b16 %v3499
    %v3763 = vunpack.c.l.b16 %v3500
    %v3764 = vunpack.c.l.b16 %v3501
    %v3765 = vunpack.c.l.b16 %v3502
    %v3766 = vunpack.c.l.b16 %v3503
    %v3767 = vunpack.c.l.b16 %v3504
    %v3768 = vunpack.c.l.b16 %v3505
    %v3769 = vunpack.c.l.b16 %v3506
    %v3770 = vunpack.c.l.b16 %v3507
    %v3771 = vunpack.c.l.b16 %v3508
    %v3772 = vunpack.c.l.b16 %v3509
    %v3773 = vunpack.c.l.b16 %v3510
    %v3774 = vunpack.c.l.b16 %v3511
    %v3775 = vunpack.c.l.b16 %v3512
    %v3776 = vunpack.c.l.b16 %v3513
    %v3777 = vunpack.c.l.b16 %v3514
    %v3778 = vunpack.c.l.b16 %v3515
    %v3779 = vunpack.c.l.b16 %v3516
    %v3780 = vunpack.c.l.b16 %v3517
    %v3781 = vunpack.c.l.b16 %v3518
    %v3782 = vunpack.c.l.b16 %v3519
    %v3783 = vunpack.c.l.b16 %v3520
    %v3784 = vunpack.c.l.b16 %v3521
    %v3785 = vunpack.c.l.b16 %v3522
    %v3786 = vunpack.c.l.b16 %v3523
    %v3787 = vunpack.c.l.b16 %v3524
    %v3788 = vunpack.c.l.b16 %v3525
    %v3789 = vunpack.c.l.b16 %v3526
    %v3790 = vunpack.c.l.b16 %v3527
    %v3791 = vunpack.c.l.b16 %v3528
    %v3792 = vunpack.c.l.b16 %v3529
    %v3793 = vunpack.c.l.b16 %v3530
    %v3794 = vunpack.c.l.b16 %v3531
    %v3795 = vunpack.c.l.b16 %v3532
    %v3796 = vunpack.c.l.b16 %v3533
    %v3797 = vunpack.c.l.b16 %v3534
    %v3798 = vunpack.c.l.b16 %v3535
    %v3799 = vunpack.c.l.b16 %v3536
    %v3800 = vpack.c.b16 %v3673, %v3672
    %v3801 = vpack.c.b16 %v3675, %v3674
    %v3802 = vpack.c.b16 %v3677, %v3676
    %v3803 = vpack.c.b16 %v3679, %v3678
    %v3804 = vpack.c.b16 %v3681, %v3680
    %v3805 = vpack.c.b16 %v3683, %v3682
    %v3806 = vpack.c.b16 %v3685, %v3684
    %v3807 = vpack.c.b16 %v3687, %v3686
    %v3808 = vpack.c.b16 %v3689, %v3688
    %v3809 = vpack.c.b16 %v3691, %v3690
    %v3810 = vpack.c.b16 %v3693, %v3692
    %v3811 = vpack.c.b16 %v3695, %v3694
    %v3812 = vpack.c.b16 %v3697, %v3696
    %v3813 = vpack.c.b16 %v3699, %v3698
    %v3814 = vpack.c.b16 %v3701, %v3700
    %v3815 = vpack.c.b16 %v3703, %v3702
    %v3816 = vpack.c.b16 %v3705, %v3704
    %v3817 = vpack.c.b16 %v3707, %v3706
    %v3818 = vpack.c.b16 %v3709, %v3708
    %v3819 = vpack.c.b16 %v3711, %v3710
    %v3820 = vpack.c.b16 %v3713, %v3712
    %v3821 = vpack.c.b16 %v3715, %v3714
    %v3822 = vpack.c.b16 %v3717, %v3716
    %v3823 = vpack.c.b16 %v3719, %v3718
    %v3824 = vpack.c.b16 %v3721, %v3720
    %v3825 = vpack.c.b16 %v3723, %v3722
    %v3826 = vpack.c.b16 %v3725, %v3724
    %v3827 = vpack.c.b16 %v3727, %v3726
    %v3828 = vpack.c.b16 %v3729, %v3728
    %v3829 = vpack.c.b16 %v3731, %v3730
    %v3830 = vpack.c.b16 %v3733, %v3732
    %v3831 = vpack.c.b16 %v3735, %v3734
    %v3832 = vpack.c.b16 %v3737, %v3736
    %v3833 = vpack.c.b16 %v3739, %v3738
    %v3834 = vpack.c.b16 %v3741, %v3740
    %v3835 = vpack.c.b16 %v3743, %v3742
    %v3836 = vpack.c.b16 %v3745, %v3744
    %v3837 = vpack.c.b16 %v3747, %v3746
    %v3838 = vpack.c.b16 %v3749, %v3748
    %v3839 = vpack.c.b16 %v3751, %v3750
    %v3840 = vpack.c.b16 %v3753, %v3752
    %v3841 = vpack.c.b16 %v3755, %v3754
    %v3842 = vpack.c.b16 %v3757, %v3756
    %v3843 = vpack.c.b16 %v3759, %v3758
    %v3844 = vpack.c.b16 %v3761, %v3760
    %v3845 = vpack.c.b16 %v3763, %v3762
    %v3846 = vpack.c.b16 %v3765, %v3764
    %v3847 = vpack.c.b16 %v3767, %v3766
    %v3848 = vpack.c.b16 %v3769, %v3768
    %v3849 = vpack.c.b16 %v3771, %v3770
    %v3850 = vpack.c.b16 %v3773, %v3772
    %v3851 = vpack.c.b16 %v3775, %v3774
    %v3852 = vpack.c.b16 %v3777, %v3776
    %v3853 = vpack.c.b16 %v3779, %v3778
    %v3854 = vpack.c.b16 %v3781, %v3780
    %v3855 = vpack.c.b16 %v3783, %v3782
    %v3856 = vpack.c.b16 %v3785, %v3784
    %v3857 = vpack.c.b16 %v3787, %v3786
    %v3858 = vpack.c.b16 %v3789, %v3788
    %v3859 = vpack.c.b16 %v3791, %v3790
    %v3860 = vpack.c.b16 %v3793, %v3792
    %v3861 = vpack.c.b16 %v3795, %v3794
    %v3862 = vpack.c.b16 %v3797, %v3796
    %v3863 = vpack.c.b16 %v3799, %v3798
    %3928 = vmatprep.subr.bf16.mxu0 0
    %3929 = vmatpush1.bf16.msra.mxu0 %v3800
    %3930 = vmatprep.subr.bf16.mxu0 0
    %3931 = vmatpush1.bf16.msra.mxu0 %v3801
    %3932 = vmatprep.subr.bf16.mxu0 0
    %3933 = vmatpush1.bf16.msra.mxu0 %v3802
    %3934 = vmatprep.subr.bf16.mxu0 0
    %3935 = vmatpush1.bf16.msra.mxu0 %v3803
    %3936 = vmatprep.subr.bf16.mxu0 0
    %3937 = vmatpush1.bf16.msra.mxu0 %v3804
    %3938 = vmatprep.subr.bf16.mxu0 0
    %3939 = vmatpush1.bf16.msra.mxu0 %v3805
    %3940 = vmatprep.subr.bf16.mxu0 0
    %3941 = vmatpush1.bf16.msra.mxu0 %v3806
    %3942 = vmatprep.subr.bf16.mxu0 0
    %3943 = vmatpush1.bf16.msra.mxu0 %v3807
    %3944 = vmatprep.subr.bf16.mxu0 0
    %3945 = vmatpush1.bf16.msra.mxu0 %v3808
    %3946 = vmatprep.subr.bf16.mxu0 0
    %3947 = vmatpush1.bf16.msra.mxu0 %v3809
    %3948 = vmatprep.subr.bf16.mxu0 0
    %3949 = vmatpush1.bf16.msra.mxu0 %v3810
    %3950 = vmatprep.subr.bf16.mxu0 0
    %3951 = vmatpush1.bf16.msra.mxu0 %v3811
    %3952 = vmatprep.subr.bf16.mxu0 0
    %3953 = vmatpush1.bf16.msra.mxu0 %v3812
    %3954 = vmatprep.subr.bf16.mxu0 0
    %3955 = vmatpush1.bf16.msra.mxu0 %v3813
    %3956 = vmatprep.subr.bf16.mxu0 0
    %3957 = vmatpush1.bf16.msra.mxu0 %v3814
    %3958 = vmatprep.subr.bf16.mxu0 0
    %3959 = vmatpush1.bf16.msra.mxu0 %v3815
    %3960 = vmatprep.mubr.bf16.mxu0 %v3402
    %3961 = vmatmul.mubr.bf16.gmra.mrb[0].mxu0 %v3401
    %v3962 = vpop.f32.mrb[0].mxu0
    %v3963 = vadd.f32 %v3542, %v3962
    %v3964 = vpop.f32.mrb[0].mxu0
    %v3965 = vpop.f32.mrb[0].mxu0
    %v3966 = vpop.f32.mrb[0].mxu0
    %3967 = vdwg.mxu0
    %3968 = vmatprep.subr.bf16.mxu0 0
    %3969 = vmatpush1.bf16.msra.mxu0 %v3816
    %3970 = vmatprep.subr.bf16.mxu0 0
    %3971 = vmatpush1.bf16.msra.mxu0 %v3817
    %3972 = vmatprep.subr.bf16.mxu0 0
    %3973 = vmatpush1.bf16.msra.mxu0 %v3818
    %3974 = vmatprep.subr.bf16.mxu0 0
    %3975 = vmatpush1.bf16.msra.mxu0 %v3819
    %3976 = vmatprep.subr.bf16.mxu0 0
    %3977 = vmatpush1.bf16.msra.mxu0 %v3820
    %3978 = vmatprep.subr.bf16.mxu0 0
    %3979 = vmatpush1.bf16.msra.mxu0 %v3821
    %3980 = vmatprep.subr.bf16.mxu0 0
    %3981 = vmatpush1.bf16.msra.mxu0 %v3822
    %3982 = vmatprep.subr.bf16.mxu0 0
    %3983 = vmatpush1.bf16.msra.mxu0 %v3823
    %3984 = vmatprep.subr.bf16.mxu0 0
    %3985 = vmatpush1.bf16.msra.mxu0 %v3824
    %3986 = vmatprep.subr.bf16.mxu0 0
    %3987 = vmatpush1.bf16.msra.mxu0 %v3825
    %3988 = vmatprep.subr.bf16.mxu0 0
    %3989 = vmatpush1.bf16.msra.mxu0 %v3826
    %3990 = vmatprep.subr.bf16.mxu0 0
    %3991 = vmatpush1.bf16.msra.mxu0 %v3827
    %3992 = vmatprep.subr.bf16.mxu0 0
    %3993 = vmatpush1.bf16.msra.mxu0 %v3828
    %3994 = vmatprep.subr.bf16.mxu0 0
    %3995 = vmatpush1.bf16.msra.mxu0 %v3829
    %3996 = vmatprep.subr.bf16.mxu0 0
    %3997 = vmatpush1.bf16.msra.mxu0 %v3830
    %3998 = vmatprep.subr.bf16.mxu0 0
    %3999 = vmatpush1.bf16.msra.mxu0 %v3831
    %4000 = vmatprep.mubr.bf16.mxu0 %v3404
    %4001 = vmatmul.mubr.bf16.gmra.mrb[0].mxu0 %v3403
    %v4002 = vpop.f32.mrb[0].mxu0
    %v4003 = vadd.f32 %v3963, %v4002
    %v4004 = vpop.f32.mrb[0].mxu0
    %v4005 = vpop.f32.mrb[0].mxu0
    %v4006 = vpop.f32.mrb[0].mxu0
    %4007 = vdwg.mxu0
    %4008 = vmatprep.subr.bf16.mxu0 0
    %4009 = vmatpush1.bf16.msra.mxu0 %v3832
    %4010 = vmatprep.subr.bf16.mxu0 0
    %4011 = vmatpush1.bf16.msra.mxu0 %v3833
    %4012 = vmatprep.subr.bf16.mxu0 0
    %4013 = vmatpush1.bf16.msra.mxu0 %v3834
    %4014 = vmatprep.subr.bf16.mxu0 0
    %4015 = vmatpush1.bf16.msra.mxu0 %v3835
    %4016 = vmatprep.subr.bf16.mxu0 0
    %4017 = vmatpush1.bf16.msra.mxu0 %v3836
    %4018 = vmatprep.subr.bf16.mxu0 0
    %4019 = vmatpush1.bf16.msra.mxu0 %v3837
    %4020 = vmatprep.subr.bf16.mxu0 0
    %4021 = vmatpush1.bf16.msra.mxu0 %v3838
    %4022 = vmatprep.subr.bf16.mxu0 0
    %4023 = vmatpush1.bf16.msra.mxu0 %v3839
    %4024 = vmatprep.subr.bf16.mxu0 0
    %4025 = vmatpush1.bf16.msra.mxu0 %v3840
    %4026 = vmatprep.subr.bf16.mxu0 0
    %4027 = vmatpush1.bf16.msra.mxu0 %v3841
    %4028 = vmatprep.subr.bf16.mxu0 0
    %4029 = vmatpush1.bf16.msra.mxu0 %v3842
    %4030 = vmatprep.subr.bf16.mxu0 0
    %4031 = vmatpush1.bf16.msra.mxu0 %v3843
    %4032 = vmatprep.subr.bf16.mxu0 0
    %4033 = vmatpush1.bf16.msra.mxu0 %v3844
    %4034 = vmatprep.subr.bf16.mxu0 0
    %4035 = vmatpush1.bf16.msra.mxu0 %v3845
    %4036 = vmatprep.subr.bf16.mxu0 0
    %4037 = vmatpush1.bf16.msra.mxu0 %v3846
    %4038 = vmatprep.subr.bf16.mxu0 0
    %4039 = vmatpush1.bf16.msra.mxu0 %v3847
    %4040 = vmatprep.mubr.bf16.mxu0 %v3406
    %4041 = vmatmul.mubr.bf16.gmra.mrb[0].mxu0 %v3405
    %v4042 = vpop.f32.mrb[0].mxu0
    %v4043 = vadd.f32 %v4003, %v4042
    %v4044 = vpop.f32.mrb[0].mxu0
    %v4045 = vpop.f32.mrb[0].mxu0
    %v4046 = vpop.f32.mrb[0].mxu0
    %4047 = vdwg.mxu0
    %4048 = vmatprep.subr.bf16.mxu0 0
    %4049 = vmatpush1.bf16.msra.mxu0 %v3848
    %4050 = vmatprep.subr.bf16.mxu0 0
    %4051 = vmatpush1.bf16.msra.mxu0 %v3849
    %4052 = vmatprep.subr.bf16.mxu0 0
    %4053 = vmatpush1.bf16.msra.mxu0 %v3850
    %4054 = vmatprep.subr.bf16.mxu0 0
    %4055 = vmatpush1.bf16.msra.mxu0 %v3851
    %4056 = vmatprep.subr.bf16.mxu0 0
    %4057 = vmatpush1.bf16.msra.mxu0 %v3852
    %4058 = vmatprep.subr.bf16.mxu0 0
    %4059 = vmatpush1.bf16.msra.mxu0 %v3853
    %4060 = vmatprep.subr.bf16.mxu0 0
    %4061 = vmatpush1.bf16.msra.mxu0 %v3854
    %4062 = vmatprep.subr.bf16.mxu0 0
    %4063 = vmatpush1.bf16.msra.mxu0 %v3855
    %4064 = vmatprep.subr.bf16.mxu0 0
    %4065 = vmatpush1.bf16.msra.mxu0 %v3856
    %4066 = vmatprep.subr.bf16.mxu0 0
    %4067 = vmatpush1.bf16.msra.mxu0 %v3857
    %4068 = vmatprep.subr.bf16.mxu0 0
    %4069 = vmatpush1.bf16.msra.mxu0 %v3858
    %4070 = vmatprep.subr.bf16.mxu0 0
    %4071 = vmatpush1.bf16.msra.mxu0 %v3859
    %4072 = vmatprep.subr.bf16.mxu0 0
    %4073 = vmatpush1.bf16.msra.mxu0 %v3860
    %4074 = vmatprep.subr.bf16.mxu0 0
    %4075 = vmatpush1.bf16.msra.mxu0 %v3861
    %4076 = vmatprep.subr.bf16.mxu0 0
    %4077 = vmatpush1.bf16.msra.mxu0 %v3862
    %4078 = vmatprep.subr.bf16.mxu0 0
    %4079 = vmatpush1.bf16.msra.mxu0 %v3863
    %4080 = vmatprep.mubr.bf16.mxu0 %v3408
    %4081 = vmatmul.mubr.bf16.gmra.mrb[0].mxu0 %v3407
    %v4082 = vpop.f32.mrb[0].mxu0
    %v4083 = vadd.f32 %v4043, %v4082
    %v4084 = vpop.f32.mrb[0].mxu0
    %v4085 = vpop.f32.mrb[0].mxu0
    %v4086 = vpop.f32.mrb[0].mxu0
    %4087 = vdwg.mxu0
    %vm4088 = vcmask 74752
    %4089 = vst.msk [vmem:[#allocation19] sm:$0x3] %vm4088, %v4083
    %v4090 = vld [vmem:[#allocation16] sm:$0xff]
    %v4091 = vld [vmem:[#allocation16 + $0x8] sm:$0xff]
    %v4092 = vld [vmem:[#allocation16 + $0x10] sm:$0xff]
    %v4093 = vld [vmem:[#allocation16 + $0x18] sm:$0xff]
    %v4094 = vld [vmem:[#allocation16 + $0x20] sm:$0xff]
    %v4095 = vld [vmem:[#allocation16 + $0x28] sm:$0xff]
    %v4096 = vld [vmem:[#allocation16 + $0x30] sm:$0xff]
    %v4097 = vld [vmem:[#allocation16 + $0x38] sm:$0xff]
    %v4098 = vld [vmem:[#allocation16 + $0x40] sm:$0xff]
    %v4099 = vld [vmem:[#allocation16 + $0x48] sm:$0xff]
    %v4100 = vld [vmem:[#allocation16 + $0x50] sm:$0xff]
    %v4101 = vld [vmem:[#allocation16 + $0x58] sm:$0xff]
    %v4102 = vld [vmem:[#allocation16 + $0x60] sm:$0xff]
    %v4103 = vld [vmem:[#allocation16 + $0x68] sm:$0xff]
    %v4104 = vld [vmem:[#allocation16 + $0x70] sm:$0xff]
    %v4105 = vld [vmem:[#allocation16 + $0x78] sm:$0xff]
    %v4106 = vld [vmem:[#allocation16 + $0x80] sm:$0xff]
    %v4107 = vld [vmem:[#allocation16 + $0x88] sm:$0xff]
    %v4108 = vld [vmem:[#allocation16 + $0x90] sm:$0xff]
    %v4109 = vld [vmem:[#allocation16 + $0x98] sm:$0xff]
    %v4110 = vld [vmem:[#allocation16 + $0xa0] sm:$0xff]
    %v4111 = vld [vmem:[#allocation16 + $0xa8] sm:$0xff]
    %v4112 = vld [vmem:[#allocation16 + $0xb0] sm:$0xff]
    %v4113 = vld [vmem:[#allocation16 + $0xb8] sm:$0xff]
    %v4114 = vld [vmem:[#allocation16 + $0xc0] sm:$0xff]
    %v4115 = vld [vmem:[#allocation16 + $0xc8] sm:$0xff]
    %v4116 = vld [vmem:[#allocation16 + $0xd0] sm:$0xff]
    %v4117 = vld [vmem:[#allocation16 + $0xd8] sm:$0xff]
    %v4118 = vld [vmem:[#allocation16 + $0xe0] sm:$0xff]
    %v4119 = vld [vmem:[#allocation16 + $0xe8] sm:$0xff]
    %v4120 = vld [vmem:[#allocation16 + $0xf0] sm:$0xff]
    %v4121 = vld [vmem:[#allocation16 + $0xf8] sm:$0xff]
    %v4122 = vld [vmem:[#allocation16 + $0x100] sm:$0xff]
    %v4123 = vld [vmem:[#allocation16 + $0x108] sm:$0xff]
    %v4124 = vld [vmem:[#allocation16 + $0x110] sm:$0xff]
    %v4125 = vld [vmem:[#allocation16 + $0x118] sm:$0xff]
    %v4126 = vld [vmem:[#allocation16 + $0x120] sm:$0xff]
    %v4127 = vld [vmem:[#allocation16 + $0x128] sm:$0xff]
    %v4128 = vld [vmem:[#allocation16 + $0x130] sm:$0xff]
    %v4129 = vld [vmem:[#allocation16 + $0x138] sm:$0xff]
    %v4130 = vld [vmem:[#allocation16 + $0x140] sm:$0xff]
    %v4131 = vld [vmem:[#allocation16 + $0x148] sm:$0xff]
    %v4132 = vld [vmem:[#allocation16 + $0x150] sm:$0xff]
    %v4133 = vld [vmem:[#allocation16 + $0x158] sm:$0xff]
    %v4134 = vld [vmem:[#allocation16 + $0x160] sm:$0xff]
    %v4135 = vld [vmem:[#allocation16 + $0x168] sm:$0xff]
    %v4136 = vld [vmem:[#allocation16 + $0x170] sm:$0xff]
    %v4137 = vld [vmem:[#allocation16 + $0x178] sm:$0xff]
    %v4138 = vld [vmem:[#allocation16 + $0x180] sm:$0xff]
    %v4139 = vld [vmem:[#allocation16 + $0x188] sm:$0xff]
    %v4140 = vld [vmem:[#allocation16 + $0x190] sm:$0xff]
    %v4141 = vld [vmem:[#allocation16 + $0x198] sm:$0xff]
    %v4142 = vld [vmem:[#allocation16 + $0x1a0] sm:$0xff]
    %v4143 = vld [vmem:[#allocation16 + $0x1a8] sm:$0xff]
    %v4144 = vld [vmem:[#allocation16 + $0x1b0] sm:$0xff]
    %v4145 = vld [vmem:[#allocation16 + $0x1b8] sm:$0xff]
    %v4146 = vld [vmem:[#allocation16 + $0x1c0] sm:$0xff]
    %v4147 = vld [vmem:[#allocation16 + $0x1c8] sm:$0xff]
    %v4148 = vld [vmem:[#allocation16 + $0x1d0] sm:$0xff]
    %v4149 = vld [vmem:[#allocation16 + $0x1d8] sm:$0xff]
    %v4150 = vld [vmem:[#allocation16 + $0x1e0] sm:$0xff]
    %v4151 = vld [vmem:[#allocation16 + $0x1e8] sm:$0xff]
    %v4152 = vld [vmem:[#allocation16 + $0x1f0] sm:$0xff]
    %v4153 = vld [vmem:[#allocation16 + $0x1f8] sm:$0xff]
    %v4154 = vld [vmem:[#allocation16 + $0x200] sm:$0xff]
    %v4155 = vld [vmem:[#allocation16 + $0x208] sm:$0xff]
    %v4156 = vld [vmem:[#allocation16 + $0x210] sm:$0xff]
    %v4157 = vld [vmem:[#allocation16 + $0x218] sm:$0xff]
    %v4158 = vld [vmem:[#allocation16 + $0x220] sm:$0xff]
    %v4159 = vld [vmem:[#allocation16 + $0x228] sm:$0xff]
    %v4160 = vld [vmem:[#allocation16 + $0x230] sm:$0xff]
    %v4161 = vld [vmem:[#allocation16 + $0x238] sm:$0xff]
    %v4162 = vld [vmem:[#allocation16 + $0x240] sm:$0xff]
    %v4163 = vld [vmem:[#allocation16 + $0x248] sm:$0xff]
    %v4164 = vld [vmem:[#allocation16 + $0x250] sm:$0xff]
    %v4165 = vld [vmem:[#allocation16 + $0x258] sm:$0xff]
    %v4166 = vld [vmem:[#allocation16 + $0x260] sm:$0xff]
    %v4167 = vld [vmem:[#allocation16 + $0x268] sm:$0xff]
    %v4168 = vld [vmem:[#allocation16 + $0x270] sm:$0xff]
    %v4169 = vld [vmem:[#allocation16 + $0x278] sm:$0xff]
    %v4170 = vld [vmem:[#allocation16 + $0x280] sm:$0xff]
    %v4171 = vld [vmem:[#allocation16 + $0x288] sm:$0xff]
    %v4172 = vld [vmem:[#allocation16 + $0x290] sm:$0xff]
    %v4173 = vld [vmem:[#allocation16 + $0x298] sm:$0xff]
    %v4174 = vld [vmem:[#allocation16 + $0x2a0] sm:$0xff]
    %v4175 = vld [vmem:[#allocation16 + $0x2a8] sm:$0xff]
    %v4176 = vld [vmem:[#allocation16 + $0x2b0] sm:$0xff]
    %v4177 = vld [vmem:[#allocation16 + $0x2b8] sm:$0xff]
    %v4178 = vld [vmem:[#allocation16 + $0x2c0] sm:$0xff]
    %v4179 = vld [vmem:[#allocation16 + $0x2c8] sm:$0xff]
    %v4180 = vld [vmem:[#allocation16 + $0x2d0] sm:$0xff]
    %v4181 = vld [vmem:[#allocation16 + $0x2d8] sm:$0xff]
    %v4182 = vld [vmem:[#allocation16 + $0x2e0] sm:$0xff]
    %v4183 = vld [vmem:[#allocation16 + $0x2e8] sm:$0xff]
    %v4184 = vld [vmem:[#allocation16 + $0x2f0] sm:$0xff]
    %v4185 = vld [vmem:[#allocation16 + $0x2f8] sm:$0xff]
    %v4186 = vld [vmem:[#allocation16 + $0x300] sm:$0xff]
    %v4187 = vld [vmem:[#allocation16 + $0x308] sm:$0xff]
    %v4188 = vld [vmem:[#allocation16 + $0x310] sm:$0xff]
    %v4189 = vld [vmem:[#allocation16 + $0x318] sm:$0xff]
    %v4190 = vld [vmem:[#allocation16 + $0x320] sm:$0xff]
    %v4191 = vld [vmem:[#allocation16 + $0x328] sm:$0xff]
    %v4192 = vld [vmem:[#allocation16 + $0x330] sm:$0xff]
    %v4193 = vld [vmem:[#allocation16 + $0x338] sm:$0xff]
    %v4194 = vld [vmem:[#allocation16 + $0x340] sm:$0xff]
    %v4195 = vld [vmem:[#allocation16 + $0x348] sm:$0xff]
    %v4196 = vld [vmem:[#allocation16 + $0x350] sm:$0xff]
    %v4197 = vld [vmem:[#allocation16 + $0x358] sm:$0xff]
    %v4198 = vld [vmem:[#allocation16 + $0x360] sm:$0xff]
    %v4199 = vld [vmem:[#allocation16 + $0x368] sm:$0xff]
    %v4200 = vld [vmem:[#allocation16 + $0x370] sm:$0xff]
    %v4201 = vld [vmem:[#allocation16 + $0x378] sm:$0xff]
    %v4202 = vld [vmem:[#allocation16 + $0x380] sm:$0xff]
    %v4203 = vld [vmem:[#allocation16 + $0x388] sm:$0xff]
    %v4204 = vld [vmem:[#allocation16 + $0x390] sm:$0xff]
    %v4205 = vld [vmem:[#allocation16 + $0x398] sm:$0xff]
    %v4206 = vld [vmem:[#allocation16 + $0x3a0] sm:$0xff]
    %v4207 = vld [vmem:[#allocation16 + $0x3a8] sm:$0xff]
    %v4208 = vld [vmem:[#allocation16 + $0x3b0] sm:$0xff]
    %v4209 = vld [vmem:[#allocation16 + $0x3b8] sm:$0xff]
    %v4210 = vld [vmem:[#allocation16 + $0x3c0] sm:$0xff]
    %v4211 = vld [vmem:[#allocation16 + $0x3c8] sm:$0xff]
    %v4212 = vld [vmem:[#allocation16 + $0x3d0] sm:$0xff]
    %v4213 = vld [vmem:[#allocation16 + $0x3d8] sm:$0xff]
    %v4214 = vld [vmem:[#allocation16 + $0x3e0] sm:$0xff]
    %v4215 = vld [vmem:[#allocation16 + $0x3e8] sm:$0xff]
    %v4216 = vld [vmem:[#allocation16 + $0x3f0] sm:$0xff]
    %v4217 = vld [vmem:[#allocation16 + $0x3f8] sm:$0xff]
    %v4218 = vld [vmem:[#allocation16 + $0x400] sm:$0xff]
    %v4219 = vld [vmem:[#allocation16 + $0x408] sm:$0xff]
    %v4220 = vld [vmem:[#allocation16 + $0x410] sm:$0xff]
    %v4221 = vld [vmem:[#allocation16 + $0x418] sm:$0xff]
    %v4222 = vld [vmem:[#allocation16 + $0x420] sm:$0xff]
    %v4223 = vld [vmem:[#allocation16 + $0x428] sm:$0xff]
    %v4224 = vld [vmem:[#allocation16 + $0x430] sm:$0xff]
    %v4225 = vld [vmem:[#allocation16 + $0x438] sm:$0xff]
    %v4226 = vld [vmem:[#allocation16 + $0x440] sm:$0xff]
    %v4227 = vld [vmem:[#allocation16 + $0x448] sm:$0xff]
    %v4228 = vld [vmem:[#allocation16 + $0x450] sm:$0xff]
    %v4229 = vld [vmem:[#allocation16 + $0x458] sm:$0xff]
    %v4230 = vld [vmem:[#allocation16 + $0x460] sm:$0xff]
    %v4231 = vld [vmem:[#allocation16 + $0x468] sm:$0xff]
    %v4232 = vld [vmem:[#allocation16 + $0x470] sm:$0xff]
    %v4233 = vld [vmem:[#allocation16 + $0x478] sm:$0xff]
    %v4234 = vld [vmem:[#allocation16 + $0x480] sm:$0xff]
    %v4235 = vld [vmem:[#allocation16 + $0x488] sm:$0xff]
    %v4236 = vld [vmem:[#allocation16 + $0x490] sm:$0xff]
    %v4237 = vld [vmem:[#allocation16 + $0x498] sm:$0xff]
    %v4238 = vld [vmem:[#allocation16 + $0x4a0] sm:$0xff]
    %v4239 = vld [vmem:[#allocation16 + $0x4a8] sm:$0xff]
    %v4240 = vld [vmem:[#allocation16 + $0x4b0] sm:$0xff]
    %v4241 = vld [vmem:[#allocation16 + $0x4b8] sm:$0xff]
    %v4242 = vld [vmem:[#allocation16 + $0x4c0] sm:$0xff]
    %v4243 = vld [vmem:[#allocation16 + $0x4c8] sm:$0xff]
    %v4244 = vld [vmem:[#allocation16 + $0x4d0] sm:$0xff]
    %v4245 = vld [vmem:[#allocation16 + $0x4d8] sm:$0xff]
    %v4246 = vld [vmem:[#allocation16 + $0x4e0] sm:$0xff]
    %v4247 = vld [vmem:[#allocation16 + $0x4e8] sm:$0xff]
    %v4248 = vld [vmem:[#allocation16 + $0x4f0] sm:$0xff]
    %v4249 = vld [vmem:[#allocation16 + $0x4f8] sm:$0xff]
    %v4250 = vld [vmem:[#allocation16 + $0x500] sm:$0xff]
    %v4251 = vld [vmem:[#allocation16 + $0x508] sm:$0xff]
    %v4252 = vld [vmem:[#allocation16 + $0x510] sm:$0xff]
    %v4253 = vld [vmem:[#allocation16 + $0x518] sm:$0xff]
    %v4254 = vld [vmem:[#allocation16 + $0x520] sm:$0xff]
    %v4255 = vld [vmem:[#allocation16 + $0x528] sm:$0xff]
    %v4256 = vld [vmem:[#allocation16 + $0x530] sm:$0xff]
    %v4257 = vld [vmem:[#allocation16 + $0x538] sm:$0xff]
    %v4258 = vld [vmem:[#allocation16 + $0x540] sm:$0xff]
    %v4259 = vld [vmem:[#allocation16 + $0x548] sm:$0xff]
    %v4260 = vld [vmem:[#allocation16 + $0x550] sm:$0xff]
    %v4261 = vld [vmem:[#allocation16 + $0x558] sm:$0xff]
    %v4262 = vld [vmem:[#allocation16 + $0x560] sm:$0xff]
    %v4263 = vld [vmem:[#allocation16 + $0x568] sm:$0xff]
    %v4264 = vld [vmem:[#allocation16 + $0x570] sm:$0xff]
    %v4265 = vld [vmem:[#allocation16 + $0x578] sm:$0xff]
    %v4266 = vld [vmem:[#allocation16 + $0x580] sm:$0xff]
    %v4267 = vld [vmem:[#allocation16 + $0x588] sm:$0xff]
    %v4268 = vld [vmem:[#allocation16 + $0x590] sm:$0xff]
    %v4269 = vld [vmem:[#allocation16 + $0x598] sm:$0xff]
    %v4270 = vld [vmem:[#allocation16 + $0x5a0] sm:$0xff]
    %v4271 = vld [vmem:[#allocation16 + $0x5a8] sm:$0xff]
    %v4272 = vld [vmem:[#allocation16 + $0x5b0] sm:$0xff]
    %v4273 = vld [vmem:[#allocation16 + $0x5b8] sm:$0xff]
    %v4274 = vld [vmem:[#allocation16 + $0x5c0] sm:$0xff]
    %v4275 = vld [vmem:[#allocation16 + $0x5c8] sm:$0xff]
    %v4276 = vld [vmem:[#allocation16 + $0x5d0] sm:$0xff]
    %v4277 = vld [vmem:[#allocation16 + $0x5d8] sm:$0xff]
    %v4278 = vld [vmem:[#allocation16 + $0x5e0] sm:$0xff]
    %v4279 = vld [vmem:[#allocation16 + $0x5e8] sm:$0xff]
    %v4280 = vld [vmem:[#allocation16 + $0x5f0] sm:$0xff]
    %v4281 = vld [vmem:[#allocation16 + $0x5f8] sm:$0xff]
    %v4282 = vld [vmem:[#allocation16 + $0x600] sm:$0xff]
    %v4283 = vld [vmem:[#allocation16 + $0x608] sm:$0xff]
    %v4284 = vld [vmem:[#allocation16 + $0x610] sm:$0xff]
    %v4285 = vld [vmem:[#allocation16 + $0x618] sm:$0xff]
    %v4286 = vld [vmem:[#allocation16 + $0x620] sm:$0xff]
    %v4287 = vld [vmem:[#allocation16 + $0x628] sm:$0xff]
    %v4288 = vld [vmem:[#allocation16 + $0x630] sm:$0xff]
    %v4289 = vld [vmem:[#allocation16 + $0x638] sm:$0xff]
    %v4290 = vld [vmem:[#allocation16 + $0x640] sm:$0xff]
    %v4291 = vld [vmem:[#allocation16 + $0x648] sm:$0xff]
    %v4292 = vld [vmem:[#allocation16 + $0x650] sm:$0xff]
    %v4293 = vld [vmem:[#allocation16 + $0x658] sm:$0xff]
    %v4294 = vld [vmem:[#allocation16 + $0x660] sm:$0xff]
    %v4295 = vld [vmem:[#allocation16 + $0x668] sm:$0xff]
    %v4296 = vld [vmem:[#allocation16 + $0x670] sm:$0xff]
    %v4297 = vld [vmem:[#allocation16 + $0x678] sm:$0xff]
    %v4298 = vld [vmem:[#allocation16 + $0x680] sm:$0xff]
    %v4299 = vld [vmem:[#allocation16 + $0x688] sm:$0xff]
    %v4300 = vld [vmem:[#allocation16 + $0x690] sm:$0xff]
    %v4301 = vld [vmem:[#allocation16 + $0x698] sm:$0xff]
    %v4302 = vld [vmem:[#allocation16 + $0x6a0] sm:$0xff]
    %v4303 = vld [vmem:[#allocation16 + $0x6a8] sm:$0xff]
    %v4304 = vld [vmem:[#allocation16 + $0x6b0] sm:$0xff]
    %v4305 = vld [vmem:[#allocation16 + $0x6b8] sm:$0xff]
    %v4306 = vld [vmem:[#allocation16 + $0x6c0] sm:$0xff]
    %v4307 = vld [vmem:[#allocation16 + $0x6c8] sm:$0xff]
    %v4308 = vld [vmem:[#allocation16 + $0x6d0] sm:$0xff]
    %v4309 = vld [vmem:[#allocation16 + $0x6d8] sm:$0xff]
    %v4310 = vld [vmem:[#allocation16 + $0x6e0] sm:$0xff]
    %v4311 = vld [vmem:[#allocation16 + $0x6e8] sm:$0xff]
    %v4312 = vld [vmem:[#allocation16 + $0x6f0] sm:$0xff]
    %v4313 = vld [vmem:[#allocation16 + $0x6f8] sm:$0xff]
    %v4314 = vld [vmem:[#allocation16 + $0x700] sm:$0xff]
    %v4315 = vld [vmem:[#allocation16 + $0x708] sm:$0xff]
    %v4316 = vld [vmem:[#allocation16 + $0x710] sm:$0xff]
    %v4317 = vld [vmem:[#allocation16 + $0x718] sm:$0xff]
    %v4318 = vld [vmem:[#allocation16 + $0x720] sm:$0xff]
    %v4319 = vld [vmem:[#allocation16 + $0x728] sm:$0xff]
    %v4320 = vld [vmem:[#allocation16 + $0x730] sm:$0xff]
    %v4321 = vld [vmem:[#allocation16 + $0x738] sm:$0xff]
    %v4322 = vld [vmem:[#allocation16 + $0x740] sm:$0xff]
    %v4323 = vld [vmem:[#allocation16 + $0x748] sm:$0xff]
    %v4324 = vld [vmem:[#allocation16 + $0x750] sm:$0xff]
    %v4325 = vld [vmem:[#allocation16 + $0x758] sm:$0xff]
    %v4326 = vld [vmem:[#allocation16 + $0x760] sm:$0xff]
    %v4327 = vld [vmem:[#allocation16 + $0x768] sm:$0xff]
    %v4328 = vld [vmem:[#allocation16 + $0x770] sm:$0xff]
    %v4329 = vld [vmem:[#allocation16 + $0x778] sm:$0xff]
    %v4330 = vld [vmem:[#allocation16 + $0x780] sm:$0xff]
    %v4331 = vld [vmem:[#allocation16 + $0x788] sm:$0xff]
    %v4332 = vld [vmem:[#allocation16 + $0x790] sm:$0xff]
    %v4333 = vld [vmem:[#allocation16 + $0x798] sm:$0xff]
    %v4334 = vld [vmem:[#allocation16 + $0x7a0] sm:$0xff]
    %v4335 = vld [vmem:[#allocation16 + $0x7a8] sm:$0xff]
    %v4336 = vld [vmem:[#allocation16 + $0x7b0] sm:$0xff]
    %v4337 = vld [vmem:[#allocation16 + $0x7b8] sm:$0xff]
    %v4338 = vld [vmem:[#allocation16 + $0x7c0] sm:$0xff]
    %v4339 = vld [vmem:[#allocation16 + $0x7c8] sm:$0xff]
    %v4340 = vld [vmem:[#allocation16 + $0x7d0] sm:$0xff]
    %v4341 = vld [vmem:[#allocation16 + $0x7d8] sm:$0xff]
    %v4342 = vld [vmem:[#allocation16 + $0x7e0] sm:$0xff]
    %v4343 = vld [vmem:[#allocation16 + $0x7e8] sm:$0xff]
    %v4344 = vld [vmem:[#allocation16 + $0x7f0] sm:$0xff]
    %v4345 = vld [vmem:[#allocation16 + $0x7f8] sm:$0xff]
    %v4346 = vld [vmem:[#allocation16 + $0x800] sm:$0xff]
    %v4347 = vld [vmem:[#allocation16 + $0x808] sm:$0xff]
    %v4348 = vld [vmem:[#allocation16 + $0x810] sm:$0xff]
    %v4349 = vld [vmem:[#allocation16 + $0x818] sm:$0xff]
    %v4350 = vld [vmem:[#allocation16 + $0x820] sm:$0xff]
    %v4351 = vld [vmem:[#allocation16 + $0x828] sm:$0xff]
    %v4352 = vld [vmem:[#allocation16 + $0x830] sm:$0xff]
    %v4353 = vld [vmem:[#allocation16 + $0x838] sm:$0xff]
    %v4354 = vld [vmem:[#allocation16 + $0x840] sm:$0xff]
    %v4355 = vld [vmem:[#allocation16 + $0x848] sm:$0xff]
    %v4356 = vld [vmem:[#allocation16 + $0x850] sm:$0xff]
    %v4357 = vld [vmem:[#allocation16 + $0x858] sm:$0xff]
    %v4358 = vld [vmem:[#allocation16 + $0x860] sm:$0xff]
    %v4359 = vld [vmem:[#allocation16 + $0x868] sm:$0xff]
    %v4360 = vld [vmem:[#allocation16 + $0x870] sm:$0xff]
    %v4361 = vld [vmem:[#allocation16 + $0x878] sm:$0xff]
    %v4362 = vld [vmem:[#allocation16 + $0x880] sm:$0xff]
    %v4363 = vld [vmem:[#allocation16 + $0x888] sm:$0xff]
    %v4364 = vld [vmem:[#allocation16 + $0x890] sm:$0xff]
    %v4365 = vld [vmem:[#allocation16 + $0x898] sm:$0xff]
    %v4366 = vld [vmem:[#allocation16 + $0x8a0] sm:$0xff]
    %v4367 = vld [vmem:[#allocation16 + $0x8a8] sm:$0xff]
    %v4368 = vld [vmem:[#allocation16 + $0x8b0] sm:$0xff]
    %v4369 = vld [vmem:[#allocation16 + $0x8b8] sm:$0xff]
    %v4370 = vld [vmem:[#allocation16 + $0x8c0] sm:$0xff]
    %v4371 = vld [vmem:[#allocation16 + $0x8c8] sm:$0xff]
    %v4372 = vld [vmem:[#allocation16 + $0x8d0] sm:$0xff]
    %v4373 = vld [vmem:[#allocation16 + $0x8d8] sm:$0xff]
    %v4374 = vld [vmem:[#allocation16 + $0x8e0] sm:$0xff]
    %v4375 = vld [vmem:[#allocation16 + $0x8e8] sm:$0xff]
    %v4376 = vld [vmem:[#allocation16 + $0x8f0] sm:$0xff]
    %v4377 = vld [vmem:[#allocation16 + $0x8f8] sm:$0xff]
    %v4378 = vld [vmem:[#allocation16 + $0x900] sm:$0xff]
    %v4379 = vld [vmem:[#allocation16 + $0x908] sm:$0xff]
    %v4380 = vld [vmem:[#allocation16 + $0x910] sm:$0xff]
    %v4381 = vld [vmem:[#allocation16 + $0x918] sm:$0xff]
    %v4382 = vld [vmem:[#allocation16 + $0x920] sm:$0xff]
    %v4383 = vld [vmem:[#allocation16 + $0x928] sm:$0xff]
    %v4384 = vld [vmem:[#allocation16 + $0x930] sm:$0xff]
    %v4385 = vld [vmem:[#allocation16 + $0x938] sm:$0xff]
    %v4386 = vld [vmem:[#allocation16 + $0x940] sm:$0xff]
    %v4387 = vld [vmem:[#allocation16 + $0x948] sm:$0xff]
    %v4388 = vld [vmem:[#allocation16 + $0x950] sm:$0xff]
    %v4389 = vld [vmem:[#allocation16 + $0x958] sm:$0xff]
    %v4390 = vld [vmem:[#allocation16 + $0x960] sm:$0xff]
    %v4391 = vld [vmem:[#allocation16 + $0x968] sm:$0xff]
    %v4392 = vld [vmem:[#allocation16 + $0x970] sm:$0xff]
    %v4393 = vld [vmem:[#allocation16 + $0x978] sm:$0xff]
    %v4394 = vld [vmem:[#allocation16 + $0x980] sm:$0xff]
    %v4395 = vld [vmem:[#allocation16 + $0x988] sm:$0xff]
    %v4396 = vld [vmem:[#allocation16 + $0x990] sm:$0xff]
    %v4397 = vld [vmem:[#allocation16 + $0x998] sm:$0xff]
    %v4398 = vld [vmem:[#allocation16 + $0x9a0] sm:$0xff]
    %v4399 = vld [vmem:[#allocation16 + $0x9a8] sm:$0xff]
    %v4400 = vld [vmem:[#allocation16 + $0x9b0] sm:$0xff]
    %v4401 = vld [vmem:[#allocation16 + $0x9b8] sm:$0xff]
    %v4402 = vld [vmem:[#allocation16 + $0x9c0] sm:$0xff]
    %v4403 = vld [vmem:[#allocation16 + $0x9c8] sm:$0xff]
    %v4404 = vld [vmem:[#allocation16 + $0x9d0] sm:$0xff]
    %v4405 = vld [vmem:[#allocation16 + $0x9d8] sm:$0xff]
    %v4406 = vld [vmem:[#allocation16 + $0x9e0] sm:$0xff]
    %v4407 = vld [vmem:[#allocation16 + $0x9e8] sm:$0xff]
    %v4408 = vld [vmem:[#allocation16 + $0x9f0] sm:$0xff]
    %v4409 = vld [vmem:[#allocation16 + $0x9f8] sm:$0xff]
    %v4410 = vld [vmem:[#allocation16 + $0xa00] sm:$0xff]
    %v4411 = vld [vmem:[#allocation16 + $0xa08] sm:$0xff]
    %v4412 = vld [vmem:[#allocation16 + $0xa10] sm:$0xff]
    %v4413 = vld [vmem:[#allocation16 + $0xa18] sm:$0xff]
    %v4414 = vld [vmem:[#allocation16 + $0xa20] sm:$0xff]
    %v4415 = vld [vmem:[#allocation16 + $0xa28] sm:$0xff]
    %v4416 = vld [vmem:[#allocation16 + $0xa30] sm:$0xff]
    %v4417 = vld [vmem:[#allocation16 + $0xa38] sm:$0xff]
    %v4418 = vld [vmem:[#allocation16 + $0xa40] sm:$0xff]
    %v4419 = vld [vmem:[#allocation16 + $0xa48] sm:$0xff]
    %v4420 = vld [vmem:[#allocation16 + $0xa50] sm:$0xff]
    %v4421 = vld [vmem:[#allocation16 + $0xa58] sm:$0xff]
    %v4422 = vld [vmem:[#allocation16 + $0xa60] sm:$0xff]
    %v4423 = vld [vmem:[#allocation16 + $0xa68] sm:$0xff]
    %v4424 = vld [vmem:[#allocation16 + $0xa70] sm:$0xff]
    %v4425 = vld [vmem:[#allocation16 + $0xa78] sm:$0xff]
    %v4426 = vld [vmem:[#allocation16 + $0xa80] sm:$0xff]
    %v4427 = vld [vmem:[#allocation16 + $0xa88] sm:$0xff]
    %v4428 = vld [vmem:[#allocation16 + $0xa90] sm:$0xff]
    %v4429 = vld [vmem:[#allocation16 + $0xa98] sm:$0xff]
    %v4430 = vld [vmem:[#allocation16 + $0xaa0] sm:$0xff]
    %v4431 = vld [vmem:[#allocation16 + $0xaa8] sm:$0xff]
    %v4432 = vld [vmem:[#allocation16 + $0xab0] sm:$0xff]
    %v4433 = vld [vmem:[#allocation16 + $0xab8] sm:$0xff]
    %v4434 = vld [vmem:[#allocation16 + $0xac0] sm:$0xff]
    %v4435 = vld [vmem:[#allocation16 + $0xac8] sm:$0xff]
    %v4436 = vld [vmem:[#allocation16 + $0xad0] sm:$0xff]
    %v4437 = vld [vmem:[#allocation16 + $0xad8] sm:$0xff]
    %v4438 = vld [vmem:[#allocation16 + $0xae0] sm:$0xff]
    %v4439 = vld [vmem:[#allocation16 + $0xae8] sm:$0xff]
    %v4440 = vld [vmem:[#allocation16 + $0xaf0] sm:$0xff]
    %v4441 = vld [vmem:[#allocation16 + $0xaf8] sm:$0xff]
    %v4442 = vld [vmem:[#allocation16 + $0xb00] sm:$0xff]
    %v4443 = vld [vmem:[#allocation16 + $0xb08] sm:$0xff]
    %v4444 = vld [vmem:[#allocation16 + $0xb10] sm:$0xff]
    %v4445 = vld [vmem:[#allocation16 + $0xb18] sm:$0xff]
    %v4446 = vld [vmem:[#allocation16 + $0xb20] sm:$0xff]
    %v4447 = vld [vmem:[#allocation16 + $0xb28] sm:$0xff]
    %v4448 = vld [vmem:[#allocation16 + $0xb30] sm:$0xff]
    %v4449 = vld [vmem:[#allocation16 + $0xb38] sm:$0xff]
    %v4450 = vld [vmem:[#allocation16 + $0xb40] sm:$0xff]
    %v4451 = vld [vmem:[#allocation16 + $0xb48] sm:$0xff]
    %v4452 = vld [vmem:[#allocation16 + $0xb50] sm:$0xff]
    %v4453 = vld [vmem:[#allocation16 + $0xb58] sm:$0xff]
    %v4454 = vld [vmem:[#allocation16 + $0xb60] sm:$0xff]
    %v4455 = vld [vmem:[#allocation16 + $0xb68] sm:$0xff]
    %v4456 = vld [vmem:[#allocation16 + $0xb70] sm:$0xff]
    %v4457 = vld [vmem:[#allocation16 + $0xb78] sm:$0xff]
    %v4458 = vld [vmem:[#allocation16 + $0xb80] sm:$0xff]
    %v4459 = vld [vmem:[#allocation16 + $0xb88] sm:$0xff]
    %v4460 = vld [vmem:[#allocation16 + $0xb90] sm:$0xff]
    %v4461 = vld [vmem:[#allocation16 + $0xb98] sm:$0xff]
    %v4462 = vld [vmem:[#allocation16 + $0xba0] sm:$0xff]
    %v4463 = vld [vmem:[#allocation16 + $0xba8] sm:$0xff]
    %v4464 = vld [vmem:[#allocation16 + $0xbb0] sm:$0xff]
    %v4465 = vld [vmem:[#allocation16 + $0xbb8] sm:$0xff]
    %v4466 = vld [vmem:[#allocation16 + $0xbc0] sm:$0xff]
    %v4467 = vld [vmem:[#allocation16 + $0xbc8] sm:$0xff]
    %v4468 = vld [vmem:[#allocation16 + $0xbd0] sm:$0xff]
    %v4469 = vld [vmem:[#allocation16 + $0xbd8] sm:$0xff]
    %v4470 = vld [vmem:[#allocation16 + $0xbe0] sm:$0xff]
    %v4471 = vld [vmem:[#allocation16 + $0xbe8] sm:$0xff]
    %v4472 = vld [vmem:[#allocation16 + $0xbf0] sm:$0xff]
    %v4473 = vld [vmem:[#allocation16 + $0xbf8] sm:$0xff]
    %v4474 = vld [vmem:[#allocation16 + $0xc00] sm:$0xff]
    %v4475 = vld [vmem:[#allocation16 + $0xc08] sm:$0xff]
    %v4476 = vld [vmem:[#allocation16 + $0xc10] sm:$0xff]
    %v4477 = vld [vmem:[#allocation16 + $0xc18] sm:$0xff]
    %v4478 = vld [vmem:[#allocation16 + $0xc20] sm:$0xff]
    %v4479 = vld [vmem:[#allocation16 + $0xc28] sm:$0xff]
    %v4480 = vld [vmem:[#allocation16 + $0xc30] sm:$0xff]
    %v4481 = vld [vmem:[#allocation16 + $0xc38] sm:$0xff]
    %v4482 = vld [vmem:[#allocation16 + $0xc40] sm:$0xff]
    %v4483 = vld [vmem:[#allocation16 + $0xc48] sm:$0xff]
    %v4484 = vld [vmem:[#allocation16 + $0xc50] sm:$0xff]
    %v4485 = vld [vmem:[#allocation16 + $0xc58] sm:$0xff]
    %v4486 = vld [vmem:[#allocation16 + $0xc60] sm:$0xff]
    %v4487 = vld [vmem:[#allocation16 + $0xc68] sm:$0xff]
    %v4488 = vld [vmem:[#allocation16 + $0xc70] sm:$0xff]
    %v4489 = vld [vmem:[#allocation16 + $0xc78] sm:$0xff]
    %v4490 = vld [vmem:[#allocation16 + $0xc80] sm:$0xff]
    %v4491 = vld [vmem:[#allocation16 + $0xc88] sm:$0xff]
    %v4492 = vld [vmem:[#allocation16 + $0xc90] sm:$0xff]
    %v4493 = vld [vmem:[#allocation16 + $0xc98] sm:$0xff]
    %v4494 = vld [vmem:[#allocation16 + $0xca0] sm:$0xff]
    %v4495 = vld [vmem:[#allocation16 + $0xca8] sm:$0xff]
    %v4496 = vld [vmem:[#allocation16 + $0xcb0] sm:$0xff]
    %v4497 = vld [vmem:[#allocation16 + $0xcb8] sm:$0xff]
    %v4498 = vld [vmem:[#allocation16 + $0xcc0] sm:$0xff]
    %v4499 = vld [vmem:[#allocation16 + $0xcc8] sm:$0xff]
    %v4500 = vld [vmem:[#allocation16 + $0xcd0] sm:$0xff]
    %v4501 = vld [vmem:[#allocation16 + $0xcd8] sm:$0xff]
    %v4502 = vld [vmem:[#allocation16 + $0xce0] sm:$0xff]
    %v4503 = vld [vmem:[#allocation16 + $0xce8] sm:$0xff]
    %v4504 = vld [vmem:[#allocation16 + $0xcf0] sm:$0xff]
    %v4505 = vld [vmem:[#allocation16 + $0xcf8] sm:$0xff]
    %v4506 = vld [vmem:[#allocation16 + $0xd00] sm:$0xff]
    %v4507 = vld [vmem:[#allocation16 + $0xd08] sm:$0xff]
    %v4508 = vld [vmem:[#allocation16 + $0xd10] sm:$0xff]
    %v4509 = vld [vmem:[#allocation16 + $0xd18] sm:$0xff]
    %v4510 = vld [vmem:[#allocation16 + $0xd20] sm:$0xff]
    %v4511 = vld [vmem:[#allocation16 + $0xd28] sm:$0xff]
    %v4512 = vld [vmem:[#allocation16 + $0xd30] sm:$0xff]
    %v4513 = vld [vmem:[#allocation16 + $0xd38] sm:$0xff]
    %v4514 = vld [vmem:[#allocation16 + $0xd40] sm:$0xff]
    %v4515 = vld [vmem:[#allocation16 + $0xd48] sm:$0xff]
    %v4516 = vld [vmem:[#allocation16 + $0xd50] sm:$0xff]
    %v4517 = vld [vmem:[#allocation16 + $0xd58] sm:$0xff]
    %v4518 = vld [vmem:[#allocation16 + $0xd60] sm:$0xff]
    %v4519 = vld [vmem:[#allocation16 + $0xd68] sm:$0xff]
    %v4520 = vld [vmem:[#allocation16 + $0xd70] sm:$0xff]
    %v4521 = vld [vmem:[#allocation16 + $0xd78] sm:$0xff]
    %v4522 = vld [vmem:[#allocation16 + $0xd80] sm:$0xff]
    %v4523 = vld [vmem:[#allocation16 + $0xd88] sm:$0xff]
    %v4524 = vld [vmem:[#allocation16 + $0xd90] sm:$0xff]
    %v4525 = vld [vmem:[#allocation16 + $0xd98] sm:$0xff]
    %v4526 = vld [vmem:[#allocation16 + $0xda0] sm:$0xff]
    %v4527 = vld [vmem:[#allocation16 + $0xda8] sm:$0xff]
    %v4528 = vld [vmem:[#allocation16 + $0xdb0] sm:$0xff]
    %v4529 = vld [vmem:[#allocation16 + $0xdb8] sm:$0xff]
    %v4530 = vld [vmem:[#allocation16 + $0xdc0] sm:$0xff]
    %v4531 = vld [vmem:[#allocation16 + $0xdc8] sm:$0xff]
    %v4532 = vld [vmem:[#allocation16 + $0xdd0] sm:$0xff]
    %v4533 = vld [vmem:[#allocation16 + $0xdd8] sm:$0xff]
    %v4534 = vld [vmem:[#allocation16 + $0xde0] sm:$0xff]
    %v4535 = vld [vmem:[#allocation16 + $0xde8] sm:$0xff]
    %v4536 = vld [vmem:[#allocation16 + $0xdf0] sm:$0xff]
    %v4537 = vld [vmem:[#allocation16 + $0xdf8] sm:$0xff]
    %v4538 = vld [vmem:[#allocation16 + $0xe00] sm:$0xff]
    %v4539 = vld [vmem:[#allocation16 + $0xe08] sm:$0xff]
    %v4540 = vld [vmem:[#allocation16 + $0xe10] sm:$0xff]
    %v4541 = vld [vmem:[#allocation16 + $0xe18] sm:$0xff]
    %v4542 = vld [vmem:[#allocation16 + $0xe20] sm:$0xff]
    %v4543 = vld [vmem:[#allocation16 + $0xe28] sm:$0xff]
    %v4544 = vld [vmem:[#allocation16 + $0xe30] sm:$0xff]
    %v4545 = vld [vmem:[#allocation16 + $0xe38] sm:$0xff]
    %v4546 = vld [vmem:[#allocation16 + $0xe40] sm:$0xff]
    %v4547 = vld [vmem:[#allocation16 + $0xe48] sm:$0xff]
    %v4548 = vld [vmem:[#allocation16 + $0xe50] sm:$0xff]
    %v4549 = vld [vmem:[#allocation16 + $0xe58] sm:$0xff]
    %v4550 = vld [vmem:[#allocation16 + $0xe60] sm:$0xff]
    %v4551 = vld [vmem:[#allocation16 + $0xe68] sm:$0xff]
    %v4552 = vld [vmem:[#allocation16 + $0xe70] sm:$0xff]
    %v4553 = vld [vmem:[#allocation16 + $0xe78] sm:$0xff]
    %v4554 = vld [vmem:[#allocation16 + $0xe80] sm:$0xff]
    %v4555 = vld [vmem:[#allocation16 + $0xe88] sm:$0xff]
    %v4556 = vld [vmem:[#allocation16 + $0xe90] sm:$0xff]
    %v4557 = vld [vmem:[#allocation16 + $0xe98] sm:$0xff]
    %v4558 = vld [vmem:[#allocation16 + $0xea0] sm:$0xff]
    %v4559 = vld [vmem:[#allocation16 + $0xea8] sm:$0xff]
    %v4560 = vld [vmem:[#allocation16 + $0xeb0] sm:$0xff]
    %v4561 = vld [vmem:[#allocation16 + $0xeb8] sm:$0xff]
    %v4562 = vld [vmem:[#allocation16 + $0xec0] sm:$0xff]
    %v4563 = vld [vmem:[#allocation16 + $0xec8] sm:$0xff]
    %v4564 = vld [vmem:[#allocation16 + $0xed0] sm:$0xff]
    %v4565 = vld [vmem:[#allocation16 + $0xed8] sm:$0xff]
    %v4566 = vld [vmem:[#allocation16 + $0xee0] sm:$0xff]
    %v4567 = vld [vmem:[#allocation16 + $0xee8] sm:$0xff]
    %v4568 = vld [vmem:[#allocation16 + $0xef0] sm:$0xff]
    %v4569 = vld [vmem:[#allocation16 + $0xef8] sm:$0xff]
    %v4570 = vld [vmem:[#allocation16 + $0xf00] sm:$0xff]
    %v4571 = vld [vmem:[#allocation16 + $0xf08] sm:$0xff]
    %v4572 = vld [vmem:[#allocation16 + $0xf10] sm:$0xff]
    %v4573 = vld [vmem:[#allocation16 + $0xf18] sm:$0xff]
    %v4574 = vld [vmem:[#allocation16 + $0xf20] sm:$0xff]
    %v4575 = vld [vmem:[#allocation16 + $0xf28] sm:$0xff]
    %v4576 = vld [vmem:[#allocation16 + $0xf30] sm:$0xff]
    %v4577 = vld [vmem:[#allocation16 + $0xf38] sm:$0xff]
    %v4578 = vld [vmem:[#allocation16 + $0xf40] sm:$0xff]
    %v4579 = vld [vmem:[#allocation16 + $0xf48] sm:$0xff]
    %v4580 = vld [vmem:[#allocation16 + $0xf50] sm:$0xff]
    %v4581 = vld [vmem:[#allocation16 + $0xf58] sm:$0xff]
    %v4582 = vld [vmem:[#allocation16 + $0xf60] sm:$0xff]
    %v4583 = vld [vmem:[#allocation16 + $0xf68] sm:$0xff]
    %v4584 = vld [vmem:[#allocation16 + $0xf70] sm:$0xff]
    %v4585 = vld [vmem:[#allocation16 + $0xf78] sm:$0xff]
    %v4586 = vld [vmem:[#allocation16 + $0xf80] sm:$0xff]
    %v4587 = vld [vmem:[#allocation16 + $0xf88] sm:$0xff]
    %v4588 = vld [vmem:[#allocation16 + $0xf90] sm:$0xff]
    %v4589 = vld [vmem:[#allocation16 + $0xf98] sm:$0xff]
    %v4590 = vld [vmem:[#allocation16 + $0xfa0] sm:$0xff]
    %v4591 = vld [vmem:[#allocation16 + $0xfa8] sm:$0xff]
    %v4592 = vld [vmem:[#allocation16 + $0xfb0] sm:$0xff]
    %v4593 = vld [vmem:[#allocation16 + $0xfb8] sm:$0xff]
    %v4594 = vld [vmem:[#allocation16 + $0xfc0] sm:$0xff]
    %v4595 = vld [vmem:[#allocation16 + $0xfc8] sm:$0xff]
    %v4596 = vld [vmem:[#allocation16 + $0xfd0] sm:$0xff]
    %v4597 = vld [vmem:[#allocation16 + $0xfd8] sm:$0xff]
    %v4598 = vld [vmem:[#allocation16 + $0xfe0] sm:$0xff]
    %v4599 = vld [vmem:[#allocation16 + $0xfe8] sm:$0xff]
    %v4600 = vld [vmem:[#allocation16 + $0xff0] sm:$0xff]
    %v4601 = vld [vmem:[#allocation16 + $0xff8] sm:$0xff]
    %v4602 = vld [vmem:[#allocation17] sm:$0xff]
    %v4604 = vlaneseq
    %v4605 = vshrl.u32 %v4604, 7
    %v4606 = vsub.s32 0, %v4605
    %v4607 = vrot.slane %v4602, %v4606
    %v4608 = vlaneseq
    %v4609 = vshrl.u32 %v4608, 7
    %v4610 = vsub.s32 1, %v4609
    %v4611 = vrot.slane %v4602, %v4610
    %v4612 = vlaneseq
    %v4613 = vshrl.u32 %v4612, 7
    %v4614 = vsub.s32 2, %v4613
    %v4615 = vrot.slane %v4602, %v4614
    %v4616 = vlaneseq
    %v4617 = vshrl.u32 %v4616, 7
    %v4618 = vsub.s32 3, %v4617
    %v4619 = vrot.slane %v4602, %v4618
    %v4620 = vlaneseq
    %v4621 = vshrl.u32 %v4620, 7
    %v4622 = vsub.s32 4, %v4621
    %v4623 = vrot.slane %v4602, %v4622
    %v4624 = vlaneseq
    %v4625 = vshrl.u32 %v4624, 7
    %v4626 = vsub.s32 5, %v4625
    %v4627 = vrot.slane %v4602, %v4626
    %v4628 = vlaneseq
    %v4629 = vshrl.u32 %v4628, 7
    %v4630 = vsub.s32 6, %v4629
    %v4631 = vrot.slane %v4602, %v4630
    %v4632 = vlaneseq
    %v4633 = vshrl.u32 %v4632, 7
    %v4634 = vsub.s32 7, %v4633
    %v4635 = vrot.slane %v4602, %v4634
    %v5156 = vunpack.c.l.b16 %v4090
    %v5157 = vunpack.c.h.b16 %v4090
    %v5158 = vunpack.c.l.b16 %v4091
    %v5159 = vunpack.c.h.b16 %v4091
    %v5160 = vunpack.c.l.b16 %v4092
    %v5161 = vunpack.c.h.b16 %v4092
    %v5162 = vunpack.c.l.b16 %v4093
    %v5163 = vunpack.c.h.b16 %v4093
    %v5164 = vunpack.c.l.b16 %v4094
    %v5165 = vunpack.c.h.b16 %v4094
    %v5166 = vunpack.c.l.b16 %v4095
    %v5167 = vunpack.c.h.b16 %v4095
    %v5168 = vunpack.c.l.b16 %v4096
    %v5169 = vunpack.c.h.b16 %v4096
    %v5170 = vunpack.c.l.b16 %v4097
    %v5171 = vunpack.c.h.b16 %v4097
    %v5172 = vunpack.c.l.b16 %v4098
    %v5173 = vunpack.c.h.b16 %v4098
    %v5174 = vunpack.c.l.b16 %v4099
    %v5175 = vunpack.c.h.b16 %v4099
    %v5176 = vunpack.c.l.b16 %v4100
    %v5177 = vunpack.c.h.b16 %v4100
    %v5178 = vunpack.c.l.b16 %v4101
    %v5179 = vunpack.c.h.b16 %v4101
    %v5180 = vunpack.c.l.b16 %v4102
    %v5181 = vunpack.c.h.b16 %v4102
    %v5182 = vunpack.c.l.b16 %v4103
    %v5183 = vunpack.c.h.b16 %v4103
    %v5184 = vunpack.c.l.b16 %v4104
    %v5185 = vunpack.c.h.b16 %v4104
    %v5186 = vunpack.c.l.b16 %v4105
    %v5187 = vunpack.c.h.b16 %v4105
    %v5188 = vunpack.c.l.b16 %v4106
    %v5189 = vunpack.c.h.b16 %v4106
    %v5190 = vunpack.c.l.b16 %v4107
    %v5191 = vunpack.c.h.b16 %v4107
    %v5192 = vunpack.c.l.b16 %v4108
    %v5193 = vunpack.c.h.b16 %v4108
    %v5194 = vunpack.c.l.b16 %v4109
    %v5195 = vunpack.c.h.b16 %v4109
    %v5196 = vunpack.c.l.b16 %v4110
    %v5197 = vunpack.c.h.b16 %v4110
    %v5198 = vunpack.c.l.b16 %v4111
    %v5199 = vunpack.c.h.b16 %v4111
    %v5200 = vunpack.c.l.b16 %v4112
    %v5201 = vunpack.c.h.b16 %v4112
    %v5202 = vunpack.c.l.b16 %v4113
    %v5203 = vunpack.c.h.b16 %v4113
    %v5204 = vunpack.c.l.b16 %v4114
    %v5205 = vunpack.c.h.b16 %v4114
    %v5206 = vunpack.c.l.b16 %v4115
    %v5207 = vunpack.c.h.b16 %v4115
    %v5208 = vunpack.c.l.b16 %v4116
    %v5209 = vunpack.c.h.b16 %v4116
    %v5210 = vunpack.c.l.b16 %v4117
    %v5211 = vunpack.c.h.b16 %v4117
    %v5212 = vunpack.c.l.b16 %v4118
    %v5213 = vunpack.c.h.b16 %v4118
    %v5214 = vunpack.c.l.b16 %v4119
    %v5215 = vunpack.c.h.b16 %v4119
    %v5216 = vunpack.c.l.b16 %v4120
    %v5217 = vunpack.c.h.b16 %v4120
    %v5218 = vunpack.c.l.b16 %v4121
    %v5219 = vunpack.c.h.b16 %v4121
    %v5220 = vunpack.c.l.b16 %v4122
    %v5221 = vunpack.c.h.b16 %v4122
    %v5222 = vunpack.c.l.b16 %v4123
    %v5223 = vunpack.c.h.b16 %v4123
    %v5224 = vunpack.c.l.b16 %v4124
    %v5225 = vunpack.c.h.b16 %v4124
    %v5226 = vunpack.c.l.b16 %v4125
    %v5227 = vunpack.c.h.b16 %v4125
    %v5228 = vunpack.c.l.b16 %v4126
    %v5229 = vunpack.c.h.b16 %v4126
    %v5230 = vunpack.c.l.b16 %v4127
    %v5231 = vunpack.c.h.b16 %v4127
    %v5232 = vunpack.c.l.b16 %v4128
    %v5233 = vunpack.c.h.b16 %v4128
    %v5234 = vunpack.c.l.b16 %v4129
    %v5235 = vunpack.c.h.b16 %v4129
    %v5236 = vunpack.c.l.b16 %v4130
    %v5237 = vunpack.c.h.b16 %v4130
    %v5238 = vunpack.c.l.b16 %v4131
    %v5239 = vunpack.c.h.b16 %v4131
    %v5240 = vunpack.c.l.b16 %v4132
    %v5241 = vunpack.c.h.b16 %v4132
    %v5242 = vunpack.c.l.b16 %v4133
    %v5243 = vunpack.c.h.b16 %v4133
    %v5244 = vunpack.c.l.b16 %v4134
    %v5245 = vunpack.c.h.b16 %v4134
    %v5246 = vunpack.c.l.b16 %v4135
    %v5247 = vunpack.c.h.b16 %v4135
    %v5248 = vunpack.c.l.b16 %v4136
    %v5249 = vunpack.c.h.b16 %v4136
    %v5250 = vunpack.c.l.b16 %v4137
    %v5251 = vunpack.c.h.b16 %v4137
    %v5252 = vunpack.c.l.b16 %v4138
    %v5253 = vunpack.c.h.b16 %v4138
    %v5254 = vunpack.c.l.b16 %v4139
    %v5255 = vunpack.c.h.b16 %v4139
    %v5256 = vunpack.c.l.b16 %v4140
    %v5257 = vunpack.c.h.b16 %v4140
    %v5258 = vunpack.c.l.b16 %v4141
    %v5259 = vunpack.c.h.b16 %v4141
    %v5260 = vunpack.c.l.b16 %v4142
    %v5261 = vunpack.c.h.b16 %v4142
    %v5262 = vunpack.c.l.b16 %v4143
    %v5263 = vunpack.c.h.b16 %v4143
    %v5264 = vunpack.c.l.b16 %v4144
    %v5265 = vunpack.c.h.b16 %v4144
    %v5266 = vunpack.c.l.b16 %v4145
    %v5267 = vunpack.c.h.b16 %v4145
    %v5268 = vunpack.c.l.b16 %v4146
    %v5269 = vunpack.c.h.b16 %v4146
    %v5270 = vunpack.c.l.b16 %v4147
    %v5271 = vunpack.c.h.b16 %v4147
    %v5272 = vunpack.c.l.b16 %v4148
    %v5273 = vunpack.c.h.b16 %v4148
    %v5274 = vunpack.c.l.b16 %v4149
    %v5275 = vunpack.c.h.b16 %v4149
    %v5276 = vunpack.c.l.b16 %v4150
    %v5277 = vunpack.c.h.b16 %v4150
    %v5278 = vunpack.c.l.b16 %v4151
    %v5279 = vunpack.c.h.b16 %v4151
    %v5280 = vunpack.c.l.b16 %v4152
    %v5281 = vunpack.c.h.b16 %v4152
    %v5282 = vunpack.c.l.b16 %v4153
    %v5283 = vunpack.c.h.b16 %v4153
    %v5284 = vunpack.c.l.b16 %v4154
    %v5285 = vunpack.c.h.b16 %v4154
    %v5286 = vunpack.c.l.b16 %v4155
    %v5287 = vunpack.c.h.b16 %v4155
    %v5288 = vunpack.c.l.b16 %v4156
    %v5289 = vunpack.c.h.b16 %v4156
    %v5290 = vunpack.c.l.b16 %v4157
    %v5291 = vunpack.c.h.b16 %v4157
    %v5292 = vunpack.c.l.b16 %v4158
    %v5293 = vunpack.c.h.b16 %v4158
    %v5294 = vunpack.c.l.b16 %v4159
    %v5295 = vunpack.c.h.b16 %v4159
    %v5296 = vunpack.c.l.b16 %v4160
    %v5297 = vunpack.c.h.b16 %v4160
    %v5298 = vunpack.c.l.b16 %v4161
    %v5299 = vunpack.c.h.b16 %v4161
    %v5300 = vunpack.c.l.b16 %v4162
    %v5301 = vunpack.c.h.b16 %v4162
    %v5302 = vunpack.c.l.b16 %v4163
    %v5303 = vunpack.c.h.b16 %v4163
    %v5304 = vunpack.c.l.b16 %v4164
    %v5305 = vunpack.c.h.b16 %v4164
    %v5306 = vunpack.c.l.b16 %v4165
    %v5307 = vunpack.c.h.b16 %v4165
    %v5308 = vunpack.c.l.b16 %v4166
    %v5309 = vunpack.c.h.b16 %v4166
    %v5310 = vunpack.c.l.b16 %v4167
    %v5311 = vunpack.c.h.b16 %v4167
    %v5312 = vunpack.c.l.b16 %v4168
    %v5313 = vunpack.c.h.b16 %v4168
    %v5314 = vunpack.c.l.b16 %v4169
    %v5315 = vunpack.c.h.b16 %v4169
    %v5316 = vunpack.c.l.b16 %v4170
    %v5317 = vunpack.c.h.b16 %v4170
    %v5318 = vunpack.c.l.b16 %v4171
    %v5319 = vunpack.c.h.b16 %v4171
    %v5320 = vunpack.c.l.b16 %v4172
    %v5321 = vunpack.c.h.b16 %v4172
    %v5322 = vunpack.c.l.b16 %v4173
    %v5323 = vunpack.c.h.b16 %v4173
    %v5324 = vunpack.c.l.b16 %v4174
    %v5325 = vunpack.c.h.b16 %v4174
    %v5326 = vunpack.c.l.b16 %v4175
    %v5327 = vunpack.c.h.b16 %v4175
    %v5328 = vunpack.c.l.b16 %v4176
    %v5329 = vunpack.c.h.b16 %v4176
    %v5330 = vunpack.c.l.b16 %v4177
    %v5331 = vunpack.c.h.b16 %v4177
    %v5332 = vunpack.c.l.b16 %v4178
    %v5333 = vunpack.c.h.b16 %v4178
    %v5334 = vunpack.c.l.b16 %v4179
    %v5335 = vunpack.c.h.b16 %v4179
    %v5336 = vunpack.c.l.b16 %v4180
    %v5337 = vunpack.c.h.b16 %v4180
    %v5338 = vunpack.c.l.b16 %v4181
    %v5339 = vunpack.c.h.b16 %v4181
    %v5340 = vunpack.c.l.b16 %v4182
    %v5341 = vunpack.c.h.b16 %v4182
    %v5342 = vunpack.c.l.b16 %v4183
    %v5343 = vunpack.c.h.b16 %v4183
    %v5344 = vunpack.c.l.b16 %v4184
    %v5345 = vunpack.c.h.b16 %v4184
    %v5346 = vunpack.c.l.b16 %v4185
    %v5347 = vunpack.c.h.b16 %v4185
    %v5348 = vunpack.c.l.b16 %v4186
    %v5349 = vunpack.c.h.b16 %v4186
    %v5350 = vunpack.c.l.b16 %v4187
    %v5351 = vunpack.c.h.b16 %v4187
    %v5352 = vunpack.c.l.b16 %v4188
    %v5353 = vunpack.c.h.b16 %v4188
    %v5354 = vunpack.c.l.b16 %v4189
    %v5355 = vunpack.c.h.b16 %v4189
    %v5356 = vunpack.c.l.b16 %v4190
    %v5357 = vunpack.c.h.b16 %v4190
    %v5358 = vunpack.c.l.b16 %v4191
    %v5359 = vunpack.c.h.b16 %v4191
    %v5360 = vunpack.c.l.b16 %v4192
    %v5361 = vunpack.c.h.b16 %v4192
    %v5362 = vunpack.c.l.b16 %v4193
    %v5363 = vunpack.c.h.b16 %v4193
    %v5364 = vunpack.c.l.b16 %v4194
    %v5365 = vunpack.c.h.b16 %v4194
    %v5366 = vunpack.c.l.b16 %v4195
    %v5367 = vunpack.c.h.b16 %v4195
    %v5368 = vunpack.c.l.b16 %v4196
    %v5369 = vunpack.c.h.b16 %v4196
    %v5370 = vunpack.c.l.b16 %v4197
    %v5371 = vunpack.c.h.b16 %v4197
    %v5372 = vunpack.c.l.b16 %v4198
    %v5373 = vunpack.c.h.b16 %v4198
    %v5374 = vunpack.c.l.b16 %v4199
    %v5375 = vunpack.c.h.b16 %v4199
    %v5376 = vunpack.c.l.b16 %v4200
    %v5377 = vunpack.c.h.b16 %v4200
    %v5378 = vunpack.c.l.b16 %v4201
    %v5379 = vunpack.c.h.b16 %v4201
    %v5380 = vunpack.c.l.b16 %v4202
    %v5381 = vunpack.c.h.b16 %v4202
    %v5382 = vunpack.c.l.b16 %v4203
    %v5383 = vunpack.c.h.b16 %v4203
    %v5384 = vunpack.c.l.b16 %v4204
    %v5385 = vunpack.c.h.b16 %v4204
    %v5386 = vunpack.c.l.b16 %v4205
    %v5387 = vunpack.c.h.b16 %v4205
    %v5388 = vunpack.c.l.b16 %v4206
    %v5389 = vunpack.c.h.b16 %v4206
    %v5390 = vunpack.c.l.b16 %v4207
    %v5391 = vunpack.c.h.b16 %v4207
    %v5392 = vunpack.c.l.b16 %v4208
    %v5393 = vunpack.c.h.b16 %v4208
    %v5394 = vunpack.c.l.b16 %v4209
    %v5395 = vunpack.c.h.b16 %v4209
    %v5396 = vunpack.c.l.b16 %v4210
    %v5397 = vunpack.c.h.b16 %v4210
    %v5398 = vunpack.c.l.b16 %v4211
    %v5399 = vunpack.c.h.b16 %v4211
    %v5400 = vunpack.c.l.b16 %v4212
    %v5401 = vunpack.c.h.b16 %v4212
    %v5402 = vunpack.c.l.b16 %v4213
    %v5403 = vunpack.c.h.b16 %v4213
    %v5404 = vunpack.c.l.b16 %v4214
    %v5405 = vunpack.c.h.b16 %v4214
    %v5406 = vunpack.c.l.b16 %v4215
    %v5407 = vunpack.c.h.b16 %v4215
    %v5408 = vunpack.c.l.b16 %v4216
    %v5409 = vunpack.c.h.b16 %v4216
    %v5410 = vunpack.c.l.b16 %v4217
    %v5411 = vunpack.c.h.b16 %v4217
    %v5412 = vunpack.c.l.b16 %v4218
    %v5413 = vunpack.c.h.b16 %v4218
    %v5414 = vunpack.c.l.b16 %v4219
    %v5415 = vunpack.c.h.b16 %v4219
    %v5416 = vunpack.c.l.b16 %v4220
    %v5417 = vunpack.c.h.b16 %v4220
    %v5418 = vunpack.c.l.b16 %v4221
    %v5419 = vunpack.c.h.b16 %v4221
    %v5420 = vunpack.c.l.b16 %v4222
    %v5421 = vunpack.c.h.b16 %v4222
    %v5422 = vunpack.c.l.b16 %v4223
    %v5423 = vunpack.c.h.b16 %v4223
    %v5424 = vunpack.c.l.b16 %v4224
    %v5425 = vunpack.c.h.b16 %v4224
    %v5426 = vunpack.c.l.b16 %v4225
    %v5427 = vunpack.c.h.b16 %v4225
    %v5428 = vunpack.c.l.b16 %v4226
    %v5429 = vunpack.c.h.b16 %v4226
    %v5430 = vunpack.c.l.b16 %v4227
    %v5431 = vunpack.c.h.b16 %v4227
    %v5432 = vunpack.c.l.b16 %v4228
    %v5433 = vunpack.c.h.b16 %v4228
    %v5434 = vunpack.c.l.b16 %v4229
    %v5435 = vunpack.c.h.b16 %v4229
    %v5436 = vunpack.c.l.b16 %v4230
    %v5437 = vunpack.c.h.b16 %v4230
    %v5438 = vunpack.c.l.b16 %v4231
    %v5439 = vunpack.c.h.b16 %v4231
    %v5440 = vunpack.c.l.b16 %v4232
    %v5441 = vunpack.c.h.b16 %v4232
    %v5442 = vunpack.c.l.b16 %v4233
    %v5443 = vunpack.c.h.b16 %v4233
    %v5444 = vunpack.c.l.b16 %v4234
    %v5445 = vunpack.c.h.b16 %v4234
    %v5446 = vunpack.c.l.b16 %v4235
    %v5447 = vunpack.c.h.b16 %v4235
    %v5448 = vunpack.c.l.b16 %v4236
    %v5449 = vunpack.c.h.b16 %v4236
    %v5450 = vunpack.c.l.b16 %v4237
    %v5451 = vunpack.c.h.b16 %v4237
    %v5452 = vunpack.c.l.b16 %v4238
    %v5453 = vunpack.c.h.b16 %v4238
    %v5454 = vunpack.c.l.b16 %v4239
    %v5455 = vunpack.c.h.b16 %v4239
    %v5456 = vunpack.c.l.b16 %v4240
    %v5457 = vunpack.c.h.b16 %v4240
    %v5458 = vunpack.c.l.b16 %v4241
    %v5459 = vunpack.c.h.b16 %v4241
    %v5460 = vunpack.c.l.b16 %v4242
    %v5461 = vunpack.c.h.b16 %v4242
    %v5462 = vunpack.c.l.b16 %v4243
    %v5463 = vunpack.c.h.b16 %v4243
    %v5464 = vunpack.c.l.b16 %v4244
    %v5465 = vunpack.c.h.b16 %v4244
    %v5466 = vunpack.c.l.b16 %v4245
    %v5467 = vunpack.c.h.b16 %v4245
    %v5468 = vunpack.c.l.b16 %v4246
    %v5469 = vunpack.c.h.b16 %v4246
    %v5470 = vunpack.c.l.b16 %v4247
    %v5471 = vunpack.c.h.b16 %v4247
    %v5472 = vunpack.c.l.b16 %v4248
    %v5473 = vunpack.c.h.b16 %v4248
    %v5474 = vunpack.c.l.b16 %v4249
    %v5475 = vunpack.c.h.b16 %v4249
    %v5476 = vunpack.c.l.b16 %v4250
    %v5477 = vunpack.c.h.b16 %v4250
    %v5478 = vunpack.c.l.b16 %v4251
    %v5479 = vunpack.c.h.b16 %v4251
    %v5480 = vunpack.c.l.b16 %v4252
    %v5481 = vunpack.c.h.b16 %v4252
    %v5482 = vunpack.c.l.b16 %v4253
    %v5483 = vunpack.c.h.b16 %v4253
    %v5484 = vunpack.c.l.b16 %v4254
    %v5485 = vunpack.c.h.b16 %v4254
    %v5486 = vunpack.c.l.b16 %v4255
    %v5487 = vunpack.c.h.b16 %v4255
    %v5488 = vunpack.c.l.b16 %v4256
    %v5489 = vunpack.c.h.b16 %v4256
    %v5490 = vunpack.c.l.b16 %v4257
    %v5491 = vunpack.c.h.b16 %v4257
    %v5492 = vunpack.c.l.b16 %v4258
    %v5493 = vunpack.c.h.b16 %v4258
    %v5494 = vunpack.c.l.b16 %v4259
    %v5495 = vunpack.c.h.b16 %v4259
    %v5496 = vunpack.c.l.b16 %v4260
    %v5497 = vunpack.c.h.b16 %v4260
    %v5498 = vunpack.c.l.b16 %v4261
    %v5499 = vunpack.c.h.b16 %v4261
    %v5500 = vunpack.c.l.b16 %v4262
    %v5501 = vunpack.c.h.b16 %v4262
    %v5502 = vunpack.c.l.b16 %v4263
    %v5503 = vunpack.c.h.b16 %v4263
    %v5504 = vunpack.c.l.b16 %v4264
    %v5505 = vunpack.c.h.b16 %v4264
    %v5506 = vunpack.c.l.b16 %v4265
    %v5507 = vunpack.c.h.b16 %v4265
    %v5508 = vunpack.c.l.b16 %v4266
    %v5509 = vunpack.c.h.b16 %v4266
    %v5510 = vunpack.c.l.b16 %v4267
    %v5511 = vunpack.c.h.b16 %v4267
    %v5512 = vunpack.c.l.b16 %v4268
    %v5513 = vunpack.c.h.b16 %v4268
    %v5514 = vunpack.c.l.b16 %v4269
    %v5515 = vunpack.c.h.b16 %v4269
    %v5516 = vunpack.c.l.b16 %v4270
    %v5517 = vunpack.c.h.b16 %v4270
    %v5518 = vunpack.c.l.b16 %v4271
    %v5519 = vunpack.c.h.b16 %v4271
    %v5520 = vunpack.c.l.b16 %v4272
    %v5521 = vunpack.c.h.b16 %v4272
    %v5522 = vunpack.c.l.b16 %v4273
    %v5523 = vunpack.c.h.b16 %v4273
    %v5524 = vunpack.c.l.b16 %v4274
    %v5525 = vunpack.c.h.b16 %v4274
    %v5526 = vunpack.c.l.b16 %v4275
    %v5527 = vunpack.c.h.b16 %v4275
    %v5528 = vunpack.c.l.b16 %v4276
    %v5529 = vunpack.c.h.b16 %v4276
    %v5530 = vunpack.c.l.b16 %v4277
    %v5531 = vunpack.c.h.b16 %v4277
    %v5532 = vunpack.c.l.b16 %v4278
    %v5533 = vunpack.c.h.b16 %v4278
    %v5534 = vunpack.c.l.b16 %v4279
    %v5535 = vunpack.c.h.b16 %v4279
    %v5536 = vunpack.c.l.b16 %v4280
    %v5537 = vunpack.c.h.b16 %v4280
    %v5538 = vunpack.c.l.b16 %v4281
    %v5539 = vunpack.c.h.b16 %v4281
    %v5540 = vunpack.c.l.b16 %v4282
    %v5541 = vunpack.c.h.b16 %v4282
    %v5542 = vunpack.c.l.b16 %v4283
    %v5543 = vunpack.c.h.b16 %v4283
    %v5544 = vunpack.c.l.b16 %v4284
    %v5545 = vunpack.c.h.b16 %v4284
    %v5546 = vunpack.c.l.b16 %v4285
    %v5547 = vunpack.c.h.b16 %v4285
    %v5548 = vunpack.c.l.b16 %v4286
    %v5549 = vunpack.c.h.b16 %v4286
    %v5550 = vunpack.c.l.b16 %v4287
    %v5551 = vunpack.c.h.b16 %v4287
    %v5552 = vunpack.c.l.b16 %v4288
    %v5553 = vunpack.c.h.b16 %v4288
    %v5554 = vunpack.c.l.b16 %v4289
    %v5555 = vunpack.c.h.b16 %v4289
    %v5556 = vunpack.c.l.b16 %v4290
    %v5557 = vunpack.c.h.b16 %v4290
    %v5558 = vunpack.c.l.b16 %v4291
    %v5559 = vunpack.c.h.b16 %v4291
    %v5560 = vunpack.c.l.b16 %v4292
    %v5561 = vunpack.c.h.b16 %v4292
    %v5562 = vunpack.c.l.b16 %v4293
    %v5563 = vunpack.c.h.b16 %v4293
    %v5564 = vunpack.c.l.b16 %v4294
    %v5565 = vunpack.c.h.b16 %v4294
    %v5566 = vunpack.c.l.b16 %v4295
    %v5567 = vunpack.c.h.b16 %v4295
    %v5568 = vunpack.c.l.b16 %v4296
    %v5569 = vunpack.c.h.b16 %v4296
    %v5570 = vunpack.c.l.b16 %v4297
    %v5571 = vunpack.c.h.b16 %v4297
    %v5572 = vunpack.c.l.b16 %v4298
    %v5573 = vunpack.c.h.b16 %v4298
    %v5574 = vunpack.c.l.b16 %v4299
    %v5575 = vunpack.c.h.b16 %v4299
    %v5576 = vunpack.c.l.b16 %v4300
    %v5577 = vunpack.c.h.b16 %v4300
    %v5578 = vunpack.c.l.b16 %v4301
    %v5579 = vunpack.c.h.b16 %v4301
    %v5580 = vunpack.c.l.b16 %v4302
    %v5581 = vunpack.c.h.b16 %v4302
    %v5582 = vunpack.c.l.b16 %v4303
    %v5583 = vunpack.c.h.b16 %v4303
    %v5584 = vunpack.c.l.b16 %v4304
    %v5585 = vunpack.c.h.b16 %v4304
    %v5586 = vunpack.c.l.b16 %v4305
    %v5587 = vunpack.c.h.b16 %v4305
    %v5588 = vunpack.c.l.b16 %v4306
    %v5589 = vunpack.c.h.b16 %v4306
    %v5590 = vunpack.c.l.b16 %v4307
    %v5591 = vunpack.c.h.b16 %v4307
    %v5592 = vunpack.c.l.b16 %v4308
    %v5593 = vunpack.c.h.b16 %v4308
    %v5594 = vunpack.c.l.b16 %v4309
    %v5595 = vunpack.c.h.b16 %v4309
    %v5596 = vunpack.c.l.b16 %v4310
    %v5597 = vunpack.c.h.b16 %v4310
    %v5598 = vunpack.c.l.b16 %v4311
    %v5599 = vunpack.c.h.b16 %v4311
    %v5600 = vunpack.c.l.b16 %v4312
    %v5601 = vunpack.c.h.b16 %v4312
    %v5602 = vunpack.c.l.b16 %v4313
    %v5603 = vunpack.c.h.b16 %v4313
    %v5604 = vunpack.c.l.b16 %v4314
    %v5605 = vunpack.c.h.b16 %v4314
    %v5606 = vunpack.c.l.b16 %v4315
    %v5607 = vunpack.c.h.b16 %v4315
    %v5608 = vunpack.c.l.b16 %v4316
    %v5609 = vunpack.c.h.b16 %v4316
    %v5610 = vunpack.c.l.b16 %v4317
    %v5611 = vunpack.c.h.b16 %v4317
    %v5612 = vunpack.c.l.b16 %v4318
    %v5613 = vunpack.c.h.b16 %v4318
    %v5614 = vunpack.c.l.b16 %v4319
    %v5615 = vunpack.c.h.b16 %v4319
    %v5616 = vunpack.c.l.b16 %v4320
    %v5617 = vunpack.c.h.b16 %v4320
    %v5618 = vunpack.c.l.b16 %v4321
    %v5619 = vunpack.c.h.b16 %v4321
    %v5620 = vunpack.c.l.b16 %v4322
    %v5621 = vunpack.c.h.b16 %v4322
    %v5622 = vunpack.c.l.b16 %v4323
    %v5623 = vunpack.c.h.b16 %v4323
    %v5624 = vunpack.c.l.b16 %v4324
    %v5625 = vunpack.c.h.b16 %v4324
    %v5626 = vunpack.c.l.b16 %v4325
    %v5627 = vunpack.c.h.b16 %v4325
    %v5628 = vunpack.c.l.b16 %v4326
    %v5629 = vunpack.c.h.b16 %v4326
    %v5630 = vunpack.c.l.b16 %v4327
    %v5631 = vunpack.c.h.b16 %v4327
    %v5632 = vunpack.c.l.b16 %v4328
    %v5633 = vunpack.c.h.b16 %v4328
    %v5634 = vunpack.c.l.b16 %v4329
    %v5635 = vunpack.c.h.b16 %v4329
    %v5636 = vunpack.c.l.b16 %v4330
    %v5637 = vunpack.c.h.b16 %v4330
    %v5638 = vunpack.c.l.b16 %v4331
    %v5639 = vunpack.c.h.b16 %v4331
    %v5640 = vunpack.c.l.b16 %v4332
    %v5641 = vunpack.c.h.b16 %v4332
    %v5642 = vunpack.c.l.b16 %v4333
    %v5643 = vunpack.c.h.b16 %v4333
    %v5644 = vunpack.c.l.b16 %v4334
    %v5645 = vunpack.c.h.b16 %v4334
    %v5646 = vunpack.c.l.b16 %v4335
    %v5647 = vunpack.c.h.b16 %v4335
    %v5648 = vunpack.c.l.b16 %v4336
    %v5649 = vunpack.c.h.b16 %v4336
    %v5650 = vunpack.c.l.b16 %v4337
    %v5651 = vunpack.c.h.b16 %v4337
    %v5652 = vunpack.c.l.b16 %v4338
    %v5653 = vunpack.c.h.b16 %v4338
    %v5654 = vunpack.c.l.b16 %v4339
    %v5655 = vunpack.c.h.b16 %v4339
    %v5656 = vunpack.c.l.b16 %v4340
    %v5657 = vunpack.c.h.b16 %v4340
    %v5658 = vunpack.c.l.b16 %v4341
    %v5659 = vunpack.c.h.b16 %v4341
    %v5660 = vunpack.c.l.b16 %v4342
    %v5661 = vunpack.c.h.b16 %v4342
    %v5662 = vunpack.c.l.b16 %v4343
    %v5663 = vunpack.c.h.b16 %v4343
    %v5664 = vunpack.c.l.b16 %v4344
    %v5665 = vunpack.c.h.b16 %v4344
    %v5666 = vunpack.c.l.b16 %v4345
    %v5667 = vunpack.c.h.b16 %v4345
    %v5668 = vunpack.c.l.b16 %v4346
    %v5669 = vunpack.c.h.b16 %v4346
    %v5670 = vunpack.c.l.b16 %v4347
    %v5671 = vunpack.c.h.b16 %v4347
    %v5672 = vunpack.c.l.b16 %v4348
    %v5673 = vunpack.c.h.b16 %v4348
    %v5674 = vunpack.c.l.b16 %v4349
    %v5675 = vunpack.c.h.b16 %v4349
    %v5676 = vunpack.c.l.b16 %v4350
    %v5677 = vunpack.c.h.b16 %v4350
    %v5678 = vunpack.c.l.b16 %v4351
    %v5679 = vunpack.c.h.b16 %v4351
    %v5680 = vunpack.c.l.b16 %v4352
    %v5681 = vunpack.c.h.b16 %v4352
    %v5682 = vunpack.c.l.b16 %v4353
    %v5683 = vunpack.c.h.b16 %v4353
    %v5684 = vunpack.c.l.b16 %v4354
    %v5685 = vunpack.c.h.b16 %v4354
    %v5686 = vunpack.c.l.b16 %v4355
    %v5687 = vunpack.c.h.b16 %v4355
    %v5688 = vunpack.c.l.b16 %v4356
    %v5689 = vunpack.c.h.b16 %v4356
    %v5690 = vunpack.c.l.b16 %v4357
    %v5691 = vunpack.c.h.b16 %v4357
    %v5692 = vunpack.c.l.b16 %v4358
    %v5693 = vunpack.c.h.b16 %v4358
    %v5694 = vunpack.c.l.b16 %v4359
    %v5695 = vunpack.c.h.b16 %v4359
    %v5696 = vunpack.c.l.b16 %v4360
    %v5697 = vunpack.c.h.b16 %v4360
    %v5698 = vunpack.c.l.b16 %v4361
    %v5699 = vunpack.c.h.b16 %v4361
    %v5700 = vunpack.c.l.b16 %v4362
    %v5701 = vunpack.c.h.b16 %v4362
    %v5702 = vunpack.c.l.b16 %v4363
    %v5703 = vunpack.c.h.b16 %v4363
    %v5704 = vunpack.c.l.b16 %v4364
    %v5705 = vunpack.c.h.b16 %v4364
    %v5706 = vunpack.c.l.b16 %v4365
    %v5707 = vunpack.c.h.b16 %v4365
    %v5708 = vunpack.c.l.b16 %v4366
    %v5709 = vunpack.c.h.b16 %v4366
    %v5710 = vunpack.c.l.b16 %v4367
    %v5711 = vunpack.c.h.b16 %v4367
    %v5712 = vunpack.c.l.b16 %v4368
    %v5713 = vunpack.c.h.b16 %v4368
    %v5714 = vunpack.c.l.b16 %v4369
    %v5715 = vunpack.c.h.b16 %v4369
    %v5716 = vunpack.c.l.b16 %v4370
    %v5717 = vunpack.c.h.b16 %v4370
    %v5718 = vunpack.c.l.b16 %v4371
    %v5719 = vunpack.c.h.b16 %v4371
    %v5720 = vunpack.c.l.b16 %v4372
    %v5721 = vunpack.c.h.b16 %v4372
    %v5722 = vunpack.c.l.b16 %v4373
    %v5723 = vunpack.c.h.b16 %v4373
    %v5724 = vunpack.c.l.b16 %v4374
    %v5725 = vunpack.c.h.b16 %v4374
    %v5726 = vunpack.c.l.b16 %v4375
    %v5727 = vunpack.c.h.b16 %v4375
    %v5728 = vunpack.c.l.b16 %v4376
    %v5729 = vunpack.c.h.b16 %v4376
    %v5730 = vunpack.c.l.b16 %v4377
    %v5731 = vunpack.c.h.b16 %v4377
    %v5732 = vunpack.c.l.b16 %v4378
    %v5733 = vunpack.c.h.b16 %v4378
    %v5734 = vunpack.c.l.b16 %v4379
    %v5735 = vunpack.c.h.b16 %v4379
    %v5736 = vunpack.c.l.b16 %v4380
    %v5737 = vunpack.c.h.b16 %v4380
    %v5738 = vunpack.c.l.b16 %v4381
    %v5739 = vunpack.c.h.b16 %v4381
    %v5740 = vunpack.c.l.b16 %v4382
    %v5741 = vunpack.c.h.b16 %v4382
    %v5742 = vunpack.c.l.b16 %v4383
    %v5743 = vunpack.c.h.b16 %v4383
    %v5744 = vunpack.c.l.b16 %v4384
    %v5745 = vunpack.c.h.b16 %v4384
    %v5746 = vunpack.c.l.b16 %v4385
    %v5747 = vunpack.c.h.b16 %v4385
    %v5748 = vunpack.c.l.b16 %v4386
    %v5749 = vunpack.c.h.b16 %v4386
    %v5750 = vunpack.c.l.b16 %v4387
    %v5751 = vunpack.c.h.b16 %v4387
    %v5752 = vunpack.c.l.b16 %v4388
    %v5753 = vunpack.c.h.b16 %v4388
    %v5754 = vunpack.c.l.b16 %v4389
    %v5755 = vunpack.c.h.b16 %v4389
    %v5756 = vunpack.c.l.b16 %v4390
    %v5757 = vunpack.c.h.b16 %v4390
    %v5758 = vunpack.c.l.b16 %v4391
    %v5759 = vunpack.c.h.b16 %v4391
    %v5760 = vunpack.c.l.b16 %v4392
    %v5761 = vunpack.c.h.b16 %v4392
    %v5762 = vunpack.c.l.b16 %v4393
    %v5763 = vunpack.c.h.b16 %v4393
    %v5764 = vunpack.c.l.b16 %v4394
    %v5765 = vunpack.c.h.b16 %v4394
    %v5766 = vunpack.c.l.b16 %v4395
    %v5767 = vunpack.c.h.b16 %v4395
    %v5768 = vunpack.c.l.b16 %v4396
    %v5769 = vunpack.c.h.b16 %v4396
    %v5770 = vunpack.c.l.b16 %v4397
    %v5771 = vunpack.c.h.b16 %v4397
    %v5772 = vunpack.c.l.b16 %v4398
    %v5773 = vunpack.c.h.b16 %v4398
    %v5774 = vunpack.c.l.b16 %v4399
    %v5775 = vunpack.c.h.b16 %v4399
    %v5776 = vunpack.c.l.b16 %v4400
    %v5777 = vunpack.c.h.b16 %v4400
    %v5778 = vunpack.c.l.b16 %v4401
    %v5779 = vunpack.c.h.b16 %v4401
    %v5780 = vunpack.c.l.b16 %v4402
    %v5781 = vunpack.c.h.b16 %v4402
    %v5782 = vunpack.c.l.b16 %v4403
    %v5783 = vunpack.c.h.b16 %v4403
    %v5784 = vunpack.c.l.b16 %v4404
    %v5785 = vunpack.c.h.b16 %v4404
    %v5786 = vunpack.c.l.b16 %v4405
    %v5787 = vunpack.c.h.b16 %v4405
    %v5788 = vunpack.c.l.b16 %v4406
    %v5789 = vunpack.c.h.b16 %v4406
    %v5790 = vunpack.c.l.b16 %v4407
    %v5791 = vunpack.c.h.b16 %v4407
    %v5792 = vunpack.c.l.b16 %v4408
    %v5793 = vunpack.c.h.b16 %v4408
    %v5794 = vunpack.c.l.b16 %v4409
    %v5795 = vunpack.c.h.b16 %v4409
    %v5796 = vunpack.c.l.b16 %v4410
    %v5797 = vunpack.c.h.b16 %v4410
    %v5798 = vunpack.c.l.b16 %v4411
    %v5799 = vunpack.c.h.b16 %v4411
    %v5800 = vunpack.c.l.b16 %v4412
    %v5801 = vunpack.c.h.b16 %v4412
    %v5802 = vunpack.c.l.b16 %v4413
    %v5803 = vunpack.c.h.b16 %v4413
    %v5804 = vunpack.c.l.b16 %v4414
    %v5805 = vunpack.c.h.b16 %v4414
    %v5806 = vunpack.c.l.b16 %v4415
    %v5807 = vunpack.c.h.b16 %v4415
    %v5808 = vunpack.c.l.b16 %v4416
    %v5809 = vunpack.c.h.b16 %v4416
    %v5810 = vunpack.c.l.b16 %v4417
    %v5811 = vunpack.c.h.b16 %v4417
    %v5812 = vunpack.c.l.b16 %v4418
    %v5813 = vunpack.c.h.b16 %v4418
    %v5814 = vunpack.c.l.b16 %v4419
    %v5815 = vunpack.c.h.b16 %v4419
    %v5816 = vunpack.c.l.b16 %v4420
    %v5817 = vunpack.c.h.b16 %v4420
    %v5818 = vunpack.c.l.b16 %v4421
    %v5819 = vunpack.c.h.b16 %v4421
    %v5820 = vunpack.c.l.b16 %v4422
    %v5821 = vunpack.c.h.b16 %v4422
    %v5822 = vunpack.c.l.b16 %v4423
    %v5823 = vunpack.c.h.b16 %v4423
    %v5824 = vunpack.c.l.b16 %v4424
    %v5825 = vunpack.c.h.b16 %v4424
    %v5826 = vunpack.c.l.b16 %v4425
    %v5827 = vunpack.c.h.b16 %v4425
    %v5828 = vunpack.c.l.b16 %v4426
    %v5829 = vunpack.c.h.b16 %v4426
    %v5830 = vunpack.c.l.b16 %v4427
    %v5831 = vunpack.c.h.b16 %v4427
    %v5832 = vunpack.c.l.b16 %v4428
    %v5833 = vunpack.c.h.b16 %v4428
    %v5834 = vunpack.c.l.b16 %v4429
    %v5835 = vunpack.c.h.b16 %v4429
    %v5836 = vunpack.c.l.b16 %v4430
    %v5837 = vunpack.c.h.b16 %v4430
    %v5838 = vunpack.c.l.b16 %v4431
    %v5839 = vunpack.c.h.b16 %v4431
    %v5840 = vunpack.c.l.b16 %v4432
    %v5841 = vunpack.c.h.b16 %v4432
    %v5842 = vunpack.c.l.b16 %v4433
    %v5843 = vunpack.c.h.b16 %v4433
    %v5844 = vunpack.c.l.b16 %v4434
    %v5845 = vunpack.c.h.b16 %v4434
    %v5846 = vunpack.c.l.b16 %v4435
    %v5847 = vunpack.c.h.b16 %v4435
    %v5848 = vunpack.c.l.b16 %v4436
    %v5849 = vunpack.c.h.b16 %v4436
    %v5850 = vunpack.c.l.b16 %v4437
    %v5851 = vunpack.c.h.b16 %v4437
    %v5852 = vunpack.c.l.b16 %v4438
    %v5853 = vunpack.c.h.b16 %v4438
    %v5854 = vunpack.c.l.b16 %v4439
    %v5855 = vunpack.c.h.b16 %v4439
    %v5856 = vunpack.c.l.b16 %v4440
    %v5857 = vunpack.c.h.b16 %v4440
    %v5858 = vunpack.c.l.b16 %v4441
    %v5859 = vunpack.c.h.b16 %v4441
    %v5860 = vunpack.c.l.b16 %v4442
    %v5861 = vunpack.c.h.b16 %v4442
    %v5862 = vunpack.c.l.b16 %v4443
    %v5863 = vunpack.c.h.b16 %v4443
    %v5864 = vunpack.c.l.b16 %v4444
    %v5865 = vunpack.c.h.b16 %v4444
    %v5866 = vunpack.c.l.b16 %v4445
    %v5867 = vunpack.c.h.b16 %v4445
    %v5868 = vunpack.c.l.b16 %v4446
    %v5869 = vunpack.c.h.b16 %v4446
    %v5870 = vunpack.c.l.b16 %v4447
    %v5871 = vunpack.c.h.b16 %v4447
    %v5872 = vunpack.c.l.b16 %v4448
    %v5873 = vunpack.c.h.b16 %v4448
    %v5874 = vunpack.c.l.b16 %v4449
    %v5875 = vunpack.c.h.b16 %v4449
    %v5876 = vunpack.c.l.b16 %v4450
    %v5877 = vunpack.c.h.b16 %v4450
    %v5878 = vunpack.c.l.b16 %v4451
    %v5879 = vunpack.c.h.b16 %v4451
    %v5880 = vunpack.c.l.b16 %v4452
    %v5881 = vunpack.c.h.b16 %v4452
    %v5882 = vunpack.c.l.b16 %v4453
    %v5883 = vunpack.c.h.b16 %v4453
    %v5884 = vunpack.c.l.b16 %v4454
    %v5885 = vunpack.c.h.b16 %v4454
    %v5886 = vunpack.c.l.b16 %v4455
    %v5887 = vunpack.c.h.b16 %v4455
    %v5888 = vunpack.c.l.b16 %v4456
    %v5889 = vunpack.c.h.b16 %v4456
    %v5890 = vunpack.c.l.b16 %v4457
    %v5891 = vunpack.c.h.b16 %v4457
    %v5892 = vunpack.c.l.b16 %v4458
    %v5893 = vunpack.c.h.b16 %v4458
    %v5894 = vunpack.c.l.b16 %v4459
    %v5895 = vunpack.c.h.b16 %v4459
    %v5896 = vunpack.c.l.b16 %v4460
    %v5897 = vunpack.c.h.b16 %v4460
    %v5898 = vunpack.c.l.b16 %v4461
    %v5899 = vunpack.c.h.b16 %v4461
    %v5900 = vunpack.c.l.b16 %v4462
    %v5901 = vunpack.c.h.b16 %v4462
    %v5902 = vunpack.c.l.b16 %v4463
    %v5903 = vunpack.c.h.b16 %v4463
    %v5904 = vunpack.c.l.b16 %v4464
    %v5905 = vunpack.c.h.b16 %v4464
    %v5906 = vunpack.c.l.b16 %v4465
    %v5907 = vunpack.c.h.b16 %v4465
    %v5908 = vunpack.c.l.b16 %v4466
    %v5909 = vunpack.c.h.b16 %v4466
    %v5910 = vunpack.c.l.b16 %v4467
    %v5911 = vunpack.c.h.b16 %v4467
    %v5912 = vunpack.c.l.b16 %v4468
    %v5913 = vunpack.c.h.b16 %v4468
    %v5914 = vunpack.c.l.b16 %v4469
    %v5915 = vunpack.c.h.b16 %v4469
    %v5916 = vunpack.c.l.b16 %v4470
    %v5917 = vunpack.c.h.b16 %v4470
    %v5918 = vunpack.c.l.b16 %v4471
    %v5919 = vunpack.c.h.b16 %v4471
    %v5920 = vunpack.c.l.b16 %v4472
    %v5921 = vunpack.c.h.b16 %v4472
    %v5922 = vunpack.c.l.b16 %v4473
    %v5923 = vunpack.c.h.b16 %v4473
    %v5924 = vunpack.c.l.b16 %v4474
    %v5925 = vunpack.c.h.b16 %v4474
    %v5926 = vunpack.c.l.b16 %v4475
    %v5927 = vunpack.c.h.b16 %v4475
    %v5928 = vunpack.c.l.b16 %v4476
    %v5929 = vunpack.c.h.b16 %v4476
    %v5930 = vunpack.c.l.b16 %v4477
    %v5931 = vunpack.c.h.b16 %v4477
    %v5932 = vunpack.c.l.b16 %v4478
    %v5933 = vunpack.c.h.b16 %v4478
    %v5934 = vunpack.c.l.b16 %v4479
    %v5935 = vunpack.c.h.b16 %v4479
    %v5936 = vunpack.c.l.b16 %v4480
    %v5937 = vunpack.c.h.b16 %v4480
    %v5938 = vunpack.c.l.b16 %v4481
    %v5939 = vunpack.c.h.b16 %v4481
    %v5940 = vunpack.c.l.b16 %v4482
    %v5941 = vunpack.c.h.b16 %v4482
    %v5942 = vunpack.c.l.b16 %v4483
    %v5943 = vunpack.c.h.b16 %v4483
    %v5944 = vunpack.c.l.b16 %v4484
    %v5945 = vunpack.c.h.b16 %v4484
    %v5946 = vunpack.c.l.b16 %v4485
    %v5947 = vunpack.c.h.b16 %v4485
    %v5948 = vunpack.c.l.b16 %v4486
    %v5949 = vunpack.c.h.b16 %v4486
    %v5950 = vunpack.c.l.b16 %v4487
    %v5951 = vunpack.c.h.b16 %v4487
    %v5952 = vunpack.c.l.b16 %v4488
    %v5953 = vunpack.c.h.b16 %v4488
    %v5954 = vunpack.c.l.b16 %v4489
    %v5955 = vunpack.c.h.b16 %v4489
    %v5956 = vunpack.c.l.b16 %v4490
    %v5957 = vunpack.c.h.b16 %v4490
    %v5958 = vunpack.c.l.b16 %v4491
    %v5959 = vunpack.c.h.b16 %v4491
    %v5960 = vunpack.c.l.b16 %v4492
    %v5961 = vunpack.c.h.b16 %v4492
    %v5962 = vunpack.c.l.b16 %v4493
    %v5963 = vunpack.c.h.b16 %v4493
    %v5964 = vunpack.c.l.b16 %v4494
    %v5965 = vunpack.c.h.b16 %v4494
    %v5966 = vunpack.c.l.b16 %v4495
    %v5967 = vunpack.c.h.b16 %v4495
    %v5968 = vunpack.c.l.b16 %v4496
    %v5969 = vunpack.c.h.b16 %v4496
    %v5970 = vunpack.c.l.b16 %v4497
    %v5971 = vunpack.c.h.b16 %v4497
    %v5972 = vunpack.c.l.b16 %v4498
    %v5973 = vunpack.c.h.b16 %v4498
    %v5974 = vunpack.c.l.b16 %v4499
    %v5975 = vunpack.c.h.b16 %v4499
    %v5976 = vunpack.c.l.b16 %v4500
    %v5977 = vunpack.c.h.b16 %v4500
    %v5978 = vunpack.c.l.b16 %v4501
    %v5979 = vunpack.c.h.b16 %v4501
    %v5980 = vunpack.c.l.b16 %v4502
    %v5981 = vunpack.c.h.b16 %v4502
    %v5982 = vunpack.c.l.b16 %v4503
    %v5983 = vunpack.c.h.b16 %v4503
    %v5984 = vunpack.c.l.b16 %v4504
    %v5985 = vunpack.c.h.b16 %v4504
    %v5986 = vunpack.c.l.b16 %v4505
    %v5987 = vunpack.c.h.b16 %v4505
    %v5988 = vunpack.c.l.b16 %v4506
    %v5989 = vunpack.c.h.b16 %v4506
    %v5990 = vunpack.c.l.b16 %v4507
    %v5991 = vunpack.c.h.b16 %v4507
    %v5992 = vunpack.c.l.b16 %v4508
    %v5993 = vunpack.c.h.b16 %v4508
    %v5994 = vunpack.c.l.b16 %v4509
    %v5995 = vunpack.c.h.b16 %v4509
    %v5996 = vunpack.c.l.b16 %v4510
    %v5997 = vunpack.c.h.b16 %v4510
    %v5998 = vunpack.c.l.b16 %v4511
    %v5999 = vunpack.c.h.b16 %v4511
    %v6000 = vunpack.c.l.b16 %v4512
    %v6001 = vunpack.c.h.b16 %v4512
    %v6002 = vunpack.c.l.b16 %v4513
    %v6003 = vunpack.c.h.b16 %v4513
    %v6004 = vunpack.c.l.b16 %v4514
    %v6005 = vunpack.c.h.b16 %v4514
    %v6006 = vunpack.c.l.b16 %v4515
    %v6007 = vunpack.c.h.b16 %v4515
    %v6008 = vunpack.c.l.b16 %v4516
    %v6009 = vunpack.c.h.b16 %v4516
    %v6010 = vunpack.c.l.b16 %v4517
    %v6011 = vunpack.c.h.b16 %v4517
    %v6012 = vunpack.c.l.b16 %v4518
    %v6013 = vunpack.c.h.b16 %v4518
    %v6014 = vunpack.c.l.b16 %v4519
    %v6015 = vunpack.c.h.b16 %v4519
    %v6016 = vunpack.c.l.b16 %v4520
    %v6017 = vunpack.c.h.b16 %v4520
    %v6018 = vunpack.c.l.b16 %v4521
    %v6019 = vunpack.c.h.b16 %v4521
    %v6020 = vunpack.c.l.b16 %v4522
    %v6021 = vunpack.c.h.b16 %v4522
    %v6022 = vunpack.c.l.b16 %v4523
    %v6023 = vunpack.c.h.b16 %v4523
    %v6024 = vunpack.c.l.b16 %v4524
    %v6025 = vunpack.c.h.b16 %v4524
    %v6026 = vunpack.c.l.b16 %v4525
    %v6027 = vunpack.c.h.b16 %v4525
    %v6028 = vunpack.c.l.b16 %v4526
    %v6029 = vunpack.c.h.b16 %v4526
    %v6030 = vunpack.c.l.b16 %v4527
    %v6031 = vunpack.c.h.b16 %v4527
    %v6032 = vunpack.c.l.b16 %v4528
    %v6033 = vunpack.c.h.b16 %v4528
    %v6034 = vunpack.c.l.b16 %v4529
    %v6035 = vunpack.c.h.b16 %v4529
    %v6036 = vunpack.c.l.b16 %v4530
    %v6037 = vunpack.c.h.b16 %v4530
    %v6038 = vunpack.c.l.b16 %v4531
    %v6039 = vunpack.c.h.b16 %v4531
    %v6040 = vunpack.c.l.b16 %v4532
    %v6041 = vunpack.c.h.b16 %v4532
    %v6042 = vunpack.c.l.b16 %v4533
    %v6043 = vunpack.c.h.b16 %v4533
    %v6044 = vunpack.c.l.b16 %v4534
    %v6045 = vunpack.c.h.b16 %v4534
    %v6046 = vunpack.c.l.b16 %v4535
    %v6047 = vunpack.c.h.b16 %v4535
    %v6048 = vunpack.c.l.b16 %v4536
    %v6049 = vunpack.c.h.b16 %v4536
    %v6050 = vunpack.c.l.b16 %v4537
    %v6051 = vunpack.c.h.b16 %v4537
    %v6052 = vunpack.c.l.b16 %v4538
    %v6053 = vunpack.c.h.b16 %v4538
    %v6054 = vunpack.c.l.b16 %v4539
    %v6055 = vunpack.c.h.b16 %v4539
    %v6056 = vunpack.c.l.b16 %v4540
    %v6057 = vunpack.c.h.b16 %v4540
    %v6058 = vunpack.c.l.b16 %v4541
    %v6059 = vunpack.c.h.b16 %v4541
    %v6060 = vunpack.c.l.b16 %v4542
    %v6061 = vunpack.c.h.b16 %v4542
    %v6062 = vunpack.c.l.b16 %v4543
    %v6063 = vunpack.c.h.b16 %v4543
    %v6064 = vunpack.c.l.b16 %v4544
    %v6065 = vunpack.c.h.b16 %v4544
    %v6066 = vunpack.c.l.b16 %v4545
    %v6067 = vunpack.c.h.b16 %v4545
    %v6068 = vunpack.c.l.b16 %v4546
    %v6069 = vunpack.c.h.b16 %v4546
    %v6070 = vunpack.c.l.b16 %v4547
    %v6071 = vunpack.c.h.b16 %v4547
    %v6072 = vunpack.c.l.b16 %v4548
    %v6073 = vunpack.c.h.b16 %v4548
    %v6074 = vunpack.c.l.b16 %v4549
    %v6075 = vunpack.c.h.b16 %v4549
    %v6076 = vunpack.c.l.b16 %v4550
    %v6077 = vunpack.c.h.b16 %v4550
    %v6078 = vunpack.c.l.b16 %v4551
    %v6079 = vunpack.c.h.b16 %v4551
    %v6080 = vunpack.c.l.b16 %v4552
    %v6081 = vunpack.c.h.b16 %v4552
    %v6082 = vunpack.c.l.b16 %v4553
    %v6083 = vunpack.c.h.b16 %v4553
    %v6084 = vunpack.c.l.b16 %v4554
    %v6085 = vunpack.c.h.b16 %v4554
    %v6086 = vunpack.c.l.b16 %v4555
    %v6087 = vunpack.c.h.b16 %v4555
    %v6088 = vunpack.c.l.b16 %v4556
    %v6089 = vunpack.c.h.b16 %v4556
    %v6090 = vunpack.c.l.b16 %v4557
    %v6091 = vunpack.c.h.b16 %v4557
    %v6092 = vunpack.c.l.b16 %v4558
    %v6093 = vunpack.c.h.b16 %v4558
    %v6094 = vunpack.c.l.b16 %v4559
    %v6095 = vunpack.c.h.b16 %v4559
    %v6096 = vunpack.c.l.b16 %v4560
    %v6097 = vunpack.c.h.b16 %v4560
    %v6098 = vunpack.c.l.b16 %v4561
    %v6099 = vunpack.c.h.b16 %v4561
    %v6100 = vunpack.c.l.b16 %v4562
    %v6101 = vunpack.c.h.b16 %v4562
    %v6102 = vunpack.c.l.b16 %v4563
    %v6103 = vunpack.c.h.b16 %v4563
    %v6104 = vunpack.c.l.b16 %v4564
    %v6105 = vunpack.c.h.b16 %v4564
    %v6106 = vunpack.c.l.b16 %v4565
    %v6107 = vunpack.c.h.b16 %v4565
    %v6108 = vunpack.c.l.b16 %v4566
    %v6109 = vunpack.c.h.b16 %v4566
    %v6110 = vunpack.c.l.b16 %v4567
    %v6111 = vunpack.c.h.b16 %v4567
    %v6112 = vunpack.c.l.b16 %v4568
    %v6113 = vunpack.c.h.b16 %v4568
    %v6114 = vunpack.c.l.b16 %v4569
    %v6115 = vunpack.c.h.b16 %v4569
    %v6116 = vunpack.c.l.b16 %v4570
    %v6117 = vunpack.c.h.b16 %v4570
    %v6118 = vunpack.c.l.b16 %v4571
    %v6119 = vunpack.c.h.b16 %v4571
    %v6120 = vunpack.c.l.b16 %v4572
    %v6121 = vunpack.c.h.b16 %v4572
    %v6122 = vunpack.c.l.b16 %v4573
    %v6123 = vunpack.c.h.b16 %v4573
    %v6124 = vunpack.c.l.b16 %v4574
    %v6125 = vunpack.c.h.b16 %v4574
    %v6126 = vunpack.c.l.b16 %v4575
    %v6127 = vunpack.c.h.b16 %v4575
    %v6128 = vunpack.c.l.b16 %v4576
    %v6129 = vunpack.c.h.b16 %v4576
    %v6130 = vunpack.c.l.b16 %v4577
    %v6131 = vunpack.c.h.b16 %v4577
    %v6132 = vunpack.c.l.b16 %v4578
    %v6133 = vunpack.c.h.b16 %v4578
    %v6134 = vunpack.c.l.b16 %v4579
    %v6135 = vunpack.c.h.b16 %v4579
    %v6136 = vunpack.c.l.b16 %v4580
    %v6137 = vunpack.c.h.b16 %v4580
    %v6138 = vunpack.c.l.b16 %v4581
    %v6139 = vunpack.c.h.b16 %v4581
    %v6140 = vunpack.c.l.b16 %v4582
    %v6141 = vunpack.c.h.b16 %v4582
    %v6142 = vunpack.c.l.b16 %v4583
    %v6143 = vunpack.c.h.b16 %v4583
    %v6144 = vunpack.c.l.b16 %v4584
    %v6145 = vunpack.c.h.b16 %v4584
    %v6146 = vunpack.c.l.b16 %v4585
    %v6147 = vunpack.c.h.b16 %v4585
    %v6148 = vunpack.c.l.b16 %v4586
    %v6149 = vunpack.c.h.b16 %v4586
    %v6150 = vunpack.c.l.b16 %v4587
    %v6151 = vunpack.c.h.b16 %v4587
    %v6152 = vunpack.c.l.b16 %v4588
    %v6153 = vunpack.c.h.b16 %v4588
    %v6154 = vunpack.c.l.b16 %v4589
    %v6155 = vunpack.c.h.b16 %v4589
    %v6156 = vunpack.c.l.b16 %v4590
    %v6157 = vunpack.c.h.b16 %v4590
    %v6158 = vunpack.c.l.b16 %v4591
    %v6159 = vunpack.c.h.b16 %v4591
    %v6160 = vunpack.c.l.b16 %v4592
    %v6161 = vunpack.c.h.b16 %v4592
    %v6162 = vunpack.c.l.b16 %v4593
    %v6163 = vunpack.c.h.b16 %v4593
    %v6164 = vunpack.c.l.b16 %v4594
    %v6165 = vunpack.c.h.b16 %v4594
    %v6166 = vunpack.c.l.b16 %v4595
    %v6167 = vunpack.c.h.b16 %v4595
    %v6168 = vunpack.c.l.b16 %v4596
    %v6169 = vunpack.c.h.b16 %v4596
    %v6170 = vunpack.c.l.b16 %v4597
    %v6171 = vunpack.c.h.b16 %v4597
    %v6172 = vunpack.c.l.b16 %v4598
    %v6173 = vunpack.c.h.b16 %v4598
    %v6174 = vunpack.c.l.b16 %v4599
    %v6175 = vunpack.c.h.b16 %v4599
    %v6176 = vunpack.c.l.b16 %v4600
    %v6177 = vunpack.c.h.b16 %v4600
    %v6178 = vunpack.c.l.b16 %v4601
    %v6179 = vunpack.c.h.b16 %v4601
    %v6180 = vpack.c.b16 %v5164, %v5156
    %v6181 = vpack.c.b16 %v5165, %v5157
    %v6182 = vpack.c.b16 %v5166, %v5158
    %v6183 = vpack.c.b16 %v5167, %v5159
    %v6184 = vpack.c.b16 %v5168, %v5160
    %v6185 = vpack.c.b16 %v5169, %v5161
    %v6186 = vpack.c.b16 %v5170, %v5162
    %v6187 = vpack.c.b16 %v5171, %v5163
    %v6188 = vpack.c.b16 %v5180, %v5172
    %v6189 = vpack.c.b16 %v5181, %v5173
    %v6190 = vpack.c.b16 %v5182, %v5174
    %v6191 = vpack.c.b16 %v5183, %v5175
    %v6192 = vpack.c.b16 %v5184, %v5176
    %v6193 = vpack.c.b16 %v5185, %v5177
    %v6194 = vpack.c.b16 %v5186, %v5178
    %v6195 = vpack.c.b16 %v5187, %v5179
    %v6196 = vpack.c.b16 %v5196, %v5188
    %v6197 = vpack.c.b16 %v5197, %v5189
    %v6198 = vpack.c.b16 %v5198, %v5190
    %v6199 = vpack.c.b16 %v5199, %v5191
    %v6200 = vpack.c.b16 %v5200, %v5192
    %v6201 = vpack.c.b16 %v5201, %v5193
    %v6202 = vpack.c.b16 %v5202, %v5194
    %v6203 = vpack.c.b16 %v5203, %v5195
    %v6204 = vpack.c.b16 %v5212, %v5204
    %v6205 = vpack.c.b16 %v5213, %v5205
    %v6206 = vpack.c.b16 %v5214, %v5206
    %v6207 = vpack.c.b16 %v5215, %v5207
    %v6208 = vpack.c.b16 %v5216, %v5208
    %v6209 = vpack.c.b16 %v5217, %v5209
    %v6210 = vpack.c.b16 %v5218, %v5210
    %v6211 = vpack.c.b16 %v5219, %v5211
    %v6212 = vpack.c.b16 %v5228, %v5220
    %v6213 = vpack.c.b16 %v5229, %v5221
    %v6214 = vpack.c.b16 %v5230, %v5222
    %v6215 = vpack.c.b16 %v5231, %v5223
    %v6216 = vpack.c.b16 %v5232, %v5224
    %v6217 = vpack.c.b16 %v5233, %v5225
    %v6218 = vpack.c.b16 %v5234, %v5226
    %v6219 = vpack.c.b16 %v5235, %v5227
    %v6220 = vpack.c.b16 %v5244, %v5236
    %v6221 = vpack.c.b16 %v5245, %v5237
    %v6222 = vpack.c.b16 %v5246, %v5238
    %v6223 = vpack.c.b16 %v5247, %v5239
    %v6224 = vpack.c.b16 %v5248, %v5240
    %v6225 = vpack.c.b16 %v5249, %v5241
    %v6226 = vpack.c.b16 %v5250, %v5242
    %v6227 = vpack.c.b16 %v5251, %v5243
    %v6228 = vpack.c.b16 %v5260, %v5252
    %v6229 = vpack.c.b16 %v5261, %v5253
    %v6230 = vpack.c.b16 %v5262, %v5254
    %v6231 = vpack.c.b16 %v5263, %v5255
    %v6232 = vpack.c.b16 %v5264, %v5256
    %v6233 = vpack.c.b16 %v5265, %v5257
    %v6234 = vpack.c.b16 %v5266, %v5258
    %v6235 = vpack.c.b16 %v5267, %v5259
    %v6236 = vpack.c.b16 %v5276, %v5268
    %v6237 = vpack.c.b16 %v5277, %v5269
    %v6238 = vpack.c.b16 %v5278, %v5270
    %v6239 = vpack.c.b16 %v5279, %v5271
    %v6240 = vpack.c.b16 %v5280, %v5272
    %v6241 = vpack.c.b16 %v5281, %v5273
    %v6242 = vpack.c.b16 %v5282, %v5274
    %v6243 = vpack.c.b16 %v5283, %v5275
    %v6244 = vpack.c.b16 %v5292, %v5284
    %v6245 = vpack.c.b16 %v5293, %v5285
    %v6246 = vpack.c.b16 %v5294, %v5286
    %v6247 = vpack.c.b16 %v5295, %v5287
    %v6248 = vpack.c.b16 %v5296, %v5288
    %v6249 = vpack.c.b16 %v5297, %v5289
    %v6250 = vpack.c.b16 %v5298, %v5290
    %v6251 = vpack.c.b16 %v5299, %v5291
    %v6252 = vpack.c.b16 %v5308, %v5300
    %v6253 = vpack.c.b16 %v5309, %v5301
    %v6254 = vpack.c.b16 %v5310, %v5302
    %v6255 = vpack.c.b16 %v5311, %v5303
    %v6256 = vpack.c.b16 %v5312, %v5304
    %v6257 = vpack.c.b16 %v5313, %v5305
    %v6258 = vpack.c.b16 %v5314, %v5306
    %v6259 = vpack.c.b16 %v5315, %v5307
    %v6260 = vpack.c.b16 %v5324, %v5316
    %v6261 = vpack.c.b16 %v5325, %v5317
    %v6262 = vpack.c.b16 %v5326, %v5318
    %v6263 = vpack.c.b16 %v5327, %v5319
    %v6264 = vpack.c.b16 %v5328, %v5320
    %v6265 = vpack.c.b16 %v5329, %v5321
    %v6266 = vpack.c.b16 %v5330, %v5322
    %v6267 = vpack.c.b16 %v5331, %v5323
    %v6268 = vpack.c.b16 %v5340, %v5332
    %v6269 = vpack.c.b16 %v5341, %v5333
    %v6270 = vpack.c.b16 %v5342, %v5334
    %v6271 = vpack.c.b16 %v5343, %v5335
    %v6272 = vpack.c.b16 %v5344, %v5336
    %v6273 = vpack.c.b16 %v5345, %v5337
    %v6274 = vpack.c.b16 %v5346, %v5338
    %v6275 = vpack.c.b16 %v5347, %v5339
    %v6276 = vpack.c.b16 %v5356, %v5348
    %v6277 = vpack.c.b16 %v5357, %v5349
    %v6278 = vpack.c.b16 %v5358, %v5350
    %v6279 = vpack.c.b16 %v5359, %v5351
    %v6280 = vpack.c.b16 %v5360, %v5352
    %v6281 = vpack.c.b16 %v5361, %v5353
    %v6282 = vpack.c.b16 %v5362, %v5354
    %v6283 = vpack.c.b16 %v5363, %v5355
    %v6284 = vpack.c.b16 %v5372, %v5364
    %v6285 = vpack.c.b16 %v5373, %v5365
    %v6286 = vpack.c.b16 %v5374, %v5366
    %v6287 = vpack.c.b16 %v5375, %v5367
    %v6288 = vpack.c.b16 %v5376, %v5368
    %v6289 = vpack.c.b16 %v5377, %v5369
    %v6290 = vpack.c.b16 %v5378, %v5370
    %v6291 = vpack.c.b16 %v5379, %v5371
    %v6292 = vpack.c.b16 %v5388, %v5380
    %v6293 = vpack.c.b16 %v5389, %v5381
    %v6294 = vpack.c.b16 %v5390, %v5382
    %v6295 = vpack.c.b16 %v5391, %v5383
    %v6296 = vpack.c.b16 %v5392, %v5384
    %v6297 = vpack.c.b16 %v5393, %v5385
    %v6298 = vpack.c.b16 %v5394, %v5386
    %v6299 = vpack.c.b16 %v5395, %v5387
    %v6300 = vpack.c.b16 %v5404, %v5396
    %v6301 = vpack.c.b16 %v5405, %v5397
    %v6302 = vpack.c.b16 %v5406, %v5398
    %v6303 = vpack.c.b16 %v5407, %v5399
    %v6304 = vpack.c.b16 %v5408, %v5400
    %v6305 = vpack.c.b16 %v5409, %v5401
    %v6306 = vpack.c.b16 %v5410, %v5402
    %v6307 = vpack.c.b16 %v5411, %v5403
    %v6308 = vpack.c.b16 %v5420, %v5412
    %v6309 = vpack.c.b16 %v5421, %v5413
    %v6310 = vpack.c.b16 %v5422, %v5414
    %v6311 = vpack.c.b16 %v5423, %v5415
    %v6312 = vpack.c.b16 %v5424, %v5416
    %v6313 = vpack.c.b16 %v5425, %v5417
    %v6314 = vpack.c.b16 %v5426, %v5418
    %v6315 = vpack.c.b16 %v5427, %v5419
    %v6316 = vpack.c.b16 %v5436, %v5428
    %v6317 = vpack.c.b16 %v5437, %v5429
    %v6318 = vpack.c.b16 %v5438, %v5430
    %v6319 = vpack.c.b16 %v5439, %v5431
    %v6320 = vpack.c.b16 %v5440, %v5432
    %v6321 = vpack.c.b16 %v5441, %v5433
    %v6322 = vpack.c.b16 %v5442, %v5434
    %v6323 = vpack.c.b16 %v5443, %v5435
    %v6324 = vpack.c.b16 %v5452, %v5444
    %v6325 = vpack.c.b16 %v5453, %v5445
    %v6326 = vpack.c.b16 %v5454, %v5446
    %v6327 = vpack.c.b16 %v5455, %v5447
    %v6328 = vpack.c.b16 %v5456, %v5448
    %v6329 = vpack.c.b16 %v5457, %v5449
    %v6330 = vpack.c.b16 %v5458, %v5450
    %v6331 = vpack.c.b16 %v5459, %v5451
    %v6332 = vpack.c.b16 %v5468, %v5460
    %v6333 = vpack.c.b16 %v5469, %v5461
    %v6334 = vpack.c.b16 %v5470, %v5462
    %v6335 = vpack.c.b16 %v5471, %v5463
    %v6336 = vpack.c.b16 %v5472, %v5464
    %v6337 = vpack.c.b16 %v5473, %v5465
    %v6338 = vpack.c.b16 %v5474, %v5466
    %v6339 = vpack.c.b16 %v5475, %v5467
    %v6340 = vpack.c.b16 %v5484, %v5476
    %v6341 = vpack.c.b16 %v5485, %v5477
    %v6342 = vpack.c.b16 %v5486, %v5478
    %v6343 = vpack.c.b16 %v5487, %v5479
    %v6344 = vpack.c.b16 %v5488, %v5480
    %v6345 = vpack.c.b16 %v5489, %v5481
    %v6346 = vpack.c.b16 %v5490, %v5482
    %v6347 = vpack.c.b16 %v5491, %v5483
    %v6348 = vpack.c.b16 %v5500, %v5492
    %v6349 = vpack.c.b16 %v5501, %v5493
    %v6350 = vpack.c.b16 %v5502, %v5494
    %v6351 = vpack.c.b16 %v5503, %v5495
    %v6352 = vpack.c.b16 %v5504, %v5496
    %v6353 = vpack.c.b16 %v5505, %v5497
    %v6354 = vpack.c.b16 %v5506, %v5498
    %v6355 = vpack.c.b16 %v5507, %v5499
    %v6356 = vpack.c.b16 %v5516, %v5508
    %v6357 = vpack.c.b16 %v5517, %v5509
    %v6358 = vpack.c.b16 %v5518, %v5510
    %v6359 = vpack.c.b16 %v5519, %v5511
    %v6360 = vpack.c.b16 %v5520, %v5512
    %v6361 = vpack.c.b16 %v5521, %v5513
    %v6362 = vpack.c.b16 %v5522, %v5514
    %v6363 = vpack.c.b16 %v5523, %v5515
    %v6364 = vpack.c.b16 %v5532, %v5524
    %v6365 = vpack.c.b16 %v5533, %v5525
    %v6366 = vpack.c.b16 %v5534, %v5526
    %v6367 = vpack.c.b16 %v5535, %v5527
    %v6368 = vpack.c.b16 %v5536, %v5528
    %v6369 = vpack.c.b16 %v5537, %v5529
    %v6370 = vpack.c.b16 %v5538, %v5530
    %v6371 = vpack.c.b16 %v5539, %v5531
    %v6372 = vpack.c.b16 %v5548, %v5540
    %v6373 = vpack.c.b16 %v5549, %v5541
    %v6374 = vpack.c.b16 %v5550, %v5542
    %v6375 = vpack.c.b16 %v5551, %v5543
    %v6376 = vpack.c.b16 %v5552, %v5544
    %v6377 = vpack.c.b16 %v5553, %v5545
    %v6378 = vpack.c.b16 %v5554, %v5546
    %v6379 = vpack.c.b16 %v5555, %v5547
    %v6380 = vpack.c.b16 %v5564, %v5556
    %v6381 = vpack.c.b16 %v5565, %v5557
    %v6382 = vpack.c.b16 %v5566, %v5558
    %v6383 = vpack.c.b16 %v5567, %v5559
    %v6384 = vpack.c.b16 %v5568, %v5560
    %v6385 = vpack.c.b16 %v5569, %v5561
    %v6386 = vpack.c.b16 %v5570, %v5562
    %v6387 = vpack.c.b16 %v5571, %v5563
    %v6388 = vpack.c.b16 %v5580, %v5572
    %v6389 = vpack.c.b16 %v5581, %v5573
    %v6390 = vpack.c.b16 %v5582, %v5574
    %v6391 = vpack.c.b16 %v5583, %v5575
    %v6392 = vpack.c.b16 %v5584, %v5576
    %v6393 = vpack.c.b16 %v5585, %v5577
    %v6394 = vpack.c.b16 %v5586, %v5578
    %v6395 = vpack.c.b16 %v5587, %v5579
    %v6396 = vpack.c.b16 %v5596, %v5588
    %v6397 = vpack.c.b16 %v5597, %v5589
    %v6398 = vpack.c.b16 %v5598, %v5590
    %v6399 = vpack.c.b16 %v5599, %v5591
    %v6400 = vpack.c.b16 %v5600, %v5592
    %v6401 = vpack.c.b16 %v5601, %v5593
    %v6402 = vpack.c.b16 %v5602, %v5594
    %v6403 = vpack.c.b16 %v5603, %v5595
    %v6404 = vpack.c.b16 %v5612, %v5604
    %v6405 = vpack.c.b16 %v5613, %v5605
    %v6406 = vpack.c.b16 %v5614, %v5606
    %v6407 = vpack.c.b16 %v5615, %v5607
    %v6408 = vpack.c.b16 %v5616, %v5608
    %v6409 = vpack.c.b16 %v5617, %v5609
    %v6410 = vpack.c.b16 %v5618, %v5610
    %v6411 = vpack.c.b16 %v5619, %v5611
    %v6412 = vpack.c.b16 %v5628, %v5620
    %v6413 = vpack.c.b16 %v5629, %v5621
    %v6414 = vpack.c.b16 %v5630, %v5622
    %v6415 = vpack.c.b16 %v5631, %v5623
    %v6416 = vpack.c.b16 %v5632, %v5624
    %v6417 = vpack.c.b16 %v5633, %v5625
    %v6418 = vpack.c.b16 %v5634, %v5626
    %v6419 = vpack.c.b16 %v5635, %v5627
    %v6420 = vpack.c.b16 %v5644, %v5636
    %v6421 = vpack.c.b16 %v5645, %v5637
    %v6422 = vpack.c.b16 %v5646, %v5638
    %v6423 = vpack.c.b16 %v5647, %v5639
    %v6424 = vpack.c.b16 %v5648, %v5640
    %v6425 = vpack.c.b16 %v5649, %v5641
    %v6426 = vpack.c.b16 %v5650, %v5642
    %v6427 = vpack.c.b16 %v5651, %v5643
    %v6428 = vpack.c.b16 %v5660, %v5652
    %v6429 = vpack.c.b16 %v5661, %v5653
    %v6430 = vpack.c.b16 %v5662, %v5654
    %v6431 = vpack.c.b16 %v5663, %v5655
    %v6432 = vpack.c.b16 %v5664, %v5656
    %v6433 = vpack.c.b16 %v5665, %v5657
    %v6434 = vpack.c.b16 %v5666, %v5658
    %v6435 = vpack.c.b16 %v5667, %v5659
    %v6436 = vpack.c.b16 %v5676, %v5668
    %v6437 = vpack.c.b16 %v5677, %v5669
    %v6438 = vpack.c.b16 %v5678, %v5670
    %v6439 = vpack.c.b16 %v5679, %v5671
    %v6440 = vpack.c.b16 %v5680, %v5672
    %v6441 = vpack.c.b16 %v5681, %v5673
    %v6442 = vpack.c.b16 %v5682, %v5674
    %v6443 = vpack.c.b16 %v5683, %v5675
    %v6444 = vpack.c.b16 %v5692, %v5684
    %v6445 = vpack.c.b16 %v5693, %v5685
    %v6446 = vpack.c.b16 %v5694, %v5686
    %v6447 = vpack.c.b16 %v5695, %v5687
    %v6448 = vpack.c.b16 %v5696, %v5688
    %v6449 = vpack.c.b16 %v5697, %v5689
    %v6450 = vpack.c.b16 %v5698, %v5690
    %v6451 = vpack.c.b16 %v5699, %v5691
    %v6452 = vpack.c.b16 %v5708, %v5700
    %v6453 = vpack.c.b16 %v5709, %v5701
    %v6454 = vpack.c.b16 %v5710, %v5702
    %v6455 = vpack.c.b16 %v5711, %v5703
    %v6456 = vpack.c.b16 %v5712, %v5704
    %v6457 = vpack.c.b16 %v5713, %v5705
    %v6458 = vpack.c.b16 %v5714, %v5706
    %v6459 = vpack.c.b16 %v5715, %v5707
    %v6460 = vpack.c.b16 %v5724, %v5716
    %v6461 = vpack.c.b16 %v5725, %v5717
    %v6462 = vpack.c.b16 %v5726, %v5718
    %v6463 = vpack.c.b16 %v5727, %v5719
    %v6464 = vpack.c.b16 %v5728, %v5720
    %v6465 = vpack.c.b16 %v5729, %v5721
    %v6466 = vpack.c.b16 %v5730, %v5722
    %v6467 = vpack.c.b16 %v5731, %v5723
    %v6468 = vpack.c.b16 %v5740, %v5732
    %v6469 = vpack.c.b16 %v5741, %v5733
    %v6470 = vpack.c.b16 %v5742, %v5734
    %v6471 = vpack.c.b16 %v5743, %v5735
    %v6472 = vpack.c.b16 %v5744, %v5736
    %v6473 = vpack.c.b16 %v5745, %v5737
    %v6474 = vpack.c.b16 %v5746, %v5738
    %v6475 = vpack.c.b16 %v5747, %v5739
    %v6476 = vpack.c.b16 %v5756, %v5748
    %v6477 = vpack.c.b16 %v5757, %v5749
    %v6478 = vpack.c.b16 %v5758, %v5750
    %v6479 = vpack.c.b16 %v5759, %v5751
    %v6480 = vpack.c.b16 %v5760, %v5752
    %v6481 = vpack.c.b16 %v5761, %v5753
    %v6482 = vpack.c.b16 %v5762, %v5754
    %v6483 = vpack.c.b16 %v5763, %v5755
    %v6484 = vpack.c.b16 %v5772, %v5764
    %v6485 = vpack.c.b16 %v5773, %v5765
    %v6486 = vpack.c.b16 %v5774, %v5766
    %v6487 = vpack.c.b16 %v5775, %v5767
    %v6488 = vpack.c.b16 %v5776, %v5768
    %v6489 = vpack.c.b16 %v5777, %v5769
    %v6490 = vpack.c.b16 %v5778, %v5770
    %v6491 = vpack.c.b16 %v5779, %v5771
    %v6492 = vpack.c.b16 %v5788, %v5780
    %v6493 = vpack.c.b16 %v5789, %v5781
    %v6494 = vpack.c.b16 %v5790, %v5782
    %v6495 = vpack.c.b16 %v5791, %v5783
    %v6496 = vpack.c.b16 %v5792, %v5784
    %v6497 = vpack.c.b16 %v5793, %v5785
    %v6498 = vpack.c.b16 %v5794, %v5786
    %v6499 = vpack.c.b16 %v5795, %v5787
    %v6500 = vpack.c.b16 %v5804, %v5796
    %v6501 = vpack.c.b16 %v5805, %v5797
    %v6502 = vpack.c.b16 %v5806, %v5798
    %v6503 = vpack.c.b16 %v5807, %v5799
    %v6504 = vpack.c.b16 %v5808, %v5800
    %v6505 = vpack.c.b16 %v5809, %v5801
    %v6506 = vpack.c.b16 %v5810, %v5802
    %v6507 = vpack.c.b16 %v5811, %v5803
    %v6508 = vpack.c.b16 %v5820, %v5812
    %v6509 = vpack.c.b16 %v5821, %v5813
    %v6510 = vpack.c.b16 %v5822, %v5814
    %v6511 = vpack.c.b16 %v5823, %v5815
    %v6512 = vpack.c.b16 %v5824, %v5816
    %v6513 = vpack.c.b16 %v5825, %v5817
    %v6514 = vpack.c.b16 %v5826, %v5818
    %v6515 = vpack.c.b16 %v5827, %v5819
    %v6516 = vpack.c.b16 %v5836, %v5828
    %v6517 = vpack.c.b16 %v5837, %v5829
    %v6518 = vpack.c.b16 %v5838, %v5830
    %v6519 = vpack.c.b16 %v5839, %v5831
    %v6520 = vpack.c.b16 %v5840, %v5832
    %v6521 = vpack.c.b16 %v5841, %v5833
    %v6522 = vpack.c.b16 %v5842, %v5834
    %v6523 = vpack.c.b16 %v5843, %v5835
    %v6524 = vpack.c.b16 %v5852, %v5844
    %v6525 = vpack.c.b16 %v5853, %v5845
    %v6526 = vpack.c.b16 %v5854, %v5846
    %v6527 = vpack.c.b16 %v5855, %v5847
    %v6528 = vpack.c.b16 %v5856, %v5848
    %v6529 = vpack.c.b16 %v5857, %v5849
    %v6530 = vpack.c.b16 %v5858, %v5850
    %v6531 = vpack.c.b16 %v5859, %v5851
    %v6532 = vpack.c.b16 %v5868, %v5860
    %v6533 = vpack.c.b16 %v5869, %v5861
    %v6534 = vpack.c.b16 %v5870, %v5862
    %v6535 = vpack.c.b16 %v5871, %v5863
    %v6536 = vpack.c.b16 %v5872, %v5864
    %v6537 = vpack.c.b16 %v5873, %v5865
    %v6538 = vpack.c.b16 %v5874, %v5866
    %v6539 = vpack.c.b16 %v5875, %v5867
    %v6540 = vpack.c.b16 %v5884, %v5876
    %v6541 = vpack.c.b16 %v5885, %v5877
    %v6542 = vpack.c.b16 %v5886, %v5878
    %v6543 = vpack.c.b16 %v5887, %v5879
    %v6544 = vpack.c.b16 %v5888, %v5880
    %v6545 = vpack.c.b16 %v5889, %v5881
    %v6546 = vpack.c.b16 %v5890, %v5882
    %v6547 = vpack.c.b16 %v5891, %v5883
    %v6548 = vpack.c.b16 %v5900, %v5892
    %v6549 = vpack.c.b16 %v5901, %v5893
    %v6550 = vpack.c.b16 %v5902, %v5894
    %v6551 = vpack.c.b16 %v5903, %v5895
    %v6552 = vpack.c.b16 %v5904, %v5896
    %v6553 = vpack.c.b16 %v5905, %v5897
    %v6554 = vpack.c.b16 %v5906, %v5898
    %v6555 = vpack.c.b16 %v5907, %v5899
    %v6556 = vpack.c.b16 %v5916, %v5908
    %v6557 = vpack.c.b16 %v5917, %v5909
    %v6558 = vpack.c.b16 %v5918, %v5910
    %v6559 = vpack.c.b16 %v5919, %v5911
    %v6560 = vpack.c.b16 %v5920, %v5912
    %v6561 = vpack.c.b16 %v5921, %v5913
    %v6562 = vpack.c.b16 %v5922, %v5914
    %v6563 = vpack.c.b16 %v5923, %v5915
    %v6564 = vpack.c.b16 %v5932, %v5924
    %v6565 = vpack.c.b16 %v5933, %v5925
    %v6566 = vpack.c.b16 %v5934, %v5926
    %v6567 = vpack.c.b16 %v5935, %v5927
    %v6568 = vpack.c.b16 %v5936, %v5928
    %v6569 = vpack.c.b16 %v5937, %v5929
    %v6570 = vpack.c.b16 %v5938, %v5930
    %v6571 = vpack.c.b16 %v5939, %v5931
    %v6572 = vpack.c.b16 %v5948, %v5940
    %v6573 = vpack.c.b16 %v5949, %v5941
    %v6574 = vpack.c.b16 %v5950, %v5942
    %v6575 = vpack.c.b16 %v5951, %v5943
    %v6576 = vpack.c.b16 %v5952, %v5944
    %v6577 = vpack.c.b16 %v5953, %v5945
    %v6578 = vpack.c.b16 %v5954, %v5946
    %v6579 = vpack.c.b16 %v5955, %v5947
    %v6580 = vpack.c.b16 %v5964, %v5956
    %v6581 = vpack.c.b16 %v5965, %v5957
    %v6582 = vpack.c.b16 %v5966, %v5958
    %v6583 = vpack.c.b16 %v5967, %v5959
    %v6584 = vpack.c.b16 %v5968, %v5960
    %v6585 = vpack.c.b16 %v5969, %v5961
    %v6586 = vpack.c.b16 %v5970, %v5962
    %v6587 = vpack.c.b16 %v5971, %v5963
    %v6588 = vpack.c.b16 %v5980, %v5972
    %v6589 = vpack.c.b16 %v5981, %v5973
    %v6590 = vpack.c.b16 %v5982, %v5974
    %v6591 = vpack.c.b16 %v5983, %v5975
    %v6592 = vpack.c.b16 %v5984, %v5976
    %v6593 = vpack.c.b16 %v5985, %v5977
    %v6594 = vpack.c.b16 %v5986, %v5978
    %v6595 = vpack.c.b16 %v5987, %v5979
    %v6596 = vpack.c.b16 %v5996, %v5988
    %v6597 = vpack.c.b16 %v5997, %v5989
    %v6598 = vpack.c.b16 %v5998, %v5990
    %v6599 = vpack.c.b16 %v5999, %v5991
    %v6600 = vpack.c.b16 %v6000, %v5992
    %v6601 = vpack.c.b16 %v6001, %v5993
    %v6602 = vpack.c.b16 %v6002, %v5994
    %v6603 = vpack.c.b16 %v6003, %v5995
    %v6604 = vpack.c.b16 %v6012, %v6004
    %v6605 = vpack.c.b16 %v6013, %v6005
    %v6606 = vpack.c.b16 %v6014, %v6006
    %v6607 = vpack.c.b16 %v6015, %v6007
    %v6608 = vpack.c.b16 %v6016, %v6008
    %v6609 = vpack.c.b16 %v6017, %v6009
    %v6610 = vpack.c.b16 %v6018, %v6010
    %v6611 = vpack.c.b16 %v6019, %v6011
    %v6612 = vpack.c.b16 %v6028, %v6020
    %v6613 = vpack.c.b16 %v6029, %v6021
    %v6614 = vpack.c.b16 %v6030, %v6022
    %v6615 = vpack.c.b16 %v6031, %v6023
    %v6616 = vpack.c.b16 %v6032, %v6024
    %v6617 = vpack.c.b16 %v6033, %v6025
    %v6618 = vpack.c.b16 %v6034, %v6026
    %v6619 = vpack.c.b16 %v6035, %v6027
    %v6620 = vpack.c.b16 %v6044, %v6036
    %v6621 = vpack.c.b16 %v6045, %v6037
    %v6622 = vpack.c.b16 %v6046, %v6038
    %v6623 = vpack.c.b16 %v6047, %v6039
    %v6624 = vpack.c.b16 %v6048, %v6040
    %v6625 = vpack.c.b16 %v6049, %v6041
    %v6626 = vpack.c.b16 %v6050, %v6042
    %v6627 = vpack.c.b16 %v6051, %v6043
    %v6628 = vpack.c.b16 %v6060, %v6052
    %v6629 = vpack.c.b16 %v6061, %v6053
    %v6630 = vpack.c.b16 %v6062, %v6054
    %v6631 = vpack.c.b16 %v6063, %v6055
    %v6632 = vpack.c.b16 %v6064, %v6056
    %v6633 = vpack.c.b16 %v6065, %v6057
    %v6634 = vpack.c.b16 %v6066, %v6058
    %v6635 = vpack.c.b16 %v6067, %v6059
    %v6636 = vpack.c.b16 %v6076, %v6068
    %v6637 = vpack.c.b16 %v6077, %v6069
    %v6638 = vpack.c.b16 %v6078, %v6070
    %v6639 = vpack.c.b16 %v6079, %v6071
    %v6640 = vpack.c.b16 %v6080, %v6072
    %v6641 = vpack.c.b16 %v6081, %v6073
    %v6642 = vpack.c.b16 %v6082, %v6074
    %v6643 = vpack.c.b16 %v6083, %v6075
    %v6644 = vpack.c.b16 %v6092, %v6084
    %v6645 = vpack.c.b16 %v6093, %v6085
    %v6646 = vpack.c.b16 %v6094, %v6086
    %v6647 = vpack.c.b16 %v6095, %v6087
    %v6648 = vpack.c.b16 %v6096, %v6088
    %v6649 = vpack.c.b16 %v6097, %v6089
    %v6650 = vpack.c.b16 %v6098, %v6090
    %v6651 = vpack.c.b16 %v6099, %v6091
    %v6652 = vpack.c.b16 %v6108, %v6100
    %v6653 = vpack.c.b16 %v6109, %v6101
    %v6654 = vpack.c.b16 %v6110, %v6102
    %v6655 = vpack.c.b16 %v6111, %v6103
    %v6656 = vpack.c.b16 %v6112, %v6104
    %v6657 = vpack.c.b16 %v6113, %v6105
    %v6658 = vpack.c.b16 %v6114, %v6106
    %v6659 = vpack.c.b16 %v6115, %v6107
    %v6660 = vpack.c.b16 %v6124, %v6116
    %v6661 = vpack.c.b16 %v6125, %v6117
    %v6662 = vpack.c.b16 %v6126, %v6118
    %v6663 = vpack.c.b16 %v6127, %v6119
    %v6664 = vpack.c.b16 %v6128, %v6120
    %v6665 = vpack.c.b16 %v6129, %v6121
    %v6666 = vpack.c.b16 %v6130, %v6122
    %v6667 = vpack.c.b16 %v6131, %v6123
    %v6668 = vpack.c.b16 %v6140, %v6132
    %v6669 = vpack.c.b16 %v6141, %v6133
    %v6670 = vpack.c.b16 %v6142, %v6134
    %v6671 = vpack.c.b16 %v6143, %v6135
    %v6672 = vpack.c.b16 %v6144, %v6136
    %v6673 = vpack.c.b16 %v6145, %v6137
    %v6674 = vpack.c.b16 %v6146, %v6138
    %v6675 = vpack.c.b16 %v6147, %v6139
    %v6676 = vpack.c.b16 %v6156, %v6148
    %v6677 = vpack.c.b16 %v6157, %v6149
    %v6678 = vpack.c.b16 %v6158, %v6150
    %v6679 = vpack.c.b16 %v6159, %v6151
    %v6680 = vpack.c.b16 %v6160, %v6152
    %v6681 = vpack.c.b16 %v6161, %v6153
    %v6682 = vpack.c.b16 %v6162, %v6154
    %v6683 = vpack.c.b16 %v6163, %v6155
    %v6684 = vpack.c.b16 %v6172, %v6164
    %v6685 = vpack.c.b16 %v6173, %v6165
    %v6686 = vpack.c.b16 %v6174, %v6166
    %v6687 = vpack.c.b16 %v6175, %v6167
    %v6688 = vpack.c.b16 %v6176, %v6168
    %v6689 = vpack.c.b16 %v6177, %v6169
    %v6690 = vpack.c.b16 %v6178, %v6170
    %v6691 = vpack.c.b16 %v6179, %v6171
    %7204 = vmatprep.subr.bf16.mxu0 %v6181
    %7205 = vmatpush1.bf16.msra.mxu0 %v6180
    %7206 = vmatprep.subr.bf16.mxu0 %v6189
    %7207 = vmatpush1.bf16.msra.mxu0 %v6188
    %7208 = vmatprep.subr.bf16.mxu0 %v6197
    %7209 = vmatpush1.bf16.msra.mxu0 %v6196
    %7210 = vmatprep.subr.bf16.mxu0 %v6205
    %7211 = vmatpush1.bf16.msra.mxu0 %v6204
    %7212 = vmatprep.subr.bf16.mxu0 %v6213
    %7213 = vmatpush1.bf16.msra.mxu0 %v6212
    %7214 = vmatprep.subr.bf16.mxu0 %v6221
    %7215 = vmatpush1.bf16.msra.mxu0 %v6220
    %7216 = vmatprep.subr.bf16.mxu0 %v6229
    %7217 = vmatpush1.bf16.msra.mxu0 %v6228
    %7218 = vmatprep.subr.bf16.mxu0 %v6237
    %7219 = vmatpush1.bf16.msra.mxu0 %v6236
    %7220 = vmatprep.subr.bf16.mxu0 %v6245
    %7221 = vmatpush1.bf16.msra.mxu0 %v6244
    %7222 = vmatprep.subr.bf16.mxu0 %v6253
    %7223 = vmatpush1.bf16.msra.mxu0 %v6252
    %7224 = vmatprep.subr.bf16.mxu0 %v6261
    %7225 = vmatpush1.bf16.msra.mxu0 %v6260
    %7226 = vmatprep.subr.bf16.mxu0 %v6269
    %7227 = vmatpush1.bf16.msra.mxu0 %v6268
    %7228 = vmatprep.subr.bf16.mxu0 %v6277
    %7229 = vmatpush1.bf16.msra.mxu0 %v6276
    %7230 = vmatprep.subr.bf16.mxu0 %v6285
    %7231 = vmatpush1.bf16.msra.mxu0 %v6284
    %7232 = vmatprep.subr.bf16.mxu0 %v6293
    %7233 = vmatpush1.bf16.msra.mxu0 %v6292
    %7234 = vmatprep.subr.bf16.mxu0 %v6301
    %7235 = vmatpush1.bf16.msra.mxu0 %v6300
    %7236 = vmatprep.mubr.bf16.mxu0 %v3402
    %7237 = vmatmul.mubr.bf16.gmra.mrb[0].mxu0 %v3401
    %v7238 = vpop.f32.mrb[0].mxu0
    %v7239 = vadd.f32 %v4607, %v7238
    %v7240 = vpop.f32.mrb[0].mxu0
    %v7241 = vadd.f32 %v4611, %v7240
    %v7242 = vpop.f32.mrb[0].mxu0
    %v7243 = vpop.f32.mrb[0].mxu0
    %7244 = vdwg.mxu0
    %7245 = vmatprep.subr.bf16.mxu0 %v6309
    %7246 = vmatpush1.bf16.msra.mxu0 %v6308
    %7247 = vmatprep.subr.bf16.mxu0 %v6317
    %7248 = vmatpush1.bf16.msra.mxu0 %v6316
    %7249 = vmatprep.subr.bf16.mxu0 %v6325
    %7250 = vmatpush1.bf16.msra.mxu0 %v6324
    %7251 = vmatprep.subr.bf16.mxu0 %v6333
    %7252 = vmatpush1.bf16.msra.mxu0 %v6332
    %7253 = vmatprep.subr.bf16.mxu0 %v6341
    %7254 = vmatpush1.bf16.msra.mxu0 %v6340
    %7255 = vmatprep.subr.bf16.mxu0 %v6349
    %7256 = vmatpush1.bf16.msra.mxu0 %v6348
    %7257 = vmatprep.subr.bf16.mxu0 %v6357
    %7258 = vmatpush1.bf16.msra.mxu0 %v6356
    %7259 = vmatprep.subr.bf16.mxu0 %v6365
    %7260 = vmatpush1.bf16.msra.mxu0 %v6364
    %7261 = vmatprep.subr.bf16.mxu0 %v6373
    %7262 = vmatpush1.bf16.msra.mxu0 %v6372
    %7263 = vmatprep.subr.bf16.mxu0 %v6381
    %7264 = vmatpush1.bf16.msra.mxu0 %v6380
    %7265 = vmatprep.subr.bf16.mxu0 %v6389
    %7266 = vmatpush1.bf16.msra.mxu0 %v6388
    %7267 = vmatprep.subr.bf16.mxu0 %v6397
    %7268 = vmatpush1.bf16.msra.mxu0 %v6396
    %7269 = vmatprep.subr.bf16.mxu0 %v6405
    %7270 = vmatpush1.bf16.msra.mxu0 %v6404
    %7271 = vmatprep.subr.bf16.mxu0 %v6413
    %7272 = vmatpush1.bf16.msra.mxu0 %v6412
    %7273 = vmatprep.subr.bf16.mxu0 %v6421
    %7274 = vmatpush1.bf16.msra.mxu0 %v6420
    %7275 = vmatprep.subr.bf16.mxu0 %v6429
    %7276 = vmatpush1.bf16.msra.mxu0 %v6428
    %7277 = vmatprep.mubr.bf16.mxu0 %v3404
    %7278 = vmatmul.mubr.bf16.gmra.mrb[0].mxu0 %v3403
    %v7279 = vpop.f32.mrb[0].mxu0
    %v7280 = vadd.f32 %v7239, %v7279
    %v7281 = vpop.f32.mrb[0].mxu0
    %v7282 = vadd.f32 %v7241, %v7281
    %v7283 = vpop.f32.mrb[0].mxu0
    %v7284 = vpop.f32.mrb[0].mxu0
    %7285 = vdwg.mxu0
    %7286 = vmatprep.subr.bf16.mxu0 %v6437
    %7287 = vmatpush1.bf16.msra.mxu0 %v6436
    %7288 = vmatprep.subr.bf16.mxu0 %v6445
    %7289 = vmatpush1.bf16.msra.mxu0 %v6444
    %7290 = vmatprep.subr.bf16.mxu0 %v6453
    %7291 = vmatpush1.bf16.msra.mxu0 %v6452
    %7292 = vmatprep.subr.bf16.mxu0 %v6461
    %7293 = vmatpush1.bf16.msra.mxu0 %v6460
    %7294 = vmatprep.subr.bf16.mxu0 %v6469
    %7295 = vmatpush1.bf16.msra.mxu0 %v6468
    %7296 = vmatprep.subr.bf16.mxu0 %v6477
    %7297 = vmatpush1.bf16.msra.mxu0 %v6476
    %7298 = vmatprep.subr.bf16.mxu0 %v6485
    %7299 = vmatpush1.bf16.msra.mxu0 %v6484
    %7300 = vmatprep.subr.bf16.mxu0 %v6493
    %7301 = vmatpush1.bf16.msra.mxu0 %v6492
    %7302 = vmatprep.subr.bf16.mxu0 %v6501
    %7303 = vmatpush1.bf16.msra.mxu0 %v6500
    %7304 = vmatprep.subr.bf16.mxu0 %v6509
    %7305 = vmatpush1.bf16.msra.mxu0 %v6508
    %7306 = vmatprep.subr.bf16.mxu0 %v6517
    %7307 = vmatpush1.bf16.msra.mxu0 %v6516
    %7308 = vmatprep.subr.bf16.mxu0 %v6525
    %7309 = vmatpush1.bf16.msra.mxu0 %v6524
    %7310 = vmatprep.subr.bf16.mxu0 %v6533
    %7311 = vmatpush1.bf16.msra.mxu0 %v6532
    %7312 = vmatprep.subr.bf16.mxu0 %v6541
    %7313 = vmatpush1.bf16.msra.mxu0 %v6540
    %7314 = vmatprep.subr.bf16.mxu0 %v6549
    %7315 = vmatpush1.bf16.msra.mxu0 %v6548
    %7316 = vmatprep.subr.bf16.mxu0 %v6557
    %7317 = vmatpush1.bf16.msra.mxu0 %v6556
    %7318 = vmatprep.mubr.bf16.mxu0 %v3406
    %7319 = vmatmul.mubr.bf16.gmra.mrb[0].mxu0 %v3405
    %v7320 = vpop.f32.mrb[0].mxu0
    %v7321 = vadd.f32 %v7280, %v7320
    %v7322 = vpop.f32.mrb[0].mxu0
    %v7323 = vadd.f32 %v7282, %v7322
    %v7324 = vpop.f32.mrb[0].mxu0
    %v7325 = vpop.f32.mrb[0].mxu0
    %7326 = vdwg.mxu0
    %7327 = vmatprep.subr.bf16.mxu0 %v6565
    %7328 = vmatpush1.bf16.msra.mxu0 %v6564
    %7329 = vmatprep.subr.bf16.mxu0 %v6573
    %7330 = vmatpush1.bf16.msra.mxu0 %v6572
    %7331 = vmatprep.subr.bf16.mxu0 %v6581
    %7332 = vmatpush1.bf16.msra.mxu0 %v6580
    %7333 = vmatprep.subr.bf16.mxu0 %v6589
    %7334 = vmatpush1.bf16.msra.mxu0 %v6588
    %7335 = vmatprep.subr.bf16.mxu0 %v6597
    %7336 = vmatpush1.bf16.msra.mxu0 %v6596
    %7337 = vmatprep.subr.bf16.mxu0 %v6605
    %7338 = vmatpush1.bf16.msra.mxu0 %v6604
    %7339 = vmatprep.subr.bf16.mxu0 %v6613
    %7340 = vmatpush1.bf16.msra.mxu0 %v6612
    %7341 = vmatprep.subr.bf16.mxu0 %v6621
    %7342 = vmatpush1.bf16.msra.mxu0 %v6620
    %7343 = vmatprep.subr.bf16.mxu0 %v6629
    %7344 = vmatpush1.bf16.msra.mxu0 %v6628
    %7345 = vmatprep.subr.bf16.mxu0 %v6637
    %7346 = vmatpush1.bf16.msra.mxu0 %v6636
    %7347 = vmatprep.subr.bf16.mxu0 %v6645
    %7348 = vmatpush1.bf16.msra.mxu0 %v6644
    %7349 = vmatprep.subr.bf16.mxu0 %v6653
    %7350 = vmatpush1.bf16.msra.mxu0 %v6652
    %7351 = vmatprep.subr.bf16.mxu0 %v6661
    %7352 = vmatpush1.bf16.msra.mxu0 %v6660
    %7353 = vmatprep.subr.bf16.mxu0 %v6669
    %7354 = vmatpush1.bf16.msra.mxu0 %v6668
    %7355 = vmatprep.subr.bf16.mxu0 %v6677
    %7356 = vmatpush1.bf16.msra.mxu0 %v6676
    %7357 = vmatprep.subr.bf16.mxu0 %v6685
    %7358 = vmatpush1.bf16.msra.mxu0 %v6684
    %7359 = vmatprep.mubr.bf16.mxu0 %v3408
    %7360 = vmatmul.mubr.bf16.gmra.mrb[0].mxu0 %v3407
    %v7361 = vpop.f32.mrb[0].mxu0
    %v7362 = vadd.f32 %v7321, %v7361
    %v7363 = vpop.f32.mrb[0].mxu0
    %v7364 = vadd.f32 %v7323, %v7363
    %v7365 = vpop.f32.mrb[0].mxu0
    %v7366 = vpop.f32.mrb[0].mxu0
    %7367 = vdwg.mxu0
    %7368 = vmatprep.subr.bf16.mxu0 %v6183
    %7369 = vmatpush1.bf16.msra.mxu0 %v6182
    %7370 = vmatprep.subr.bf16.mxu0 %v6191
    %7371 = vmatpush1.bf16.msra.mxu0 %v6190
    %7372 = vmatprep.subr.bf16.mxu0 %v6199
    %7373 = vmatpush1.bf16.msra.mxu0 %v6198
    %7374 = vmatprep.subr.bf16.mxu0 %v6207
    %7375 = vmatpush1.bf16.msra.mxu0 %v6206
    %7376 = vmatprep.subr.bf16.mxu0 %v6215
    %7377 = vmatpush1.bf16.msra.mxu0 %v6214
    %7378 = vmatprep.subr.bf16.mxu0 %v6223
    %7379 = vmatpush1.bf16.msra.mxu0 %v6222
    %7380 = vmatprep.subr.bf16.mxu0 %v6231
    %7381 = vmatpush1.bf16.msra.mxu0 %v6230
    %7382 = vmatprep.subr.bf16.mxu0 %v6239
    %7383 = vmatpush1.bf16.msra.mxu0 %v6238
    %7384 = vmatprep.subr.bf16.mxu0 %v6247
    %7385 = vmatpush1.bf16.msra.mxu0 %v6246
    %7386 = vmatprep.subr.bf16.mxu0 %v6255
    %7387 = vmatpush1.bf16.msra.mxu0 %v6254
    %7388 = vmatprep.subr.bf16.mxu0 %v6263
    %7389 = vmatpush1.bf16.msra.mxu0 %v6262
    %7390 = vmatprep.subr.bf16.mxu0 %v6271
    %7391 = vmatpush1.bf16.msra.mxu0 %v6270
    %7392 = vmatprep.subr.bf16.mxu0 %v6279
    %7393 = vmatpush1.bf16.msra.mxu0 %v6278
    %7394 = vmatprep.subr.bf16.mxu0 %v6287
    %7395 = vmatpush1.bf16.msra.mxu0 %v6286
    %7396 = vmatprep.subr.bf16.mxu0 %v6295
    %7397 = vmatpush1.bf16.msra.mxu0 %v6294
    %7398 = vmatprep.subr.bf16.mxu0 %v6303
    %7399 = vmatpush1.bf16.msra.mxu0 %v6302
    %7400 = vmatprep.mubr.bf16.mxu0 %v3402
    %7401 = vmatmul.mubr.bf16.gmra.mrb[0].mxu0 %v3401
    %v7402 = vpop.f32.mrb[0].mxu0
    %v7403 = vadd.f32 %v4615, %v7402
    %v7404 = vpop.f32.mrb[0].mxu0
    %v7405 = vadd.f32 %v4619, %v7404
    %v7406 = vpop.f32.mrb[0].mxu0
    %v7407 = vpop.f32.mrb[0].mxu0
    %7408 = vdwg.mxu0
    %7409 = vmatprep.subr.bf16.mxu0 %v6311
    %7410 = vmatpush1.bf16.msra.mxu0 %v6310
    %7411 = vmatprep.subr.bf16.mxu0 %v6319
    %7412 = vmatpush1.bf16.msra.mxu0 %v6318
    %7413 = vmatprep.subr.bf16.mxu0 %v6327
    %7414 = vmatpush1.bf16.msra.mxu0 %v6326
    %7415 = vmatprep.subr.bf16.mxu0 %v6335
    %7416 = vmatpush1.bf16.msra.mxu0 %v6334
    %7417 = vmatprep.subr.bf16.mxu0 %v6343
    %7418 = vmatpush1.bf16.msra.mxu0 %v6342
    %7419 = vmatprep.subr.bf16.mxu0 %v6351
    %7420 = vmatpush1.bf16.msra.mxu0 %v6350
    %7421 = vmatprep.subr.bf16.mxu0 %v6359
    %7422 = vmatpush1.bf16.msra.mxu0 %v6358
    %7423 = vmatprep.subr.bf16.mxu0 %v6367
    %7424 = vmatpush1.bf16.msra.mxu0 %v6366
    %7425 = vmatprep.subr.bf16.mxu0 %v6375
    %7426 = vmatpush1.bf16.msra.mxu0 %v6374
    %7427 = vmatprep.subr.bf16.mxu0 %v6383
    %7428 = vmatpush1.bf16.msra.mxu0 %v6382
    %7429 = vmatprep.subr.bf16.mxu0 %v6391
    %7430 = vmatpush1.bf16.msra.mxu0 %v6390
    %7431 = vmatprep.subr.bf16.mxu0 %v6399
    %7432 = vmatpush1.bf16.msra.mxu0 %v6398
    %7433 = vmatprep.subr.bf16.mxu0 %v6407
    %7434 = vmatpush1.bf16.msra.mxu0 %v6406
    %7435 = vmatprep.subr.bf16.mxu0 %v6415
    %7436 = vmatpush1.bf16.msra.mxu0 %v6414
    %7437 = vmatprep.subr.bf16.mxu0 %v6423
    %7438 = vmatpush1.bf16.msra.mxu0 %v6422
    %7439 = vmatprep.subr.bf16.mxu0 %v6431
    %7440 = vmatpush1.bf16.msra.mxu0 %v6430
    %7441 = vmatprep.mubr.bf16.mxu0 %v3404
    %7442 = vmatmul.mubr.bf16.gmra.mrb[0].mxu0 %v3403
    %v7443 = vpop.f32.mrb[0].mxu0
    %v7444 = vadd.f32 %v7403, %v7443
    %v7445 = vpop.f32.mrb[0].mxu0
    %v7446 = vadd.f32 %v7405, %v7445
    %v7447 = vpop.f32.mrb[0].mxu0
    %v7448 = vpop.f32.mrb[0].mxu0
    %7449 = vdwg.mxu0
    %7450 = vmatprep.subr.bf16.mxu0 %v6439
    %7451 = vmatpush1.bf16.msra.mxu0 %v6438
    %7452 = vmatprep.subr.bf16.mxu0 %v6447
    %7453 = vmatpush1.bf16.msra.mxu0 %v6446
    %7454 = vmatprep.subr.bf16.mxu0 %v6455
    %7455 = vmatpush1.bf16.msra.mxu0 %v6454
    %7456 = vmatprep.subr.bf16.mxu0 %v6463
    %7457 = vmatpush1.bf16.msra.mxu0 %v6462
    %7458 = vmatprep.subr.bf16.mxu0 %v6471
    %7459 = vmatpush1.bf16.msra.mxu0 %v6470
    %7460 = vmatprep.subr.bf16.mxu0 %v6479
    %7461 = vmatpush1.bf16.msra.mxu0 %v6478
    %7462 = vmatprep.subr.bf16.mxu0 %v6487
    %7463 = vmatpush1.bf16.msra.mxu0 %v6486
    %7464 = vmatprep.subr.bf16.mxu0 %v6495
    %7465 = vmatpush1.bf16.msra.mxu0 %v6494
    %7466 = vmatprep.subr.bf16.mxu0 %v6503
    %7467 = vmatpush1.bf16.msra.mxu0 %v6502
    %7468 = vmatprep.subr.bf16.mxu0 %v6511
    %7469 = vmatpush1.bf16.msra.mxu0 %v6510
    %7470 = vmatprep.subr.bf16.mxu0 %v6519
    %7471 = vmatpush1.bf16.msra.mxu0 %v6518
    %7472 = vmatprep.subr.bf16.mxu0 %v6527
    %7473 = vmatpush1.bf16.msra.mxu0 %v6526
    %7474 = vmatprep.subr.bf16.mxu0 %v6535
    %7475 = vmatpush1.bf16.msra.mxu0 %v6534
    %7476 = vmatprep.subr.bf16.mxu0 %v6543
    %7477 = vmatpush1.bf16.msra.mxu0 %v6542
    %7478 = vmatprep.subr.bf16.mxu0 %v6551
    %7479 = vmatpush1.bf16.msra.mxu0 %v6550
    %7480 = vmatprep.subr.bf16.mxu0 %v6559
    %7481 = vmatpush1.bf16.msra.mxu0 %v6558
    %7482 = vmatprep.mubr.bf16.mxu0 %v3406
    %7483 = vmatmul.mubr.bf16.gmra.mrb[0].mxu0 %v3405
    %v7484 = vpop.f32.mrb[0].mxu0
    %v7485 = vadd.f32 %v7444, %v7484
    %v7486 = vpop.f32.mrb[0].mxu0
    %v7487 = vadd.f32 %v7446, %v7486
    %v7488 = vpop.f32.mrb[0].mxu0
    %v7489 = vpop.f32.mrb[0].mxu0
    %7490 = vdwg.mxu0
    %7491 = vmatprep.subr.bf16.mxu0 %v6567
    %7492 = vmatpush1.bf16.msra.mxu0 %v6566
    %7493 = vmatprep.subr.bf16.mxu0 %v6575
    %7494 = vmatpush1.bf16.msra.mxu0 %v6574
    %7495 = vmatprep.subr.bf16.mxu0 %v6583
    %7496 = vmatpush1.bf16.msra.mxu0 %v6582
    %7497 = vmatprep.subr.bf16.mxu0 %v6591
    %7498 = vmatpush1.bf16.msra.mxu0 %v6590
    %7499 = vmatprep.subr.bf16.mxu0 %v6599
    %7500 = vmatpush1.bf16.msra.mxu0 %v6598
    %7501 = vmatprep.subr.bf16.mxu0 %v6607
    %7502 = vmatpush1.bf16.msra.mxu0 %v6606
    %7503 = vmatprep.subr.bf16.mxu0 %v6615
    %7504 = vmatpush1.bf16.msra.mxu0 %v6614
    %7505 = vmatprep.subr.bf16.mxu0 %v6623
    %7506 = vmatpush1.bf16.msra.mxu0 %v6622
    %7507 = vmatprep.subr.bf16.mxu0 %v6631
    %7508 = vmatpush1.bf16.msra.mxu0 %v6630
    %7509 = vmatprep.subr.bf16.mxu0 %v6639
    %7510 = vmatpush1.bf16.msra.mxu0 %v6638
    %7511 = vmatprep.subr.bf16.mxu0 %v6647
    %7512 = vmatpush1.bf16.msra.mxu0 %v6646
    %7513 = vmatprep.subr.bf16.mxu0 %v6655
    %7514 = vmatpush1.bf16.msra.mxu0 %v6654
    %7515 = vmatprep.subr.bf16.mxu0 %v6663
    %7516 = vmatpush1.bf16.msra.mxu0 %v6662
    %7517 = vmatprep.subr.bf16.mxu0 %v6671
    %7518 = vmatpush1.bf16.msra.mxu0 %v6670
    %7519 = vmatprep.subr.bf16.mxu0 %v6679
    %7520 = vmatpush1.bf16.msra.mxu0 %v6678
    %7521 = vmatprep.subr.bf16.mxu0 %v6687
    %7522 = vmatpush1.bf16.msra.mxu0 %v6686
    %7523 = vmatprep.mubr.bf16.mxu0 %v3408
    %7524 = vmatmul.mubr.bf16.gmra.mrb[0].mxu0 %v3407
    %v7525 = vpop.f32.mrb[0].mxu0
    %v7526 = vadd.f32 %v7485, %v7525
    %v7527 = vpop.f32.mrb[0].mxu0
    %v7528 = vadd.f32 %v7487, %v7527
    %v7529 = vpop.f32.mrb[0].mxu0
    %v7530 = vpop.f32.mrb[0].mxu0
    %7531 = vdwg.mxu0
    %7532 = vmatprep.subr.bf16.mxu0 %v6185
    %7533 = vmatpush1.bf16.msra.mxu0 %v6184
    %7534 = vmatprep.subr.bf16.mxu0 %v6193
    %7535 = vmatpush1.bf16.msra.mxu0 %v6192
    %7536 = vmatprep.subr.bf16.mxu0 %v6201
    %7537 = vmatpush1.bf16.msra.mxu0 %v6200
    %7538 = vmatprep.subr.bf16.mxu0 %v6209
    %7539 = vmatpush1.bf16.msra.mxu0 %v6208
    %7540 = vmatprep.subr.bf16.mxu0 %v6217
    %7541 = vmatpush1.bf16.msra.mxu0 %v6216
    %7542 = vmatprep.subr.bf16.mxu0 %v6225
    %7543 = vmatpush1.bf16.msra.mxu0 %v6224
    %7544 = vmatprep.subr.bf16.mxu0 %v6233
    %7545 = vmatpush1.bf16.msra.mxu0 %v6232
    %7546 = vmatprep.subr.bf16.mxu0 %v6241
    %7547 = vmatpush1.bf16.msra.mxu0 %v6240
    %7548 = vmatprep.subr.bf16.mxu0 %v6249
    %7549 = vmatpush1.bf16.msra.mxu0 %v6248
    %7550 = vmatprep.subr.bf16.mxu0 %v6257
    %7551 = vmatpush1.bf16.msra.mxu0 %v6256
    %7552 = vmatprep.subr.bf16.mxu0 %v6265
    %7553 = vmatpush1.bf16.msra.mxu0 %v6264
    %7554 = vmatprep.subr.bf16.mxu0 %v6273
    %7555 = vmatpush1.bf16.msra.mxu0 %v6272
    %7556 = vmatprep.subr.bf16.mxu0 %v6281
    %7557 = vmatpush1.bf16.msra.mxu0 %v6280
    %7558 = vmatprep.subr.bf16.mxu0 %v6289
    %7559 = vmatpush1.bf16.msra.mxu0 %v6288
    %7560 = vmatprep.subr.bf16.mxu0 %v6297
    %7561 = vmatpush1.bf16.msra.mxu0 %v6296
    %7562 = vmatprep.subr.bf16.mxu0 %v6305
    %7563 = vmatpush1.bf16.msra.mxu0 %v6304
    %7564 = vmatprep.mubr.bf16.mxu0 %v3402
    %7565 = vmatmul.mubr.bf16.gmra.mrb[0].mxu0 %v3401
    %v7566 = vpop.f32.mrb[0].mxu0
    %v7567 = vadd.f32 %v4623, %v7566
    %v7568 = vpop.f32.mrb[0].mxu0
    %v7569 = vadd.f32 %v4627, %v7568
    %v7570 = vpop.f32.mrb[0].mxu0
    %v7571 = vpop.f32.mrb[0].mxu0
    %7572 = vdwg.mxu0
    %7573 = vmatprep.subr.bf16.mxu0 %v6313
    %7574 = vmatpush1.bf16.msra.mxu0 %v6312
    %7575 = vmatprep.subr.bf16.mxu0 %v6321
    %7576 = vmatpush1.bf16.msra.mxu0 %v6320
    %7577 = vmatprep.subr.bf16.mxu0 %v6329
    %7578 = vmatpush1.bf16.msra.mxu0 %v6328
    %7579 = vmatprep.subr.bf16.mxu0 %v6337
    %7580 = vmatpush1.bf16.msra.mxu0 %v6336
    %7581 = vmatprep.subr.bf16.mxu0 %v6345
    %7582 = vmatpush1.bf16.msra.mxu0 %v6344
    %7583 = vmatprep.subr.bf16.mxu0 %v6353
    %7584 = vmatpush1.bf16.msra.mxu0 %v6352
    %7585 = vmatprep.subr.bf16.mxu0 %v6361
    %7586 = vmatpush1.bf16.msra.mxu0 %v6360
    %7587 = vmatprep.subr.bf16.mxu0 %v6369
    %7588 = vmatpush1.bf16.msra.mxu0 %v6368
    %7589 = vmatprep.subr.bf16.mxu0 %v6377
    %7590 = vmatpush1.bf16.msra.mxu0 %v6376
    %7591 = vmatprep.subr.bf16.mxu0 %v6385
    %7592 = vmatpush1.bf16.msra.mxu0 %v6384
    %7593 = vmatprep.subr.bf16.mxu0 %v6393
    %7594 = vmatpush1.bf16.msra.mxu0 %v6392
    %7595 = vmatprep.subr.bf16.mxu0 %v6401
    %7596 = vmatpush1.bf16.msra.mxu0 %v6400
    %7597 = vmatprep.subr.bf16.mxu0 %v6409
    %7598 = vmatpush1.bf16.msra.mxu0 %v6408
    %7599 = vmatprep.subr.bf16.mxu0 %v6417
    %7600 = vmatpush1.bf16.msra.mxu0 %v6416
    %7601 = vmatprep.subr.bf16.mxu0 %v6425
    %7602 = vmatpush1.bf16.msra.mxu0 %v6424
    %7603 = vmatprep.subr.bf16.mxu0 %v6433
    %7604 = vmatpush1.bf16.msra.mxu0 %v6432
    %7605 = vmatprep.mubr.bf16.mxu0 %v3404
    %7606 = vmatmul.mubr.bf16.gmra.mrb[0].mxu0 %v3403
    %v7607 = vpop.f32.mrb[0].mxu0
    %v7608 = vadd.f32 %v7567, %v7607
    %v7609 = vpop.f32.mrb[0].mxu0
    %v7610 = vadd.f32 %v7569, %v7609
    %v7611 = vpop.f32.mrb[0].mxu0
    %v7612 = vpop.f32.mrb[0].mxu0
    %7613 = vdwg.mxu0
    %7614 = vmatprep.subr.bf16.mxu0 %v6441
    %7615 = vmatpush1.bf16.msra.mxu0 %v6440
    %7616 = vmatprep.subr.bf16.mxu0 %v6449
    %7617 = vmatpush1.bf16.msra.mxu0 %v6448
    %7618 = vmatprep.subr.bf16.mxu0 %v6457
    %7619 = vmatpush1.bf16.msra.mxu0 %v6456
    %7620 = vmatprep.subr.bf16.mxu0 %v6465
    %7621 = vmatpush1.bf16.msra.mxu0 %v6464
    %7622 = vmatprep.subr.bf16.mxu0 %v6473
    %7623 = vmatpush1.bf16.msra.mxu0 %v6472
    %7624 = vmatprep.subr.bf16.mxu0 %v6481
    %7625 = vmatpush1.bf16.msra.mxu0 %v6480
    %7626 = vmatprep.subr.bf16.mxu0 %v6489
    %7627 = vmatpush1.bf16.msra.mxu0 %v6488
    %7628 = vmatprep.subr.bf16.mxu0 %v6497
    %7629 = vmatpush1.bf16.msra.mxu0 %v6496
    %7630 = vmatprep.subr.bf16.mxu0 %v6505
    %7631 = vmatpush1.bf16.msra.mxu0 %v6504
    %7632 = vmatprep.subr.bf16.mxu0 %v6513
    %7633 = vmatpush1.bf16.msra.mxu0 %v6512
    %7634 = vmatprep.subr.bf16.mxu0 %v6521
    %7635 = vmatpush1.bf16.msra.mxu0 %v6520
    %7636 = vmatprep.subr.bf16.mxu0 %v6529
    %7637 = vmatpush1.bf16.msra.mxu0 %v6528
    %7638 = vmatprep.subr.bf16.mxu0 %v6537
    %7639 = vmatpush1.bf16.msra.mxu0 %v6536
    %7640 = vmatprep.subr.bf16.mxu0 %v6545
    %7641 = vmatpush1.bf16.msra.mxu0 %v6544
    %7642 = vmatprep.subr.bf16.mxu0 %v6553
    %7643 = vmatpush1.bf16.msra.mxu0 %v6552
    %7644 = vmatprep.subr.bf16.mxu0 %v6561
    %7645 = vmatpush1.bf16.msra.mxu0 %v6560
    %7646 = vmatprep.mubr.bf16.mxu0 %v3406
    %7647 = vmatmul.mubr.bf16.gmra.mrb[0].mxu0 %v3405
    %v7648 = vpop.f32.mrb[0].mxu0
    %v7649 = vadd.f32 %v7608, %v7648
    %v7650 = vpop.f32.mrb[0].mxu0
    %v7651 = vadd.f32 %v7610, %v7650
    %v7652 = vpop.f32.mrb[0].mxu0
    %v7653 = vpop.f32.mrb[0].mxu0
    %7654 = vdwg.mxu0
    %7655 = vmatprep.subr.bf16.mxu0 %v6569
    %7656 = vmatpush1.bf16.msra.mxu0 %v6568
    %7657 = vmatprep.subr.bf16.mxu0 %v6577
    %7658 = vmatpush1.bf16.msra.mxu0 %v6576
    %7659 = vmatprep.subr.bf16.mxu0 %v6585
    %7660 = vmatpush1.bf16.msra.mxu0 %v6584
    %7661 = vmatprep.subr.bf16.mxu0 %v6593
    %7662 = vmatpush1.bf16.msra.mxu0 %v6592
    %7663 = vmatprep.subr.bf16.mxu0 %v6601
    %7664 = vmatpush1.bf16.msra.mxu0 %v6600
    %7665 = vmatprep.subr.bf16.mxu0 %v6609
    %7666 = vmatpush1.bf16.msra.mxu0 %v6608
    %7667 = vmatprep.subr.bf16.mxu0 %v6617
    %7668 = vmatpush1.bf16.msra.mxu0 %v6616
    %7669 = vmatprep.subr.bf16.mxu0 %v6625
    %7670 = vmatpush1.bf16.msra.mxu0 %v6624
    %7671 = vmatprep.subr.bf16.mxu0 %v6633
    %7672 = vmatpush1.bf16.msra.mxu0 %v6632
    %7673 = vmatprep.subr.bf16.mxu0 %v6641
    %7674 = vmatpush1.bf16.msra.mxu0 %v6640
    %7675 = vmatprep.subr.bf16.mxu0 %v6649
    %7676 = vmatpush1.bf16.msra.mxu0 %v6648
    %7677 = vmatprep.subr.bf16.mxu0 %v6657
    %7678 = vmatpush1.bf16.msra.mxu0 %v6656
    %7679 = vmatprep.subr.bf16.mxu0 %v6665
    %7680 = vmatpush1.bf16.msra.mxu0 %v6664
    %7681 = vmatprep.subr.bf16.mxu0 %v6673
    %7682 = vmatpush1.bf16.msra.mxu0 %v6672
    %7683 = vmatprep.subr.bf16.mxu0 %v6681
    %7684 = vmatpush1.bf16.msra.mxu0 %v6680
    %7685 = vmatprep.subr.bf16.mxu0 %v6689
    %7686 = vmatpush1.bf16.msra.mxu0 %v6688
    %7687 = vmatprep.mubr.bf16.mxu0 %v3408
    %7688 = vmatmul.mubr.bf16.gmra.mrb[0].mxu0 %v3407
    %v7689 = vpop.f32.mrb[0].mxu0
    %v7690 = vadd.f32 %v7649, %v7689
    %v7691 = vpop.f32.mrb[0].mxu0
    %v7692 = vadd.f32 %v7651, %v7691
    %v7693 = vpop.f32.mrb[0].mxu0
    %v7694 = vpop.f32.mrb[0].mxu0
    %7695 = vdwg.mxu0
    %7696 = vmatprep.subr.bf16.mxu0 %v6187
    %7697 = vmatpush1.bf16.msra.mxu0 %v6186
    %7698 = vmatprep.subr.bf16.mxu0 %v6195
    %7699 = vmatpush1.bf16.msra.mxu0 %v6194
    %7700 = vmatprep.subr.bf16.mxu0 %v6203
    %7701 = vmatpush1.bf16.msra.mxu0 %v6202
    %7702 = vmatprep.subr.bf16.mxu0 %v6211
    %7703 = vmatpush1.bf16.msra.mxu0 %v6210
    %7704 = vmatprep.subr.bf16.mxu0 %v6219
    %7705 = vmatpush1.bf16.msra.mxu0 %v6218
    %7706 = vmatprep.subr.bf16.mxu0 %v6227
    %7707 = vmatpush1.bf16.msra.mxu0 %v6226
    %7708 = vmatprep.subr.bf16.mxu0 %v6235
    %7709 = vmatpush1.bf16.msra.mxu0 %v6234
    %7710 = vmatprep.subr.bf16.mxu0 %v6243
    %7711 = vmatpush1.bf16.msra.mxu0 %v6242
    %7712 = vmatprep.subr.bf16.mxu0 %v6251
    %7713 = vmatpush1.bf16.msra.mxu0 %v6250
    %7714 = vmatprep.subr.bf16.mxu0 %v6259
    %7715 = vmatpush1.bf16.msra.mxu0 %v6258
    %7716 = vmatprep.subr.bf16.mxu0 %v6267
    %7717 = vmatpush1.bf16.msra.mxu0 %v6266
    %7718 = vmatprep.subr.bf16.mxu0 %v6275
    %7719 = vmatpush1.bf16.msra.mxu0 %v6274
    %7720 = vmatprep.subr.bf16.mxu0 %v6283
    %7721 = vmatpush1.bf16.msra.mxu0 %v6282
    %7722 = vmatprep.subr.bf16.mxu0 %v6291
    %7723 = vmatpush1.bf16.msra.mxu0 %v6290
    %7724 = vmatprep.subr.bf16.mxu0 %v6299
    %7725 = vmatpush1.bf16.msra.mxu0 %v6298
    %7726 = vmatprep.subr.bf16.mxu0 %v6307
    %7727 = vmatpush1.bf16.msra.mxu0 %v6306
    %7728 = vmatprep.mubr.bf16.mxu0 %v3402
    %7729 = vmatmul.mubr.bf16.gmra.mrb[0].mxu0 %v3401
    %v7730 = vpop.f32.mrb[0].mxu0
    %v7731 = vadd.f32 %v4631, %v7730
    %v7732 = vpop.f32.mrb[0].mxu0
    %v7733 = vadd.f32 %v4635, %v7732
    %v7734 = vpop.f32.mrb[0].mxu0
    %v7735 = vpop.f32.mrb[0].mxu0
    %7736 = vdwg.mxu0
    %7737 = vmatprep.subr.bf16.mxu0 %v6315
    %7738 = vmatpush1.bf16.msra.mxu0 %v6314
    %7739 = vmatprep.subr.bf16.mxu0 %v6323
    %7740 = vmatpush1.bf16.msra.mxu0 %v6322
    %7741 = vmatprep.subr.bf16.mxu0 %v6331
    %7742 = vmatpush1.bf16.msra.mxu0 %v6330
    %7743 = vmatprep.subr.bf16.mxu0 %v6339
    %7744 = vmatpush1.bf16.msra.mxu0 %v6338
    %7745 = vmatprep.subr.bf16.mxu0 %v6347
    %7746 = vmatpush1.bf16.msra.mxu0 %v6346
    %7747 = vmatprep.subr.bf16.mxu0 %v6355
    %7748 = vmatpush1.bf16.msra.mxu0 %v6354
    %7749 = vmatprep.subr.bf16.mxu0 %v6363
    %7750 = vmatpush1.bf16.msra.mxu0 %v6362
    %7751 = vmatprep.subr.bf16.mxu0 %v6371
    %7752 = vmatpush1.bf16.msra.mxu0 %v6370
    %7753 = vmatprep.subr.bf16.mxu0 %v6379
    %7754 = vmatpush1.bf16.msra.mxu0 %v6378
    %7755 = vmatprep.subr.bf16.mxu0 %v6387
    %7756 = vmatpush1.bf16.msra.mxu0 %v6386
    %7757 = vmatprep.subr.bf16.mxu0 %v6395
    %7758 = vmatpush1.bf16.msra.mxu0 %v6394
    %7759 = vmatprep.subr.bf16.mxu0 %v6403
    %7760 = vmatpush1.bf16.msra.mxu0 %v6402
    %7761 = vmatprep.subr.bf16.mxu0 %v6411
    %7762 = vmatpush1.bf16.msra.mxu0 %v6410
    %7763 = vmatprep.subr.bf16.mxu0 %v6419
    %7764 = vmatpush1.bf16.msra.mxu0 %v6418
    %7765 = vmatprep.subr.bf16.mxu0 %v6427
    %7766 = vmatpush1.bf16.msra.mxu0 %v6426
    %7767 = vmatprep.subr.bf16.mxu0 %v6435
    %7768 = vmatpush1.bf16.msra.mxu0 %v6434
    %7769 = vmatprep.mubr.bf16.mxu0 %v3404
    %7770 = vmatmul.mubr.bf16.gmra.mrb[0].mxu0 %v3403
    %v7771 = vpop.f32.mrb[0].mxu0
    %v7772 = vadd.f32 %v7731, %v7771
    %v7773 = vpop.f32.mrb[0].mxu0
    %v7774 = vadd.f32 %v7733, %v7773
    %v7775 = vpop.f32.mrb[0].mxu0
    %v7776 = vpop.f32.mrb[0].mxu0
    %7777 = vdwg.mxu0
    %7778 = vmatprep.subr.bf16.mxu0 %v6443
    %7779 = vmatpush1.bf16.msra.mxu0 %v6442
    %7780 = vmatprep.subr.bf16.mxu0 %v6451
    %7781 = vmatpush1.bf16.msra.mxu0 %v6450
    %7782 = vmatprep.subr.bf16.mxu0 %v6459
    %7783 = vmatpush1.bf16.msra.mxu0 %v6458
    %7784 = vmatprep.subr.bf16.mxu0 %v6467
    %7785 = vmatpush1.bf16.msra.mxu0 %v6466
    %7786 = vmatprep.subr.bf16.mxu0 %v6475
    %7787 = vmatpush1.bf16.msra.mxu0 %v6474
    %7788 = vmatprep.subr.bf16.mxu0 %v6483
    %7789 = vmatpush1.bf16.msra.mxu0 %v6482
    %7790 = vmatprep.subr.bf16.mxu0 %v6491
    %7791 = vmatpush1.bf16.msra.mxu0 %v6490
    %7792 = vmatprep.subr.bf16.mxu0 %v6499
    %7793 = vmatpush1.bf16.msra.mxu0 %v6498
    %7794 = vmatprep.subr.bf16.mxu0 %v6507
    %7795 = vmatpush1.bf16.msra.mxu0 %v6506
    %7796 = vmatprep.subr.bf16.mxu0 %v6515
    %7797 = vmatpush1.bf16.msra.mxu0 %v6514
    %7798 = vmatprep.subr.bf16.mxu0 %v6523
    %7799 = vmatpush1.bf16.msra.mxu0 %v6522
    %7800 = vmatprep.subr.bf16.mxu0 %v6531
    %7801 = vmatpush1.bf16.msra.mxu0 %v6530
    %7802 = vmatprep.subr.bf16.mxu0 %v6539
    %7803 = vmatpush1.bf16.msra.mxu0 %v6538
    %7804 = vmatprep.subr.bf16.mxu0 %v6547
    %7805 = vmatpush1.bf16.msra.mxu0 %v6546
    %7806 = vmatprep.subr.bf16.mxu0 %v6555
    %7807 = vmatpush1.bf16.msra.mxu0 %v6554
    %7808 = vmatprep.subr.bf16.mxu0 %v6563
    %7809 = vmatpush1.bf16.msra.mxu0 %v6562
    %7810 = vmatprep.mubr.bf16.mxu0 %v3406
    %7811 = vmatmul.mubr.bf16.gmra.mrb[0].mxu0 %v3405
    %v7812 = vpop.f32.mrb[0].mxu0
    %v7813 = vadd.f32 %v7772, %v7812
    %v7814 = vpop.f32.mrb[0].mxu0
    %v7815 = vadd.f32 %v7774, %v7814
    %v7816 = vpop.f32.mrb[0].mxu0
    %v7817 = vpop.f32.mrb[0].mxu0
    %7818 = vdwg.mxu0
    %7819 = vmatprep.subr.bf16.mxu0 %v6571
    %7820 = vmatpush1.bf16.msra.mxu0 %v6570
    %7821 = vmatprep.subr.bf16.mxu0 %v6579
    %7822 = vmatpush1.bf16.msra.mxu0 %v6578
    %7823 = vmatprep.subr.bf16.mxu0 %v6587
    %7824 = vmatpush1.bf16.msra.mxu0 %v6586
    %7825 = vmatprep.subr.bf16.mxu0 %v6595
    %7826 = vmatpush1.bf16.msra.mxu0 %v6594
    %7827 = vmatprep.subr.bf16.mxu0 %v6603
    %7828 = vmatpush1.bf16.msra.mxu0 %v6602
    %7829 = vmatprep.subr.bf16.mxu0 %v6611
    %7830 = vmatpush1.bf16.msra.mxu0 %v6610
    %7831 = vmatprep.subr.bf16.mxu0 %v6619
    %7832 = vmatpush1.bf16.msra.mxu0 %v6618
    %7833 = vmatprep.subr.bf16.mxu0 %v6627
    %7834 = vmatpush1.bf16.msra.mxu0 %v6626
    %7835 = vmatprep.subr.bf16.mxu0 %v6635
    %7836 = vmatpush1.bf16.msra.mxu0 %v6634
    %7837 = vmatprep.subr.bf16.mxu0 %v6643
    %7838 = vmatpush1.bf16.msra.mxu0 %v6642
    %7839 = vmatprep.subr.bf16.mxu0 %v6651
    %7840 = vmatpush1.bf16.msra.mxu0 %v6650
    %7841 = vmatprep.subr.bf16.mxu0 %v6659
    %7842 = vmatpush1.bf16.msra.mxu0 %v6658
    %7843 = vmatprep.subr.bf16.mxu0 %v6667
    %7844 = vmatpush1.bf16.msra.mxu0 %v6666
    %7845 = vmatprep.subr.bf16.mxu0 %v6675
    %7846 = vmatpush1.bf16.msra.mxu0 %v6674
    %7847 = vmatprep.subr.bf16.mxu0 %v6683
    %7848 = vmatpush1.bf16.msra.mxu0 %v6682
    %7849 = vmatprep.subr.bf16.mxu0 %v6691
    %7850 = vmatpush1.bf16.msra.mxu0 %v6690
    %7851 = vmatprep.mubr.bf16.mxu0 %v3408
    %7852 = vmatmul.mubr.bf16.gmra.mrb[0].mxu0 %v3407
    %v7853 = vpop.f32.mrb[0].mxu0
    %v7854 = vadd.f32 %v7813, %v7853
    %v7855 = vpop.f32.mrb[0].mxu0
    %v7856 = vadd.f32 %v7815, %v7855
    %v7857 = vpop.f32.mrb[0].mxu0
    %v7858 = vpop.f32.mrb[0].mxu0
    %7859 = vdwg.mxu0
    %v7868 = vcombine.low %v7362, %v7364
    %v7869 = vcombine.low %v7526, %v7528
    %v7871 = vunpack.c.l.s4 1983009808
    %v7872 = vunpack.c.0.s8 %v7871
    %v7873 = vlaneseq
    %v7874 = vshrl.u32 %v7873, 7
    %v7875 = vsub.s32 %v7872, %v7874
    %v7876 = vrot.slane %v7868, %v7875
    %v7878 = vunpack.c.l.s4 1983009808
    %v7879 = vunpack.c.0.s8 %v7878
    %v7880 = vlaneseq
    %v7881 = vshrl.u32 %v7880, 7
    %v7882 = vsub.s32 %v7879, %v7881
    %v7883 = vrot.slane %v7869, %v7882
    %v7884 = vcombine.low %v7876, %v7883
    %v7885 = vcombine.low %v7690, %v7692
    %v7886 = vcombine.low %v7854, %v7856
    %v7888 = vunpack.c.l.s4 1983009808
    %v7889 = vunpack.c.0.s8 %v7888
    %v7890 = vlaneseq
    %v7891 = vshrl.u32 %v7890, 7
    %v7892 = vsub.s32 %v7889, %v7891
    %v7893 = vrot.slane %v7885, %v7892
    %v7895 = vunpack.c.l.s4 1983009808
    %v7896 = vunpack.c.0.s8 %v7895
    %v7897 = vlaneseq
    %v7898 = vshrl.u32 %v7897, 7
    %v7899 = vsub.s32 %v7896, %v7898
    %v7900 = vrot.slane %v7886, %v7899
    %v7901 = vcombine.low %v7893, %v7900
    %7904 = vst [vmem:[#allocation22] sm:$0xff] %v7884
    %7905 = vst [vmem:[#allocation22 + $0x8] sm:$0xff] %v7901
    // Predicated region
    $region86: #{cnn_auto_forward.1} parent=1 // pred_check
      _
    $region87: #{cnn_auto_forward.1} parent=1 // pred_check_branch
      %7907 = sbr.rel (0) target = $region89
    $region88: #{cnn_auto_forward.1} parent=1 // pred_region
      %s7909 = ssub.s32 32, 32
      %7910 = vsyncadd [#allocation4], %s7909
      %s7912 = sshll.u32 [#allocation19], 4
      %s7913 = int_to_ptr.vmem [resolvable:$true] %s7912
      %7915 = dma.vmem_to_hbm [thread:$0]  %s7913, 32, %s11, [#allocation4]
    $region89: #{cnn_auto_forward.1} parent=1 // pred_fallthru
      _
    // Predicated region
    $region90: #{cnn_auto_forward.1} parent=1 // pred_check
      _
    $region91: #{cnn_auto_forward.1} parent=1 // pred_check_branch
      %7917 = sbr.rel (0) target = $region93
    $region92: #{cnn_auto_forward.1} parent=1 // pred_region
      %s7919 = ssub.s32 256, 256
      %7920 = vsyncadd [#allocation21], %s7919
      %s7922 = sshll.u32 [#allocation20], 4
      %s7923 = int_to_ptr.vmem [resolvable:$true] %s7922
      %7925 = dma.vmem_to_hbm [thread:$0]  %s7923, 256, %s12, [#allocation21]
    $region93: #{cnn_auto_forward.1} parent=1 // pred_fallthru
      _
    // Predicated region
    $region94: #{cnn_auto_forward.1} parent=1 // pred_check
      _
    $region95: #{cnn_auto_forward.1} parent=1 // pred_check_branch
      %7927 = sbr.rel (0) target = $region97
    $region96: #{cnn_auto_forward.1} parent=1 // pred_region
      %s7929 = ssub.s32 256, 256
      %7930 = vsyncadd [#allocation21], %s7929
      %s7932 = sshll.u32 [#allocation22], 4
      %s7933 = int_to_ptr.vmem [resolvable:$true] %s7932
      %7935 = dma.vmem_to_hbm [thread:$0]  %s7933, 256, %s13, [#allocation21]
    $region97: #{cnn_auto_forward.1} parent=1 // pred_fallthru
      _
    // Predicated region
    $region98: #{cnn_auto_forward.1} parent=1 // pred_check
      _
    $region99: #{cnn_auto_forward.1} parent=1 // pred_check_branch
      %7937 = sbr.rel (0) target = $region101
    $region100: #{cnn_auto_forward.1} parent=1 // pred_region
      %7938 = dma.done [#allocation4], 32
    $region101: #{cnn_auto_forward.1} parent=1 // pred_fallthru
      _
    // Predicated region
    $region102: #{cnn_auto_forward.1} parent=1 // pred_check
      _
    $region103: #{cnn_auto_forward.1} parent=1 // pred_check_branch
      %7940 = sbr.rel (0) target = $region105
    $region104: #{cnn_auto_forward.1} parent=1 // pred_region
      %7941 = dma.done [#allocation21], 256
    $region105: #{cnn_auto_forward.1} parent=1 // pred_fallthru
      _
    // Predicated region
    $region106: #{cnn_auto_forward.1} parent=1 // pred_check
      _
    $region107: #{cnn_auto_forward.1} parent=1 // pred_check_branch
      %7943 = sbr.rel (0) target = $region109
    $region108: #{cnn_auto_forward.1} parent=1 // pred_region
      %7944 = dma.done [#allocation21], 256
    $region109: #{cnn_auto_forward.1} parent=1 // pred_fallthru
      _
    %7945 = vsyncpa [#allocation3], 1
    %7946 = vsyncpa [#allocation6], 1
    %7947 = vsyncpa [#allocation9], 1
    %7948 = vsyncpa [#allocation12], 1
    %7949 = vsyncpa [#allocation15], 1
    %7950 = vsyncpa [#allocation18], 1
    %7951 = vsyncpa [#allocation4], 1
    %7952 = vsyncpa [#allocation21], 1

</llo_original>
